<compile_context>
chip_gen: v7x
topology: tpu7x:2x2x1
jax: 0.10.0
libtpu: 0.0.40
codegen_flags: <defaults>
</compile_context>

<pallas_src>
import functools

import jax
import jax.numpy as jnp
import numpy as np
from jax import lax
from jax.experimental import pallas as pl
from jax.experimental.pallas import tpu as pltpu

_LANE = 128
_SUB = 16


def _round_up(x, m):
    return (x + m - 1) // m * m


def _vmem_limit_bytes():
    # Generation-aware scoped-VMEM limit: ~5/8 of physical VMEM
    # (v5e/v6e: 128 MiB -> 80 MiB, v7x: 64 MiB -> 40 MiB).
    cap = 64 * 1024 * 1024
    try:
        cap = int(getattr(pltpu.get_tpu_info(), "vmem_capacity_bytes", cap))
    except Exception:
        pass
    return int(min(cap * 5 // 8, 100 * 1024 * 1024))


_VMEM_LIMIT = _vmem_limit_bytes()
_TM_CAP = 1024 if _VMEM_LIMIT >= 64 * 1024 * 1024 else 512


def _cparams(dims):
    return pltpu.CompilerParams(dimension_semantics=dims,
                                vmem_limit_bytes=_VMEM_LIMIT)


def _pick_tile_m(m):
    """Split M into >=2 tiles when big enough so both v7x cores get a block."""
    if m <= 2 * _SUB:
        return _round_up(max(m, 1), _SUB)
    return min(_round_up((m + 1) // 2, _SUB), _TM_CAP)


def _pick_tile_k(k, tm):
    """Largest K tile (fewest grid steps / acc re-inits) with a <=~2MiB block."""
    kp = _round_up(k, _LANE)
    budget = 2 * 1024 * 1024
    if tm * kp * 2 <= budget:
        return kp
    for mult in range(kp // _LANE, 0, -1):
        tk = mult * _LANE
        if kp % tk == 0 and tm * tk * 2 <= budget:
            return tk
    return _LANE


# ----------------------------- Pallas kernels -------------------------------

def _gconv_kernel(x_ref, w_ref, b_ref, o_ref, acc_ref):
    """Grouped conv-as-matmul: (group, M, N, K) grid, bf16 MXU, f32 accumulate."""
    k = pl.program_id(3)

    @pl.when(k == 0)
    def _():
        acc_ref[...] = jnp.zeros_like(acc_ref)

    acc_ref[...] += jnp.dot(x_ref[...], w_ref[...],
                            preferred_element_type=jnp.float32)

    @pl.when(k == pl.num_programs(3) - 1)
    def _():
        o_ref[...] = jnp.maximum(acc_ref[...] + b_ref[...], 0.0).astype(o_ref.dtype)


def _pool_lrn_kernel(x_ref, band_ref, o_ref, *, oh, alpha, beta, k, size):
    """H-direction 3/stride-2 max pool + LocalResponseNorm for one sample.

    x_ref: (H//2, 2, OW, C) even/odd-paired W-pooled rows (bf16).  The H-max
    only slices/indexes leading dims; the LRN windowed channel sum-of-squares
    is a bf16 band matmul on the MXU with f32 accumulation, and the divide is
    folded into exp(-beta*log(.)) so transcendentals ride the EUP slot."""
    xp = x_ref[...]                                   # (H//2, 2, OW, C) bf16
    m = jnp.maximum(jnp.maximum(xp[:oh, 0], xp[:oh, 1]), xp[1:oh + 1, 0])
    band = band_ref[...]                              # (C, C) bf16, 0/1 exact
    for h in range(oh):                               # static, tiny (<=6)
        mh = m[h].astype(jnp.float32)                 # (OW, C)
        ssum = jnp.dot((mh * mh).astype(jnp.bfloat16), band,
                       preferred_element_type=jnp.float32)
        inv = jnp.exp(-beta * jnp.log(k + (alpha / size) * ssum))
        o_ref[h, :, :] = (mh * inv).astype(o_ref.dtype)


def _conv34_kernel(x_ref, w3_ref, b3_ref, w4_ref, b4_ref, o_ref):
    """conv3 (3x3 via im2col matmul) + ReLU fused with conv4 (1x1) + ReLU."""
    h = jnp.dot(x_ref[...], w3_ref[...], preferred_element_type=jnp.float32)
    h = jnp.maximum(h + b3_ref[...], 0.0)
    y = jnp.dot(h.astype(w4_ref.dtype), w4_ref[...],
                preferred_element_type=jnp.float32)
    o_ref[...] = jnp.maximum(y + b4_ref[...], 0.0).astype(o_ref.dtype)


# --------------------------- pallas_call wrappers ---------------------------

def _gconv_matmul(x, w, b, out_dtype=jnp.bfloat16):
    """x: (G, M, K) bf16, w: (G, K, N) bf16, b: (G, 1, N) f32 -> (Mp, G*N).

    Output columns [g*N:(g+1)*N] hold group g, i.e. already the PyTorch
    grouped-conv channel order — no relayout afterwards."""
    g, m, kdim = x.shape
    n = w.shape[-1]                       # multiple of 128 (caller pads cout)
    tm = _pick_tile_m(m)
    tk = _pick_tile_k(kdim, tm)
    tn = _LANE
    mp = _round_up(m, tm)
    kp = _round_up(kdim, tk)
    x = jnp.pad(x, ((0, 0), (0, mp - m), (0, kp - kdim)))
    w = jnp.pad(w, ((0, 0), (0, kp - kdim), (0, 0)))
    n_tiles = n // tn

    cost = pl.CostEstimate(
        flops=2 * g * mp * kp * n, transcendentals=0,
        bytes_accessed=g * (mp * kp + kp * n) * 2 + mp * g * n * 2)

    out = pl.pallas_call(
        _gconv_kernel,
        out_shape=jax.ShapeDtypeStruct((mp, g * n), out_dtype),
        grid_spec=pltpu.PrefetchScalarGridSpec(
            num_scalar_prefetch=0,
            grid=(g, mp // tm, n_tiles, kp // tk),
            in_specs=[
                pl.BlockSpec((None, tm, tk), lambda gi, i, j, k: (gi, i, k)),
                pl.BlockSpec((None, tk, tn), lambda gi, i, j, k: (gi, k, j)),
                pl.BlockSpec((None, 1, tn), lambda gi, i, j, k: (gi, 0, j)),
            ],
            out_specs=pl.BlockSpec(
                (tm, tn), lambda gi, i, j, k: (i, gi * n_tiles + j)),
            scratch_shapes=[pltpu.VMEM((tm, tn), jnp.float32)],
        ),
        compiler_params=_cparams(("parallel", "parallel", "parallel", "arbitrary")),
        cost_estimate=cost,
    )(x, w, b)
    return out


def maxpool3_lrn(x_nhwc, *, size=5, alpha=1e-4, beta=0.75, k=1.0,
                 out_dtype=jnp.bfloat16):
    """MaxPool2d(3, stride=2) + LocalResponseNorm(size); NHWC, C % 128 == 0.

    The W-direction stride-2 max-of-3 is one cheap XLA reduce_window; its
    (tiny) result is passed to the Pallas kernel ONCE — no 3x shifted/padded
    copies — which does the H-direction max + LRN per batch sample."""
    n, h, w, c = x_nhwc.shape
    oh = (h - 3) // 2 + 1
    ow = (w - 3) // 2 + 1

    wmax = lax.reduce_window(x_nhwc, jnp.array(-jnp.inf, x_nhwc.dtype),
                             lax.max, (1, 1, 3, 1), (1, 1, 2, 1), "VALID")
    hp = h if h % 2 == 0 else h + 1
    if hp != h:                                      # padded row is never read
        wmax = jnp.pad(wmax, ((0, 0), (0, hp - h), (0, 0), (0, 0)))
    wmax = wmax.reshape(n, hp // 2, 2, ow, c)        # even/odd pair view (free)

    idx = jnp.arange(c)
    band = (jnp.abs(idx[:, None] - idx[None, :]) <= size // 2).astype(jnp.bfloat16)

    cost = pl.CostEstimate(
        flops=2 * n * oh * ow * c * c + 10 * n * oh * ow * c,
        transcendentals=2 * n * oh * ow * c,
        bytes_accessed=(n * hp * ow * c + c * c + n * oh * ow * c) * 2)

    out = pl.pallas_call(
        functools.partial(_pool_lrn_kernel, oh=oh, alpha=alpha, beta=beta,
                          k=k, size=size),
        out_shape=jax.ShapeDtypeStruct((n, oh, ow, c), out_dtype),
        grid_spec=pltpu.PrefetchScalarGridSpec(
            num_scalar_prefetch=0,
            grid=(n,),
            in_specs=[pl.BlockSpec((None, hp // 2, 2, ow, c),
                                   lambda i: (i, 0, 0, 0, 0)),
                      pl.BlockSpec((c, c), lambda i: (0, 0))],
            out_specs=pl.BlockSpec((None, oh, ow, c), lambda i: (i, 0, 0, 0)),
        ),
        compiler_params=_cparams(("parallel",)),
        cost_estimate=cost,
    )(wmax, band)
    return out


# ------------------------------- glue layers --------------------------------

def _patches_nchw(x_nchw, ksize, stride, pad):
    """im2col via one identity-kernel convolution (no slice storm).

    Returns (N, OH, OW, C*k*k) with feature ordering (cin, kh, kw) — the same
    ordering as a flattened PyTorch OIHW weight."""
    p = lax.conv_general_dilated_patches(
        x_nchw, (ksize, ksize), (stride, stride), [(pad, pad), (pad, pad)])
    return jnp.transpose(p, (0, 2, 3, 1))


def conv2d_relu(x, w_pt, b, *, stride=1, pad=0, groups=1, channels_last=True):
    """Conv2d (PyTorch OIHW weights) + bias + ReLU -> NHWC bf16.

    Runs as ONE gridded Pallas matmul over (group, M, N, K); padded cout
    channels use zero weights/bias so they stay exactly zero downstream."""
    cout, cing, ksh, ksw = w_pt.shape
    cog = cout // groups
    cogp = _round_up(cog, _LANE)

    xb = x.astype(jnp.bfloat16)
    if channels_last:
        n, hh, ww, _ = x.shape
        xb = jnp.transpose(xb, (0, 3, 1, 2))
    else:
        n, _, hh, ww = x.shape
    oh = (hh + 2 * pad - ksh) // stride + 1
    ow = (ww + 2 * pad - ksw) // stride + 1

    cols = []
    for g in range(groups):
        pg = _patches_nchw(xb[:, g * cing:(g + 1) * cing], ksh, stride, pad)
        cols.append(pg.reshape(n * oh * ow, cing * ksh * ksw))
    cols = jnp.stack(cols, axis=0)                                  # (G, M, K)

    w = w_pt.reshape(groups, cog, cing * ksh * ksw)                 # (cin,kh,kw)
    w = jnp.transpose(w, (0, 2, 1))                                 # (G, K, cog)
    w = jnp.pad(w, ((0, 0), (0, 0), (0, cogp - cog))).astype(jnp.bfloat16)
    bb = jnp.pad(b.reshape(groups, 1, cog),
                 ((0, 0), (0, 0), (0, cogp - cog))).astype(jnp.float32)

    y = _gconv_matmul(cols, w, bb, out_dtype=jnp.bfloat16)          # (Mp, G*cogp)
    m = n * oh * ow
    return y[:m].reshape(n, oh, ow, groups * cogp)


def conv3_conv4_relu(x_nhwc, w3_pt, b3, w4_pt, b4):
    """Fused conv3 (3x3, pad 1) + ReLU + conv4 (1x1) + ReLU; gridded over batch."""
    n, hh, ww, _ = x_nhwc.shape
    c3 = w3_pt.shape[0]                        # 384 (lane-dense)
    c4 = w4_pt.shape[0]                        # 64
    c4p = _round_up(c4, _LANE)                 # 128

    cols = _patches_nhwc = _patches_nchw(
        jnp.transpose(x_nhwc.astype(jnp.bfloat16), (0, 3, 1, 2)), 3, 1, 1)
    m = hh * ww
    kdim = cols.shape[-1]
    kp = _round_up(kdim, _LANE)
    tm = _pick_tile_m(m)
    mp = _round_up(m, tm)
    cols = cols.reshape(n, m, kdim)
    cols = jnp.pad(cols, ((0, 0), (0, mp - m), (0, kp - kdim)))

    w3 = jnp.transpose(w3_pt.reshape(c3, kdim), (1, 0))
    w3 = jnp.pad(w3, ((0, kp - kdim), (0, 0))).astype(jnp.bfloat16)
    w4 = jnp.transpose(w4_pt.reshape(c4, c3), (1, 0))
    w4 = jnp.pad(w4, ((0, 0), (0, c4p - c4))).astype(jnp.bfloat16)
    b3r = b3.reshape(1, c3).astype(jnp.float32)
    b4r = jnp.pad(b4, (0, c4p - c4)).reshape(1, c4p).astype(jnp.float32)

    cost = pl.CostEstimate(
        flops=2 * n * mp * (kp * c3 + c3 * c4p), transcendentals=0,
        bytes_accessed=n * mp * kp * 2 + (kp * c3 + c3 * c4p) * 2 + n * mp * c4p * 4)

    out = pl.pallas_call(
        _conv34_kernel,
        out_shape=jax.ShapeDtypeStruct((n, mp, c4p), jnp.float32),
        grid_spec=pltpu.PrefetchScalarGridSpec(
            num_scalar_prefetch=0,
            grid=(n, mp // tm),
            in_specs=[pl.BlockSpec((None, tm, kp), lambda b, i: (b, i, 0)),
                      pl.BlockSpec((kp, c3), lambda b, i: (0, 0)),
                      pl.BlockSpec((1, c3), lambda b, i: (0, 0)),
                      pl.BlockSpec((c3, c4p), lambda b, i: (0, 0)),
                      pl.BlockSpec((1, c4p), lambda b, i: (0, 0))],
            out_specs=pl.BlockSpec((None, tm, c4p), lambda b, i: (b, i, 0)),
        ),
        compiler_params=_cparams(("parallel", "parallel")),
        cost_estimate=cost,
    )(cols, w3, b3r, w4, b4r)
    return out[:, :m, :c4].reshape(n, hh, ww, c4)


# ------------------------------ model forward -------------------------------

def itracker_forward(x_nchw, p):
    x = conv2d_relu(x_nchw, p["w1"], p["b1"], stride=4, pad=0,
                    channels_last=False)                              # 3->96 (pad 128)
    x = maxpool3_lrn(x)                                               # pool + LRN (bf16)
    x = conv2d_relu(x, p["w2"], p["b2"], stride=1, pad=2, groups=2)   # 96->256, g=2
    x = maxpool3_lrn(x)                                               # pool + LRN (bf16)
    x = conv3_conv4_relu(x, p["w3"], p["b3"], p["w4"], p["b4"])       # 256->384->64 (f32)
    x = jnp.transpose(x, (0, 3, 1, 2))                                # back to NCHW
    return x.reshape(x.shape[0], -1)                                  # == torch .view(N,-1)


def init_params(key):
    def winit(k, shape):
        fan_in = shape[1] * shape[2] * shape[3]
        return jax.random.normal(k, shape, jnp.float32) / jnp.sqrt(float(fan_in))

    ks = jax.random.split(key, 8)
    return {
        "w1": winit(ks[0], (96, 3, 11, 11)),
        "b1": 0.01 * jax.random.normal(ks[1], (96,), jnp.float32),
        "w2": winit(ks[2], (256, 48, 5, 5)),
        "b2": 0.01 * jax.random.normal(ks[3], (256,), jnp.float32),
        "w3": winit(ks[4], (384, 256, 3, 3)),
        "b3": 0.01 * jax.random.normal(ks[5], (384,), jnp.float32),
        "w4": winit(ks[6], (64, 384, 1, 1)),
        "b4": 0.01 * jax.random.normal(ks[7], (64,), jnp.float32),
    }


# ----------------------------- pure-JAX reference ---------------------------

def reference_forward(x, p):
    def conv(x, w, b, stride, pad, groups=1):
        y = jax.lax.conv_general_dilated(
            x, w, (stride, stride), [(pad, pad), (pad, pad)],
            dimension_numbers=("NCHW", "OIHW", "NCHW"),
            feature_group_count=groups,
            precision=jax.lax.Precision.HIGHEST)
        return jnp.maximum(y + b[None, :, None, None], 0.0)

    def pool(x):
        return jax.lax.reduce_window(
            x, -jnp.inf, jax.lax.max, (1, 1, 3, 3), (1, 1, 2, 2), "VALID")

    def lrn(x, size=5, alpha=1e-4, beta=0.75, k=1.0):
        sq = x * x
        pad = size // 2
        sqp = jnp.pad(sq, ((0, 0), (pad, pad), (0, 0), (0, 0)))
        s = sum(sqp[:, d:d + x.shape[1]] for d in range(size))
        return x / (k + alpha / size * s) ** beta

    x = conv(x, p["w1"], p["b1"], 4, 0)
    x = pool(x); x = lrn(x)
    x = conv(x, p["w2"], p["b2"], 1, 2, groups=2)
    x = pool(x); x = lrn(x)
    x = conv(x, p["w3"], p["b3"], 1, 1)
    x = conv(x, p["w4"], p["b4"], 1, 0)
    return x.reshape(x.shape[0], -1)


# ----------------------------------- main ------------------------------------

if __name__ == "__main__":
    key = jax.random.PRNGKey(0)
    kx, kp = jax.random.split(key)

    # Small spatial size consistent with the module: 63 -> 14 -> 6 -> 6 -> 2 -> 2 -> 2
    x = jax.random.normal(kx, (2, 3, 63, 63), jnp.float32)   # NCHW, like PyTorch
    params = init_params(kp)

    fwd = jax.jit(itracker_forward)
    out = jax.block_until_ready(fwd(x, params))

    ref = jax.block_until_ready(jax.jit(reference_forward)(x, params))
    assert out.shape == (2, 64 * 2 * 2), out.shape
    # bf16 MXU operands + bf16 inter-stage activations -> bf16-level tolerance.
    np.testing.assert_allclose(np.asarray(out), np.asarray(ref), rtol=5e-2, atol=5e-2)

    print("KERNEL_OK")
</pallas_src>

<mosaic_0001>
module attributes {stable_mosaic.version = 11 : i64} {
  func.func @_gconv_kernel(%arg0: i32, %arg1: i32, %arg2: i32, %arg3: i32, %arg4: memref<1x208x384xbf16, #tpu.memory_space<vmem>>, %arg5: memref<1x384x128xbf16, #tpu.memory_space<vmem>>, %arg6: memref<1x1x128xf32, #tpu.memory_space<vmem>>, %arg7: memref<208x128xbf16, #tpu.memory_space<vmem>>, %arg8: memref<208x128xf32, #tpu.memory_space<vmem>>) attributes {dimension_semantics = [#tpu.dimension_semantics<parallel>, #tpu.dimension_semantics<parallel>, #tpu.dimension_semantics<parallel>, #tpu.dimension_semantics<arbitrary>], iteration_bounds = array<i64: 1, 2, 1, 1>, scalar_prefetch = 0 : i64, scratch_operands = 1 : i64, tpu.core_type = #tpu.core_type<tc>, window_params = [{transform_indices = @transform_0, window_bounds = array<i64: 1, 208, 384>}, {transform_indices = @transform_1, window_bounds = array<i64: 1, 384, 128>}, {transform_indices = @transform_2, window_bounds = array<i64: 1, 1, 128>}, {transform_indices = @transform_3, window_bounds = array<i64: 208, 128>}]} {
    %c0_i32 = arith.constant 0 : i32
    %0 = arith.cmpi eq, %arg3, %c0_i32 : i32
    %1 = arith.extui %0 : i1 to i32
    %c0_i32_0 = arith.constant 0 : i32
    %2 = arith.cmpi ne, %1, %c0_i32_0 : i32
    scf.if %2 {
      %cst_12 = arith.constant 0.000000e+00 : f32
      %14 = vector.broadcast %cst_12 : f32 to vector<208x128xf32>
      %c0_13 = arith.constant 0 : index
      %c0_14 = arith.constant 0 : index
      %15 = vector.load %arg8[%c0_13, %c0_14] : memref<208x128xf32, #tpu.memory_space<vmem>>, vector<208x128xf32>
      tpu.vector_store %arg8[%c0_13, %c0_14], %14 {strides = array<i32>} : memref<208x128xf32, #tpu.memory_space<vmem>>, vector<208x128xf32>,
    } else {
    }
    %c0 = arith.constant 0 : index
    %c0_1 = arith.constant 0 : index
    %3 = vector.load %arg8[%c0, %c0_1] : memref<208x128xf32, #tpu.memory_space<vmem>>, vector<208x128xf32>
    %c0_2 = arith.constant 0 : index
    %c0_3 = arith.constant 0 : index
    %c0_4 = arith.constant 0 : index
    %4 = vector.load %arg4[%c0_2, %c0_3, %c0_4] : memref<1x208x384xbf16, #tpu.memory_space<vmem>>, vector<1x208x384xbf16>
    %5 = vector.shape_cast %4 : vector<1x208x384xbf16> to vector<208x384xbf16>
    %c0_5 = arith.constant 0 : index
    %c0_6 = arith.constant 0 : index
    %c0_7 = arith.constant 0 : index
    %6 = vector.load %arg5[%c0_5, %c0_6, %c0_7] : memref<1x384x128xbf16, #tpu.memory_space<vmem>>, vector<1x384x128xbf16>
    %7 = vector.shape_cast %6 : vector<1x384x128xbf16> to vector<384x128xbf16>
    %cst = arith.constant dense<0.000000e+00> : vector<208x128xf32>
    %8 = tpu.matmul %5, %7, %cst {dimension_numbers = #tpu.dot_dimension_numbers<[1], [0], [0], [1], [0, 0, 1, 1], [], []>} : vector<208x384xbf16>, vector<384x128xbf16>, vector<208x128xf32> -> vector<208x128xf32>
    %9 = arith.addf %3, %8 : vector<208x128xf32>
    %c0_8 = arith.constant 0 : index
    %c0_9 = arith.constant 0 : index
    %10 = vector.load %arg8[%c0_8, %c0_9] : memref<208x128xf32, #tpu.memory_space<vmem>>, vector<208x128xf32>
    tpu.vector_store %arg8[%c0_8, %c0_9], %9 {strides = array<i32>} : memref<208x128xf32, #tpu.memory_space<vmem>>, vector<208x128xf32>,
    %c0_i32_10 = arith.constant 0 : i32
    %11 = arith.cmpi eq, %arg3, %c0_i32_10 : i32
    %12 = arith.extui %11 : i1 to i32
    %c0_i32_11 = arith.constant 0 : i32
    %13 = arith.cmpi ne, %12, %c0_i32_11 : i32
    scf.if %13 {
      %c0_12 = arith.constant 0 : index
      %c0_13 = arith.constant 0 : index
      %14 = vector.load %arg8[%c0_12, %c0_13] : memref<208x128xf32, #tpu.memory_space<vmem>>, vector<208x128xf32>
      %c0_14 = arith.constant 0 : index
      %c0_15 = arith.constant 0 : index
      %c0_16 = arith.constant 0 : index
      %15 = vector.load %arg6[%c0_14, %c0_15, %c0_16] : memref<1x1x128xf32, #tpu.memory_space<vmem>>, vector<1x1x128xf32>
      %16 = vector.shape_cast %15 : vector<1x1x128xf32> to vector<1x128xf32>
      %17 = vector.broadcast %16 : vector<1x128xf32> to vector<208x128xf32>
      %18 = arith.addf %14, %17 : vector<208x128xf32>
      %cst_17 = arith.constant 0.000000e+00 : f32
      %19 = vector.broadcast %cst_17 : f32 to vector<208x128xf32>
      %20 = arith.maximumf %18, %19 : vector<208x128xf32>
      %21 = arith.truncf %20 : vector<208x128xf32> to vector<208x128xbf16>
      %c0_18 = arith.constant 0 : index
      %c0_19 = arith.constant 0 : index
      %22 = vector.load %arg7[%c0_18, %c0_19] : memref<208x128xbf16, #tpu.memory_space<vmem>>, vector<208x128xbf16>
      tpu.vector_store %arg7[%c0_18, %c0_19], %21 {strides = array<i32>} : memref<208x128xbf16, #tpu.memory_space<vmem>>, vector<208x128xbf16>,
    } else {
    }
    return
  }
  func.func @transform_0(%arg0: i32, %arg1: i32, %arg2: i32, %arg3: i32) -> (i32, i32, i32) {
    %c0_i32 = arith.constant 0 : i32
    return %arg0, %arg1, %arg3 : i32, i32, i32
  }
  func.func @transform_1(%arg0: i32, %arg1: i32, %arg2: i32, %arg3: i32) -> (i32, i32, i32) {
    %c0_i32 = arith.constant 0 : i32
    return %arg0, %arg3, %arg2 : i32, i32, i32
  }
  func.func @transform_2(%arg0: i32, %arg1: i32, %arg2: i32, %arg3: i32) -> (i32, i32, i32) {
    %c0_i32 = arith.constant 0 : i32
    %c0_i32_0 = arith.constant 0 : i32
    return %arg0, %c0_i32, %arg2 : i32, i32, i32
  }
  func.func @transform_3(%arg0: i32, %arg1: i32, %arg2: i32, %arg3: i32) -> (i32, i32) {
    %c1_i32 = arith.constant 1 : i32
    %0 = arith.muli %arg0, %c1_i32 : i32
    %1 = arith.addi %0, %arg2 : i32
    %c0_i32 = arith.constant 0 : i32
    return %arg1, %1 : i32, i32
  }
}

module attributes {stable_mosaic.version = 11 : i64} {
  func.func @_pool_lrn_kernel(%arg0: i32, %arg1: memref<1x7x2x6x128xbf16, #tpu.memory_space<vmem>>, %arg2: memref<128x128xbf16, #tpu.memory_space<vmem>>, %arg3: memref<1x6x6x128xbf16, #tpu.memory_space<vmem>>) attributes {dimension_semantics = [#tpu.dimension_semantics<parallel>], iteration_bounds = array<i64: 2>, scalar_prefetch = 0 : i64, scratch_operands = 0 : i64, tpu.core_type = #tpu.core_type<tc>, window_params = [{transform_indices = @transform_0, window_bounds = array<i64: 1, 7, 2, 6, 128>}, {pipeline_mode = #tpu.pipeline_mode<synchronous>, transform_indices = @transform_1, window_bounds = array<i64: 128, 128>}, {transform_indices = @transform_2, window_bounds = array<i64: 1, 6, 6, 128>}]} {
    %c0 = arith.constant 0 : index
    %c0_0 = arith.constant 0 : index
    %c0_1 = arith.constant 0 : index
    %c0_2 = arith.constant 0 : index
    %c0_3 = arith.constant 0 : index
    %0 = vector.load %arg1[%c0, %c0_0, %c0_1, %c0_2, %c0_3] : memref<1x7x2x6x128xbf16, #tpu.memory_space<vmem>>, vector<1x7x2x6x128xbf16>
    %1 = vector.shape_cast %0 : vector<1x7x2x6x128xbf16> to vector<7x2x6x128xbf16>
    %2 = vector.extract_strided_slice %1 {offsets = [0, 0, 0, 0], sizes = [6, 1, 6, 128], strides = [1, 1, 1, 1]} : vector<7x2x6x128xbf16> to vector<6x1x6x128xbf16>
    %3 = vector.shape_cast %2 : vector<6x1x6x128xbf16> to vector<6x6x128xbf16>
    %4 = vector.extract_strided_slice %1 {offsets = [0, 1, 0, 0], sizes = [6, 1, 6, 128], strides = [1, 1, 1, 1]} : vector<7x2x6x128xbf16> to vector<6x1x6x128xbf16>
    %5 = vector.shape_cast %4 : vector<6x1x6x128xbf16> to vector<6x6x128xbf16>
    %6 = arith.maximumf %3, %5 : vector<6x6x128xbf16>
    %7 = vector.extract_strided_slice %1 {offsets = [1, 0, 0, 0], sizes = [6, 1, 6, 128], strides = [1, 1, 1, 1]} : vector<7x2x6x128xbf16> to vector<6x1x6x128xbf16>
    %8 = vector.shape_cast %7 : vector<6x1x6x128xbf16> to vector<6x6x128xbf16>
    %9 = arith.maximumf %6, %8 : vector<6x6x128xbf16>
    %c0_4 = arith.constant 0 : index
    %c0_5 = arith.constant 0 : index
    %10 = vector.load %arg2[%c0_4, %c0_5] : memref<128x128xbf16, #tpu.memory_space<vmem>>, vector<128x128xbf16>
    %11 = vector.extract_strided_slice %9 {offsets = [0, 0, 0], sizes = [1, 6, 128], strides = [1, 1, 1]} : vector<6x6x128xbf16> to vector<1x6x128xbf16>
    %12 = vector.shape_cast %11 : vector<1x6x128xbf16> to vector<6x128xbf16>
    %13 = arith.extf %12 : vector<6x128xbf16> to vector<6x128xf32>
    %14 = arith.mulf %13, %13 : vector<6x128xf32>
    %15 = arith.truncf %14 : vector<6x128xf32> to vector<6x128xbf16>
    %cst = arith.constant dense<0.000000e+00> : vector<6x128xf32>
    %16 = tpu.matmul %15, %10, %cst {dimension_numbers = #tpu.dot_dimension_numbers<[1], [0], [0], [1], [0, 0, 1, 1], [], []>} : vector<6x128xbf16>, vector<128x128xbf16>, vector<6x128xf32> -> vector<6x128xf32>
    %cst_6 = arith.constant 2.000000e-05 : f32
    %17 = vector.broadcast %cst_6 : f32 to vector<6x128xf32>
    %18 = arith.mulf %17, %16 : vector<6x128xf32>
    %cst_7 = arith.constant 1.000000e+00 : f32
    %19 = vector.broadcast %cst_7 : f32 to vector<6x128xf32>
    %20 = arith.addf %19, %18 : vector<6x128xf32>
    %21 = math.log %20 : vector<6x128xf32>
    %cst_8 = arith.constant -7.500000e-01 : f32
    %22 = vector.broadcast %cst_8 : f32 to vector<6x128xf32>
    %23 = arith.mulf %22, %21 : vector<6x128xf32>
    %24 = math.exp %23 : vector<6x128xf32>
    %25 = arith.mulf %13, %24 : vector<6x128xf32>
    %26 = arith.truncf %25 : vector<6x128xf32> to vector<6x128xbf16>
    %c0_9 = arith.constant 0 : index
    %c0_10 = arith.constant 0 : index
    %c0_11 = arith.constant 0 : index
    %c0_12 = arith.constant 0 : index
    %27 = vector.load %arg3[%c0_9, %c0_10, %c0_11, %c0_12] : memref<1x6x6x128xbf16, #tpu.memory_space<vmem>>, vector<1x1x6x128xbf16>
    %28 = vector.shape_cast %27 : vector<1x1x6x128xbf16> to vector<6x128xbf16>
    %29 = vector.shape_cast %26 : vector<6x128xbf16> to vector<1x1x6x128xbf16>
    tpu.vector_store %arg3[%c0_9, %c0_10, %c0_11, %c0_12], %29 {strides = array<i32>} : memref<1x6x6x128xbf16, #tpu.memory_space<vmem>>, vector<1x1x6x128xbf16>,
    %30 = vector.extract_strided_slice %9 {offsets = [1, 0, 0], sizes = [1, 6, 128], strides = [1, 1, 1]} : vector<6x6x128xbf16> to vector<1x6x128xbf16>
    %31 = vector.shape_cast %30 : vector<1x6x128xbf16> to vector<6x128xbf16>
    %32 = arith.extf %31 : vector<6x128xbf16> to vector<6x128xf32>
    %33 = arith.mulf %32, %32 : vector<6x128xf32>
    %34 = arith.truncf %33 : vector<6x128xf32> to vector<6x128xbf16>
    %cst_13 = arith.constant dense<0.000000e+00> : vector<6x128xf32>
    %35 = tpu.matmul %34, %10, %cst_13 {dimension_numbers = #tpu.dot_dimension_numbers<[1], [0], [0], [1], [0, 0, 1, 1], [], []>} : vector<6x128xbf16>, vector<128x128xbf16>, vector<6x128xf32> -> vector<6x128xf32>
    %cst_14 = arith.constant 2.000000e-05 : f32
    %36 = vector.broadcast %cst_14 : f32 to vector<6x128xf32>
    %37 = arith.mulf %36, %35 : vector<6x128xf32>
    %cst_15 = arith.constant 1.000000e+00 : f32
    %38 = vector.broadcast %cst_15 : f32 to vector<6x128xf32>
    %39 = arith.addf %38, %37 : vector<6x128xf32>
    %40 = math.log %39 : vector<6x128xf32>
    %cst_16 = arith.constant -7.500000e-01 : f32
    %41 = vector.broadcast %cst_16 : f32 to vector<6x128xf32>
    %42 = arith.mulf %41, %40 : vector<6x128xf32>
    %43 = math.exp %42 : vector<6x128xf32>
    %44 = arith.mulf %32, %43 : vector<6x128xf32>
    %45 = arith.truncf %44 : vector<6x128xf32> to vector<6x128xbf16>
    %c0_17 = arith.constant 0 : index
    %c1 = arith.constant 1 : index
    %c0_18 = arith.constant 0 : index
    %c0_19 = arith.constant 0 : index
    %46 = vector.load %arg3[%c0_17, %c1, %c0_18, %c0_19] : memref<1x6x6x128xbf16, #tpu.memory_space<vmem>>, vector<1x1x6x128xbf16>
    %47 = vector.shape_cast %46 : vector<1x1x6x128xbf16> to vector<6x128xbf16>
    %48 = vector.shape_cast %45 : vector<6x128xbf16> to vector<1x1x6x128xbf16>
    tpu.vector_store %arg3[%c0_17, %c1, %c0_18, %c0_19], %48 {strides = array<i32>} : memref<1x6x6x128xbf16, #tpu.memory_space<vmem>>, vector<1x1x6x128xbf16>,
    %49 = vector.extract_strided_slice %9 {offsets = [2, 0, 0], sizes = [1, 6, 128], strides = [1, 1, 1]} : vector<6x6x128xbf16> to vector<1x6x128xbf16>
    %50 = vector.shape_cast %49 : vector<1x6x128xbf16> to vector<6x128xbf16>
    %51 = arith.extf %50 : vector<6x128xbf16> to vector<6x128xf32>
    %52 = arith.mulf %51, %51 : vector<6x128xf32>
    %53 = arith.truncf %52 : vector<6x128xf32> to vector<6x128xbf16>
    %cst_20 = arith.constant dense<0.000000e+00> : vector<6x128xf32>
    %54 = tpu.matmul %53, %10, %cst_20 {dimension_numbers = #tpu.dot_dimension_numbers<[1], [0], [0], [1], [0, 0, 1, 1], [], []>} : vector<6x128xbf16>, vector<128x128xbf16>, vector<6x128xf32> -> vector<6x128xf32>
    %cst_21 = arith.constant 2.000000e-05 : f32
    %55 = vector.broadcast %cst_21 : f32 to vector<6x128xf32>
    %56 = arith.mulf %55, %54 : vector<6x128xf32>
    %cst_22 = arith.constant 1.000000e+00 : f32
    %57 = vector.broadcast %cst_22 : f32 to vector<6x128xf32>
    %58 = arith.addf %57, %56 : vector<6x128xf32>
    %59 = math.log %58 : vector<6x128xf32>
    %cst_23 = arith.constant -7.500000e-01 : f32
    %60 = vector.broadcast %cst_23 : f32 to vector<6x128xf32>
    %61 = arith.mulf %60, %59 : vector<6x128xf32>
    %62 = math.exp %61 : vector<6x128xf32>
    %63 = arith.mulf %51, %62 : vector<6x128xf32>
    %64 = arith.truncf %63 : vector<6x128xf32> to vector<6x128xbf16>
    %c0_24 = arith.constant 0 : index
    %c2 = arith.constant 2 : index
    %c0_25 = arith.constant 0 : index
    %c0_26 = arith.constant 0 : index
    %65 = vector.load %arg3[%c0_24, %c2, %c0_25, %c0_26] : memref<1x6x6x128xbf16, #tpu.memory_space<vmem>>, vector<1x1x6x128xbf16>
    %66 = vector.shape_cast %65 : vector<1x1x6x128xbf16> to vector<6x128xbf16>
    %67 = vector.shape_cast %64 : vector<6x128xbf16> to vector<1x1x6x128xbf16>
    tpu.vector_store %arg3[%c0_24, %c2, %c0_25, %c0_26], %67 {strides = array<i32>} : memref<1x6x6x128xbf16, #tpu.memory_space<vmem>>, vector<1x1x6x128xbf16>,
    %68 = vector.extract_strided_slice %9 {offsets = [3, 0, 0], sizes = [1, 6, 128], strides = [1, 1, 1]} : vector<6x6x128xbf16> to vector<1x6x128xbf16>
    %69 = vector.shape_cast %68 : vector<1x6x128xbf16> to vector<6x128xbf16>
    %70 = arith.extf %69 : vector<6x128xbf16> to vector<6x128xf32>
    %71 = arith.mulf %70, %70 : vector<6x128xf32>
    %72 = arith.truncf %71 : vector<6x128xf32> to vector<6x128xbf16>
    %cst_27 = arith.constant dense<0.000000e+00> : vector<6x128xf32>
    %73 = tpu.matmul %72, %10, %cst_27 {dimension_numbers = #tpu.dot_dimension_numbers<[1], [0], [0], [1], [0, 0, 1, 1], [], []>} : vector<6x128xbf16>, vector<128x128xbf16>, vector<6x128xf32> -> vector<6x128xf32>
    %cst_28 = arith.constant 2.000000e-05 : f32
    %74 = vector.broadcast %cst_28 : f32 to vector<6x128xf32>
    %75 = arith.mulf %74, %73 : vector<6x128xf32>
    %cst_29 = arith.constant 1.000000e+00 : f32
    %76 = vector.broadcast %cst_29 : f32 to vector<6x128xf32>
    %77 = arith.addf %76, %75 : vector<6x128xf32>
    %78 = math.log %77 : vector<6x128xf32>
    %cst_30 = arith.constant -7.500000e-01 : f32
    %79 = vector.broadcast %cst_30 : f32 to vector<6x128xf32>
    %80 = arith.mulf %79, %78 : vector<6x128xf32>
    %81 = math.exp %80 : vector<6x128xf32>
    %82 = arith.mulf %70, %81 : vector<6x128xf32>
    %83 = arith.truncf %82 : vector<6x128xf32> to vector<6x128xbf16>
    %c0_31 = arith.constant 0 : index
    %c3 = arith.constant 3 : index
    %c0_32 = arith.constant 0 : index
    %c0_33 = arith.constant 0 : index
    %84 = vector.load %arg3[%c0_31, %c3, %c0_32, %c0_33] : memref<1x6x6x128xbf16, #tpu.memory_space<vmem>>, vector<1x1x6x128xbf16>
    %85 = vector.shape_cast %84 : vector<1x1x6x128xbf16> to vector<6x128xbf16>
    %86 = vector.shape_cast %83 : vector<6x128xbf16> to vector<1x1x6x128xbf16>
    tpu.vector_store %arg3[%c0_31, %c3, %c0_32, %c0_33], %86 {strides = array<i32>} : memref<1x6x6x128xbf16, #tpu.memory_space<vmem>>, vector<1x1x6x128xbf16>,
    %87 = vector.extract_strided_slice %9 {offsets = [4, 0, 0], sizes = [1, 6, 128], strides = [1, 1, 1]} : vector<6x6x128xbf16> to vector<1x6x128xbf16>
    %88 = vector.shape_cast %87 : vector<1x6x128xbf16> to vector<6x128xbf16>
    %89 = arith.extf %88 : vector<6x128xbf16> to vector<6x128xf32>
    %90 = arith.mulf %89, %89 : vector<6x128xf32>
    %91 = arith.truncf %90 : vector<6x128xf32> to vector<6x128xbf16>
    %cst_34 = arith.constant dense<0.000000e+00> : vector<6x128xf32>
    %92 = tpu.matmul %91, %10, %cst_34 {dimension_numbers = #tpu.dot_dimension_numbers<[1], [0], [0], [1], [0, 0, 1, 1], [], []>} : vector<6x128xbf16>, vector<128x128xbf16>, vector<6x128xf32> -> vector<6x128xf32>
    %cst_35 = arith.constant 2.000000e-05 : f32
    %93 = vector.broadcast %cst_35 : f32 to vector<6x128xf32>
    %94 = arith.mulf %93, %92 : vector<6x128xf32>
    %cst_36 = arith.constant 1.000000e+00 : f32
    %95 = vector.broadcast %cst_36 : f32 to vector<6x128xf32>
    %96 = arith.addf %95, %94 : vector<6x128xf32>
    %97 = math.log %96 : vector<6x128xf32>
    %cst_37 = arith.constant -7.500000e-01 : f32
    %98 = vector.broadcast %cst_37 : f32 to vector<6x128xf32>
    %99 = arith.mulf %98, %97 : vector<6x128xf32>
    %100 = math.exp %99 : vector<6x128xf32>
    %101 = arith.mulf %89, %100 : vector<6x128xf32>
    %102 = arith.truncf %101 : vector<6x128xf32> to vector<6x128xbf16>
    %c0_38 = arith.constant 0 : index
    %c4 = arith.constant 4 : index
    %c0_39 = arith.constant 0 : index
    %c0_40 = arith.constant 0 : index
    %103 = vector.load %arg3[%c0_38, %c4, %c0_39, %c0_40] : memref<1x6x6x128xbf16, #tpu.memory_space<vmem>>, vector<1x1x6x128xbf16>
    %104 = vector.shape_cast %103 : vector<1x1x6x128xbf16> to vector<6x128xbf16>
    %105 = vector.shape_cast %102 : vector<6x128xbf16> to vector<1x1x6x128xbf16>
    tpu.vector_store %arg3[%c0_38, %c4, %c0_39, %c0_40], %105 {strides = array<i32>} : memref<1x6x6x128xbf16, #tpu.memory_space<vmem>>, vector<1x1x6x128xbf16>,
    %106 = vector.extract_strided_slice %9 {offsets = [5, 0, 0], sizes = [1, 6, 128], strides = [1, 1, 1]} : vector<6x6x128xbf16> to vector<1x6x128xbf16>
    %107 = vector.shape_cast %106 : vector<1x6x128xbf16> to vector<6x128xbf16>
    %108 = arith.extf %107 : vector<6x128xbf16> to vector<6x128xf32>
    %109 = arith.mulf %108, %108 : vector<6x128xf32>
    %110 = arith.truncf %109 : vector<6x128xf32> to vector<6x128xbf16>
    %cst_41 = arith.constant dense<0.000000e+00> : vector<6x128xf32>
    %111 = tpu.matmul %110, %10, %cst_41 {dimension_numbers = #tpu.dot_dimension_numbers<[1], [0], [0], [1], [0, 0, 1, 1], [], []>} : vector<6x128xbf16>, vector<128x128xbf16>, vector<6x128xf32> -> vector<6x128xf32>
    %cst_42 = arith.constant 2.000000e-05 : f32
    %112 = vector.broadcast %cst_42 : f32 to vector<6x128xf32>
    %113 = arith.mulf %112, %111 : vector<6x128xf32>
    %cst_43 = arith.constant 1.000000e+00 : f32
    %114 = vector.broadcast %cst_43 : f32 to vector<6x128xf32>
    %115 = arith.addf %114, %113 : vector<6x128xf32>
    %116 = math.log %115 : vector<6x128xf32>
    %cst_44 = arith.constant -7.500000e-01 : f32
    %117 = vector.broadcast %cst_44 : f32 to vector<6x128xf32>
    %118 = arith.mulf %117, %116 : vector<6x128xf32>
    %119 = math.exp %118 : vector<6x128xf32>
    %120 = arith.mulf %108, %119 : vector<6x128xf32>
    %121 = arith.truncf %120 : vector<6x128xf32> to vector<6x128xbf16>
    %c0_45 = arith.constant 0 : index
    %c5 = arith.constant 5 : index
    %c0_46 = arith.constant 0 : index
    %c0_47 = arith.constant 0 : index
    %122 = vector.load %arg3[%c0_45, %c5, %c0_46, %c0_47] : memref<1x6x6x128xbf16, #tpu.memory_space<vmem>>, vector<1x1x6x128xbf16>
    %123 = vector.shape_cast %122 : vector<1x1x6x128xbf16> to vector<6x128xbf16>
    %124 = vector.shape_cast %121 : vector<6x128xbf16> to vector<1x1x6x128xbf16>
    tpu.vector_store %arg3[%c0_45, %c5, %c0_46, %c0_47], %124 {strides = array<i32>} : memref<1x6x6x128xbf16, #tpu.memory_space<vmem>>, vector<1x1x6x128xbf16>,
    return
  }
  func.func @transform_0(%arg0: i32) -> (i32, i32, i32, i32, i32) {
    %c0_i32 = arith.constant 0 : i32
    %c0_i32_0 = arith.constant 0 : i32
    %c0_i32_1 = arith.constant 0 : i32
    %c0_i32_2 = arith.constant 0 : i32
    %c0_i32_3 = arith.constant 0 : i32
    return %arg0, %c0_i32, %c0_i32_0, %c0_i32_1, %c0_i32_2 : i32, i32, i32, i32, i32
  }
  func.func @transform_1(%arg0: i32) -> (i32, i32) {
    %c0_i32 = arith.constant 0 : i32
    %c0_i32_0 = arith.constant 0 : i32
    %c0_i32_1 = arith.constant 0 : i32
    return %c0_i32, %c0_i32_0 : i32, i32
  }
  func.func @transform_2(%arg0: i32) -> (i32, i32, i32, i32) {
    %c0_i32 = arith.constant 0 : i32
    %c0_i32_0 = arith.constant 0 : i32
    %c0_i32_1 = arith.constant 0 : i32
    %c0_i32_2 = arith.constant 0 : i32
    return %arg0, %c0_i32, %c0_i32_0, %c0_i32_1 : i32, i32, i32, i32
  }
}

module attributes {stable_mosaic.version = 11 : i64} {
  func.func @_gconv_kernel(%arg0: i32, %arg1: i32, %arg2: i32, %arg3: i32, %arg4: memref<1x48x1280xbf16, #tpu.memory_space<vmem>>, %arg5: memref<1x1280x128xbf16, #tpu.memory_space<vmem>>, %arg6: memref<1x1x128xf32, #tpu.memory_space<vmem>>, %arg7: memref<48x128xbf16, #tpu.memory_space<vmem>>, %arg8: memref<48x128xf32, #tpu.memory_space<vmem>>) attributes {dimension_semantics = [#tpu.dimension_semantics<parallel>, #tpu.dimension_semantics<parallel>, #tpu.dimension_semantics<parallel>, #tpu.dimension_semantics<arbitrary>], iteration_bounds = array<i64: 2, 2, 1, 1>, scalar_prefetch = 0 : i64, scratch_operands = 1 : i64, tpu.core_type = #tpu.core_type<tc>, window_params = [{transform_indices = @transform_0, window_bounds = array<i64: 1, 48, 1280>}, {transform_indices = @transform_1, window_bounds = array<i64: 1, 1280, 128>}, {transform_indices = @transform_2, window_bounds = array<i64: 1, 1, 128>}, {transform_indices = @transform_3, window_bounds = array<i64: 48, 128>}]} {
    %c0_i32 = arith.constant 0 : i32
    %0 = arith.cmpi eq, %arg3, %c0_i32 : i32
    %1 = arith.extui %0 : i1 to i32
    %c0_i32_0 = arith.constant 0 : i32
    %2 = arith.cmpi ne, %1, %c0_i32_0 : i32
    scf.if %2 {
      %cst_12 = arith.constant 0.000000e+00 : f32
      %14 = vector.broadcast %cst_12 : f32 to vector<48x128xf32>
      %c0_13 = arith.constant 0 : index
      %c0_14 = arith.constant 0 : index
      %15 = vector.load %arg8[%c0_13, %c0_14] : memref<48x128xf32, #tpu.memory_space<vmem>>, vector<48x128xf32>
      tpu.vector_store %arg8[%c0_13, %c0_14], %14 {strides = array<i32>} : memref<48x128xf32, #tpu.memory_space<vmem>>, vector<48x128xf32>,
    } else {
    }
    %c0 = arith.constant 0 : index
    %c0_1 = arith.constant 0 : index
    %3 = vector.load %arg8[%c0, %c0_1] : memref<48x128xf32, #tpu.memory_space<vmem>>, vector<48x128xf32>
    %c0_2 = arith.constant 0 : index
    %c0_3 = arith.constant 0 : index
    %c0_4 = arith.constant 0 : index
    %4 = vector.load %arg4[%c0_2, %c0_3, %c0_4] : memref<1x48x1280xbf16, #tpu.memory_space<vmem>>, vector<1x48x1280xbf16>
    %5 = vector.shape_cast %4 : vector<1x48x1280xbf16> to vector<48x1280xbf16>
    %c0_5 = arith.constant 0 : index
    %c0_6 = arith.constant 0 : index
    %c0_7 = arith.constant 0 : index
    %6 = vector.load %arg5[%c0_5, %c0_6, %c0_7] : memref<1x1280x128xbf16, #tpu.memory_space<vmem>>, vector<1x1280x128xbf16>
    %7 = vector.shape_cast %6 : vector<1x1280x128xbf16> to vector<1280x128xbf16>
    %cst = arith.constant dense<0.000000e+00> : vector<48x128xf32>
    %8 = tpu.matmul %5, %7, %cst {dimension_numbers = #tpu.dot_dimension_numbers<[1], [0], [0], [1], [0, 0, 1, 1], [], []>} : vector<48x1280xbf16>, vector<1280x128xbf16>, vector<48x128xf32> -> vector<48x128xf32>
    %9 = arith.addf %3, %8 : vector<48x128xf32>
    %c0_8 = arith.constant 0 : index
    %c0_9 = arith.constant 0 : index
    %10 = vector.load %arg8[%c0_8, %c0_9] : memref<48x128xf32, #tpu.memory_space<vmem>>, vector<48x128xf32>
    tpu.vector_store %arg8[%c0_8, %c0_9], %9 {strides = array<i32>} : memref<48x128xf32, #tpu.memory_space<vmem>>, vector<48x128xf32>,
    %c0_i32_10 = arith.constant 0 : i32
    %11 = arith.cmpi eq, %arg3, %c0_i32_10 : i32
    %12 = arith.extui %11 : i1 to i32
    %c0_i32_11 = arith.constant 0 : i32
    %13 = arith.cmpi ne, %12, %c0_i32_11 : i32
    scf.if %13 {
      %c0_12 = arith.constant 0 : index
      %c0_13 = arith.constant 0 : index
      %14 = vector.load %arg8[%c0_12, %c0_13] : memref<48x128xf32, #tpu.memory_space<vmem>>, vector<48x128xf32>
      %c0_14 = arith.constant 0 : index
      %c0_15 = arith.constant 0 : index
      %c0_16 = arith.constant 0 : index
      %15 = vector.load %arg6[%c0_14, %c0_15, %c0_16] : memref<1x1x128xf32, #tpu.memory_space<vmem>>, vector<1x1x128xf32>
      %16 = vector.shape_cast %15 : vector<1x1x128xf32> to vector<1x128xf32>
      %17 = vector.broadcast %16 : vector<1x128xf32> to vector<48x128xf32>
      %18 = arith.addf %14, %17 : vector<48x128xf32>
      %cst_17 = arith.constant 0.000000e+00 : f32
      %19 = vector.broadcast %cst_17 : f32 to vector<48x128xf32>
      %20 = arith.maximumf %18, %19 : vector<48x128xf32>
      %21 = arith.truncf %20 : vector<48x128xf32> to vector<48x128xbf16>
      %c0_18 = arith.constant 0 : index
      %c0_19 = arith.constant 0 : index
      %22 = vector.load %arg7[%c0_18, %c0_19] : memref<48x128xbf16, #tpu.memory_space<vmem>>, vector<48x128xbf16>
      tpu.vector_store %arg7[%c0_18, %c0_19], %21 {strides = array<i32>} : memref<48x128xbf16, #tpu.memory_space<vmem>>, vector<48x128xbf16>,
    } else {
    }
    return
  }
  func.func @transform_0(%arg0: i32, %arg1: i32, %arg2: i32, %arg3: i32) -> (i32, i32, i32) {
    %c0_i32 = arith.constant 0 : i32
    return %arg0, %arg1, %arg3 : i32, i32, i32
  }
  func.func @transform_1(%arg0: i32, %arg1: i32, %arg2: i32, %arg3: i32) -> (i32, i32, i32) {
    %c0_i32 = arith.constant 0 : i32
    return %arg0, %arg3, %arg2 : i32, i32, i32
  }
  func.func @transform_2(%arg0: i32, %arg1: i32, %arg2: i32, %arg3: i32) -> (i32, i32, i32) {
    %c0_i32 = arith.constant 0 : i32
    %c0_i32_0 = arith.constant 0 : i32
    return %arg0, %c0_i32, %arg2 : i32, i32, i32
  }
  func.func @transform_3(%arg0: i32, %arg1: i32, %arg2: i32, %arg3: i32) -> (i32, i32) {
    %c1_i32 = arith.constant 1 : i32
    %0 = arith.muli %arg0, %c1_i32 : i32
    %1 = arith.addi %0, %arg2 : i32
    %c0_i32 = arith.constant 0 : i32
    return %arg1, %1 : i32, i32
  }
}

module attributes {stable_mosaic.version = 11 : i64} {
  func.func @_pool_lrn_kernel(%arg0: i32, %arg1: memref<1x3x2x2x256xbf16, #tpu.memory_space<vmem>>, %arg2: memref<256x256xbf16, #tpu.memory_space<vmem>>, %arg3: memref<1x2x2x256xbf16, #tpu.memory_space<vmem>>) attributes {dimension_semantics = [#tpu.dimension_semantics<parallel>], iteration_bounds = array<i64: 2>, scalar_prefetch = 0 : i64, scratch_operands = 0 : i64, tpu.core_type = #tpu.core_type<tc>, window_params = [{transform_indices = @transform_0, window_bounds = array<i64: 1, 3, 2, 2, 256>}, {pipeline_mode = #tpu.pipeline_mode<synchronous>, transform_indices = @transform_1, window_bounds = array<i64: 256, 256>}, {transform_indices = @transform_2, window_bounds = array<i64: 1, 2, 2, 256>}]} {
    %c0 = arith.constant 0 : index
    %c0_0 = arith.constant 0 : index
    %c0_1 = arith.constant 0 : index
    %c0_2 = arith.constant 0 : index
    %c0_3 = arith.constant 0 : index
    %0 = vector.load %arg1[%c0, %c0_0, %c0_1, %c0_2, %c0_3] : memref<1x3x2x2x256xbf16, #tpu.memory_space<vmem>>, vector<1x3x2x2x256xbf16>
    %1 = vector.shape_cast %0 : vector<1x3x2x2x256xbf16> to vector<3x2x2x256xbf16>
    %2 = vector.extract_strided_slice %1 {offsets = [0, 0, 0, 0], sizes = [2, 1, 2, 256], strides = [1, 1, 1, 1]} : vector<3x2x2x256xbf16> to vector<2x1x2x256xbf16>
    %3 = vector.shape_cast %2 : vector<2x1x2x256xbf16> to vector<2x2x256xbf16>
    %4 = vector.extract_strided_slice %1 {offsets = [0, 1, 0, 0], sizes = [2, 1, 2, 256], strides = [1, 1, 1, 1]} : vector<3x2x2x256xbf16> to vector<2x1x2x256xbf16>
    %5 = vector.shape_cast %4 : vector<2x1x2x256xbf16> to vector<2x2x256xbf16>
    %6 = arith.maximumf %3, %5 : vector<2x2x256xbf16>
    %7 = vector.extract_strided_slice %1 {offsets = [1, 0, 0, 0], sizes = [2, 1, 2, 256], strides = [1, 1, 1, 1]} : vector<3x2x2x256xbf16> to vector<2x1x2x256xbf16>
    %8 = vector.shape_cast %7 : vector<2x1x2x256xbf16> to vector<2x2x256xbf16>
    %9 = arith.maximumf %6, %8 : vector<2x2x256xbf16>
    %c0_4 = arith.constant 0 : index
    %c0_5 = arith.constant 0 : index
    %10 = vector.load %arg2[%c0_4, %c0_5] : memref<256x256xbf16, #tpu.memory_space<vmem>>, vector<256x256xbf16>
    %11 = vector.extract_strided_slice %9 {offsets = [0, 0, 0], sizes = [1, 2, 256], strides = [1, 1, 1]} : vector<2x2x256xbf16> to vector<1x2x256xbf16>
    %12 = vector.shape_cast %11 : vector<1x2x256xbf16> to vector<2x256xbf16>
    %13 = arith.extf %12 : vector<2x256xbf16> to vector<2x256xf32>
    %14 = arith.mulf %13, %13 : vector<2x256xf32>
    %15 = arith.truncf %14 : vector<2x256xf32> to vector<2x256xbf16>
    %cst = arith.constant dense<0.000000e+00> : vector<2x256xf32>
    %16 = tpu.matmul %15, %10, %cst {dimension_numbers = #tpu.dot_dimension_numbers<[1], [0], [0], [1], [0, 0, 1, 1], [], []>} : vector<2x256xbf16>, vector<256x256xbf16>, vector<2x256xf32> -> vector<2x256xf32>
    %cst_6 = arith.constant 2.000000e-05 : f32
    %17 = vector.broadcast %cst_6 : f32 to vector<2x256xf32>
    %18 = arith.mulf %17, %16 : vector<2x256xf32>
    %cst_7 = arith.constant 1.000000e+00 : f32
    %19 = vector.broadcast %cst_7 : f32 to vector<2x256xf32>
    %20 = arith.addf %19, %18 : vector<2x256xf32>
    %21 = math.log %20 : vector<2x256xf32>
    %cst_8 = arith.constant -7.500000e-01 : f32
    %22 = vector.broadcast %cst_8 : f32 to vector<2x256xf32>
    %23 = arith.mulf %22, %21 : vector<2x256xf32>
    %24 = math.exp %23 : vector<2x256xf32>
    %25 = arith.mulf %13, %24 : vector<2x256xf32>
    %26 = arith.truncf %25 : vector<2x256xf32> to vector<2x256xbf16>
    %c0_9 = arith.constant 0 : index
    %c0_10 = arith.constant 0 : index
    %c0_11 = arith.constant 0 : index
    %c0_12 = arith.constant 0 : index
    %27 = vector.load %arg3[%c0_9, %c0_10, %c0_11, %c0_12] : memref<1x2x2x256xbf16, #tpu.memory_space<vmem>>, vector<1x1x2x256xbf16>
    %28 = vector.shape_cast %27 : vector<1x1x2x256xbf16> to vector<2x256xbf16>
    %29 = vector.shape_cast %26 : vector<2x256xbf16> to vector<1x1x2x256xbf16>
    tpu.vector_store %arg3[%c0_9, %c0_10, %c0_11, %c0_12], %29 {strides = array<i32>} : memref<1x2x2x256xbf16, #tpu.memory_space<vmem>>, vector<1x1x2x256xbf16>,
    %30 = vector.extract_strided_slice %9 {offsets = [1, 0, 0], sizes = [1, 2, 256], strides = [1, 1, 1]} : vector<2x2x256xbf16> to vector<1x2x256xbf16>
    %31 = vector.shape_cast %30 : vector<1x2x256xbf16> to vector<2x256xbf16>
    %32 = arith.extf %31 : vector<2x256xbf16> to vector<2x256xf32>
    %33 = arith.mulf %32, %32 : vector<2x256xf32>
    %34 = arith.truncf %33 : vector<2x256xf32> to vector<2x256xbf16>
    %cst_13 = arith.constant dense<0.000000e+00> : vector<2x256xf32>
    %35 = tpu.matmul %34, %10, %cst_13 {dimension_numbers = #tpu.dot_dimension_numbers<[1], [0], [0], [1], [0, 0, 1, 1], [], []>} : vector<2x256xbf16>, vector<256x256xbf16>, vector<2x256xf32> -> vector<2x256xf32>
    %cst_14 = arith.constant 2.000000e-05 : f32
    %36 = vector.broadcast %cst_14 : f32 to vector<2x256xf32>
    %37 = arith.mulf %36, %35 : vector<2x256xf32>
    %cst_15 = arith.constant 1.000000e+00 : f32
    %38 = vector.broadcast %cst_15 : f32 to vector<2x256xf32>
    %39 = arith.addf %38, %37 : vector<2x256xf32>
    %40 = math.log %39 : vector<2x256xf32>
    %cst_16 = arith.constant -7.500000e-01 : f32
    %41 = vector.broadcast %cst_16 : f32 to vector<2x256xf32>
    %42 = arith.mulf %41, %40 : vector<2x256xf32>
    %43 = math.exp %42 : vector<2x256xf32>
    %44 = arith.mulf %32, %43 : vector<2x256xf32>
    %45 = arith.truncf %44 : vector<2x256xf32> to vector<2x256xbf16>
    %c0_17 = arith.constant 0 : index
    %c1 = arith.constant 1 : index
    %c0_18 = arith.constant 0 : index
    %c0_19 = arith.constant 0 : index
    %46 = vector.load %arg3[%c0_17, %c1, %c0_18, %c0_19] : memref<1x2x2x256xbf16, #tpu.memory_space<vmem>>, vector<1x1x2x256xbf16>
    %47 = vector.shape_cast %46 : vector<1x1x2x256xbf16> to vector<2x256xbf16>
    %48 = vector.shape_cast %45 : vector<2x256xbf16> to vector<1x1x2x256xbf16>
    tpu.vector_store %arg3[%c0_17, %c1, %c0_18, %c0_19], %48 {strides = array<i32>} : memref<1x2x2x256xbf16, #tpu.memory_space<vmem>>, vector<1x1x2x256xbf16>,
    return
  }
  func.func @transform_0(%arg0: i32) -> (i32, i32, i32, i32, i32) {
    %c0_i32 = arith.constant 0 : i32
    %c0_i32_0 = arith.constant 0 : i32
    %c0_i32_1 = arith.constant 0 : i32
    %c0_i32_2 = arith.constant 0 : i32
    %c0_i32_3 = arith.constant 0 : i32
    return %arg0, %c0_i32, %c0_i32_0, %c0_i32_1, %c0_i32_2 : i32, i32, i32, i32, i32
  }
  func.func @transform_1(%arg0: i32) -> (i32, i32) {
    %c0_i32 = arith.constant 0 : i32
    %c0_i32_0 = arith.constant 0 : i32
    %c0_i32_1 = arith.constant 0 : i32
    return %c0_i32, %c0_i32_0 : i32, i32
  }
  func.func @transform_2(%arg0: i32) -> (i32, i32, i32, i32) {
    %c0_i32 = arith.constant 0 : i32
    %c0_i32_0 = arith.constant 0 : i32
    %c0_i32_1 = arith.constant 0 : i32
    %c0_i32_2 = arith.constant 0 : i32
    return %arg0, %c0_i32, %c0_i32_0, %c0_i32_1 : i32, i32, i32, i32
  }
}

module attributes {stable_mosaic.version = 11 : i64} {
  func.func @_conv34_kernel(%arg0: i32, %arg1: i32, %arg2: memref<1x16x2304xbf16, #tpu.memory_space<vmem>>, %arg3: memref<2304x384xbf16, #tpu.memory_space<vmem>>, %arg4: memref<1x384xf32, #tpu.memory_space<vmem>>, %arg5: memref<384x128xbf16, #tpu.memory_space<vmem>>, %arg6: memref<1x128xf32, #tpu.memory_space<vmem>>, %arg7: memref<1x16x128xf32, #tpu.memory_space<vmem>>) attributes {dimension_semantics = [#tpu.dimension_semantics<parallel>, #tpu.dimension_semantics<parallel>], iteration_bounds = array<i64: 2, 1>, scalar_prefetch = 0 : i64, scratch_operands = 0 : i64, tpu.core_type = #tpu.core_type<tc>, window_params = [{transform_indices = @transform_0, window_bounds = array<i64: 1, 16, 2304>}, {pipeline_mode = #tpu.pipeline_mode<synchronous>, transform_indices = @transform_1, window_bounds = array<i64: 2304, 384>}, {pipeline_mode = #tpu.pipeline_mode<synchronous>, transform_indices = @transform_2, window_bounds = array<i64: 1, 384>}, {pipeline_mode = #tpu.pipeline_mode<synchronous>, transform_indices = @transform_3, window_bounds = array<i64: 384, 128>}, {pipeline_mode = #tpu.pipeline_mode<synchronous>, transform_indices = @transform_4, window_bounds = array<i64: 1, 128>}, {transform_indices = @transform_5, window_bounds = array<i64: 1, 16, 128>}]} {
    %c0 = arith.constant 0 : index
    %c0_0 = arith.constant 0 : index
    %c0_1 = arith.constant 0 : index
    %0 = vector.load %arg2[%c0, %c0_0, %c0_1] : memref<1x16x2304xbf16, #tpu.memory_space<vmem>>, vector<1x16x2304xbf16>
    %1 = vector.shape_cast %0 : vector<1x16x2304xbf16> to vector<16x2304xbf16>
    %c0_2 = arith.constant 0 : index
    %c0_3 = arith.constant 0 : index
    %2 = vector.load %arg3[%c0_2, %c0_3] : memref<2304x384xbf16, #tpu.memory_space<vmem>>, vector<2304x384xbf16>
    %cst = arith.constant dense<0.000000e+00> : vector<16x384xf32>
    %3 = tpu.matmul %1, %2, %cst {dimension_numbers = #tpu.dot_dimension_numbers<[1], [0], [0], [1], [0, 0, 1, 1], [], []>} : vector<16x2304xbf16>, vector<2304x384xbf16>, vector<16x384xf32> -> vector<16x384xf32>
    %c0_4 = arith.constant 0 : index
    %c0_5 = arith.constant 0 : index
    %4 = vector.load %arg4[%c0_4, %c0_5] : memref<1x384xf32, #tpu.memory_space<vmem>>, vector<1x384xf32>
    %5 = vector.broadcast %4 : vector<1x384xf32> to vector<16x384xf32>
    %6 = arith.addf %3, %5 : vector<16x384xf32>
    %cst_6 = arith.constant 0.000000e+00 : f32
    %7 = vector.broadcast %cst_6 : f32 to vector<16x384xf32>
    %8 = arith.maximumf %6, %7 : vector<16x384xf32>
    %9 = arith.truncf %8 : vector<16x384xf32> to vector<16x384xbf16>
    %c0_7 = arith.constant 0 : index
    %c0_8 = arith.constant 0 : index
    %10 = vector.load %arg5[%c0_7, %c0_8] : memref<384x128xbf16, #tpu.memory_space<vmem>>, vector<384x128xbf16>
    %cst_9 = arith.constant dense<0.000000e+00> : vector<16x128xf32>
    %11 = tpu.matmul %9, %10, %cst_9 {dimension_numbers = #tpu.dot_dimension_numbers<[1], [0], [0], [1], [0, 0, 1, 1], [], []>} : vector<16x384xbf16>, vector<384x128xbf16>, vector<16x128xf32> -> vector<16x128xf32>
    %c0_10 = arith.constant 0 : index
    %c0_11 = arith.constant 0 : index
    %12 = vector.load %arg6[%c0_10, %c0_11] : memref<1x128xf32, #tpu.memory_space<vmem>>, vector<1x128xf32>
    %13 = vector.broadcast %12 : vector<1x128xf32> to vector<16x128xf32>
    %14 = arith.addf %11, %13 : vector<16x128xf32>
    %cst_12 = arith.constant 0.000000e+00 : f32
    %15 = vector.broadcast %cst_12 : f32 to vector<16x128xf32>
    %16 = arith.maximumf %14, %15 : vector<16x128xf32>
    %c0_13 = arith.constant 0 : index
    %c0_14 = arith.constant 0 : index
    %c0_15 = arith.constant 0 : index
    %17 = vector.load %arg7[%c0_13, %c0_14, %c0_15] : memref<1x16x128xf32, #tpu.memory_space<vmem>>, vector<1x16x128xf32>
    %18 = vector.shape_cast %17 : vector<1x16x128xf32> to vector<16x128xf32>
    %19 = vector.shape_cast %16 : vector<16x128xf32> to vector<1x16x128xf32>
    tpu.vector_store %arg7[%c0_13, %c0_14, %c0_15], %19 {strides = array<i32>} : memref<1x16x128xf32, #tpu.memory_space<vmem>>, vector<1x16x128xf32>,
    return
  }
  func.func @transform_0(%arg0: i32, %arg1: i32) -> (i32, i32, i32) {
    %c0_i32 = arith.constant 0 : i32
    %c0_i32_0 = arith.constant 0 : i32
    return %arg0, %arg1, %c0_i32 : i32, i32, i32
  }
  func.func @transform_1(%arg0: i32, %arg1: i32) -> (i32, i32) {
    %c0_i32 = arith.constant 0 : i32
    %c0_i32_0 = arith.constant 0 : i32
    %c0_i32_1 = arith.constant 0 : i32
    return %c0_i32, %c0_i32_0 : i32, i32
  }
  func.func @transform_2(%arg0: i32, %arg1: i32) -> (i32, i32) {
    %c0_i32 = arith.constant 0 : i32
    %c0_i32_0 = arith.constant 0 : i32
    %c0_i32_1 = arith.constant 0 : i32
    return %c0_i32, %c0_i32_0 : i32, i32
  }
  func.func @transform_3(%arg0: i32, %arg1: i32) -> (i32, i32) {
    %c0_i32 = arith.constant 0 : i32
    %c0_i32_0 = arith.constant 0 : i32
    %c0_i32_1 = arith.constant 0 : i32
    return %c0_i32, %c0_i32_0 : i32, i32
  }
  func.func @transform_4(%arg0: i32, %arg1: i32) -> (i32, i32) {
    %c0_i32 = arith.constant 0 : i32
    %c0_i32_0 = arith.constant 0 : i32
    %c0_i32_1 = arith.constant 0 : i32
    return %c0_i32, %c0_i32_0 : i32, i32
  }
  func.func @transform_5(%arg0: i32, %arg1: i32) -> (i32, i32, i32) {
    %c0_i32 = arith.constant 0 : i32
    %c0_i32_0 = arith.constant 0 : i32
    return %arg0, %arg1, %c0_i32 : i32, i32, i32
  }
}

</mosaic_0001>

<llo_original>
// kernel: itracker_forward.6
$region0: #{itracker_forward.6}
  #allocation0 [shape = 'u32[]', space=smem, size = 0x4, offset = 0x4, fixed_abs, tag = 'smem constant byte address 0x4 - core index']
  #allocation1 [shape = 'u32[144,128]{1,0:T(1,128)}', space=vmem, size = 0x12000, scoped, tag = 'internal scratch']
  %s0 = inlined_call_operand.vmem [shape: bf16[2,7,2,6,128], index: 0, kind: input, shape index: {}]
  %s1 = inlined_call_operand.vmem [shape: bf16[128,128], index: 1, kind: input, shape index: {}]
  %s2 = inlined_call_operand.vmem [shape: bf16[2,6,6,128], index: 2, kind: output, shape index: {}]
  %s3 = sld [smem:[#allocation0]]
  $region41: #{itracker_forward.6} parent=0
    _
  %s5 = ssub.s32 1, %s3
  %s6 = scalar_select 0, %s5, %s3
  loop: start=0, step=1, limit=4
  $region2: #{itracker_forward.6} parent=0 // loop_pre_header
    _
  $region3: #{itracker_forward.6} parent=0 // loop_header
    %s8 = sphi 0, %s12
    %p9 = scmp.ge.s32.totalorder %s8, 4
    %s18 = sphi 0, %s20
    %s21 = sphi 0, %s18
    %s22 = sphi 0, %s21
    %s38 = sphi 0, %s22
    %s42 = sphi 0, %s42
    %s44 = sphi 0, %s42
    %s45 = sphi 0, %s44
    %s59 = sphi 0, %s45
    %s65 = sphi 0, %s67
    %s68 = sphi 0, %s65
    %s69 = sphi 0, %s68
    %s85 = sphi 0, %s69
  $region4: #{itracker_forward.6} parent=0 // loop_header_branch
    %11 = sbr.rel (%p9) target = $region8
  $region5: #{itracker_forward.6} parent=0 // loop_body
    %s13 = ssub.s32 %s8, 1
    %s14 = ssub.s32 %s8, 2
    %s15 = sadd.s32 %s8, 1
    %s16 = ssub.s32 %s8, %s15
    %p17 = scmp.eq.s32.totalorder %s16, 0
    %s19 = sadd.s32 %s18, 1
    %s20 = scalar_select %p17, %s18, %s19
    %p23 = pneg %p17
    %p24 = scmp.eq.s32.totalorder %s8, 1
    %p25 = por %p23, %p24
    %p26 = scmp.ne.s32.totalorder %s18, %s21
    %p27 = scmp.eq.s32.totalorder %s8, 0
    %p28 = por %p26, %p27
    %p29 = scmp.ne.s32.totalorder %s18, %s21
    %p30 = scmp.eq.s32.totalorder %s13, 1
    %p31 = por %p29, %p30
    %p32 = scmp.ne.s32.totalorder %s21, %s22
    %p33 = scmp.eq.s32.totalorder %s13, 0
    %p34 = por %p32, %p33
    %p35 = scmp.ne.s32.totalorder %s21, %s22
    %p36 = scmp.eq.s32.totalorder %s14, 1
    %p37 = por %p35, %p36
    %p39 = scmp.ne.s32.totalorder %s22, %s38
    %p40 = scmp.eq.s32.totalorder %s14, 0
    %p41 = por %p39, %p40
    %s43 = sadd.s32 %s42, 1
    %p46 = scmp.eq.s32.totalorder %s8, 1
    %p47 = scmp.ne.s32.totalorder %s42, %s44
    %p48 = scmp.eq.s32.totalorder %s8, 0
    %p49 = por %p47, %p48
    %p50 = scmp.ne.s32.totalorder %s42, %s44
    %p51 = scmp.eq.s32.totalorder %s13, 1
    %p52 = por %p50, %p51
    %p53 = scmp.ne.s32.totalorder %s44, %s45
    %p54 = scmp.eq.s32.totalorder %s13, 0
    %p55 = por %p53, %p54
    %p56 = scmp.ne.s32.totalorder %s44, %s45
    %p57 = scmp.eq.s32.totalorder %s14, 1
    %p58 = por %p56, %p57
    %p60 = scmp.ne.s32.totalorder %s45, %s59
    %p61 = scmp.eq.s32.totalorder %s14, 0
    %p62 = por %p60, %p61
    %s63 = ssub.s32 %s8, %s15
    %p64 = scmp.eq.s32.totalorder %s63, 0
    %s66 = sadd.s32 %s65, 1
    %s67 = scalar_select %p64, %s65, %s66
    %p70 = pneg %p64
    %p71 = scmp.eq.s32.totalorder %s8, 1
    %p72 = por %p70, %p71
    %p73 = scmp.ne.s32.totalorder %s65, %s68
    %p74 = scmp.eq.s32.totalorder %s8, 0
    %p75 = por %p73, %p74
    %p76 = scmp.ne.s32.totalorder %s65, %s68
    %p77 = scmp.eq.s32.totalorder %s13, 1
    %p78 = por %p76, %p77
    %p79 = scmp.ne.s32.totalorder %s68, %s69
    %p80 = scmp.eq.s32.totalorder %s13, 0
    %p81 = por %p79, %p80
    %p82 = scmp.ne.s32.totalorder %s68, %s69
    %p83 = scmp.eq.s32.totalorder %s14, 1
    %p84 = por %p82, %p83
    %p86 = scmp.ne.s32.totalorder %s69, %s85
    %p87 = scmp.eq.s32.totalorder %s14, 0
    %p88 = por %p86, %p87
    %p89 = scmp.le.s32.totalorder 1, %s8
    %p90 = scmp.lt.s32.totalorder %s8, 3
    %p91 = pnand %p89, %p90
    %p92 = pneg %p91
    // Predicated region
    $region9: #{itracker_forward.6} parent=5 // pred_check
      _
    $region10: #{itracker_forward.6} parent=5 // pred_check_branch
      %94 = sbr.rel (%p91) target = $region12
    $region11: #{itracker_forward.6} parent=5 // pred_region
      %s95 = ssub.s32 %s8, 1
      // Predicated region
      $region13: #{itracker_forward.6} parent=11 // pred_check
        %p96 = pneg %p55
      $region14: #{itracker_forward.6} parent=11 // pred_check_branch
        %98 = sbr.rel (%p96) target = $region16
      $region15: #{itracker_forward.6} parent=11 // pred_region
        _
      $region16: #{itracker_forward.6} parent=11 // pred_fallthru
        _
    $region12: #{itracker_forward.6} parent=5 // pred_fallthru
      _
    %p99 = scmp.lt.s32.totalorder %s8, 2
    // Predicated region
    $region17: #{itracker_forward.6} parent=5 // pred_check
      %p100 = pneg %p99
    $region18: #{itracker_forward.6} parent=5 // pred_check_branch
      %102 = sbr.rel (%p100) target = $region20
    $region19: #{itracker_forward.6} parent=5 // pred_region
      // Predicated region
      $region21: #{itracker_forward.6} parent=19 // pred_check
        %p103 = pneg %p28
      $region22: #{itracker_forward.6} parent=19 // pred_check_branch
        %105 = sbr.rel (%p103) target = $region24
      $region23: #{itracker_forward.6} parent=19 // pred_region
        %p106 = scmp.lt.s32.totalorder %s8, 1
        %s107 = scalar_select %p106, %s8, 1
        %s108 = smul.addr %s107, 14
        %s109 = smul.addr %s108, 4
        %s110 = scalar_lea.vmem %s0, %s109
      $region24: #{itracker_forward.6} parent=19 // pred_fallthru
        _
    $region20: #{itracker_forward.6} parent=5 // pred_fallthru
      _
    %p111 = scmp.le.s32.totalorder 1, %s8
    %p112 = scmp.lt.s32.totalorder %s8, 3
    %p113 = pnand %p111, %p112
    %p114 = pneg %p113
    // Predicated region
    $region25: #{itracker_forward.6} parent=5 // pred_check
      _
    $region26: #{itracker_forward.6} parent=5 // pred_check_branch
      %116 = sbr.rel (%p113) target = $region28
    $region27: #{itracker_forward.6} parent=5 // pred_region
      %s117 = ssub.s32 %s8, 1
      %p118 = scmp.lt.s32.totalorder %s13, 1
      %s119 = scalar_select %p118, %s13, 1
      %s120 = smul.addr %s119, 14
      %s121 = smul.addr %s120, 4
      %s122 = scalar_lea.vmem %s0, %s121
      %p123 = pneg %p34
      %p124 = pneg %p31
      %p125 = pneg %p55
      %p126 = pneg %p52
      %p127 = pneg %p81
      %p128 = pneg %p78
      %p129 = scmp.lt.s32.totalorder %s13, 1
      %s130 = scalar_select %p129, %s13, 1
      %s131 = smul.addr %s130, 6
      %s132 = smul.addr %s131, 4
      %s133 = scalar_lea.vmem %s2, %s132
      %p134 = scmp.lt.s32.totalorder %s13, 1
      %s135 = scalar_select %p134, %s13, 1
      %s136 = smul.addr %s135, 14
      %s137 = smul.addr %s136, 4
      %s138 = scalar_lea.vmem %s0, %s137
      %p139 = scmp.lt.s32.totalorder %s13, 1
      %s140 = scalar_select %p139, %s13, 1
      %s141 = smul.addr %s140, 6
      %s142 = smul.addr %s141, 4
      %s143 = scalar_lea.vmem %s2, %s142
      %v145 = vld [vmem:[%s138] sm:$0x7]
      %v146 = vld [vmem:[%s138 + $0x4] sm:$0x7]
      %v147 = vld [vmem:[%s138 + $0x8] sm:$0x7]
      %v148 = vld [vmem:[%s138 + $0xc] sm:$0x7]
      %v149 = vld [vmem:[%s138 + $0x10] sm:$0x7]
      %v150 = vld [vmem:[%s138 + $0x14] sm:$0x7]
      %v151 = vld [vmem:[%s138 + $0x18] sm:$0x7]
      %v152 = vld [vmem:[%s138 + $0x1c] sm:$0x7]
      %v153 = vld [vmem:[%s138 + $0x20] sm:$0x7]
      %v154 = vld [vmem:[%s138 + $0x24] sm:$0x7]
      %v155 = vld [vmem:[%s138 + $0x28] sm:$0x7]
      %v156 = vld [vmem:[%s138 + $0x2c] sm:$0x7]
      %v157 = vld [vmem:[%s138 + $0x30] sm:$0x7]
      %v158 = vmax.bf16 %v145, %v146
      %v159 = vmax.bf16 %v147, %v148
      %v160 = vmax.bf16 %v149, %v150
      %v161 = vmax.bf16 %v151, %v152
      %v162 = vmax.bf16 %v153, %v154
      %v163 = vmax.bf16 %v155, %v156
      %v164 = vmax.bf16 %v158, %v147
      %v165 = vmax.bf16 %v159, %v149
      %v166 = vmax.bf16 %v160, %v151
      %v167 = vmax.bf16 %v161, %v153
      %v168 = vmax.bf16 %v162, %v155
      %v169 = vmax.bf16 %v163, %v157
      %v170 = vld [vmem:[%s1] sm:$0xf]
      %v171 = vld [vmem:[%s1 + $0x4] sm:$0xf]
      %v172 = vld [vmem:[%s1 + $0x8] sm:$0xf]
      %v173 = vld [vmem:[%s1 + $0xc] sm:$0xf]
      %v174 = vld [vmem:[%s1 + $0x10] sm:$0xf]
      %v175 = vld [vmem:[%s1 + $0x14] sm:$0xf]
      %v176 = vld [vmem:[%s1 + $0x18] sm:$0xf]
      %v177 = vld [vmem:[%s1 + $0x1c] sm:$0xf]
      %v178 = vld [vmem:[%s1 + $0x20] sm:$0xf]
      %v179 = vld [vmem:[%s1 + $0x24] sm:$0xf]
      %v180 = vld [vmem:[%s1 + $0x28] sm:$0xf]
      %v181 = vld [vmem:[%s1 + $0x2c] sm:$0xf]
      %v182 = vld [vmem:[%s1 + $0x30] sm:$0xf]
      %v183 = vld [vmem:[%s1 + $0x34] sm:$0xf]
      %v184 = vld [vmem:[%s1 + $0x38] sm:$0xf]
      %v185 = vld [vmem:[%s1 + $0x3c] sm:$0xf]
      %v186 = vunpack.c.l.bf16 %v164
      %v187 = vmul.f32 %v186, %v186
      %v188 = vpack.c.bf16 %v187, %v187
      %v205 = vunpack.c.l.b16 %v170
      %v206 = vunpack.c.l.b16 %v171
      %v207 = vunpack.c.l.b16 %v172
      %v208 = vunpack.c.l.b16 %v173
      %v209 = vunpack.c.l.b16 %v174
      %v210 = vunpack.c.l.b16 %v175
      %v211 = vunpack.c.l.b16 %v176
      %v212 = vunpack.c.l.b16 %v177
      %v213 = vunpack.c.l.b16 %v178
      %v214 = vunpack.c.l.b16 %v179
      %v215 = vunpack.c.l.b16 %v180
      %v216 = vunpack.c.l.b16 %v181
      %v217 = vunpack.c.l.b16 %v182
      %v218 = vunpack.c.l.b16 %v183
      %v219 = vunpack.c.l.b16 %v184
      %v220 = vunpack.c.l.b16 %v185
      %v221 = vpack.c.b16 %v206, %v205
      %v222 = vpack.c.b16 %v208, %v207
      %v223 = vpack.c.b16 %v210, %v209
      %v224 = vpack.c.b16 %v212, %v211
      %v225 = vpack.c.b16 %v214, %v213
      %v226 = vpack.c.b16 %v216, %v215
      %v227 = vpack.c.b16 %v218, %v217
      %v228 = vpack.c.b16 %v220, %v219
      %237 = vmatprep.subr.bf16.mxu0 0
      %238 = vmatpush1.bf16.msra.mxu0 %v221
      %239 = vmatprep.subr.bf16.mxu0 0
      %240 = vmatpush1.bf16.msra.mxu0 %v222
      %241 = vmatprep.subr.bf16.mxu0 0
      %242 = vmatpush1.bf16.msra.mxu0 %v223
      %243 = vmatprep.subr.bf16.mxu0 0
      %244 = vmatpush1.bf16.msra.mxu0 %v224
      %245 = vmatprep.subr.bf16.mxu0 0
      %246 = vmatpush1.bf16.msra.mxu0 %v225
      %247 = vmatprep.subr.bf16.mxu0 0
      %248 = vmatpush1.bf16.msra.mxu0 %v226
      %249 = vmatprep.subr.bf16.mxu0 0
      %250 = vmatpush1.bf16.msra.mxu0 %v227
      %251 = vmatprep.subr.bf16.mxu0 0
      %252 = vmatpush1.bf16.msra.mxu0 %v228
      %253 = vmatprep.subr.bf16.mxu0 0
      %254 = vmatpush1.bf16.msra.mxu0 0
      %255 = vmatprep.subr.bf16.mxu0 0
      %256 = vmatpush1.bf16.msra.mxu0 0
      %257 = vmatprep.subr.bf16.mxu0 0
      %258 = vmatpush1.bf16.msra.mxu0 0
      %259 = vmatprep.subr.bf16.mxu0 0
      %260 = vmatpush1.bf16.msra.mxu0 0
      %261 = vmatprep.subr.bf16.mxu0 0
      %262 = vmatpush1.bf16.msra.mxu0 0
      %263 = vmatprep.subr.bf16.mxu0 0
      %264 = vmatpush1.bf16.msra.mxu0 0
      %265 = vmatprep.subr.bf16.mxu0 0
      %266 = vmatpush1.bf16.msra.mxu0 0
      %267 = vmatprep.subr.bf16.mxu0 0
      %268 = vmatpush1.bf16.msra.mxu0 0
      %269 = vmatprep.mubr.bf16.mxu0 0
      %270 = vmatmul.mubr.bf16.gmra.mrb[0].mxu0 %v188
      %v271 = vpop.f32.mrb[0].mxu0
      %v272 = vadd.f32 0.0, %v271
      %v273 = vpop.f32.mrb[0].mxu0
      %v274 = vpop.f32.mrb[0].mxu0
      %v275 = vpop.f32.mrb[0].mxu0
      %276 = vdwg.mxu0
      %v277 = vmul.f32 %v272, 2e-05
      %v278 = vadd.f32 %v277, 1.0
      %v279 = vlog2.pop %v278
      %v280 = vmul.f32 %v279, 0.6931472
      %v281 = vmul.f32 %v280, -0.75
      %v282 = vmul.f32 %v281, 1.442695
      %v283 = vpow.pop %v282
      %v284 = vmul.f32 %v186, %v283
      %v285 = vpack.c.bf16 %v284, %v284
      %286 = vst [vmem:[%s143] sm:$0x7] %v285
      %v287 = vunpack.c.l.bf16 %v165
      %v288 = vmul.f32 %v287, %v287
      %v289 = vpack.c.bf16 %v288, %v288
      %290 = vmatprep.subr.bf16.mxu0 0
      %291 = vmatpush1.bf16.msra.mxu0 %v221
      %292 = vmatprep.subr.bf16.mxu0 0
      %293 = vmatpush1.bf16.msra.mxu0 %v222
      %294 = vmatprep.subr.bf16.mxu0 0
      %295 = vmatpush1.bf16.msra.mxu0 %v223
      %296 = vmatprep.subr.bf16.mxu0 0
      %297 = vmatpush1.bf16.msra.mxu0 %v224
      %298 = vmatprep.subr.bf16.mxu0 0
      %299 = vmatpush1.bf16.msra.mxu0 %v225
      %300 = vmatprep.subr.bf16.mxu0 0
      %301 = vmatpush1.bf16.msra.mxu0 %v226
      %302 = vmatprep.subr.bf16.mxu0 0
      %303 = vmatpush1.bf16.msra.mxu0 %v227
      %304 = vmatprep.subr.bf16.mxu0 0
      %305 = vmatpush1.bf16.msra.mxu0 %v228
      %306 = vmatprep.subr.bf16.mxu0 0
      %307 = vmatpush1.bf16.msra.mxu0 0
      %308 = vmatprep.subr.bf16.mxu0 0
      %309 = vmatpush1.bf16.msra.mxu0 0
      %310 = vmatprep.subr.bf16.mxu0 0
      %311 = vmatpush1.bf16.msra.mxu0 0
      %312 = vmatprep.subr.bf16.mxu0 0
      %313 = vmatpush1.bf16.msra.mxu0 0
      %314 = vmatprep.subr.bf16.mxu0 0
      %315 = vmatpush1.bf16.msra.mxu0 0
      %316 = vmatprep.subr.bf16.mxu0 0
      %317 = vmatpush1.bf16.msra.mxu0 0
      %318 = vmatprep.subr.bf16.mxu0 0
      %319 = vmatpush1.bf16.msra.mxu0 0
      %320 = vmatprep.subr.bf16.mxu0 0
      %321 = vmatpush1.bf16.msra.mxu0 0
      %322 = vmatprep.mubr.bf16.mxu0 0
      %323 = vmatmul.mubr.bf16.gmra.mrb[0].mxu0 %v289
      %v324 = vpop.f32.mrb[0].mxu0
      %v325 = vadd.f32 0.0, %v324
      %v326 = vpop.f32.mrb[0].mxu0
      %v327 = vpop.f32.mrb[0].mxu0
      %v328 = vpop.f32.mrb[0].mxu0
      %329 = vdwg.mxu0
      %v330 = vmul.f32 %v325, 2e-05
      %v331 = vadd.f32 %v330, 1.0
      %v332 = vlog2.pop %v331
      %v333 = vmul.f32 %v332, 0.6931472
      %v334 = vmul.f32 %v333, -0.75
      %v335 = vmul.f32 %v334, 1.442695
      %v336 = vpow.pop %v335
      %v337 = vmul.f32 %v287, %v336
      %v338 = vpack.c.bf16 %v337, %v337
      %s339 = scalar_lea.vmem %s143, 4
      %340 = vst [vmem:[%s339] sm:$0x7] %v338
      %v341 = vunpack.c.l.bf16 %v166
      %v342 = vmul.f32 %v341, %v341
      %v343 = vpack.c.bf16 %v342, %v342
      %344 = vmatprep.subr.bf16.mxu0 0
      %345 = vmatpush1.bf16.msra.mxu0 %v221
      %346 = vmatprep.subr.bf16.mxu0 0
      %347 = vmatpush1.bf16.msra.mxu0 %v222
      %348 = vmatprep.subr.bf16.mxu0 0
      %349 = vmatpush1.bf16.msra.mxu0 %v223
      %350 = vmatprep.subr.bf16.mxu0 0
      %351 = vmatpush1.bf16.msra.mxu0 %v224
      %352 = vmatprep.subr.bf16.mxu0 0
      %353 = vmatpush1.bf16.msra.mxu0 %v225
      %354 = vmatprep.subr.bf16.mxu0 0
      %355 = vmatpush1.bf16.msra.mxu0 %v226
      %356 = vmatprep.subr.bf16.mxu0 0
      %357 = vmatpush1.bf16.msra.mxu0 %v227
      %358 = vmatprep.subr.bf16.mxu0 0
      %359 = vmatpush1.bf16.msra.mxu0 %v228
      %360 = vmatprep.subr.bf16.mxu0 0
      %361 = vmatpush1.bf16.msra.mxu0 0
      %362 = vmatprep.subr.bf16.mxu0 0
      %363 = vmatpush1.bf16.msra.mxu0 0
      %364 = vmatprep.subr.bf16.mxu0 0
      %365 = vmatpush1.bf16.msra.mxu0 0
      %366 = vmatprep.subr.bf16.mxu0 0
      %367 = vmatpush1.bf16.msra.mxu0 0
      %368 = vmatprep.subr.bf16.mxu0 0
      %369 = vmatpush1.bf16.msra.mxu0 0
      %370 = vmatprep.subr.bf16.mxu0 0
      %371 = vmatpush1.bf16.msra.mxu0 0
      %372 = vmatprep.subr.bf16.mxu0 0
      %373 = vmatpush1.bf16.msra.mxu0 0
      %374 = vmatprep.subr.bf16.mxu0 0
      %375 = vmatpush1.bf16.msra.mxu0 0
      %376 = vmatprep.mubr.bf16.mxu0 0
      %377 = vmatmul.mubr.bf16.gmra.mrb[0].mxu0 %v343
      %v378 = vpop.f32.mrb[0].mxu0
      %v379 = vadd.f32 0.0, %v378
      %v380 = vpop.f32.mrb[0].mxu0
      %v381 = vpop.f32.mrb[0].mxu0
      %v382 = vpop.f32.mrb[0].mxu0
      %383 = vdwg.mxu0
      %v384 = vmul.f32 %v379, 2e-05
      %v385 = vadd.f32 %v384, 1.0
      %v386 = vlog2.pop %v385
      %v387 = vmul.f32 %v386, 0.6931472
      %v388 = vmul.f32 %v387, -0.75
      %v389 = vmul.f32 %v388, 1.442695
      %v390 = vpow.pop %v389
      %v391 = vmul.f32 %v341, %v390
      %v392 = vpack.c.bf16 %v391, %v391
      %s393 = scalar_lea.vmem %s143, 8
      %394 = vst [vmem:[%s393] sm:$0x7] %v392
      %v395 = vunpack.c.l.bf16 %v167
      %v396 = vmul.f32 %v395, %v395
      %v397 = vpack.c.bf16 %v396, %v396
      %398 = vmatprep.subr.bf16.mxu0 0
      %399 = vmatpush1.bf16.msra.mxu0 %v221
      %400 = vmatprep.subr.bf16.mxu0 0
      %401 = vmatpush1.bf16.msra.mxu0 %v222
      %402 = vmatprep.subr.bf16.mxu0 0
      %403 = vmatpush1.bf16.msra.mxu0 %v223
      %404 = vmatprep.subr.bf16.mxu0 0
      %405 = vmatpush1.bf16.msra.mxu0 %v224
      %406 = vmatprep.subr.bf16.mxu0 0
      %407 = vmatpush1.bf16.msra.mxu0 %v225
      %408 = vmatprep.subr.bf16.mxu0 0
      %409 = vmatpush1.bf16.msra.mxu0 %v226
      %410 = vmatprep.subr.bf16.mxu0 0
      %411 = vmatpush1.bf16.msra.mxu0 %v227
      %412 = vmatprep.subr.bf16.mxu0 0
      %413 = vmatpush1.bf16.msra.mxu0 %v228
      %414 = vmatprep.subr.bf16.mxu0 0
      %415 = vmatpush1.bf16.msra.mxu0 0
      %416 = vmatprep.subr.bf16.mxu0 0
      %417 = vmatpush1.bf16.msra.mxu0 0
      %418 = vmatprep.subr.bf16.mxu0 0
      %419 = vmatpush1.bf16.msra.mxu0 0
      %420 = vmatprep.subr.bf16.mxu0 0
      %421 = vmatpush1.bf16.msra.mxu0 0
      %422 = vmatprep.subr.bf16.mxu0 0
      %423 = vmatpush1.bf16.msra.mxu0 0
      %424 = vmatprep.subr.bf16.mxu0 0
      %425 = vmatpush1.bf16.msra.mxu0 0
      %426 = vmatprep.subr.bf16.mxu0 0
      %427 = vmatpush1.bf16.msra.mxu0 0
      %428 = vmatprep.subr.bf16.mxu0 0
      %429 = vmatpush1.bf16.msra.mxu0 0
      %430 = vmatprep.mubr.bf16.mxu0 0
      %431 = vmatmul.mubr.bf16.gmra.mrb[0].mxu0 %v397
      %v432 = vpop.f32.mrb[0].mxu0
      %v433 = vadd.f32 0.0, %v432
      %v434 = vpop.f32.mrb[0].mxu0
      %v435 = vpop.f32.mrb[0].mxu0
      %v436 = vpop.f32.mrb[0].mxu0
      %437 = vdwg.mxu0
      %v438 = vmul.f32 %v433, 2e-05
      %v439 = vadd.f32 %v438, 1.0
      %v440 = vlog2.pop %v439
      %v441 = vmul.f32 %v440, 0.6931472
      %v442 = vmul.f32 %v441, -0.75
      %v443 = vmul.f32 %v442, 1.442695
      %v444 = vpow.pop %v443
      %v445 = vmul.f32 %v395, %v444
      %v446 = vpack.c.bf16 %v445, %v445
      %s447 = scalar_lea.vmem %s143, 12
      %448 = vst [vmem:[%s447] sm:$0x7] %v446
      %v449 = vunpack.c.l.bf16 %v168
      %v450 = vmul.f32 %v449, %v449
      %v451 = vpack.c.bf16 %v450, %v450
      %452 = vmatprep.subr.bf16.mxu0 0
      %453 = vmatpush1.bf16.msra.mxu0 %v221
      %454 = vmatprep.subr.bf16.mxu0 0
      %455 = vmatpush1.bf16.msra.mxu0 %v222
      %456 = vmatprep.subr.bf16.mxu0 0
      %457 = vmatpush1.bf16.msra.mxu0 %v223
      %458 = vmatprep.subr.bf16.mxu0 0
      %459 = vmatpush1.bf16.msra.mxu0 %v224
      %460 = vmatprep.subr.bf16.mxu0 0
      %461 = vmatpush1.bf16.msra.mxu0 %v225
      %462 = vmatprep.subr.bf16.mxu0 0
      %463 = vmatpush1.bf16.msra.mxu0 %v226
      %464 = vmatprep.subr.bf16.mxu0 0
      %465 = vmatpush1.bf16.msra.mxu0 %v227
      %466 = vmatprep.subr.bf16.mxu0 0
      %467 = vmatpush1.bf16.msra.mxu0 %v228
      %468 = vmatprep.subr.bf16.mxu0 0
      %469 = vmatpush1.bf16.msra.mxu0 0
      %470 = vmatprep.subr.bf16.mxu0 0
      %471 = vmatpush1.bf16.msra.mxu0 0
      %472 = vmatprep.subr.bf16.mxu0 0
      %473 = vmatpush1.bf16.msra.mxu0 0
      %474 = vmatprep.subr.bf16.mxu0 0
      %475 = vmatpush1.bf16.msra.mxu0 0
      %476 = vmatprep.subr.bf16.mxu0 0
      %477 = vmatpush1.bf16.msra.mxu0 0
      %478 = vmatprep.subr.bf16.mxu0 0
      %479 = vmatpush1.bf16.msra.mxu0 0
      %480 = vmatprep.subr.bf16.mxu0 0
      %481 = vmatpush1.bf16.msra.mxu0 0
      %482 = vmatprep.subr.bf16.mxu0 0
      %483 = vmatpush1.bf16.msra.mxu0 0
      %484 = vmatprep.mubr.bf16.mxu0 0
      %485 = vmatmul.mubr.bf16.gmra.mrb[0].mxu0 %v451
      %v486 = vpop.f32.mrb[0].mxu0
      %v487 = vadd.f32 0.0, %v486
      %v488 = vpop.f32.mrb[0].mxu0
      %v489 = vpop.f32.mrb[0].mxu0
      %v490 = vpop.f32.mrb[0].mxu0
      %491 = vdwg.mxu0
      %v492 = vmul.f32 %v487, 2e-05
      %v493 = vadd.f32 %v492, 1.0
      %v494 = vlog2.pop %v493
      %v495 = vmul.f32 %v494, 0.6931472
      %v496 = vmul.f32 %v495, -0.75
      %v497 = vmul.f32 %v496, 1.442695
      %v498 = vpow.pop %v497
      %v499 = vmul.f32 %v449, %v498
      %v500 = vpack.c.bf16 %v499, %v499
      %s501 = scalar_lea.vmem %s143, 16
      %502 = vst [vmem:[%s501] sm:$0x7] %v500
      %v503 = vunpack.c.l.bf16 %v169
      %v504 = vmul.f32 %v503, %v503
      %v505 = vpack.c.bf16 %v504, %v504
      %506 = vmatprep.subr.bf16.mxu0 0
      %507 = vmatpush1.bf16.msra.mxu0 %v221
      %508 = vmatprep.subr.bf16.mxu0 0
      %509 = vmatpush1.bf16.msra.mxu0 %v222
      %510 = vmatprep.subr.bf16.mxu0 0
      %511 = vmatpush1.bf16.msra.mxu0 %v223
      %512 = vmatprep.subr.bf16.mxu0 0
      %513 = vmatpush1.bf16.msra.mxu0 %v224
      %514 = vmatprep.subr.bf16.mxu0 0
      %515 = vmatpush1.bf16.msra.mxu0 %v225
      %516 = vmatprep.subr.bf16.mxu0 0
      %517 = vmatpush1.bf16.msra.mxu0 %v226
      %518 = vmatprep.subr.bf16.mxu0 0
      %519 = vmatpush1.bf16.msra.mxu0 %v227
      %520 = vmatprep.subr.bf16.mxu0 0
      %521 = vmatpush1.bf16.msra.mxu0 %v228
      %522 = vmatprep.subr.bf16.mxu0 0
      %523 = vmatpush1.bf16.msra.mxu0 0
      %524 = vmatprep.subr.bf16.mxu0 0
      %525 = vmatpush1.bf16.msra.mxu0 0
      %526 = vmatprep.subr.bf16.mxu0 0
      %527 = vmatpush1.bf16.msra.mxu0 0
      %528 = vmatprep.subr.bf16.mxu0 0
      %529 = vmatpush1.bf16.msra.mxu0 0
      %530 = vmatprep.subr.bf16.mxu0 0
      %531 = vmatpush1.bf16.msra.mxu0 0
      %532 = vmatprep.subr.bf16.mxu0 0
      %533 = vmatpush1.bf16.msra.mxu0 0
      %534 = vmatprep.subr.bf16.mxu0 0
      %535 = vmatpush1.bf16.msra.mxu0 0
      %536 = vmatprep.subr.bf16.mxu0 0
      %537 = vmatpush1.bf16.msra.mxu0 0
      %538 = vmatprep.mubr.bf16.mxu0 0
      %539 = vmatmul.mubr.bf16.gmra.mrb[0].mxu0 %v505
      %v540 = vpop.f32.mrb[0].mxu0
      %v541 = vadd.f32 0.0, %v540
      %v542 = vpop.f32.mrb[0].mxu0
      %v543 = vpop.f32.mrb[0].mxu0
      %v544 = vpop.f32.mrb[0].mxu0
      %545 = vdwg.mxu0
      %v546 = vmul.f32 %v541, 2e-05
      %v547 = vadd.f32 %v546, 1.0
      %v548 = vlog2.pop %v547
      %v549 = vmul.f32 %v548, 0.6931472
      %v550 = vmul.f32 %v549, -0.75
      %v551 = vmul.f32 %v550, 1.442695
      %v552 = vpow.pop %v551
      %v553 = vmul.f32 %v503, %v552
      %v554 = vpack.c.bf16 %v553, %v553
      %s555 = scalar_lea.vmem %s143, 20
      %556 = vst [vmem:[%s555] sm:$0x7] %v554
      %p557 = scmp.lt.s32.totalorder %s13, 1
      %s558 = scalar_select %p557, %s13, 1
      %s559 = smul.addr %s558, 6
      %s560 = smul.addr %s559, 4
      %s561 = scalar_lea.vmem %s2, %s560
      // Predicated region
      $region29: #{itracker_forward.6} parent=27 // pred_check
        %p562 = pneg %p78
      $region30: #{itracker_forward.6} parent=27 // pred_check_branch
        %564 = sbr.rel (%p562) target = $region32
      $region31: #{itracker_forward.6} parent=27 // pred_region
        _
      $region32: #{itracker_forward.6} parent=27 // pred_fallthru
        _
    $region28: #{itracker_forward.6} parent=5 // pred_fallthru
      _
    %p565 = scmp.le.s32.totalorder 2, %s8
    // Predicated region
    $region33: #{itracker_forward.6} parent=5 // pred_check
      %p566 = pneg %p565
    $region34: #{itracker_forward.6} parent=5 // pred_check_branch
      %568 = sbr.rel (%p566) target = $region36
    $region35: #{itracker_forward.6} parent=5 // pred_region
      %s569 = ssub.s32 %s8, 2
      // Predicated region
      $region37: #{itracker_forward.6} parent=35 // pred_check
        %p570 = pneg %p84
      $region38: #{itracker_forward.6} parent=35 // pred_check_branch
        %572 = sbr.rel (%p570) target = $region40
      $region39: #{itracker_forward.6} parent=35 // pred_region
        %p573 = scmp.lt.s32.totalorder %s14, 1
        %s574 = scalar_select %p573, %s14, 1
        %s575 = smul.addr %s574, 6
        %s576 = smul.addr %s575, 4
        %s577 = scalar_lea.vmem %s2, %s576
      $region40: #{itracker_forward.6} parent=35 // pred_fallthru
        _
    $region36: #{itracker_forward.6} parent=5 // pred_fallthru
      _
  $region6: #{itracker_forward.6} parent=0 // loop_footer
    %s12 = sadd.s32 1, %s8
  $region7: #{itracker_forward.6} parent=0 // loop_footer_branch
    %7 = sbr.rel target = $region3
  $region8: #{itracker_forward.6} parent=0 // loop_exit
    _

// kernel: itracker_forward.5
$region0: #{itracker_forward.5}
  #allocation0 [shape = 'u32[]', space=smem, size = 0x4, offset = 0x4, fixed_abs, tag = 'smem constant byte address 0x4 - core index']
  #allocation1 [shape = 'u32[144,128]{1,0:T(1,128)}', space=vmem, size = 0x12000, scoped, tag = 'internal scratch']
  #allocation2 [shape = 'f32[208,128]{1,0:T(8,128)}', space=vmem, size = 0x1a000, scoped, tag = 'scratch operand']
  %s0 = inlined_call_operand.vmem [shape: bf16[1,416,384], index: 0, kind: input, shape index: {}]
  %s1 = inlined_call_operand.vmem [shape: bf16[1,384,128], index: 1, kind: input, shape index: {}]
  %s2 = inlined_call_operand.vmem [shape: f32[1,1,128], index: 2, kind: input, shape index: {}]
  %s3 = inlined_call_operand.vmem [shape: bf16[416,128], index: 3, kind: output, shape index: {}]
  %s4 = sld [smem:[#allocation0]]
  $region53: #{itracker_forward.5} parent=0
    _
  %s6 = ssub.s32 1, %s4
  %s7 = scalar_select 0, %s6, %s4
  loop: start=0, step=1, limit=4
  $region2: #{itracker_forward.5} parent=0 // loop_pre_header
    _
  $region3: #{itracker_forward.5} parent=0 // loop_header
    %s9 = sphi 0, %s13
    %p10 = scmp.ge.s32.totalorder %s9, 4
    %s16 = sphi 0, %s42
    %s17 = sphi 0, %s38
    %s18 = sphi 0, %s34
    %s19 = sphi 0, %s30
    %s20 = sphi 0, %s16
    %s21 = sphi 0, %s17
    %s22 = sphi 0, %s18
    %s23 = sphi 0, %s19
    %s24 = sphi 0, %s20
    %s25 = sphi 0, %s21
    %s26 = sphi 0, %s22
    %s27 = sphi 0, %s23
    %s49 = sphi 0, %s51
    %s52 = sphi 0, %s49
    %s53 = sphi 0, %s52
    %s69 = sphi 0, %s53
    %s79 = sphi 0, %s81
    %s82 = sphi 0, %s79
    %s83 = sphi 0, %s82
    %s99 = sphi 0, %s83
    %s107 = sphi 0, %s109
    %s110 = sphi 0, %s107
    %s111 = sphi 0, %s110
    %s127 = sphi 0, %s111
    %s137 = sphi 0, %s139
    %s140 = sphi 0, %s137
    %s141 = sphi 0, %s140
    %s157 = sphi 0, %s141
  $region4: #{itracker_forward.5} parent=0 // loop_header_branch
    %12 = sbr.rel (%p10) target = $region8
  $region5: #{itracker_forward.5} parent=0 // loop_body
    %s14 = ssub.s32 %s9, 1
    %s15 = ssub.s32 %s9, 2
    %s28 = sadd.s32 1, %s19
    %p29 = scmp.ge.s32.totalorder %s28, 1
    %s30 = scalar_select %p29, 0, %s28
    %s31 = sadd.s32 1, %s18
    %s32 = scalar_select %p29, %s31, %s18
    %p33 = scmp.ge.s32.totalorder %s32, 1
    %s34 = scalar_select %p33, 0, %s32
    %s35 = sadd.s32 1, %s17
    %s36 = scalar_select %p33, %s35, %s17
    %p37 = scmp.ge.s32.totalorder %s36, 2
    %s38 = scalar_select %p37, 0, %s36
    %s39 = sadd.s32 1, %s16
    %s40 = scalar_select %p37, %s39, %s16
    %p41 = scmp.ge.s32.totalorder %s40, 1
    %s42 = scalar_select %p41, 0, %s40
    %s43 = ssub.s32 %s16, %s42
    %s44 = ssub.s32 %s17, %s38
    %s45 = sor.u32 %s43, %s44
    %s46 = ssub.s32 %s19, %s30
    %s47 = sor.u32 %s45, %s46
    %p48 = scmp.eq.s32.totalorder %s47, 0
    %s50 = sadd.s32 %s49, 1
    %s51 = scalar_select %p48, %s49, %s50
    %p54 = pneg %p48
    %p55 = scmp.eq.s32.totalorder %s9, 1
    %p56 = por %p54, %p55
    %p57 = scmp.ne.s32.totalorder %s49, %s52
    %p58 = scmp.eq.s32.totalorder %s9, 0
    %p59 = por %p57, %p58
    %p60 = scmp.ne.s32.totalorder %s49, %s52
    %p61 = scmp.eq.s32.totalorder %s14, 1
    %p62 = por %p60, %p61
    %p63 = scmp.ne.s32.totalorder %s52, %s53
    %p64 = scmp.eq.s32.totalorder %s14, 0
    %p65 = por %p63, %p64
    %p66 = scmp.ne.s32.totalorder %s52, %s53
    %p67 = scmp.eq.s32.totalorder %s15, 1
    %p68 = por %p66, %p67
    %p70 = scmp.ne.s32.totalorder %s53, %s69
    %p71 = scmp.eq.s32.totalorder %s15, 0
    %p72 = por %p70, %p71
    %s73 = ssub.s32 %s16, %s42
    %s74 = ssub.s32 %s19, %s30
    %s75 = sor.u32 %s73, %s74
    %s76 = ssub.s32 %s18, %s34
    %s77 = sor.u32 %s75, %s76
    %p78 = scmp.eq.s32.totalorder %s77, 0
    %s80 = sadd.s32 %s79, 1
    %s81 = scalar_select %p78, %s79, %s80
    %p84 = pneg %p78
    %p85 = scmp.eq.s32.totalorder %s9, 1
    %p86 = por %p84, %p85
    %p87 = scmp.ne.s32.totalorder %s79, %s82
    %p88 = scmp.eq.s32.totalorder %s9, 0
    %p89 = por %p87, %p88
    %p90 = scmp.ne.s32.totalorder %s79, %s82
    %p91 = scmp.eq.s32.totalorder %s14, 1
    %p92 = por %p90, %p91
    %p93 = scmp.ne.s32.totalorder %s82, %s83
    %p94 = scmp.eq.s32.totalorder %s14, 0
    %p95 = por %p93, %p94
    %p96 = scmp.ne.s32.totalorder %s82, %s83
    %p97 = scmp.eq.s32.totalorder %s15, 1
    %p98 = por %p96, %p97
    %p100 = scmp.ne.s32.totalorder %s83, %s99
    %p101 = scmp.eq.s32.totalorder %s15, 0
    %p102 = por %p100, %p101
    %s103 = ssub.s32 %s16, %s42
    %s104 = ssub.s32 %s18, %s34
    %s105 = sor.u32 %s103, %s104
    %p106 = scmp.eq.s32.totalorder %s105, 0
    %s108 = sadd.s32 %s107, 1
    %s109 = scalar_select %p106, %s107, %s108
    %p112 = pneg %p106
    %p113 = scmp.eq.s32.totalorder %s9, 1
    %p114 = por %p112, %p113
    %p115 = scmp.ne.s32.totalorder %s107, %s110
    %p116 = scmp.eq.s32.totalorder %s9, 0
    %p117 = por %p115, %p116
    %p118 = scmp.ne.s32.totalorder %s107, %s110
    %p119 = scmp.eq.s32.totalorder %s14, 1
    %p120 = por %p118, %p119
    %p121 = scmp.ne.s32.totalorder %s110, %s111
    %p122 = scmp.eq.s32.totalorder %s14, 0
    %p123 = por %p121, %p122
    %p124 = scmp.ne.s32.totalorder %s110, %s111
    %p125 = scmp.eq.s32.totalorder %s15, 1
    %p126 = por %p124, %p125
    %p128 = scmp.ne.s32.totalorder %s111, %s127
    %p129 = scmp.eq.s32.totalorder %s15, 0
    %p130 = por %p128, %p129
    %s131 = sadd.s32 %s16, %s18
    %s132 = sadd.s32 %s42, %s34
    %s133 = ssub.s32 %s17, %s38
    %s134 = ssub.s32 %s131, %s132
    %s135 = sor.u32 %s133, %s134
    %p136 = scmp.eq.s32.totalorder %s135, 0
    %s138 = sadd.s32 %s137, 1
    %s139 = scalar_select %p136, %s137, %s138
    %p142 = pneg %p136
    %p143 = scmp.eq.s32.totalorder %s9, 1
    %p144 = por %p142, %p143
    %p145 = scmp.ne.s32.totalorder %s137, %s140
    %p146 = scmp.eq.s32.totalorder %s9, 0
    %p147 = por %p145, %p146
    %p148 = scmp.ne.s32.totalorder %s137, %s140
    %p149 = scmp.eq.s32.totalorder %s14, 1
    %p150 = por %p148, %p149
    %p151 = scmp.ne.s32.totalorder %s140, %s141
    %p152 = scmp.eq.s32.totalorder %s14, 0
    %p153 = por %p151, %p152
    %p154 = scmp.ne.s32.totalorder %s140, %s141
    %p155 = scmp.eq.s32.totalorder %s15, 1
    %p156 = por %p154, %p155
    %p158 = scmp.ne.s32.totalorder %s141, %s157
    %p159 = scmp.eq.s32.totalorder %s15, 0
    %p160 = por %p158, %p159
    %p161 = scmp.le.s32.totalorder 1, %s9
    %p162 = scmp.lt.s32.totalorder %s9, 3
    %p163 = pnand %p161, %p162
    %p164 = pneg %p163
    // Predicated region
    $region9: #{itracker_forward.5} parent=5 // pred_check
      _
    $region10: #{itracker_forward.5} parent=5 // pred_check_branch
      %166 = sbr.rel (%p163) target = $region12
    $region11: #{itracker_forward.5} parent=5 // pred_region
      %s167 = ssub.s32 %s9, 1
      // Predicated region
      $region13: #{itracker_forward.5} parent=11 // pred_check
        %p168 = pneg %p95
      $region14: #{itracker_forward.5} parent=11 // pred_check_branch
        %170 = sbr.rel (%p168) target = $region16
      $region15: #{itracker_forward.5} parent=11 // pred_region
        %s171 = smul.u32 48, %s23
        %p172 = scmp.lt.s32.totalorder %s20, 0
        %s173 = scalar_select %p172, %s20, 0
        %p174 = scmp.lt.s32.totalorder %s171, 47
        %s175 = scalar_select %p174, %s171, 47
        %p176 = scmp.lt.s32.totalorder %s22, 0
        %s177 = scalar_select %p176, %s22, 0
        %s178 = sadd.s32 %s177, %s175
        %s179 = smul.addr %s173, 48
        %s180 = sadd.s32 %s178, %s179
        %s181 = smul.addr %s180, 4
        %s182 = scalar_lea.vmem %s1, %s181
        %s183 = smul.u32 48, %s23
      $region16: #{itracker_forward.5} parent=11 // pred_fallthru
        _
      // Predicated region
      $region17: #{itracker_forward.5} parent=11 // pred_check
        %p184 = pneg %p123
      $region18: #{itracker_forward.5} parent=11 // pred_check_branch
        %186 = sbr.rel (%p184) target = $region20
      $region19: #{itracker_forward.5} parent=11 // pred_region
        %p187 = scmp.lt.s32.totalorder %s20, 0
        %s188 = scalar_select %p187, %s20, 0
        %p189 = scmp.lt.s32.totalorder %s22, 0
        %s190 = scalar_select %p189, %s22, 0
        %s191 = sadd.s32 %s190, %s188
        %s192 = scalar_lea.vmem %s2, %s191
      $region20: #{itracker_forward.5} parent=11 // pred_fallthru
        _
    $region12: #{itracker_forward.5} parent=5 // pred_fallthru
      _
    %p193 = scmp.lt.s32.totalorder %s9, 2
    // Predicated region
    $region21: #{itracker_forward.5} parent=5 // pred_check
      %p194 = pneg %p193
    $region22: #{itracker_forward.5} parent=5 // pred_check_branch
      %196 = sbr.rel (%p194) target = $region24
    $region23: #{itracker_forward.5} parent=5 // pred_region
      // Predicated region
      $region25: #{itracker_forward.5} parent=23 // pred_check
        %p197 = pneg %p59
      $region26: #{itracker_forward.5} parent=23 // pred_check_branch
        %199 = sbr.rel (%p197) target = $region28
      $region27: #{itracker_forward.5} parent=23 // pred_region
        %s200 = smul.u32 26, %s17
        %s201 = smul.u32 3, %s19
        %p202 = scmp.lt.s32.totalorder %s16, 0
        %s203 = scalar_select %p202, %s16, 0
        %p204 = scmp.lt.s32.totalorder %s200, 51
        %s205 = scalar_select %p204, %s200, 51
        %p206 = scmp.lt.s32.totalorder %s201, 2
        %s207 = scalar_select %p206, %s201, 2
        %s208 = smul.addr %s205, 3
        %s209 = sadd.s32 %s207, %s208
        %s210 = smul.addr %s203, 156
        %s211 = sadd.s32 %s209, %s210
        %s212 = smul.addr %s211, 4
        %s213 = scalar_lea.vmem %s0, %s212
        %s214 = smul.u32 26, %s17
        %s215 = smul.u32 3, %s19
      $region28: #{itracker_forward.5} parent=23 // pred_fallthru
        _
    $region24: #{itracker_forward.5} parent=5 // pred_fallthru
      _
    %p216 = scmp.le.s32.totalorder 1, %s9
    %p217 = scmp.lt.s32.totalorder %s9, 3
    %p218 = pnand %p216, %p217
    %p219 = pneg %p218
    // Predicated region
    $region29: #{itracker_forward.5} parent=5 // pred_check
      _
    $region30: #{itracker_forward.5} parent=5 // pred_check_branch
      %221 = sbr.rel (%p218) target = $region32
    $region31: #{itracker_forward.5} parent=5 // pred_region
      %s222 = ssub.s32 %s9, 1
      %s223 = smul.u32 26, %s21
      %s224 = smul.u32 3, %s23
      %p225 = scmp.lt.s32.totalorder %s20, 0
      %s226 = scalar_select %p225, %s20, 0
      %p227 = scmp.lt.s32.totalorder %s223, 51
      %s228 = scalar_select %p227, %s223, 51
      %p229 = scmp.lt.s32.totalorder %s224, 2
      %s230 = scalar_select %p229, %s224, 2
      %s231 = smul.addr %s228, 3
      %s232 = sadd.s32 %s230, %s231
      %s233 = smul.addr %s226, 156
      %s234 = sadd.s32 %s232, %s233
      %s235 = smul.addr %s234, 4
      %s236 = scalar_lea.vmem %s0, %s235
      %p237 = pneg %p65
      %p238 = pneg %p62
      %s239 = smul.u32 48, %s23
      %p240 = scmp.lt.s32.totalorder %s20, 0
      %s241 = scalar_select %p240, %s20, 0
      %p242 = scmp.lt.s32.totalorder %s239, 47
      %s243 = scalar_select %p242, %s239, 47
      %p244 = scmp.lt.s32.totalorder %s22, 0
      %s245 = scalar_select %p244, %s22, 0
      %s246 = sadd.s32 %s245, %s243
      %s247 = smul.addr %s241, 48
      %s248 = sadd.s32 %s246, %s247
      %s249 = smul.addr %s248, 4
      %s250 = scalar_lea.vmem %s1, %s249
      %p251 = pneg %p95
      %p252 = pneg %p92
      %p253 = scmp.lt.s32.totalorder %s20, 0
      %s254 = scalar_select %p253, %s20, 0
      %p255 = scmp.lt.s32.totalorder %s22, 0
      %s256 = scalar_select %p255, %s22, 0
      %s257 = sadd.s32 %s256, %s254
      %s258 = scalar_lea.vmem %s2, %s257
      %p259 = pneg %p123
      %p260 = pneg %p120
      %p261 = pneg %p153
      %p262 = pneg %p150
      %s263 = sadd.s32 %s20, %s22
      %s264 = smul.u32 26, %s21
      %p265 = scmp.lt.s32.totalorder %s264, 51
      %s266 = scalar_select %p265, %s264, 51
      %p267 = scmp.lt.s32.totalorder %s263, 0
      %s268 = scalar_select %p267, %s263, 0
      %s269 = sadd.s32 %s268, %s266
      %s270 = smul.addr %s269, 4
      %s271 = scalar_lea.vmem %s3, %s270
      %s272 = smul.u32 26, %s21
      %s273 = smul.u32 3, %s23
      %p274 = scmp.lt.s32.totalorder %s20, 0
      %s275 = scalar_select %p274, %s20, 0
      %p276 = scmp.lt.s32.totalorder %s272, 51
      %s277 = scalar_select %p276, %s272, 51
      %p278 = scmp.lt.s32.totalorder %s273, 2
      %s279 = scalar_select %p278, %s273, 2
      %s280 = smul.addr %s277, 3
      %s281 = sadd.s32 %s279, %s280
      %s282 = smul.addr %s275, 156
      %s283 = sadd.s32 %s281, %s282
      %s284 = smul.addr %s283, 4
      %s285 = scalar_lea.vmem %s0, %s284
      %s286 = smul.u32 26, %s21
      %s287 = smul.u32 3, %s23
      %s288 = smul.u32 48, %s23
      %p289 = scmp.lt.s32.totalorder %s20, 0
      %s290 = scalar_select %p289, %s20, 0
      %p291 = scmp.lt.s32.totalorder %s288, 47
      %s292 = scalar_select %p291, %s288, 47
      %p293 = scmp.lt.s32.totalorder %s22, 0
      %s294 = scalar_select %p293, %s22, 0
      %s295 = sadd.s32 %s294, %s292
      %s296 = smul.addr %s290, 48
      %s297 = sadd.s32 %s295, %s296
      %s298 = smul.addr %s297, 4
      %s299 = scalar_lea.vmem %s1, %s298
      %s300 = smul.u32 48, %s23
      %p301 = scmp.lt.s32.totalorder %s20, 0
      %s302 = scalar_select %p301, %s20, 0
      %p303 = scmp.lt.s32.totalorder %s22, 0
      %s304 = scalar_select %p303, %s22, 0
      %s305 = sadd.s32 %s304, %s302
      %s306 = scalar_lea.vmem %s2, %s305
      %s307 = sadd.s32 %s20, %s22
      %s308 = smul.u32 26, %s21
      %p309 = scmp.lt.s32.totalorder %s308, 51
      %s310 = scalar_select %p309, %s308, 51
      %p311 = scmp.lt.s32.totalorder %s307, 0
      %s312 = scalar_select %p311, %s307, 0
      %s313 = sadd.s32 %s312, %s310
      %s314 = smul.addr %s313, 4
      %s315 = scalar_lea.vmem %s3, %s314
      %s316 = sadd.s32 %s20, %s22
      %s317 = smul.u32 26, %s21
      %p319 = scmp.eq.s32.totalorder %s23, 0
      // Predicated region
      $region33: #{itracker_forward.5} parent=31 // pred_check
        %p320 = pneg %p319
      $region34: #{itracker_forward.5} parent=31 // pred_check_branch
        %322 = sbr.rel (%p320) target = $region36
      $region35: #{itracker_forward.5} parent=31 // pred_region
        %323 = vst [vmem:[#allocation2] sm:$0xff] 0.0
        %324 = vst [vmem:[#allocation2 + $0x8] sm:$0xff] 0.0
        %325 = vst [vmem:[#allocation2 + $0x10] sm:$0xff] 0.0
        %326 = vst [vmem:[#allocation2 + $0x18] sm:$0xff] 0.0
        %327 = vst [vmem:[#allocation2 + $0x20] sm:$0xff] 0.0
        %328 = vst [vmem:[#allocation2 + $0x28] sm:$0xff] 0.0
        %329 = vst [vmem:[#allocation2 + $0x30] sm:$0xff] 0.0
        %330 = vst [vmem:[#allocation2 + $0x38] sm:$0xff] 0.0
        %331 = vst [vmem:[#allocation2 + $0x40] sm:$0xff] 0.0
        %332 = vst [vmem:[#allocation2 + $0x48] sm:$0xff] 0.0
        %333 = vst [vmem:[#allocation2 + $0x50] sm:$0xff] 0.0
        %334 = vst [vmem:[#allocation2 + $0x58] sm:$0xff] 0.0
        %335 = vst [vmem:[#allocation2 + $0x60] sm:$0xff] 0.0
        %336 = vst [vmem:[#allocation2 + $0x68] sm:$0xff] 0.0
        %337 = vst [vmem:[#allocation2 + $0x70] sm:$0xff] 0.0
        %338 = vst [vmem:[#allocation2 + $0x78] sm:$0xff] 0.0
        %339 = vst [vmem:[#allocation2 + $0x80] sm:$0xff] 0.0
        %340 = vst [vmem:[#allocation2 + $0x88] sm:$0xff] 0.0
        %341 = vst [vmem:[#allocation2 + $0x90] sm:$0xff] 0.0
        %342 = vst [vmem:[#allocation2 + $0x98] sm:$0xff] 0.0
        %343 = vst [vmem:[#allocation2 + $0xa0] sm:$0xff] 0.0
        %344 = vst [vmem:[#allocation2 + $0xa8] sm:$0xff] 0.0
        %345 = vst [vmem:[#allocation2 + $0xb0] sm:$0xff] 0.0
        %346 = vst [vmem:[#allocation2 + $0xb8] sm:$0xff] 0.0
        %347 = vst [vmem:[#allocation2 + $0xc0] sm:$0xff] 0.0
        %348 = vst [vmem:[#allocation2 + $0xc8] sm:$0xff] 0.0
      $region36: #{itracker_forward.5} parent=31 // pred_fallthru
        _
      %v349 = vld [vmem:[#allocation2] sm:$0xff]
      %v350 = vld [vmem:[#allocation2 + $0x8] sm:$0xff]
      %v351 = vld [vmem:[#allocation2 + $0x10] sm:$0xff]
      %v352 = vld [vmem:[#allocation2 + $0x18] sm:$0xff]
      %v353 = vld [vmem:[#allocation2 + $0x20] sm:$0xff]
      %v354 = vld [vmem:[#allocation2 + $0x28] sm:$0xff]
      %v355 = vld [vmem:[#allocation2 + $0x30] sm:$0xff]
      %v356 = vld [vmem:[#allocation2 + $0x38] sm:$0xff]
      %v357 = vld [vmem:[#allocation2 + $0x40] sm:$0xff]
      %v358 = vld [vmem:[#allocation2 + $0x48] sm:$0xff]
      %v359 = vld [vmem:[#allocation2 + $0x50] sm:$0xff]
      %v360 = vld [vmem:[#allocation2 + $0x58] sm:$0xff]
      %v361 = vld [vmem:[#allocation2 + $0x60] sm:$0xff]
      %v362 = vld [vmem:[#allocation2 + $0x68] sm:$0xff]
      %v363 = vld [vmem:[#allocation2 + $0x70] sm:$0xff]
      %v364 = vld [vmem:[#allocation2 + $0x78] sm:$0xff]
      %v365 = vld [vmem:[#allocation2 + $0x80] sm:$0xff]
      %v366 = vld [vmem:[#allocation2 + $0x88] sm:$0xff]
      %v367 = vld [vmem:[#allocation2 + $0x90] sm:$0xff]
      %v368 = vld [vmem:[#allocation2 + $0x98] sm:$0xff]
      %v369 = vld [vmem:[#allocation2 + $0xa0] sm:$0xff]
      %v370 = vld [vmem:[#allocation2 + $0xa8] sm:$0xff]
      %v371 = vld [vmem:[#allocation2 + $0xb0] sm:$0xff]
      %v372 = vld [vmem:[#allocation2 + $0xb8] sm:$0xff]
      %v373 = vld [vmem:[#allocation2 + $0xc0] sm:$0xff]
      %v374 = vld [vmem:[#allocation2 + $0xc8] sm:$0xff]
      %v375 = vld [vmem:[%s285] sm:$0xff]
      %v376 = vld [vmem:[%s285 + $0x8] sm:$0xf]
      %v377 = vld [vmem:[%s285 + $0xc] sm:$0xff]
      %v378 = vld [vmem:[%s285 + $0x14] sm:$0xf]
      %v379 = vld [vmem:[%s285 + $0x18] sm:$0xff]
      %v380 = vld [vmem:[%s285 + $0x20] sm:$0xf]
      %v381 = vld [vmem:[%s285 + $0x24] sm:$0xff]
      %v382 = vld [vmem:[%s285 + $0x2c] sm:$0xf]
      %v383 = vld [vmem:[%s285 + $0x30] sm:$0xff]
      %v384 = vld [vmem:[%s285 + $0x38] sm:$0xf]
      %v385 = vld [vmem:[%s285 + $0x3c] sm:$0xff]
      %v386 = vld [vmem:[%s285 + $0x44] sm:$0xf]
      %v387 = vld [vmem:[%s285 + $0x48] sm:$0xff]
      %v388 = vld [vmem:[%s285 + $0x50] sm:$0xf]
      %v389 = vld [vmem:[%s285 + $0x54] sm:$0xff]
      %v390 = vld [vmem:[%s285 + $0x5c] sm:$0xf]
      %v391 = vld [vmem:[%s285 + $0x60] sm:$0xff]
      %v392 = vld [vmem:[%s285 + $0x68] sm:$0xf]
      %v393 = vld [vmem:[%s285 + $0x6c] sm:$0xff]
      %v394 = vld [vmem:[%s285 + $0x74] sm:$0xf]
      %v395 = vld [vmem:[%s285 + $0x78] sm:$0xff]
      %v396 = vld [vmem:[%s285 + $0x80] sm:$0xf]
      %v397 = vld [vmem:[%s285 + $0x84] sm:$0xff]
      %v398 = vld [vmem:[%s285 + $0x8c] sm:$0xf]
      %v399 = vld [vmem:[%s285 + $0x90] sm:$0xff]
      %v400 = vld [vmem:[%s285 + $0x98] sm:$0xf]
      %v401 = vld [vmem:[%s285 + $0x9c] sm:$0xff]
      %v402 = vld [vmem:[%s285 + $0xa4] sm:$0xf]
      %v403 = vld [vmem:[%s285 + $0xa8] sm:$0xff]
      %v404 = vld [vmem:[%s285 + $0xb0] sm:$0xf]
      %v405 = vld [vmem:[%s285 + $0xb4] sm:$0xff]
      %v406 = vld [vmem:[%s285 + $0xbc] sm:$0xf]
      %v407 = vld [vmem:[%s285 + $0xc0] sm:$0xff]
      %v408 = vld [vmem:[%s285 + $0xc8] sm:$0xf]
      %v409 = vld [vmem:[%s285 + $0xcc] sm:$0xff]
      %v410 = vld [vmem:[%s285 + $0xd4] sm:$0xf]
      %v411 = vld [vmem:[%s285 + $0xd8] sm:$0xff]
      %v412 = vld [vmem:[%s285 + $0xe0] sm:$0xf]
      %v413 = vld [vmem:[%s285 + $0xe4] sm:$0xff]
      %v414 = vld [vmem:[%s285 + $0xec] sm:$0xf]
      %v415 = vld [vmem:[%s285 + $0xf0] sm:$0xff]
      %v416 = vld [vmem:[%s285 + $0xf8] sm:$0xf]
      %v417 = vld [vmem:[%s285 + $0xfc] sm:$0xff]
      %v418 = vld [vmem:[%s285 + $0x104] sm:$0xf]
      %v419 = vld [vmem:[%s285 + $0x108] sm:$0xff]
      %v420 = vld [vmem:[%s285 + $0x110] sm:$0xf]
      %v421 = vld [vmem:[%s285 + $0x114] sm:$0xff]
      %v422 = vld [vmem:[%s285 + $0x11c] sm:$0xf]
      %v423 = vld [vmem:[%s285 + $0x120] sm:$0xff]
      %v424 = vld [vmem:[%s285 + $0x128] sm:$0xf]
      %v425 = vld [vmem:[%s285 + $0x12c] sm:$0xff]
      %v426 = vld [vmem:[%s285 + $0x134] sm:$0xf]
      %v427 = vld [vmem:[%s299] sm:$0xf]
      %v428 = vld [vmem:[%s299 + $0x4] sm:$0xf]
      %v429 = vld [vmem:[%s299 + $0x8] sm:$0xf]
      %v430 = vld [vmem:[%s299 + $0xc] sm:$0xf]
      %v431 = vld [vmem:[%s299 + $0x10] sm:$0xf]
      %v432 = vld [vmem:[%s299 + $0x14] sm:$0xf]
      %v433 = vld [vmem:[%s299 + $0x18] sm:$0xf]
      %v434 = vld [vmem:[%s299 + $0x1c] sm:$0xf]
      %v435 = vld [vmem:[%s299 + $0x20] sm:$0xf]
      %v436 = vld [vmem:[%s299 + $0x24] sm:$0xf]
      %v437 = vld [vmem:[%s299 + $0x28] sm:$0xf]
      %v438 = vld [vmem:[%s299 + $0x2c] sm:$0xf]
      %v439 = vld [vmem:[%s299 + $0x30] sm:$0xf]
      %v440 = vld [vmem:[%s299 + $0x34] sm:$0xf]
      %v441 = vld [vmem:[%s299 + $0x38] sm:$0xf]
      %v442 = vld [vmem:[%s299 + $0x3c] sm:$0xf]
      %v443 = vld [vmem:[%s299 + $0x40] sm:$0xf]
      %v444 = vld [vmem:[%s299 + $0x44] sm:$0xf]
      %v445 = vld [vmem:[%s299 + $0x48] sm:$0xf]
      %v446 = vld [vmem:[%s299 + $0x4c] sm:$0xf]
      %v447 = vld [vmem:[%s299 + $0x50] sm:$0xf]
      %v448 = vld [vmem:[%s299 + $0x54] sm:$0xf]
      %v449 = vld [vmem:[%s299 + $0x58] sm:$0xf]
      %v450 = vld [vmem:[%s299 + $0x5c] sm:$0xf]
      %v451 = vld [vmem:[%s299 + $0x60] sm:$0xf]
      %v452 = vld [vmem:[%s299 + $0x64] sm:$0xf]
      %v453 = vld [vmem:[%s299 + $0x68] sm:$0xf]
      %v454 = vld [vmem:[%s299 + $0x6c] sm:$0xf]
      %v455 = vld [vmem:[%s299 + $0x70] sm:$0xf]
      %v456 = vld [vmem:[%s299 + $0x74] sm:$0xf]
      %v457 = vld [vmem:[%s299 + $0x78] sm:$0xf]
      %v458 = vld [vmem:[%s299 + $0x7c] sm:$0xf]
      %v459 = vld [vmem:[%s299 + $0x80] sm:$0xf]
      %v460 = vld [vmem:[%s299 + $0x84] sm:$0xf]
      %v461 = vld [vmem:[%s299 + $0x88] sm:$0xf]
      %v462 = vld [vmem:[%s299 + $0x8c] sm:$0xf]
      %v463 = vld [vmem:[%s299 + $0x90] sm:$0xf]
      %v464 = vld [vmem:[%s299 + $0x94] sm:$0xf]
      %v465 = vld [vmem:[%s299 + $0x98] sm:$0xf]
      %v466 = vld [vmem:[%s299 + $0x9c] sm:$0xf]
      %v467 = vld [vmem:[%s299 + $0xa0] sm:$0xf]
      %v468 = vld [vmem:[%s299 + $0xa4] sm:$0xf]
      %v469 = vld [vmem:[%s299 + $0xa8] sm:$0xf]
      %v470 = vld [vmem:[%s299 + $0xac] sm:$0xf]
      %v471 = vld [vmem:[%s299 + $0xb0] sm:$0xf]
      %v472 = vld [vmem:[%s299 + $0xb4] sm:$0xf]
      %v473 = vld [vmem:[%s299 + $0xb8] sm:$0xf]
      %v474 = vld [vmem:[%s299 + $0xbc] sm:$0xf]
      %v527 = vunpack.c.l.b16 %v375
      %v528 = vunpack.c.h.b16 %v375
      %v529 = vunpack.c.l.b16 %v376
      %v530 = vunpack.c.l.b16 %v377
      %v531 = vunpack.c.h.b16 %v377
      %v532 = vunpack.c.l.b16 %v378
      %v533 = vunpack.c.l.b16 %v379
      %v534 = vunpack.c.h.b16 %v379
      %v535 = vunpack.c.l.b16 %v380
      %v536 = vunpack.c.l.b16 %v381
      %v537 = vunpack.c.h.b16 %v381
      %v538 = vunpack.c.l.b16 %v382
      %v539 = vunpack.c.l.b16 %v383
      %v540 = vunpack.c.h.b16 %v383
      %v541 = vunpack.c.l.b16 %v384
      %v542 = vunpack.c.l.b16 %v385
      %v543 = vunpack.c.h.b16 %v385
      %v544 = vunpack.c.l.b16 %v386
      %v545 = vunpack.c.l.b16 %v387
      %v546 = vunpack.c.h.b16 %v387
      %v547 = vunpack.c.l.b16 %v388
      %v548 = vunpack.c.l.b16 %v389
      %v549 = vunpack.c.h.b16 %v389
      %v550 = vunpack.c.l.b16 %v390
      %v551 = vunpack.c.l.b16 %v391
      %v552 = vunpack.c.h.b16 %v391
      %v553 = vunpack.c.l.b16 %v392
      %v554 = vunpack.c.l.b16 %v393
      %v555 = vunpack.c.h.b16 %v393
      %v556 = vunpack.c.l.b16 %v394
      %v557 = vunpack.c.l.b16 %v395
      %v558 = vunpack.c.h.b16 %v395
      %v559 = vunpack.c.l.b16 %v396
      %v560 = vunpack.c.l.b16 %v397
      %v561 = vunpack.c.h.b16 %v397
      %v562 = vunpack.c.l.b16 %v398
      %v563 = vunpack.c.l.b16 %v399
      %v564 = vunpack.c.h.b16 %v399
      %v565 = vunpack.c.l.b16 %v400
      %v566 = vunpack.c.l.b16 %v401
      %v567 = vunpack.c.h.b16 %v401
      %v568 = vunpack.c.l.b16 %v402
      %v569 = vunpack.c.l.b16 %v403
      %v570 = vunpack.c.h.b16 %v403
      %v571 = vunpack.c.l.b16 %v404
      %v572 = vunpack.c.l.b16 %v405
      %v573 = vunpack.c.h.b16 %v405
      %v574 = vunpack.c.l.b16 %v406
      %v575 = vunpack.c.l.b16 %v407
      %v576 = vunpack.c.h.b16 %v407
      %v577 = vunpack.c.l.b16 %v408
      %v578 = vunpack.c.l.b16 %v409
      %v579 = vunpack.c.h.b16 %v409
      %v580 = vunpack.c.l.b16 %v410
      %v581 = vunpack.c.l.b16 %v411
      %v582 = vunpack.c.h.b16 %v411
      %v583 = vunpack.c.l.b16 %v412
      %v584 = vunpack.c.l.b16 %v413
      %v585 = vunpack.c.h.b16 %v413
      %v586 = vunpack.c.l.b16 %v414
      %v587 = vunpack.c.l.b16 %v415
      %v588 = vunpack.c.h.b16 %v415
      %v589 = vunpack.c.l.b16 %v416
      %v590 = vunpack.c.l.b16 %v417
      %v591 = vunpack.c.h.b16 %v417
      %v592 = vunpack.c.l.b16 %v418
      %v593 = vunpack.c.l.b16 %v419
      %v594 = vunpack.c.h.b16 %v419
      %v595 = vunpack.c.l.b16 %v420
      %v596 = vunpack.c.l.b16 %v421
      %v597 = vunpack.c.h.b16 %v421
      %v598 = vunpack.c.l.b16 %v422
      %v599 = vunpack.c.l.b16 %v423
      %v600 = vunpack.c.h.b16 %v423
      %v601 = vunpack.c.l.b16 %v424
      %v602 = vunpack.c.l.b16 %v425
      %v603 = vunpack.c.h.b16 %v425
      %v604 = vunpack.c.l.b16 %v426
      %v605 = vpack.c.b16 %v530, %v527
      %v606 = vpack.c.b16 %v531, %v528
      %v607 = vpack.c.b16 %v532, %v529
      %v608 = vpack.c.b16 %v536, %v533
      %v609 = vpack.c.b16 %v537, %v534
      %v610 = vpack.c.b16 %v538, %v535
      %v611 = vpack.c.b16 %v542, %v539
      %v612 = vpack.c.b16 %v543, %v540
      %v613 = vpack.c.b16 %v544, %v541
      %v614 = vpack.c.b16 %v548, %v545
      %v615 = vpack.c.b16 %v549, %v546
      %v616 = vpack.c.b16 %v550, %v547
      %v617 = vpack.c.b16 %v554, %v551
      %v618 = vpack.c.b16 %v555, %v552
      %v619 = vpack.c.b16 %v556, %v553
      %v620 = vpack.c.b16 %v560, %v557
      %v621 = vpack.c.b16 %v561, %v558
      %v622 = vpack.c.b16 %v562, %v559
      %v623 = vpack.c.b16 %v566, %v563
      %v624 = vpack.c.b16 %v567, %v564
      %v625 = vpack.c.b16 %v568, %v565
      %v626 = vpack.c.b16 %v572, %v569
      %v627 = vpack.c.b16 %v573, %v570
      %v628 = vpack.c.b16 %v574, %v571
      %v629 = vpack.c.b16 %v578, %v575
      %v630 = vpack.c.b16 %v579, %v576
      %v631 = vpack.c.b16 %v580, %v577
      %v632 = vpack.c.b16 %v584, %v581
      %v633 = vpack.c.b16 %v585, %v582
      %v634 = vpack.c.b16 %v586, %v583
      %v635 = vpack.c.b16 %v590, %v587
      %v636 = vpack.c.b16 %v591, %v588
      %v637 = vpack.c.b16 %v592, %v589
      %v638 = vpack.c.b16 %v596, %v593
      %v639 = vpack.c.b16 %v597, %v594
      %v640 = vpack.c.b16 %v598, %v595
      %v641 = vpack.c.b16 %v602, %v599
      %v642 = vpack.c.b16 %v603, %v600
      %v643 = vpack.c.b16 %v604, %v601
      %v731 = vunpack.c.l.b16 %v427
      %v732 = vunpack.c.l.b16 %v428
      %v733 = vunpack.c.l.b16 %v429
      %v734 = vunpack.c.l.b16 %v430
      %v735 = vunpack.c.l.b16 %v431
      %v736 = vunpack.c.l.b16 %v432
      %v737 = vunpack.c.l.b16 %v433
      %v738 = vunpack.c.l.b16 %v434
      %v739 = vunpack.c.l.b16 %v435
      %v740 = vunpack.c.l.b16 %v436
      %v741 = vunpack.c.l.b16 %v437
      %v742 = vunpack.c.l.b16 %v438
      %v743 = vunpack.c.l.b16 %v439
      %v744 = vunpack.c.l.b16 %v440
      %v745 = vunpack.c.l.b16 %v441
      %v746 = vunpack.c.l.b16 %v442
      %v747 = vunpack.c.l.b16 %v443
      %v748 = vunpack.c.l.b16 %v444
      %v749 = vunpack.c.l.b16 %v445
      %v750 = vunpack.c.l.b16 %v446
      %v751 = vunpack.c.l.b16 %v447
      %v752 = vunpack.c.l.b16 %v448
      %v753 = vunpack.c.l.b16 %v449
      %v754 = vunpack.c.l.b16 %v450
      %v755 = vunpack.c.l.b16 %v451
      %v756 = vunpack.c.l.b16 %v452
      %v757 = vunpack.c.l.b16 %v453
      %v758 = vunpack.c.l.b16 %v454
      %v759 = vunpack.c.l.b16 %v455
      %v760 = vunpack.c.l.b16 %v456
      %v761 = vunpack.c.l.b16 %v457
      %v762 = vunpack.c.l.b16 %v458
      %v763 = vunpack.c.l.b16 %v459
      %v764 = vunpack.c.l.b16 %v460
      %v765 = vunpack.c.l.b16 %v461
      %v766 = vunpack.c.l.b16 %v462
      %v767 = vunpack.c.l.b16 %v463
      %v768 = vunpack.c.l.b16 %v464
      %v769 = vunpack.c.l.b16 %v465
      %v770 = vunpack.c.l.b16 %v466
      %v771 = vunpack.c.l.b16 %v467
      %v772 = vunpack.c.l.b16 %v468
      %v773 = vunpack.c.l.b16 %v469
      %v774 = vunpack.c.l.b16 %v470
      %v775 = vunpack.c.l.b16 %v471
      %v776 = vunpack.c.l.b16 %v472
      %v777 = vunpack.c.l.b16 %v473
      %v778 = vunpack.c.l.b16 %v474
      %v779 = vpack.c.b16 %v732, %v731
      %v780 = vpack.c.b16 %v734, %v733
      %v781 = vpack.c.b16 %v736, %v735
      %v782 = vpack.c.b16 %v738, %v737
      %v783 = vpack.c.b16 %v740, %v739
      %v784 = vpack.c.b16 %v742, %v741
      %v785 = vpack.c.b16 %v744, %v743
      %v786 = vpack.c.b16 %v746, %v745
      %v787 = vpack.c.b16 %v748, %v747
      %v788 = vpack.c.b16 %v750, %v749
      %v789 = vpack.c.b16 %v752, %v751
      %v790 = vpack.c.b16 %v754, %v753
      %v791 = vpack.c.b16 %v756, %v755
      %v792 = vpack.c.b16 %v758, %v757
      %v793 = vpack.c.b16 %v760, %v759
      %v794 = vpack.c.b16 %v762, %v761
      %v795 = vpack.c.b16 %v764, %v763
      %v796 = vpack.c.b16 %v766, %v765
      %v797 = vpack.c.b16 %v768, %v767
      %v798 = vpack.c.b16 %v770, %v769
      %v799 = vpack.c.b16 %v772, %v771
      %v800 = vpack.c.b16 %v774, %v773
      %v801 = vpack.c.b16 %v776, %v775
      %v802 = vpack.c.b16 %v778, %v777
      %827 = vmatprep.subr.bf16.mxu0 0
      %828 = vmatpush1.bf16.msra.mxu0 %v779
      %829 = vmatprep.subr.bf16.mxu0 0
      %830 = vmatpush1.bf16.msra.mxu0 %v780
      %831 = vmatprep.subr.bf16.mxu0 0
      %832 = vmatpush1.bf16.msra.mxu0 %v781
      %833 = vmatprep.subr.bf16.mxu0 0
      %834 = vmatpush1.bf16.msra.mxu0 %v782
      %835 = vmatprep.subr.bf16.mxu0 0
      %836 = vmatpush1.bf16.msra.mxu0 %v783
      %837 = vmatprep.subr.bf16.mxu0 0
      %838 = vmatpush1.bf16.msra.mxu0 %v784
      %839 = vmatprep.subr.bf16.mxu0 0
      %840 = vmatpush1.bf16.msra.mxu0 %v785
      %841 = vmatprep.subr.bf16.mxu0 0
      %842 = vmatpush1.bf16.msra.mxu0 %v786
      %843 = vmatprep.subr.bf16.mxu0 0
      %844 = vmatpush1.bf16.msra.mxu0 %v787
      %845 = vmatprep.subr.bf16.mxu0 0
      %846 = vmatpush1.bf16.msra.mxu0 %v788
      %847 = vmatprep.subr.bf16.mxu0 0
      %848 = vmatpush1.bf16.msra.mxu0 %v789
      %849 = vmatprep.subr.bf16.mxu0 0
      %850 = vmatpush1.bf16.msra.mxu0 %v790
      %851 = vmatprep.subr.bf16.mxu0 0
      %852 = vmatpush1.bf16.msra.mxu0 %v791
      %853 = vmatprep.subr.bf16.mxu0 0
      %854 = vmatpush1.bf16.msra.mxu0 %v792
      %855 = vmatprep.subr.bf16.mxu0 0
      %856 = vmatpush1.bf16.msra.mxu0 %v793
      %857 = vmatprep.subr.bf16.mxu0 0
      %858 = vmatpush1.bf16.msra.mxu0 %v794
      %859 = vmatprep.mubr.bf16.mxu0 %v606
      %860 = vmatmul.mubr.bf16.gmra.mrb[0].mxu0 %v605
      %v861 = vpop.f32.mrb[0].mxu0
      %v862 = vadd.f32 0.0, %v861
      %v863 = vpop.f32.mrb[0].mxu0
      %v864 = vpop.f32.mrb[0].mxu0
      %v865 = vadd.f32 0.0, %v864
      %v866 = vpop.f32.mrb[0].mxu0
      %867 = vmatprep.mubr.bf16.mxu0 %v609
      %868 = vmatmul.mubr.bf16.gmra.mrb[0].mxu0 %v608
      %v869 = vpop.f32.mrb[0].mxu0
      %v870 = vadd.f32 0.0, %v869
      %v871 = vpop.f32.mrb[0].mxu0
      %v872 = vpop.f32.mrb[0].mxu0
      %v873 = vadd.f32 0.0, %v872
      %v874 = vpop.f32.mrb[0].mxu0
      %875 = vmatprep.mubr.bf16.mxu0 %v612
      %876 = vmatmul.mubr.bf16.gmra.mrb[0].mxu0 %v611
      %v877 = vpop.f32.mrb[0].mxu0
      %v878 = vadd.f32 0.0, %v877
      %v879 = vpop.f32.mrb[0].mxu0
      %v880 = vpop.f32.mrb[0].mxu0
      %v881 = vadd.f32 0.0, %v880
      %v882 = vpop.f32.mrb[0].mxu0
      %883 = vmatprep.mubr.bf16.mxu0 %v615
      %884 = vmatmul.mubr.bf16.gmra.mrb[0].mxu0 %v614
      %v885 = vpop.f32.mrb[0].mxu0
      %v886 = vadd.f32 0.0, %v885
      %v887 = vpop.f32.mrb[0].mxu0
      %v888 = vpop.f32.mrb[0].mxu0
      %v889 = vadd.f32 0.0, %v888
      %v890 = vpop.f32.mrb[0].mxu0
      %891 = vmatprep.mubr.bf16.mxu0 %v618
      %892 = vmatmul.mubr.bf16.gmra.mrb[0].mxu0 %v617
      %v893 = vpop.f32.mrb[0].mxu0
      %v894 = vadd.f32 0.0, %v893
      %v895 = vpop.f32.mrb[0].mxu0
      %v896 = vpop.f32.mrb[0].mxu0
      %v897 = vadd.f32 0.0, %v896
      %v898 = vpop.f32.mrb[0].mxu0
      %899 = vmatprep.mubr.bf16.mxu0 %v621
      %900 = vmatmul.mubr.bf16.gmra.mrb[0].mxu0 %v620
      %v901 = vpop.f32.mrb[0].mxu0
      %v902 = vadd.f32 0.0, %v901
      %v903 = vpop.f32.mrb[0].mxu0
      %v904 = vpop.f32.mrb[0].mxu0
      %v905 = vadd.f32 0.0, %v904
      %v906 = vpop.f32.mrb[0].mxu0
      %907 = vmatprep.mubr.bf16.mxu0 %v624
      %908 = vmatmul.mubr.bf16.gmra.mrb[0].mxu0 %v623
      %v909 = vpop.f32.mrb[0].mxu0
      %v910 = vadd.f32 0.0, %v909
      %v911 = vpop.f32.mrb[0].mxu0
      %v912 = vpop.f32.mrb[0].mxu0
      %v913 = vadd.f32 0.0, %v912
      %v914 = vpop.f32.mrb[0].mxu0
      %915 = vmatprep.mubr.bf16.mxu0 %v627
      %916 = vmatmul.mubr.bf16.gmra.mrb[0].mxu0 %v626
      %v917 = vpop.f32.mrb[0].mxu0
      %v918 = vadd.f32 0.0, %v917
      %v919 = vpop.f32.mrb[0].mxu0
      %v920 = vpop.f32.mrb[0].mxu0
      %v921 = vadd.f32 0.0, %v920
      %v922 = vpop.f32.mrb[0].mxu0
      %923 = vmatprep.mubr.bf16.mxu0 %v630
      %924 = vmatmul.mubr.bf16.gmra.mrb[0].mxu0 %v629
      %v925 = vpop.f32.mrb[0].mxu0
      %v926 = vadd.f32 0.0, %v925
      %v927 = vpop.f32.mrb[0].mxu0
      %v928 = vpop.f32.mrb[0].mxu0
      %v929 = vadd.f32 0.0, %v928
      %v930 = vpop.f32.mrb[0].mxu0
      %931 = vmatprep.mubr.bf16.mxu0 %v633
      %932 = vmatmul.mubr.bf16.gmra.mrb[0].mxu0 %v632
      %v933 = vpop.f32.mrb[0].mxu0
      %v934 = vadd.f32 0.0, %v933
      %v935 = vpop.f32.mrb[0].mxu0
      %v936 = vpop.f32.mrb[0].mxu0
      %v937 = vadd.f32 0.0, %v936
      %v938 = vpop.f32.mrb[0].mxu0
      %939 = vmatprep.mubr.bf16.mxu0 %v636
      %940 = vmatmul.mubr.bf16.gmra.mrb[0].mxu0 %v635
      %v941 = vpop.f32.mrb[0].mxu0
      %v942 = vadd.f32 0.0, %v941
      %v943 = vpop.f32.mrb[0].mxu0
      %v944 = vpop.f32.mrb[0].mxu0
      %v945 = vadd.f32 0.0, %v944
      %v946 = vpop.f32.mrb[0].mxu0
      %947 = vmatprep.mubr.bf16.mxu0 %v639
      %948 = vmatmul.mubr.bf16.gmra.mrb[0].mxu0 %v638
      %v949 = vpop.f32.mrb[0].mxu0
      %v950 = vadd.f32 0.0, %v949
      %v951 = vpop.f32.mrb[0].mxu0
      %v952 = vpop.f32.mrb[0].mxu0
      %v953 = vadd.f32 0.0, %v952
      %v954 = vpop.f32.mrb[0].mxu0
      %955 = vmatprep.mubr.bf16.mxu0 %v642
      %956 = vmatmul.mubr.bf16.gmra.mrb[0].mxu0 %v641
      %v957 = vpop.f32.mrb[0].mxu0
      %v958 = vadd.f32 0.0, %v957
      %v959 = vpop.f32.mrb[0].mxu0
      %v960 = vpop.f32.mrb[0].mxu0
      %v961 = vadd.f32 0.0, %v960
      %v962 = vpop.f32.mrb[0].mxu0
      %963 = vdwg.mxu0
      %964 = vmatprep.subr.bf16.mxu0 0
      %965 = vmatpush1.bf16.msra.mxu0 %v795
      %966 = vmatprep.subr.bf16.mxu0 0
      %967 = vmatpush1.bf16.msra.mxu0 %v796
      %968 = vmatprep.subr.bf16.mxu0 0
      %969 = vmatpush1.bf16.msra.mxu0 %v797
      %970 = vmatprep.subr.bf16.mxu0 0
      %971 = vmatpush1.bf16.msra.mxu0 %v798
      %972 = vmatprep.subr.bf16.mxu0 0
      %973 = vmatpush1.bf16.msra.mxu0 %v799
      %974 = vmatprep.subr.bf16.mxu0 0
      %975 = vmatpush1.bf16.msra.mxu0 %v800
      %976 = vmatprep.subr.bf16.mxu0 0
      %977 = vmatpush1.bf16.msra.mxu0 %v801
      %978 = vmatprep.subr.bf16.mxu0 0
      %979 = vmatpush1.bf16.msra.mxu0 %v802
      %980 = vmatprep.subr.bf16.mxu0 0
      %981 = vmatpush1.bf16.msra.mxu0 0
      %982 = vmatprep.subr.bf16.mxu0 0
      %983 = vmatpush1.bf16.msra.mxu0 0
      %984 = vmatprep.subr.bf16.mxu0 0
      %985 = vmatpush1.bf16.msra.mxu0 0
      %986 = vmatprep.subr.bf16.mxu0 0
      %987 = vmatpush1.bf16.msra.mxu0 0
      %988 = vmatprep.subr.bf16.mxu0 0
      %989 = vmatpush1.bf16.msra.mxu0 0
      %990 = vmatprep.subr.bf16.mxu0 0
      %991 = vmatpush1.bf16.msra.mxu0 0
      %992 = vmatprep.subr.bf16.mxu0 0
      %993 = vmatpush1.bf16.msra.mxu0 0
      %994 = vmatprep.subr.bf16.mxu0 0
      %995 = vmatpush1.bf16.msra.mxu0 0
      %996 = vmatprep.mubr.bf16.mxu0 0
      %997 = vmatmul.mubr.bf16.gmra.mrb[0].mxu0 %v607
      %v998 = vpop.f32.mrb[0].mxu0
      %v999 = vadd.f32 %v862, %v998
      %v1000 = vpop.f32.mrb[0].mxu0
      %v1001 = vpop.f32.mrb[0].mxu0
      %v1002 = vadd.f32 %v865, %v1001
      %v1003 = vpop.f32.mrb[0].mxu0
      %1004 = vmatprep.mubr.bf16.mxu0 0
      %1005 = vmatmul.mubr.bf16.gmra.mrb[0].mxu0 %v610
      %v1006 = vpop.f32.mrb[0].mxu0
      %v1007 = vadd.f32 %v870, %v1006
      %v1008 = vpop.f32.mrb[0].mxu0
      %v1009 = vpop.f32.mrb[0].mxu0
      %v1010 = vadd.f32 %v873, %v1009
      %v1011 = vpop.f32.mrb[0].mxu0
      %1012 = vmatprep.mubr.bf16.mxu0 0
      %1013 = vmatmul.mubr.bf16.gmra.mrb[0].mxu0 %v613
      %v1014 = vpop.f32.mrb[0].mxu0
      %v1015 = vadd.f32 %v878, %v1014
      %v1016 = vpop.f32.mrb[0].mxu0
      %v1017 = vpop.f32.mrb[0].mxu0
      %v1018 = vadd.f32 %v881, %v1017
      %v1019 = vpop.f32.mrb[0].mxu0
      %1020 = vmatprep.mubr.bf16.mxu0 0
      %1021 = vmatmul.mubr.bf16.gmra.mrb[0].mxu0 %v616
      %v1022 = vpop.f32.mrb[0].mxu0
      %v1023 = vadd.f32 %v886, %v1022
      %v1024 = vpop.f32.mrb[0].mxu0
      %v1025 = vpop.f32.mrb[0].mxu0
      %v1026 = vadd.f32 %v889, %v1025
      %v1027 = vpop.f32.mrb[0].mxu0
      %1028 = vmatprep.mubr.bf16.mxu0 0
      %1029 = vmatmul.mubr.bf16.gmra.mrb[0].mxu0 %v619
      %v1030 = vpop.f32.mrb[0].mxu0
      %v1031 = vadd.f32 %v894, %v1030
      %v1032 = vpop.f32.mrb[0].mxu0
      %v1033 = vpop.f32.mrb[0].mxu0
      %v1034 = vadd.f32 %v897, %v1033
      %v1035 = vpop.f32.mrb[0].mxu0
      %1036 = vmatprep.mubr.bf16.mxu0 0
      %1037 = vmatmul.mubr.bf16.gmra.mrb[0].mxu0 %v622
      %v1038 = vpop.f32.mrb[0].mxu0
      %v1039 = vadd.f32 %v902, %v1038
      %v1040 = vpop.f32.mrb[0].mxu0
      %v1041 = vpop.f32.mrb[0].mxu0
      %v1042 = vadd.f32 %v905, %v1041
      %v1043 = vpop.f32.mrb[0].mxu0
      %1044 = vmatprep.mubr.bf16.mxu0 0
      %1045 = vmatmul.mubr.bf16.gmra.mrb[0].mxu0 %v625
      %v1046 = vpop.f32.mrb[0].mxu0
      %v1047 = vadd.f32 %v910, %v1046
      %v1048 = vpop.f32.mrb[0].mxu0
      %v1049 = vpop.f32.mrb[0].mxu0
      %v1050 = vadd.f32 %v913, %v1049
      %v1051 = vpop.f32.mrb[0].mxu0
      %1052 = vmatprep.mubr.bf16.mxu0 0
      %1053 = vmatmul.mubr.bf16.gmra.mrb[0].mxu0 %v628
      %v1054 = vpop.f32.mrb[0].mxu0
      %v1055 = vadd.f32 %v918, %v1054
      %v1056 = vpop.f32.mrb[0].mxu0
      %v1057 = vpop.f32.mrb[0].mxu0
      %v1058 = vadd.f32 %v921, %v1057
      %v1059 = vpop.f32.mrb[0].mxu0
      %1060 = vmatprep.mubr.bf16.mxu0 0
      %1061 = vmatmul.mubr.bf16.gmra.mrb[0].mxu0 %v631
      %v1062 = vpop.f32.mrb[0].mxu0
      %v1063 = vadd.f32 %v926, %v1062
      %v1064 = vpop.f32.mrb[0].mxu0
      %v1065 = vpop.f32.mrb[0].mxu0
      %v1066 = vadd.f32 %v929, %v1065
      %v1067 = vpop.f32.mrb[0].mxu0
      %1068 = vmatprep.mubr.bf16.mxu0 0
      %1069 = vmatmul.mubr.bf16.gmra.mrb[0].mxu0 %v634
      %v1070 = vpop.f32.mrb[0].mxu0
      %v1071 = vadd.f32 %v934, %v1070
      %v1072 = vpop.f32.mrb[0].mxu0
      %v1073 = vpop.f32.mrb[0].mxu0
      %v1074 = vadd.f32 %v937, %v1073
      %v1075 = vpop.f32.mrb[0].mxu0
      %1076 = vmatprep.mubr.bf16.mxu0 0
      %1077 = vmatmul.mubr.bf16.gmra.mrb[0].mxu0 %v637
      %v1078 = vpop.f32.mrb[0].mxu0
      %v1079 = vadd.f32 %v942, %v1078
      %v1080 = vpop.f32.mrb[0].mxu0
      %v1081 = vpop.f32.mrb[0].mxu0
      %v1082 = vadd.f32 %v945, %v1081
      %v1083 = vpop.f32.mrb[0].mxu0
      %1084 = vmatprep.mubr.bf16.mxu0 0
      %1085 = vmatmul.mubr.bf16.gmra.mrb[0].mxu0 %v640
      %v1086 = vpop.f32.mrb[0].mxu0
      %v1087 = vadd.f32 %v950, %v1086
      %v1088 = vpop.f32.mrb[0].mxu0
      %v1089 = vpop.f32.mrb[0].mxu0
      %v1090 = vadd.f32 %v953, %v1089
      %v1091 = vpop.f32.mrb[0].mxu0
      %1092 = vmatprep.mubr.bf16.mxu0 0
      %1093 = vmatmul.mubr.bf16.gmra.mrb[0].mxu0 %v643
      %v1094 = vpop.f32.mrb[0].mxu0
      %v1095 = vadd.f32 %v958, %v1094
      %v1096 = vpop.f32.mrb[0].mxu0
      %v1097 = vpop.f32.mrb[0].mxu0
      %v1098 = vadd.f32 %v961, %v1097
      %v1099 = vpop.f32.mrb[0].mxu0
      %1100 = vdwg.mxu0
      %v1101 = vadd.f32 %v349, %v999
      %v1102 = vadd.f32 %v350, %v1002
      %v1103 = vadd.f32 %v351, %v1007
      %v1104 = vadd.f32 %v352, %v1010
      %v1105 = vadd.f32 %v353, %v1015
      %v1106 = vadd.f32 %v354, %v1018
      %v1107 = vadd.f32 %v355, %v1023
      %v1108 = vadd.f32 %v356, %v1026
      %v1109 = vadd.f32 %v357, %v1031
      %v1110 = vadd.f32 %v358, %v1034
      %v1111 = vadd.f32 %v359, %v1039
      %v1112 = vadd.f32 %v360, %v1042
      %v1113 = vadd.f32 %v361, %v1047
      %v1114 = vadd.f32 %v362, %v1050
      %v1115 = vadd.f32 %v363, %v1055
      %v1116 = vadd.f32 %v364, %v1058
      %v1117 = vadd.f32 %v365, %v1063
      %v1118 = vadd.f32 %v366, %v1066
      %v1119 = vadd.f32 %v367, %v1071
      %v1120 = vadd.f32 %v368, %v1074
      %v1121 = vadd.f32 %v369, %v1079
      %v1122 = vadd.f32 %v370, %v1082
      %v1123 = vadd.f32 %v371, %v1087
      %v1124 = vadd.f32 %v372, %v1090
      %v1125 = vadd.f32 %v373, %v1095
      %v1126 = vadd.f32 %v374, %v1098
      %1127 = vst [vmem:[#allocation2] sm:$0xff] %v1101
      %1128 = vst [vmem:[#allocation2 + $0x8] sm:$0xff] %v1102
      %1129 = vst [vmem:[#allocation2 + $0x10] sm:$0xff] %v1103
      %1130 = vst [vmem:[#allocation2 + $0x18] sm:$0xff] %v1104
      %1131 = vst [vmem:[#allocation2 + $0x20] sm:$0xff] %v1105
      %1132 = vst [vmem:[#allocation2 + $0x28] sm:$0xff] %v1106
      %1133 = vst [vmem:[#allocation2 + $0x30] sm:$0xff] %v1107
      %1134 = vst [vmem:[#allocation2 + $0x38] sm:$0xff] %v1108
      %1135 = vst [vmem:[#allocation2 + $0x40] sm:$0xff] %v1109
      %1136 = vst [vmem:[#allocation2 + $0x48] sm:$0xff] %v1110
      %1137 = vst [vmem:[#allocation2 + $0x50] sm:$0xff] %v1111
      %1138 = vst [vmem:[#allocation2 + $0x58] sm:$0xff] %v1112
      %1139 = vst [vmem:[#allocation2 + $0x60] sm:$0xff] %v1113
      %1140 = vst [vmem:[#allocation2 + $0x68] sm:$0xff] %v1114
      %1141 = vst [vmem:[#allocation2 + $0x70] sm:$0xff] %v1115
      %1142 = vst [vmem:[#allocation2 + $0x78] sm:$0xff] %v1116
      %1143 = vst [vmem:[#allocation2 + $0x80] sm:$0xff] %v1117
      %1144 = vst [vmem:[#allocation2 + $0x88] sm:$0xff] %v1118
      %1145 = vst [vmem:[#allocation2 + $0x90] sm:$0xff] %v1119
      %1146 = vst [vmem:[#allocation2 + $0x98] sm:$0xff] %v1120
      %1147 = vst [vmem:[#allocation2 + $0xa0] sm:$0xff] %v1121
      %1148 = vst [vmem:[#allocation2 + $0xa8] sm:$0xff] %v1122
      %1149 = vst [vmem:[#allocation2 + $0xb0] sm:$0xff] %v1123
      %1150 = vst [vmem:[#allocation2 + $0xb8] sm:$0xff] %v1124
      %1151 = vst [vmem:[#allocation2 + $0xc0] sm:$0xff] %v1125
      %1152 = vst [vmem:[#allocation2 + $0xc8] sm:$0xff] %v1126
      // Predicated region
      $region37: #{itracker_forward.5} parent=31 // pred_check
        %p1153 = pneg %p319
      $region38: #{itracker_forward.5} parent=31 // pred_check_branch
        %1155 = sbr.rel (%p1153) target = $region40
      $region39: #{itracker_forward.5} parent=31 // pred_region
        %v1156 = vld [vmem:[#allocation2] sm:$0xff]
        %v1157 = vld [vmem:[#allocation2 + $0x8] sm:$0xff]
        %v1158 = vld [vmem:[#allocation2 + $0x10] sm:$0xff]
        %v1159 = vld [vmem:[#allocation2 + $0x18] sm:$0xff]
        %v1160 = vld [vmem:[#allocation2 + $0x20] sm:$0xff]
        %v1161 = vld [vmem:[#allocation2 + $0x28] sm:$0xff]
        %v1162 = vld [vmem:[#allocation2 + $0x30] sm:$0xff]
        %v1163 = vld [vmem:[#allocation2 + $0x38] sm:$0xff]
        %v1164 = vld [vmem:[#allocation2 + $0x40] sm:$0xff]
        %v1165 = vld [vmem:[#allocation2 + $0x48] sm:$0xff]
        %v1166 = vld [vmem:[#allocation2 + $0x50] sm:$0xff]
        %v1167 = vld [vmem:[#allocation2 + $0x58] sm:$0xff]
        %v1168 = vld [vmem:[#allocation2 + $0x60] sm:$0xff]
        %v1169 = vld [vmem:[#allocation2 + $0x68] sm:$0xff]
        %v1170 = vld [vmem:[#allocation2 + $0x70] sm:$0xff]
        %v1171 = vld [vmem:[#allocation2 + $0x78] sm:$0xff]
        %v1172 = vld [vmem:[#allocation2 + $0x80] sm:$0xff]
        %v1173 = vld [vmem:[#allocation2 + $0x88] sm:$0xff]
        %v1174 = vld [vmem:[#allocation2 + $0x90] sm:$0xff]
        %v1175 = vld [vmem:[#allocation2 + $0x98] sm:$0xff]
        %v1176 = vld [vmem:[#allocation2 + $0xa0] sm:$0xff]
        %v1177 = vld [vmem:[#allocation2 + $0xa8] sm:$0xff]
        %v1178 = vld [vmem:[#allocation2 + $0xb0] sm:$0xff]
        %v1179 = vld [vmem:[#allocation2 + $0xb8] sm:$0xff]
        %v1180 = vld [vmem:[#allocation2 + $0xc0] sm:$0xff]
        %v1181 = vld [vmem:[#allocation2 + $0xc8] sm:$0xff]
        %v1182 = vld [vmem:[%s306] sm:$0x1]
        %v1184 = vlaneseq
        %v1185 = vshrl.u32 %v1184, 7
        %v1186 = vsub.s32 0, %v1185
        %v1187 = vrot.slane %v1182, %v1186
        %v1189 = vadd.f32 %v1156, %v1187
        %v1190 = vadd.f32 %v1157, %v1187
        %v1191 = vadd.f32 %v1158, %v1187
        %v1192 = vadd.f32 %v1159, %v1187
        %v1193 = vadd.f32 %v1160, %v1187
        %v1194 = vadd.f32 %v1161, %v1187
        %v1195 = vadd.f32 %v1162, %v1187
        %v1196 = vadd.f32 %v1163, %v1187
        %v1197 = vadd.f32 %v1164, %v1187
        %v1198 = vadd.f32 %v1165, %v1187
        %v1199 = vadd.f32 %v1166, %v1187
        %v1200 = vadd.f32 %v1167, %v1187
        %v1201 = vadd.f32 %v1168, %v1187
        %v1202 = vadd.f32 %v1169, %v1187
        %v1203 = vadd.f32 %v1170, %v1187
        %v1204 = vadd.f32 %v1171, %v1187
        %v1205 = vadd.f32 %v1172, %v1187
        %v1206 = vadd.f32 %v1173, %v1187
        %v1207 = vadd.f32 %v1174, %v1187
        %v1208 = vadd.f32 %v1175, %v1187
        %v1209 = vadd.f32 %v1176, %v1187
        %v1210 = vadd.f32 %v1177, %v1187
        %v1211 = vadd.f32 %v1178, %v1187
        %v1212 = vadd.f32 %v1179, %v1187
        %v1213 = vadd.f32 %v1180, %v1187
        %v1214 = vadd.f32 %v1181, %v1187
        %v1215 = vmax.f32 %v1189, 0.0
        %v1216 = vmax.f32 %v1190, 0.0
        %v1217 = vmax.f32 %v1191, 0.0
        %v1218 = vmax.f32 %v1192, 0.0
        %v1219 = vmax.f32 %v1193, 0.0
        %v1220 = vmax.f32 %v1194, 0.0
        %v1221 = vmax.f32 %v1195, 0.0
        %v1222 = vmax.f32 %v1196, 0.0
        %v1223 = vmax.f32 %v1197, 0.0
        %v1224 = vmax.f32 %v1198, 0.0
        %v1225 = vmax.f32 %v1199, 0.0
        %v1226 = vmax.f32 %v1200, 0.0
        %v1227 = vmax.f32 %v1201, 0.0
        %v1228 = vmax.f32 %v1202, 0.0
        %v1229 = vmax.f32 %v1203, 0.0
        %v1230 = vmax.f32 %v1204, 0.0
        %v1231 = vmax.f32 %v1205, 0.0
        %v1232 = vmax.f32 %v1206, 0.0
        %v1233 = vmax.f32 %v1207, 0.0
        %v1234 = vmax.f32 %v1208, 0.0
        %v1235 = vmax.f32 %v1209, 0.0
        %v1236 = vmax.f32 %v1210, 0.0
        %v1237 = vmax.f32 %v1211, 0.0
        %v1238 = vmax.f32 %v1212, 0.0
        %v1239 = vmax.f32 %v1213, 0.0
        %v1240 = vmax.f32 %v1214, 0.0
        %v1241 = vpack.c.bf16 %v1216, %v1215
        %v1242 = vpack.c.bf16 %v1218, %v1217
        %v1243 = vpack.c.bf16 %v1220, %v1219
        %v1244 = vpack.c.bf16 %v1222, %v1221
        %v1245 = vpack.c.bf16 %v1224, %v1223
        %v1246 = vpack.c.bf16 %v1226, %v1225
        %v1247 = vpack.c.bf16 %v1228, %v1227
        %v1248 = vpack.c.bf16 %v1230, %v1229
        %v1249 = vpack.c.bf16 %v1232, %v1231
        %v1250 = vpack.c.bf16 %v1234, %v1233
        %v1251 = vpack.c.bf16 %v1236, %v1235
        %v1252 = vpack.c.bf16 %v1238, %v1237
        %v1253 = vpack.c.bf16 %v1240, %v1239
        %v1267 = vunpack.c.l.b16 %v1241
        %v1268 = vunpack.c.h.b16 %v1241
        %v1269 = vunpack.c.l.b16 %v1242
        %v1270 = vunpack.c.h.b16 %v1242
        %v1271 = vunpack.c.l.b16 %v1243
        %v1272 = vunpack.c.h.b16 %v1243
        %v1273 = vunpack.c.l.b16 %v1244
        %v1274 = vunpack.c.h.b16 %v1244
        %v1275 = vunpack.c.l.b16 %v1245
        %v1276 = vunpack.c.h.b16 %v1245
        %v1277 = vunpack.c.l.b16 %v1246
        %v1278 = vunpack.c.h.b16 %v1246
        %v1279 = vunpack.c.l.b16 %v1247
        %v1280 = vunpack.c.h.b16 %v1247
        %v1281 = vunpack.c.l.b16 %v1248
        %v1282 = vunpack.c.h.b16 %v1248
        %v1283 = vunpack.c.l.b16 %v1249
        %v1284 = vunpack.c.h.b16 %v1249
        %v1285 = vunpack.c.l.b16 %v1250
        %v1286 = vunpack.c.h.b16 %v1250
        %v1287 = vunpack.c.l.b16 %v1251
        %v1288 = vunpack.c.h.b16 %v1251
        %v1289 = vunpack.c.l.b16 %v1252
        %v1290 = vunpack.c.h.b16 %v1252
        %v1291 = vunpack.c.l.b16 %v1253
        %v1292 = vunpack.c.h.b16 %v1253
        %v1293 = vpack.c.b16 %v1267, %v1267
        %v1294 = vpack.c.b16 %v1268, %v1268
        %v1295 = vpack.c.b16 %v1269, %v1269
        %v1296 = vpack.c.b16 %v1270, %v1270
        %v1297 = vpack.c.b16 %v1271, %v1271
        %v1298 = vpack.c.b16 %v1272, %v1272
        %v1299 = vpack.c.b16 %v1273, %v1273
        %v1300 = vpack.c.b16 %v1274, %v1274
        %v1301 = vpack.c.b16 %v1275, %v1275
        %v1302 = vpack.c.b16 %v1276, %v1276
        %v1303 = vpack.c.b16 %v1277, %v1277
        %v1304 = vpack.c.b16 %v1278, %v1278
        %v1305 = vpack.c.b16 %v1279, %v1279
        %v1306 = vpack.c.b16 %v1280, %v1280
        %v1307 = vpack.c.b16 %v1281, %v1281
        %v1308 = vpack.c.b16 %v1282, %v1282
        %v1309 = vpack.c.b16 %v1283, %v1283
        %v1310 = vpack.c.b16 %v1284, %v1284
        %v1311 = vpack.c.b16 %v1285, %v1285
        %v1312 = vpack.c.b16 %v1286, %v1286
        %v1313 = vpack.c.b16 %v1287, %v1287
        %v1314 = vpack.c.b16 %v1288, %v1288
        %v1315 = vpack.c.b16 %v1289, %v1289
        %v1316 = vpack.c.b16 %v1290, %v1290
        %v1317 = vpack.c.b16 %v1291, %v1291
        %v1318 = vpack.c.b16 %v1292, %v1292
        %1345 = vst [vmem:[%s315] sm:$0xf] %v1293
        %1346 = vst [vmem:[%s315 + $0x4] sm:$0xf] %v1294
        %1347 = vst [vmem:[%s315 + $0x8] sm:$0xf] %v1295
        %1348 = vst [vmem:[%s315 + $0xc] sm:$0xf] %v1296
        %1349 = vst [vmem:[%s315 + $0x10] sm:$0xf] %v1297
        %1350 = vst [vmem:[%s315 + $0x14] sm:$0xf] %v1298
        %1351 = vst [vmem:[%s315 + $0x18] sm:$0xf] %v1299
        %1352 = vst [vmem:[%s315 + $0x1c] sm:$0xf] %v1300
        %1353 = vst [vmem:[%s315 + $0x20] sm:$0xf] %v1301
        %1354 = vst [vmem:[%s315 + $0x24] sm:$0xf] %v1302
        %1355 = vst [vmem:[%s315 + $0x28] sm:$0xf] %v1303
        %1356 = vst [vmem:[%s315 + $0x2c] sm:$0xf] %v1304
        %1357 = vst [vmem:[%s315 + $0x30] sm:$0xf] %v1305
        %1358 = vst [vmem:[%s315 + $0x34] sm:$0xf] %v1306
        %1359 = vst [vmem:[%s315 + $0x38] sm:$0xf] %v1307
        %1360 = vst [vmem:[%s315 + $0x3c] sm:$0xf] %v1308
        %1361 = vst [vmem:[%s315 + $0x40] sm:$0xf] %v1309
        %1362 = vst [vmem:[%s315 + $0x44] sm:$0xf] %v1310
        %1363 = vst [vmem:[%s315 + $0x48] sm:$0xf] %v1311
        %1364 = vst [vmem:[%s315 + $0x4c] sm:$0xf] %v1312
        %1365 = vst [vmem:[%s315 + $0x50] sm:$0xf] %v1313
        %1366 = vst [vmem:[%s315 + $0x54] sm:$0xf] %v1314
        %1367 = vst [vmem:[%s315 + $0x58] sm:$0xf] %v1315
        %1368 = vst [vmem:[%s315 + $0x5c] sm:$0xf] %v1316
        %1369 = vst [vmem:[%s315 + $0x60] sm:$0xf] %v1317
        %1370 = vst [vmem:[%s315 + $0x64] sm:$0xf] %v1318
      $region40: #{itracker_forward.5} parent=31 // pred_fallthru
        _
      %s1371 = sadd.s32 %s20, %s22
      %s1372 = smul.u32 26, %s21
      %p1373 = scmp.lt.s32.totalorder %s1372, 51
      %s1374 = scalar_select %p1373, %s1372, 51
      %p1375 = scmp.lt.s32.totalorder %s1371, 0
      %s1376 = scalar_select %p1375, %s1371, 0
      %s1377 = sadd.s32 %s1376, %s1374
      %s1378 = smul.addr %s1377, 4
      %s1379 = scalar_lea.vmem %s3, %s1378
      // Predicated region
      $region41: #{itracker_forward.5} parent=31 // pred_check
        %p1380 = pneg %p150
      $region42: #{itracker_forward.5} parent=31 // pred_check_branch
        %1382 = sbr.rel (%p1380) target = $region44
      $region43: #{itracker_forward.5} parent=31 // pred_region
        %s1383 = sadd.s32 %s20, %s22
        %s1384 = smul.u32 26, %s21
      $region44: #{itracker_forward.5} parent=31 // pred_fallthru
        _
    $region32: #{itracker_forward.5} parent=5 // pred_fallthru
      _
    %p1385 = scmp.le.s32.totalorder 2, %s9
    // Predicated region
    $region45: #{itracker_forward.5} parent=5 // pred_check
      %p1386 = pneg %p1385
    $region46: #{itracker_forward.5} parent=5 // pred_check_branch
      %1388 = sbr.rel (%p1386) target = $region48
    $region47: #{itracker_forward.5} parent=5 // pred_region
      %s1389 = ssub.s32 %s9, 2
      // Predicated region
      $region49: #{itracker_forward.5} parent=47 // pred_check
        %p1390 = pneg %p156
      $region50: #{itracker_forward.5} parent=47 // pred_check_branch
        %1392 = sbr.rel (%p1390) target = $region52
      $region51: #{itracker_forward.5} parent=47 // pred_region
        %s1393 = sadd.s32 %s24, %s26
        %s1394 = smul.u32 26, %s25
        %p1395 = scmp.lt.s32.totalorder %s1394, 51
        %s1396 = scalar_select %p1395, %s1394, 51
        %p1397 = scmp.lt.s32.totalorder %s1393, 0
        %s1398 = scalar_select %p1397, %s1393, 0
        %s1399 = sadd.s32 %s1398, %s1396
        %s1400 = smul.addr %s1399, 4
        %s1401 = scalar_lea.vmem %s3, %s1400
      $region52: #{itracker_forward.5} parent=47 // pred_fallthru
        _
    $region48: #{itracker_forward.5} parent=5 // pred_fallthru
      _
  $region6: #{itracker_forward.5} parent=0 // loop_footer
    %s13 = sadd.s32 1, %s9
  $region7: #{itracker_forward.5} parent=0 // loop_footer_branch
    %8 = sbr.rel target = $region3
  $region8: #{itracker_forward.5} parent=0 // loop_exit
    _

// kernel: itracker_forward.7
$region0: #{itracker_forward.7}
  #allocation0 [shape = 'u32[]', space=smem, size = 0x4, offset = 0x4, fixed_abs, tag = 'smem constant byte address 0x4 - core index']
  #allocation1 [shape = 'u32[144,128]{1,0:T(1,128)}', space=vmem, size = 0x12000, scoped, tag = 'internal scratch']
  #allocation2 [shape = 'f32[48,128]{1,0:T(8,128)}', space=vmem, size = 0x6000, scoped, tag = 'scratch operand']
  %s0 = inlined_call_operand.vmem [shape: bf16[2,96,1280], index: 0, kind: input, shape index: {}]
  %s1 = inlined_call_operand.vmem [shape: bf16[2,1280,128], index: 1, kind: input, shape index: {}]
  %s2 = inlined_call_operand.vmem [shape: f32[2,1,128], index: 2, kind: input, shape index: {}]
  %s3 = inlined_call_operand.vmem [shape: bf16[96,256], index: 3, kind: output, shape index: {}]
  %s4 = sld [smem:[#allocation0]]
  $region90: #{itracker_forward.7} parent=0
    _
  %s6 = ssub.s32 1, %s4
  %s7 = scalar_select 0, %s6, %s4
  $region1: #{itracker_forward.7} parent=0
    #allocation3 [shape = 'u8[24576]{0}', space=vmem, size = 0x6000, scoped, tag = 'output window, operand 0']
    loop: start=0, step=1, limit=6
    $region2: #{itracker_forward.7} parent=1 // loop_pre_header
      _
    $region3: #{itracker_forward.7} parent=1 // loop_header
      %s9 = sphi 0, %s13
      %p10 = scmp.ge.s32.totalorder %s9, 6
      %s16 = sphi 0, %s42
      %s17 = sphi 0, %s38
      %s18 = sphi 0, %s34
      %s19 = sphi 0, %s30
      %s20 = sphi 0, %s16
      %s21 = sphi 0, %s17
      %s22 = sphi 0, %s18
      %s23 = sphi 0, %s19
      %s24 = sphi 0, %s20
      %s25 = sphi 0, %s21
      %s26 = sphi 0, %s22
      %s27 = sphi 0, %s23
      %s49 = sphi 0, %s51
      %s52 = sphi 0, %s49
      %s53 = sphi 0, %s52
      %s69 = sphi 0, %s53
      %s79 = sphi 0, %s81
      %s82 = sphi 0, %s79
      %s83 = sphi 0, %s82
      %s99 = sphi 0, %s83
      %s107 = sphi 0, %s109
      %s110 = sphi 0, %s107
      %s111 = sphi 0, %s110
      %s127 = sphi 0, %s111
      %s137 = sphi 0, %s139
      %s140 = sphi 0, %s137
      %s141 = sphi 0, %s140
      %s157 = sphi 0, %s141
    $region4: #{itracker_forward.7} parent=1 // loop_header_branch
      %12 = sbr.rel (%p10) target = $region8
    $region5: #{itracker_forward.7} parent=1 // loop_body
      %s14 = ssub.s32 %s9, 1
      %s15 = ssub.s32 %s9, 2
      %s28 = sadd.s32 1, %s19
      %p29 = scmp.ge.s32.totalorder %s28, 1
      %s30 = scalar_select %p29, 0, %s28
      %s31 = sadd.s32 1, %s18
      %s32 = scalar_select %p29, %s31, %s18
      %p33 = scmp.ge.s32.totalorder %s32, 1
      %s34 = scalar_select %p33, 0, %s32
      %s35 = sadd.s32 1, %s17
      %s36 = scalar_select %p33, %s35, %s17
      %p37 = scmp.ge.s32.totalorder %s36, 2
      %s38 = scalar_select %p37, 0, %s36
      %s39 = sadd.s32 1, %s16
      %s40 = scalar_select %p37, %s39, %s16
      %p41 = scmp.ge.s32.totalorder %s40, 2
      %s42 = scalar_select %p41, 0, %s40
      %s43 = ssub.s32 %s16, %s42
      %s44 = ssub.s32 %s17, %s38
      %s45 = sor.u32 %s43, %s44
      %s46 = ssub.s32 %s19, %s30
      %s47 = sor.u32 %s45, %s46
      %p48 = scmp.eq.s32.totalorder %s47, 0
      %s50 = sadd.s32 %s49, 1
      %s51 = scalar_select %p48, %s49, %s50
      %p54 = pneg %p48
      %p55 = scmp.eq.s32.totalorder %s9, 3
      %p56 = por %p54, %p55
      %p57 = scmp.ne.s32.totalorder %s49, %s52
      %p58 = scmp.eq.s32.totalorder %s9, 0
      %p59 = por %p57, %p58
      %p60 = scmp.ne.s32.totalorder %s49, %s52
      %p61 = scmp.eq.s32.totalorder %s14, 3
      %p62 = por %p60, %p61
      %p63 = scmp.ne.s32.totalorder %s52, %s53
      %p64 = scmp.eq.s32.totalorder %s14, 0
      %p65 = por %p63, %p64
      %p66 = scmp.ne.s32.totalorder %s52, %s53
      %p67 = scmp.eq.s32.totalorder %s15, 3
      %p68 = por %p66, %p67
      %p70 = scmp.ne.s32.totalorder %s53, %s69
      %p71 = scmp.eq.s32.totalorder %s15, 0
      %p72 = por %p70, %p71
      %s73 = ssub.s32 %s16, %s42
      %s74 = ssub.s32 %s19, %s30
      %s75 = sor.u32 %s73, %s74
      %s76 = ssub.s32 %s18, %s34
      %s77 = sor.u32 %s75, %s76
      %p78 = scmp.eq.s32.totalorder %s77, 0
      %s80 = sadd.s32 %s79, 1
      %s81 = scalar_select %p78, %s79, %s80
      %p84 = pneg %p78
      %p85 = scmp.eq.s32.totalorder %s9, 3
      %p86 = por %p84, %p85
      %p87 = scmp.ne.s32.totalorder %s79, %s82
      %p88 = scmp.eq.s32.totalorder %s9, 0
      %p89 = por %p87, %p88
      %p90 = scmp.ne.s32.totalorder %s79, %s82
      %p91 = scmp.eq.s32.totalorder %s14, 3
      %p92 = por %p90, %p91
      %p93 = scmp.ne.s32.totalorder %s82, %s83
      %p94 = scmp.eq.s32.totalorder %s14, 0
      %p95 = por %p93, %p94
      %p96 = scmp.ne.s32.totalorder %s82, %s83
      %p97 = scmp.eq.s32.totalorder %s15, 3
      %p98 = por %p96, %p97
      %p100 = scmp.ne.s32.totalorder %s83, %s99
      %p101 = scmp.eq.s32.totalorder %s15, 0
      %p102 = por %p100, %p101
      %s103 = ssub.s32 %s16, %s42
      %s104 = ssub.s32 %s18, %s34
      %s105 = sor.u32 %s103, %s104
      %p106 = scmp.eq.s32.totalorder %s105, 0
      %s108 = sadd.s32 %s107, 1
      %s109 = scalar_select %p106, %s107, %s108
      %p112 = pneg %p106
      %p113 = scmp.eq.s32.totalorder %s9, 3
      %p114 = por %p112, %p113
      %p115 = scmp.ne.s32.totalorder %s107, %s110
      %p116 = scmp.eq.s32.totalorder %s9, 0
      %p117 = por %p115, %p116
      %p118 = scmp.ne.s32.totalorder %s107, %s110
      %p119 = scmp.eq.s32.totalorder %s14, 3
      %p120 = por %p118, %p119
      %p121 = scmp.ne.s32.totalorder %s110, %s111
      %p122 = scmp.eq.s32.totalorder %s14, 0
      %p123 = por %p121, %p122
      %p124 = scmp.ne.s32.totalorder %s110, %s111
      %p125 = scmp.eq.s32.totalorder %s15, 3
      %p126 = por %p124, %p125
      %p128 = scmp.ne.s32.totalorder %s111, %s127
      %p129 = scmp.eq.s32.totalorder %s15, 0
      %p130 = por %p128, %p129
      %s131 = sadd.s32 %s16, %s18
      %s132 = sadd.s32 %s42, %s34
      %s133 = ssub.s32 %s17, %s38
      %s134 = ssub.s32 %s131, %s132
      %s135 = sor.u32 %s133, %s134
      %p136 = scmp.eq.s32.totalorder %s135, 0
      %s138 = sadd.s32 %s137, 1
      %s139 = scalar_select %p136, %s137, %s138
      %p142 = pneg %p136
      %p143 = scmp.eq.s32.totalorder %s9, 3
      %p144 = por %p142, %p143
      %p145 = scmp.ne.s32.totalorder %s137, %s140
      %p146 = scmp.eq.s32.totalorder %s9, 0
      %p147 = por %p145, %p146
      %p148 = scmp.ne.s32.totalorder %s137, %s140
      %p149 = scmp.eq.s32.totalorder %s14, 3
      %p150 = por %p148, %p149
      %p151 = scmp.ne.s32.totalorder %s140, %s141
      %p152 = scmp.eq.s32.totalorder %s14, 0
      %p153 = por %p151, %p152
      %p154 = scmp.ne.s32.totalorder %s140, %s141
      %p155 = scmp.eq.s32.totalorder %s15, 3
      %p156 = por %p154, %p155
      %p158 = scmp.ne.s32.totalorder %s141, %s157
      %p159 = scmp.eq.s32.totalorder %s15, 0
      %p160 = por %p158, %p159
      %p161 = scmp.le.s32.totalorder 1, %s9
      %p162 = scmp.lt.s32.totalorder %s9, 5
      %p163 = pnand %p161, %p162
      %p164 = pneg %p163
      // Predicated region
      $region9: #{itracker_forward.7} parent=5 // pred_check
        _
      $region10: #{itracker_forward.7} parent=5 // pred_check_branch
        %166 = sbr.rel (%p163) target = $region12
      $region11: #{itracker_forward.7} parent=5 // pred_region
        %s167 = ssub.s32 %s9, 1
      $region12: #{itracker_forward.7} parent=5 // pred_fallthru
        _
      %p168 = scmp.lt.s32.totalorder %s9, 4
      // Predicated region
      $region13: #{itracker_forward.7} parent=5 // pred_check
        %p169 = pneg %p168
      $region14: #{itracker_forward.7} parent=5 // pred_check_branch
        %171 = sbr.rel (%p169) target = $region16
      $region15: #{itracker_forward.7} parent=5 // pred_region
        // Predicated region
        $region17: #{itracker_forward.7} parent=15 // pred_check
          %p172 = pneg %p59
        $region18: #{itracker_forward.7} parent=15 // pred_check_branch
          %174 = sbr.rel (%p172) target = $region20
        $region19: #{itracker_forward.7} parent=15 // pred_region
          %s175 = smul.u32 6, %s17
          %s176 = smul.u32 10, %s19
          %p177 = scmp.lt.s32.totalorder %s16, 1
          %s178 = scalar_select %p177, %s16, 1
          %p179 = scmp.lt.s32.totalorder %s175, 11
          %s180 = scalar_select %p179, %s175, 11
          %p181 = scmp.lt.s32.totalorder %s176, 9
          %s182 = scalar_select %p181, %s176, 9
          %s183 = smul.addr %s180, 10
          %s184 = sadd.s32 %s182, %s183
          %s185 = smul.addr %s178, 120
          %s186 = sadd.s32 %s184, %s185
          %s187 = smul.addr %s186, 4
          %s188 = scalar_lea.vmem %s0, %s187
          %s189 = smul.u32 6, %s17
          %s190 = smul.u32 10, %s19
        $region20: #{itracker_forward.7} parent=15 // pred_fallthru
          _
        // Predicated region
        $region21: #{itracker_forward.7} parent=15 // pred_check
          %p191 = pneg %p89
        $region22: #{itracker_forward.7} parent=15 // pred_check_branch
          %193 = sbr.rel (%p191) target = $region24
        $region23: #{itracker_forward.7} parent=15 // pred_region
          %s194 = smul.u32 160, %s19
          %p195 = scmp.lt.s32.totalorder %s16, 1
          %s196 = scalar_select %p195, %s16, 1
          %p197 = scmp.lt.s32.totalorder %s194, 159
          %s198 = scalar_select %p197, %s194, 159
          %p199 = scmp.lt.s32.totalorder %s18, 0
          %s200 = scalar_select %p199, %s18, 0
          %s201 = sadd.s32 %s200, %s198
          %s202 = smul.addr %s196, 160
          %s203 = sadd.s32 %s201, %s202
          %s204 = smul.addr %s203, 4
          %s205 = scalar_lea.vmem %s1, %s204
          %s206 = smul.u32 160, %s19
        $region24: #{itracker_forward.7} parent=15 // pred_fallthru
          _
        // Predicated region
        $region25: #{itracker_forward.7} parent=15 // pred_check
          %p207 = pneg %p117
        $region26: #{itracker_forward.7} parent=15 // pred_check_branch
          %209 = sbr.rel (%p207) target = $region28
        $region27: #{itracker_forward.7} parent=15 // pred_region
          %p210 = scmp.lt.s32.totalorder %s16, 1
          %s211 = scalar_select %p210, %s16, 1
          %p212 = scmp.lt.s32.totalorder %s18, 0
          %s213 = scalar_select %p212, %s18, 0
          %s214 = sadd.s32 %s213, %s211
          %s215 = scalar_lea.vmem %s2, %s214
        $region28: #{itracker_forward.7} parent=15 // pred_fallthru
          _
      $region16: #{itracker_forward.7} parent=5 // pred_fallthru
        _
      %p216 = scmp.le.s32.totalorder 1, %s9
      %p217 = scmp.lt.s32.totalorder %s9, 5
      %p218 = pnand %p216, %p217
      %p219 = pneg %p218
      // Predicated region
      $region29: #{itracker_forward.7} parent=5 // pred_check
        _
      $region30: #{itracker_forward.7} parent=5 // pred_check_branch
        %221 = sbr.rel (%p218) target = $region32
      $region31: #{itracker_forward.7} parent=5 // pred_region
        %s222 = ssub.s32 %s9, 1
        %s223 = smul.u32 6, %s21
        %s224 = smul.u32 10, %s23
        %p225 = scmp.lt.s32.totalorder %s20, 1
        %s226 = scalar_select %p225, %s20, 1
        %p227 = scmp.lt.s32.totalorder %s223, 11
        %s228 = scalar_select %p227, %s223, 11
        %p229 = scmp.lt.s32.totalorder %s224, 9
        %s230 = scalar_select %p229, %s224, 9
        %s231 = smul.addr %s228, 10
        %s232 = sadd.s32 %s230, %s231
        %s233 = smul.addr %s226, 120
        %s234 = sadd.s32 %s232, %s233
        %s235 = smul.addr %s234, 4
        %s236 = scalar_lea.vmem %s0, %s235
        %p237 = pneg %p65
        %p238 = pneg %p62
        %s239 = smul.u32 160, %s23
        %p240 = scmp.lt.s32.totalorder %s20, 1
        %s241 = scalar_select %p240, %s20, 1
        %p242 = scmp.lt.s32.totalorder %s239, 159
        %s243 = scalar_select %p242, %s239, 159
        %p244 = scmp.lt.s32.totalorder %s22, 0
        %s245 = scalar_select %p244, %s22, 0
        %s246 = sadd.s32 %s245, %s243
        %s247 = smul.addr %s241, 160
        %s248 = sadd.s32 %s246, %s247
        %s249 = smul.addr %s248, 4
        %s250 = scalar_lea.vmem %s1, %s249
        %p251 = pneg %p95
        %p252 = pneg %p92
        %p253 = scmp.lt.s32.totalorder %s20, 1
        %s254 = scalar_select %p253, %s20, 1
        %p255 = scmp.lt.s32.totalorder %s22, 0
        %s256 = scalar_select %p255, %s22, 0
        %s257 = sadd.s32 %s256, %s254
        %s258 = scalar_lea.vmem %s2, %s257
        %p259 = pneg %p123
        %p260 = pneg %p120
        %p261 = pneg %p153
        %p262 = pneg %p150
        %s263 = sand.u32 %s140, 1
        %s264 = sand.u32 %s140, 1
        %s265 = smul.addr %s264, 24
        %s266 = scalar_lea.vmem [#allocation3], %s265
        %s267 = smul.u32 6, %s21
        %s268 = smul.u32 10, %s23
        %p269 = scmp.lt.s32.totalorder %s20, 1
        %s270 = scalar_select %p269, %s20, 1
        %p271 = scmp.lt.s32.totalorder %s267, 11
        %s272 = scalar_select %p271, %s267, 11
        %p273 = scmp.lt.s32.totalorder %s268, 9
        %s274 = scalar_select %p273, %s268, 9
        %s275 = smul.addr %s272, 10
        %s276 = sadd.s32 %s274, %s275
        %s277 = smul.addr %s270, 120
        %s278 = sadd.s32 %s276, %s277
        %s279 = smul.addr %s278, 4
        %s280 = scalar_lea.vmem %s0, %s279
        %s281 = smul.u32 6, %s21
        %s282 = smul.u32 10, %s23
        %s283 = smul.u32 160, %s23
        %p284 = scmp.lt.s32.totalorder %s20, 1
        %s285 = scalar_select %p284, %s20, 1
        %p286 = scmp.lt.s32.totalorder %s283, 159
        %s287 = scalar_select %p286, %s283, 159
        %p288 = scmp.lt.s32.totalorder %s22, 0
        %s289 = scalar_select %p288, %s22, 0
        %s290 = sadd.s32 %s289, %s287
        %s291 = smul.addr %s285, 160
        %s292 = sadd.s32 %s290, %s291
        %s293 = smul.addr %s292, 4
        %s294 = scalar_lea.vmem %s1, %s293
        %s295 = smul.u32 160, %s23
        %p296 = scmp.lt.s32.totalorder %s20, 1
        %s297 = scalar_select %p296, %s20, 1
        %p298 = scmp.lt.s32.totalorder %s22, 0
        %s299 = scalar_select %p298, %s22, 0
        %s300 = sadd.s32 %s299, %s297
        %s301 = scalar_lea.vmem %s2, %s300
        %s302 = sadd.s32 %s20, %s22
        %s303 = smul.u32 6, %s21
        %p305 = scmp.eq.s32.totalorder %s23, 0
        // Predicated region
        $region33: #{itracker_forward.7} parent=31 // pred_check
          %p306 = pneg %p305
        $region34: #{itracker_forward.7} parent=31 // pred_check_branch
          %308 = sbr.rel (%p306) target = $region36
        $region35: #{itracker_forward.7} parent=31 // pred_region
          %309 = vst [vmem:[#allocation2] sm:$0xff] 0.0
          %310 = vst [vmem:[#allocation2 + $0x8] sm:$0xff] 0.0
          %311 = vst [vmem:[#allocation2 + $0x10] sm:$0xff] 0.0
          %312 = vst [vmem:[#allocation2 + $0x18] sm:$0xff] 0.0
          %313 = vst [vmem:[#allocation2 + $0x20] sm:$0xff] 0.0
          %314 = vst [vmem:[#allocation2 + $0x28] sm:$0xff] 0.0
        $region36: #{itracker_forward.7} parent=31 // pred_fallthru
          _
        %v315 = vld [vmem:[#allocation2] sm:$0xff]
        %v316 = vld [vmem:[#allocation2 + $0x8] sm:$0xff]
        %v317 = vld [vmem:[#allocation2 + $0x10] sm:$0xff]
        %v318 = vld [vmem:[#allocation2 + $0x18] sm:$0xff]
        %v319 = vld [vmem:[#allocation2 + $0x20] sm:$0xff]
        %v320 = vld [vmem:[#allocation2 + $0x28] sm:$0xff]
        %v321 = vld [vmem:[%s280] sm:$0xff]
        %v322 = vld [vmem:[%s280 + $0x8] sm:$0xff]
        %v323 = vld [vmem:[%s280 + $0x10] sm:$0xff]
        %v324 = vld [vmem:[%s280 + $0x18] sm:$0xff]
        %v325 = vld [vmem:[%s280 + $0x20] sm:$0xff]
        %v326 = vld [vmem:[%s280 + $0x28] sm:$0xff]
        %v327 = vld [vmem:[%s280 + $0x30] sm:$0xff]
        %v328 = vld [vmem:[%s280 + $0x38] sm:$0xff]
        %v329 = vld [vmem:[%s280 + $0x40] sm:$0xff]
        %v330 = vld [vmem:[%s280 + $0x48] sm:$0xff]
        %v331 = vld [vmem:[%s280 + $0x50] sm:$0xff]
        %v332 = vld [vmem:[%s280 + $0x58] sm:$0xff]
        %v333 = vld [vmem:[%s280 + $0x60] sm:$0xff]
        %v334 = vld [vmem:[%s280 + $0x68] sm:$0xff]
        %v335 = vld [vmem:[%s280 + $0x70] sm:$0xff]
        %v336 = vld [vmem:[%s280 + $0x78] sm:$0xff]
        %v337 = vld [vmem:[%s280 + $0x80] sm:$0xff]
        %v338 = vld [vmem:[%s280 + $0x88] sm:$0xff]
        %v339 = vld [vmem:[%s280 + $0x90] sm:$0xff]
        %v340 = vld [vmem:[%s280 + $0x98] sm:$0xff]
        %v341 = vld [vmem:[%s280 + $0xa0] sm:$0xff]
        %v342 = vld [vmem:[%s280 + $0xa8] sm:$0xff]
        %v343 = vld [vmem:[%s280 + $0xb0] sm:$0xff]
        %v344 = vld [vmem:[%s280 + $0xb8] sm:$0xff]
        %v345 = vld [vmem:[%s280 + $0xc0] sm:$0xff]
        %v346 = vld [vmem:[%s280 + $0xc8] sm:$0xff]
        %v347 = vld [vmem:[%s280 + $0xd0] sm:$0xff]
        %v348 = vld [vmem:[%s280 + $0xd8] sm:$0xff]
        %v349 = vld [vmem:[%s280 + $0xe0] sm:$0xff]
        %v350 = vld [vmem:[%s280 + $0xe8] sm:$0xff]
        %v351 = vld [vmem:[%s294] sm:$0xf]
        %v352 = vld [vmem:[%s294 + $0x4] sm:$0xf]
        %v353 = vld [vmem:[%s294 + $0x8] sm:$0xf]
        %v354 = vld [vmem:[%s294 + $0xc] sm:$0xf]
        %v355 = vld [vmem:[%s294 + $0x10] sm:$0xf]
        %v356 = vld [vmem:[%s294 + $0x14] sm:$0xf]
        %v357 = vld [vmem:[%s294 + $0x18] sm:$0xf]
        %v358 = vld [vmem:[%s294 + $0x1c] sm:$0xf]
        %v359 = vld [vmem:[%s294 + $0x20] sm:$0xf]
        %v360 = vld [vmem:[%s294 + $0x24] sm:$0xf]
        %v361 = vld [vmem:[%s294 + $0x28] sm:$0xf]
        %v362 = vld [vmem:[%s294 + $0x2c] sm:$0xf]
        %v363 = vld [vmem:[%s294 + $0x30] sm:$0xf]
        %v364 = vld [vmem:[%s294 + $0x34] sm:$0xf]
        %v365 = vld [vmem:[%s294 + $0x38] sm:$0xf]
        %v366 = vld [vmem:[%s294 + $0x3c] sm:$0xf]
        %v367 = vld [vmem:[%s294 + $0x40] sm:$0xf]
        %v368 = vld [vmem:[%s294 + $0x44] sm:$0xf]
        %v369 = vld [vmem:[%s294 + $0x48] sm:$0xf]
        %v370 = vld [vmem:[%s294 + $0x4c] sm:$0xf]
        %v371 = vld [vmem:[%s294 + $0x50] sm:$0xf]
        %v372 = vld [vmem:[%s294 + $0x54] sm:$0xf]
        %v373 = vld [vmem:[%s294 + $0x58] sm:$0xf]
        %v374 = vld [vmem:[%s294 + $0x5c] sm:$0xf]
        %v375 = vld [vmem:[%s294 + $0x60] sm:$0xf]
        %v376 = vld [vmem:[%s294 + $0x64] sm:$0xf]
        %v377 = vld [vmem:[%s294 + $0x68] sm:$0xf]
        %v378 = vld [vmem:[%s294 + $0x6c] sm:$0xf]
        %v379 = vld [vmem:[%s294 + $0x70] sm:$0xf]
        %v380 = vld [vmem:[%s294 + $0x74] sm:$0xf]
        %v381 = vld [vmem:[%s294 + $0x78] sm:$0xf]
        %v382 = vld [vmem:[%s294 + $0x7c] sm:$0xf]
        %v383 = vld [vmem:[%s294 + $0x80] sm:$0xf]
        %v384 = vld [vmem:[%s294 + $0x84] sm:$0xf]
        %v385 = vld [vmem:[%s294 + $0x88] sm:$0xf]
        %v386 = vld [vmem:[%s294 + $0x8c] sm:$0xf]
        %v387 = vld [vmem:[%s294 + $0x90] sm:$0xf]
        %v388 = vld [vmem:[%s294 + $0x94] sm:$0xf]
        %v389 = vld [vmem:[%s294 + $0x98] sm:$0xf]
        %v390 = vld [vmem:[%s294 + $0x9c] sm:$0xf]
        %v391 = vld [vmem:[%s294 + $0xa0] sm:$0xf]
        %v392 = vld [vmem:[%s294 + $0xa4] sm:$0xf]
        %v393 = vld [vmem:[%s294 + $0xa8] sm:$0xf]
        %v394 = vld [vmem:[%s294 + $0xac] sm:$0xf]
        %v395 = vld [vmem:[%s294 + $0xb0] sm:$0xf]
        %v396 = vld [vmem:[%s294 + $0xb4] sm:$0xf]
        %v397 = vld [vmem:[%s294 + $0xb8] sm:$0xf]
        %v398 = vld [vmem:[%s294 + $0xbc] sm:$0xf]
        %v399 = vld [vmem:[%s294 + $0xc0] sm:$0xf]
        %v400 = vld [vmem:[%s294 + $0xc4] sm:$0xf]
        %v401 = vld [vmem:[%s294 + $0xc8] sm:$0xf]
        %v402 = vld [vmem:[%s294 + $0xcc] sm:$0xf]
        %v403 = vld [vmem:[%s294 + $0xd0] sm:$0xf]
        %v404 = vld [vmem:[%s294 + $0xd4] sm:$0xf]
        %v405 = vld [vmem:[%s294 + $0xd8] sm:$0xf]
        %v406 = vld [vmem:[%s294 + $0xdc] sm:$0xf]
        %v407 = vld [vmem:[%s294 + $0xe0] sm:$0xf]
        %v408 = vld [vmem:[%s294 + $0xe4] sm:$0xf]
        %v409 = vld [vmem:[%s294 + $0xe8] sm:$0xf]
        %v410 = vld [vmem:[%s294 + $0xec] sm:$0xf]
        %v411 = vld [vmem:[%s294 + $0xf0] sm:$0xf]
        %v412 = vld [vmem:[%s294 + $0xf4] sm:$0xf]
        %v413 = vld [vmem:[%s294 + $0xf8] sm:$0xf]
        %v414 = vld [vmem:[%s294 + $0xfc] sm:$0xf]
        %v415 = vld [vmem:[%s294 + $0x100] sm:$0xf]
        %v416 = vld [vmem:[%s294 + $0x104] sm:$0xf]
        %v417 = vld [vmem:[%s294 + $0x108] sm:$0xf]
        %v418 = vld [vmem:[%s294 + $0x10c] sm:$0xf]
        %v419 = vld [vmem:[%s294 + $0x110] sm:$0xf]
        %v420 = vld [vmem:[%s294 + $0x114] sm:$0xf]
        %v421 = vld [vmem:[%s294 + $0x118] sm:$0xf]
        %v422 = vld [vmem:[%s294 + $0x11c] sm:$0xf]
        %v423 = vld [vmem:[%s294 + $0x120] sm:$0xf]
        %v424 = vld [vmem:[%s294 + $0x124] sm:$0xf]
        %v425 = vld [vmem:[%s294 + $0x128] sm:$0xf]
        %v426 = vld [vmem:[%s294 + $0x12c] sm:$0xf]
        %v427 = vld [vmem:[%s294 + $0x130] sm:$0xf]
        %v428 = vld [vmem:[%s294 + $0x134] sm:$0xf]
        %v429 = vld [vmem:[%s294 + $0x138] sm:$0xf]
        %v430 = vld [vmem:[%s294 + $0x13c] sm:$0xf]
        %v431 = vld [vmem:[%s294 + $0x140] sm:$0xf]
        %v432 = vld [vmem:[%s294 + $0x144] sm:$0xf]
        %v433 = vld [vmem:[%s294 + $0x148] sm:$0xf]
        %v434 = vld [vmem:[%s294 + $0x14c] sm:$0xf]
        %v435 = vld [vmem:[%s294 + $0x150] sm:$0xf]
        %v436 = vld [vmem:[%s294 + $0x154] sm:$0xf]
        %v437 = vld [vmem:[%s294 + $0x158] sm:$0xf]
        %v438 = vld [vmem:[%s294 + $0x15c] sm:$0xf]
        %v439 = vld [vmem:[%s294 + $0x160] sm:$0xf]
        %v440 = vld [vmem:[%s294 + $0x164] sm:$0xf]
        %v441 = vld [vmem:[%s294 + $0x168] sm:$0xf]
        %v442 = vld [vmem:[%s294 + $0x16c] sm:$0xf]
        %v443 = vld [vmem:[%s294 + $0x170] sm:$0xf]
        %v444 = vld [vmem:[%s294 + $0x174] sm:$0xf]
        %v445 = vld [vmem:[%s294 + $0x178] sm:$0xf]
        %v446 = vld [vmem:[%s294 + $0x17c] sm:$0xf]
        %v447 = vld [vmem:[%s294 + $0x180] sm:$0xf]
        %v448 = vld [vmem:[%s294 + $0x184] sm:$0xf]
        %v449 = vld [vmem:[%s294 + $0x188] sm:$0xf]
        %v450 = vld [vmem:[%s294 + $0x18c] sm:$0xf]
        %v451 = vld [vmem:[%s294 + $0x190] sm:$0xf]
        %v452 = vld [vmem:[%s294 + $0x194] sm:$0xf]
        %v453 = vld [vmem:[%s294 + $0x198] sm:$0xf]
        %v454 = vld [vmem:[%s294 + $0x19c] sm:$0xf]
        %v455 = vld [vmem:[%s294 + $0x1a0] sm:$0xf]
        %v456 = vld [vmem:[%s294 + $0x1a4] sm:$0xf]
        %v457 = vld [vmem:[%s294 + $0x1a8] sm:$0xf]
        %v458 = vld [vmem:[%s294 + $0x1ac] sm:$0xf]
        %v459 = vld [vmem:[%s294 + $0x1b0] sm:$0xf]
        %v460 = vld [vmem:[%s294 + $0x1b4] sm:$0xf]
        %v461 = vld [vmem:[%s294 + $0x1b8] sm:$0xf]
        %v462 = vld [vmem:[%s294 + $0x1bc] sm:$0xf]
        %v463 = vld [vmem:[%s294 + $0x1c0] sm:$0xf]
        %v464 = vld [vmem:[%s294 + $0x1c4] sm:$0xf]
        %v465 = vld [vmem:[%s294 + $0x1c8] sm:$0xf]
        %v466 = vld [vmem:[%s294 + $0x1cc] sm:$0xf]
        %v467 = vld [vmem:[%s294 + $0x1d0] sm:$0xf]
        %v468 = vld [vmem:[%s294 + $0x1d4] sm:$0xf]
        %v469 = vld [vmem:[%s294 + $0x1d8] sm:$0xf]
        %v470 = vld [vmem:[%s294 + $0x1dc] sm:$0xf]
        %v471 = vld [vmem:[%s294 + $0x1e0] sm:$0xf]
        %v472 = vld [vmem:[%s294 + $0x1e4] sm:$0xf]
        %v473 = vld [vmem:[%s294 + $0x1e8] sm:$0xf]
        %v474 = vld [vmem:[%s294 + $0x1ec] sm:$0xf]
        %v475 = vld [vmem:[%s294 + $0x1f0] sm:$0xf]
        %v476 = vld [vmem:[%s294 + $0x1f4] sm:$0xf]
        %v477 = vld [vmem:[%s294 + $0x1f8] sm:$0xf]
        %v478 = vld [vmem:[%s294 + $0x1fc] sm:$0xf]
        %v479 = vld [vmem:[%s294 + $0x200] sm:$0xf]
        %v480 = vld [vmem:[%s294 + $0x204] sm:$0xf]
        %v481 = vld [vmem:[%s294 + $0x208] sm:$0xf]
        %v482 = vld [vmem:[%s294 + $0x20c] sm:$0xf]
        %v483 = vld [vmem:[%s294 + $0x210] sm:$0xf]
        %v484 = vld [vmem:[%s294 + $0x214] sm:$0xf]
        %v485 = vld [vmem:[%s294 + $0x218] sm:$0xf]
        %v486 = vld [vmem:[%s294 + $0x21c] sm:$0xf]
        %v487 = vld [vmem:[%s294 + $0x220] sm:$0xf]
        %v488 = vld [vmem:[%s294 + $0x224] sm:$0xf]
        %v489 = vld [vmem:[%s294 + $0x228] sm:$0xf]
        %v490 = vld [vmem:[%s294 + $0x22c] sm:$0xf]
        %v491 = vld [vmem:[%s294 + $0x230] sm:$0xf]
        %v492 = vld [vmem:[%s294 + $0x234] sm:$0xf]
        %v493 = vld [vmem:[%s294 + $0x238] sm:$0xf]
        %v494 = vld [vmem:[%s294 + $0x23c] sm:$0xf]
        %v495 = vld [vmem:[%s294 + $0x240] sm:$0xf]
        %v496 = vld [vmem:[%s294 + $0x244] sm:$0xf]
        %v497 = vld [vmem:[%s294 + $0x248] sm:$0xf]
        %v498 = vld [vmem:[%s294 + $0x24c] sm:$0xf]
        %v499 = vld [vmem:[%s294 + $0x250] sm:$0xf]
        %v500 = vld [vmem:[%s294 + $0x254] sm:$0xf]
        %v501 = vld [vmem:[%s294 + $0x258] sm:$0xf]
        %v502 = vld [vmem:[%s294 + $0x25c] sm:$0xf]
        %v503 = vld [vmem:[%s294 + $0x260] sm:$0xf]
        %v504 = vld [vmem:[%s294 + $0x264] sm:$0xf]
        %v505 = vld [vmem:[%s294 + $0x268] sm:$0xf]
        %v506 = vld [vmem:[%s294 + $0x26c] sm:$0xf]
        %v507 = vld [vmem:[%s294 + $0x270] sm:$0xf]
        %v508 = vld [vmem:[%s294 + $0x274] sm:$0xf]
        %v509 = vld [vmem:[%s294 + $0x278] sm:$0xf]
        %v510 = vld [vmem:[%s294 + $0x27c] sm:$0xf]
        %v541 = vunpack.c.l.b16 %v321
        %v542 = vunpack.c.h.b16 %v321
        %v543 = vunpack.c.l.b16 %v322
        %v544 = vunpack.c.h.b16 %v322
        %v545 = vunpack.c.l.b16 %v323
        %v546 = vunpack.c.h.b16 %v323
        %v547 = vunpack.c.l.b16 %v324
        %v548 = vunpack.c.h.b16 %v324
        %v549 = vunpack.c.l.b16 %v325
        %v550 = vunpack.c.h.b16 %v325
        %v551 = vunpack.c.l.b16 %v326
        %v552 = vunpack.c.h.b16 %v326
        %v553 = vunpack.c.l.b16 %v327
        %v554 = vunpack.c.h.b16 %v327
        %v555 = vunpack.c.l.b16 %v328
        %v556 = vunpack.c.h.b16 %v328
        %v557 = vunpack.c.l.b16 %v329
        %v558 = vunpack.c.h.b16 %v329
        %v559 = vunpack.c.l.b16 %v330
        %v560 = vunpack.c.h.b16 %v330
        %v561 = vunpack.c.l.b16 %v331
        %v562 = vunpack.c.h.b16 %v331
        %v563 = vunpack.c.l.b16 %v332
        %v564 = vunpack.c.h.b16 %v332
        %v565 = vunpack.c.l.b16 %v333
        %v566 = vunpack.c.h.b16 %v333
        %v567 = vunpack.c.l.b16 %v334
        %v568 = vunpack.c.h.b16 %v334
        %v569 = vunpack.c.l.b16 %v335
        %v570 = vunpack.c.h.b16 %v335
        %v571 = vunpack.c.l.b16 %v336
        %v572 = vunpack.c.h.b16 %v336
        %v573 = vunpack.c.l.b16 %v337
        %v574 = vunpack.c.h.b16 %v337
        %v575 = vunpack.c.l.b16 %v338
        %v576 = vunpack.c.h.b16 %v338
        %v577 = vunpack.c.l.b16 %v339
        %v578 = vunpack.c.h.b16 %v339
        %v579 = vunpack.c.l.b16 %v340
        %v580 = vunpack.c.h.b16 %v340
        %v581 = vunpack.c.l.b16 %v341
        %v582 = vunpack.c.h.b16 %v341
        %v583 = vunpack.c.l.b16 %v342
        %v584 = vunpack.c.h.b16 %v342
        %v585 = vunpack.c.l.b16 %v343
        %v586 = vunpack.c.h.b16 %v343
        %v587 = vunpack.c.l.b16 %v344
        %v588 = vunpack.c.h.b16 %v344
        %v589 = vunpack.c.l.b16 %v345
        %v590 = vunpack.c.h.b16 %v345
        %v591 = vunpack.c.l.b16 %v346
        %v592 = vunpack.c.h.b16 %v346
        %v593 = vunpack.c.l.b16 %v347
        %v594 = vunpack.c.h.b16 %v347
        %v595 = vunpack.c.l.b16 %v348
        %v596 = vunpack.c.h.b16 %v348
        %v597 = vunpack.c.l.b16 %v349
        %v598 = vunpack.c.h.b16 %v349
        %v599 = vunpack.c.l.b16 %v350
        %v600 = vunpack.c.h.b16 %v350
        %v601 = vpack.c.b16 %v551, %v541
        %v602 = vpack.c.b16 %v552, %v542
        %v603 = vpack.c.b16 %v553, %v543
        %v604 = vpack.c.b16 %v554, %v544
        %v605 = vpack.c.b16 %v555, %v545
        %v606 = vpack.c.b16 %v556, %v546
        %v607 = vpack.c.b16 %v557, %v547
        %v608 = vpack.c.b16 %v558, %v548
        %v609 = vpack.c.b16 %v559, %v549
        %v610 = vpack.c.b16 %v560, %v550
        %v611 = vpack.c.b16 %v571, %v561
        %v612 = vpack.c.b16 %v572, %v562
        %v613 = vpack.c.b16 %v573, %v563
        %v614 = vpack.c.b16 %v574, %v564
        %v615 = vpack.c.b16 %v575, %v565
        %v616 = vpack.c.b16 %v576, %v566
        %v617 = vpack.c.b16 %v577, %v567
        %v618 = vpack.c.b16 %v578, %v568
        %v619 = vpack.c.b16 %v579, %v569
        %v620 = vpack.c.b16 %v580, %v570
        %v621 = vpack.c.b16 %v591, %v581
        %v622 = vpack.c.b16 %v592, %v582
        %v623 = vpack.c.b16 %v593, %v583
        %v624 = vpack.c.b16 %v594, %v584
        %v625 = vpack.c.b16 %v595, %v585
        %v626 = vpack.c.b16 %v596, %v586
        %v627 = vpack.c.b16 %v597, %v587
        %v628 = vpack.c.b16 %v598, %v588
        %v629 = vpack.c.b16 %v599, %v589
        %v630 = vpack.c.b16 %v600, %v590
        %v821 = vunpack.c.l.b16 %v351
        %v822 = vunpack.c.l.b16 %v352
        %v823 = vunpack.c.l.b16 %v353
        %v824 = vunpack.c.l.b16 %v354
        %v825 = vunpack.c.l.b16 %v355
        %v826 = vunpack.c.l.b16 %v356
        %v827 = vunpack.c.l.b16 %v357
        %v828 = vunpack.c.l.b16 %v358
        %v829 = vunpack.c.l.b16 %v359
        %v830 = vunpack.c.l.b16 %v360
        %v831 = vunpack.c.l.b16 %v361
        %v832 = vunpack.c.l.b16 %v362
        %v833 = vunpack.c.l.b16 %v363
        %v834 = vunpack.c.l.b16 %v364
        %v835 = vunpack.c.l.b16 %v365
        %v836 = vunpack.c.l.b16 %v366
        %v837 = vunpack.c.l.b16 %v367
        %v838 = vunpack.c.l.b16 %v368
        %v839 = vunpack.c.l.b16 %v369
        %v840 = vunpack.c.l.b16 %v370
        %v841 = vunpack.c.l.b16 %v371
        %v842 = vunpack.c.l.b16 %v372
        %v843 = vunpack.c.l.b16 %v373
        %v844 = vunpack.c.l.b16 %v374
        %v845 = vunpack.c.l.b16 %v375
        %v846 = vunpack.c.l.b16 %v376
        %v847 = vunpack.c.l.b16 %v377
        %v848 = vunpack.c.l.b16 %v378
        %v849 = vunpack.c.l.b16 %v379
        %v850 = vunpack.c.l.b16 %v380
        %v851 = vunpack.c.l.b16 %v381
        %v852 = vunpack.c.l.b16 %v382
        %v853 = vunpack.c.l.b16 %v383
        %v854 = vunpack.c.l.b16 %v384
        %v855 = vunpack.c.l.b16 %v385
        %v856 = vunpack.c.l.b16 %v386
        %v857 = vunpack.c.l.b16 %v387
        %v858 = vunpack.c.l.b16 %v388
        %v859 = vunpack.c.l.b16 %v389
        %v860 = vunpack.c.l.b16 %v390
        %v861 = vunpack.c.l.b16 %v391
        %v862 = vunpack.c.l.b16 %v392
        %v863 = vunpack.c.l.b16 %v393
        %v864 = vunpack.c.l.b16 %v394
        %v865 = vunpack.c.l.b16 %v395
        %v866 = vunpack.c.l.b16 %v396
        %v867 = vunpack.c.l.b16 %v397
        %v868 = vunpack.c.l.b16 %v398
        %v869 = vunpack.c.l.b16 %v399
        %v870 = vunpack.c.l.b16 %v400
        %v871 = vunpack.c.l.b16 %v401
        %v872 = vunpack.c.l.b16 %v402
        %v873 = vunpack.c.l.b16 %v403
        %v874 = vunpack.c.l.b16 %v404
        %v875 = vunpack.c.l.b16 %v405
        %v876 = vunpack.c.l.b16 %v406
        %v877 = vunpack.c.l.b16 %v407
        %v878 = vunpack.c.l.b16 %v408
        %v879 = vunpack.c.l.b16 %v409
        %v880 = vunpack.c.l.b16 %v410
        %v881 = vunpack.c.l.b16 %v411
        %v882 = vunpack.c.l.b16 %v412
        %v883 = vunpack.c.l.b16 %v413
        %v884 = vunpack.c.l.b16 %v414
        %v885 = vunpack.c.l.b16 %v415
        %v886 = vunpack.c.l.b16 %v416
        %v887 = vunpack.c.l.b16 %v417
        %v888 = vunpack.c.l.b16 %v418
        %v889 = vunpack.c.l.b16 %v419
        %v890 = vunpack.c.l.b16 %v420
        %v891 = vunpack.c.l.b16 %v421
        %v892 = vunpack.c.l.b16 %v422
        %v893 = vunpack.c.l.b16 %v423
        %v894 = vunpack.c.l.b16 %v424
        %v895 = vunpack.c.l.b16 %v425
        %v896 = vunpack.c.l.b16 %v426
        %v897 = vunpack.c.l.b16 %v427
        %v898 = vunpack.c.l.b16 %v428
        %v899 = vunpack.c.l.b16 %v429
        %v900 = vunpack.c.l.b16 %v430
        %v901 = vunpack.c.l.b16 %v431
        %v902 = vunpack.c.l.b16 %v432
        %v903 = vunpack.c.l.b16 %v433
        %v904 = vunpack.c.l.b16 %v434
        %v905 = vunpack.c.l.b16 %v435
        %v906 = vunpack.c.l.b16 %v436
        %v907 = vunpack.c.l.b16 %v437
        %v908 = vunpack.c.l.b16 %v438
        %v909 = vunpack.c.l.b16 %v439
        %v910 = vunpack.c.l.b16 %v440
        %v911 = vunpack.c.l.b16 %v441
        %v912 = vunpack.c.l.b16 %v442
        %v913 = vunpack.c.l.b16 %v443
        %v914 = vunpack.c.l.b16 %v444
        %v915 = vunpack.c.l.b16 %v445
        %v916 = vunpack.c.l.b16 %v446
        %v917 = vunpack.c.l.b16 %v447
        %v918 = vunpack.c.l.b16 %v448
        %v919 = vunpack.c.l.b16 %v449
        %v920 = vunpack.c.l.b16 %v450
        %v921 = vunpack.c.l.b16 %v451
        %v922 = vunpack.c.l.b16 %v452
        %v923 = vunpack.c.l.b16 %v453
        %v924 = vunpack.c.l.b16 %v454
        %v925 = vunpack.c.l.b16 %v455
        %v926 = vunpack.c.l.b16 %v456
        %v927 = vunpack.c.l.b16 %v457
        %v928 = vunpack.c.l.b16 %v458
        %v929 = vunpack.c.l.b16 %v459
        %v930 = vunpack.c.l.b16 %v460
        %v931 = vunpack.c.l.b16 %v461
        %v932 = vunpack.c.l.b16 %v462
        %v933 = vunpack.c.l.b16 %v463
        %v934 = vunpack.c.l.b16 %v464
        %v935 = vunpack.c.l.b16 %v465
        %v936 = vunpack.c.l.b16 %v466
        %v937 = vunpack.c.l.b16 %v467
        %v938 = vunpack.c.l.b16 %v468
        %v939 = vunpack.c.l.b16 %v469
        %v940 = vunpack.c.l.b16 %v470
        %v941 = vunpack.c.l.b16 %v471
        %v942 = vunpack.c.l.b16 %v472
        %v943 = vunpack.c.l.b16 %v473
        %v944 = vunpack.c.l.b16 %v474
        %v945 = vunpack.c.l.b16 %v475
        %v946 = vunpack.c.l.b16 %v476
        %v947 = vunpack.c.l.b16 %v477
        %v948 = vunpack.c.l.b16 %v478
        %v949 = vunpack.c.l.b16 %v479
        %v950 = vunpack.c.l.b16 %v480
        %v951 = vunpack.c.l.b16 %v481
        %v952 = vunpack.c.l.b16 %v482
        %v953 = vunpack.c.l.b16 %v483
        %v954 = vunpack.c.l.b16 %v484
        %v955 = vunpack.c.l.b16 %v485
        %v956 = vunpack.c.l.b16 %v486
        %v957 = vunpack.c.l.b16 %v487
        %v958 = vunpack.c.l.b16 %v488
        %v959 = vunpack.c.l.b16 %v489
        %v960 = vunpack.c.l.b16 %v490
        %v961 = vunpack.c.l.b16 %v491
        %v962 = vunpack.c.l.b16 %v492
        %v963 = vunpack.c.l.b16 %v493
        %v964 = vunpack.c.l.b16 %v494
        %v965 = vunpack.c.l.b16 %v495
        %v966 = vunpack.c.l.b16 %v496
        %v967 = vunpack.c.l.b16 %v497
        %v968 = vunpack.c.l.b16 %v498
        %v969 = vunpack.c.l.b16 %v499
        %v970 = vunpack.c.l.b16 %v500
        %v971 = vunpack.c.l.b16 %v501
        %v972 = vunpack.c.l.b16 %v502
        %v973 = vunpack.c.l.b16 %v503
        %v974 = vunpack.c.l.b16 %v504
        %v975 = vunpack.c.l.b16 %v505
        %v976 = vunpack.c.l.b16 %v506
        %v977 = vunpack.c.l.b16 %v507
        %v978 = vunpack.c.l.b16 %v508
        %v979 = vunpack.c.l.b16 %v509
        %v980 = vunpack.c.l.b16 %v510
        %v981 = vpack.c.b16 %v822, %v821
        %v982 = vpack.c.b16 %v824, %v823
        %v983 = vpack.c.b16 %v826, %v825
        %v984 = vpack.c.b16 %v828, %v827
        %v985 = vpack.c.b16 %v830, %v829
        %v986 = vpack.c.b16 %v832, %v831
        %v987 = vpack.c.b16 %v834, %v833
        %v988 = vpack.c.b16 %v836, %v835
        %v989 = vpack.c.b16 %v838, %v837
        %v990 = vpack.c.b16 %v840, %v839
        %v991 = vpack.c.b16 %v842, %v841
        %v992 = vpack.c.b16 %v844, %v843
        %v993 = vpack.c.b16 %v846, %v845
        %v994 = vpack.c.b16 %v848, %v847
        %v995 = vpack.c.b16 %v850, %v849
        %v996 = vpack.c.b16 %v852, %v851
        %v997 = vpack.c.b16 %v854, %v853
        %v998 = vpack.c.b16 %v856, %v855
        %v999 = vpack.c.b16 %v858, %v857
        %v1000 = vpack.c.b16 %v860, %v859
        %v1001 = vpack.c.b16 %v862, %v861
        %v1002 = vpack.c.b16 %v864, %v863
        %v1003 = vpack.c.b16 %v866, %v865
        %v1004 = vpack.c.b16 %v868, %v867
        %v1005 = vpack.c.b16 %v870, %v869
        %v1006 = vpack.c.b16 %v872, %v871
        %v1007 = vpack.c.b16 %v874, %v873
        %v1008 = vpack.c.b16 %v876, %v875
        %v1009 = vpack.c.b16 %v878, %v877
        %v1010 = vpack.c.b16 %v880, %v879
        %v1011 = vpack.c.b16 %v882, %v881
        %v1012 = vpack.c.b16 %v884, %v883
        %v1013 = vpack.c.b16 %v886, %v885
        %v1014 = vpack.c.b16 %v888, %v887
        %v1015 = vpack.c.b16 %v890, %v889
        %v1016 = vpack.c.b16 %v892, %v891
        %v1017 = vpack.c.b16 %v894, %v893
        %v1018 = vpack.c.b16 %v896, %v895
        %v1019 = vpack.c.b16 %v898, %v897
        %v1020 = vpack.c.b16 %v900, %v899
        %v1021 = vpack.c.b16 %v902, %v901
        %v1022 = vpack.c.b16 %v904, %v903
        %v1023 = vpack.c.b16 %v906, %v905
        %v1024 = vpack.c.b16 %v908, %v907
        %v1025 = vpack.c.b16 %v910, %v909
        %v1026 = vpack.c.b16 %v912, %v911
        %v1027 = vpack.c.b16 %v914, %v913
        %v1028 = vpack.c.b16 %v916, %v915
        %v1029 = vpack.c.b16 %v918, %v917
        %v1030 = vpack.c.b16 %v920, %v919
        %v1031 = vpack.c.b16 %v922, %v921
        %v1032 = vpack.c.b16 %v924, %v923
        %v1033 = vpack.c.b16 %v926, %v925
        %v1034 = vpack.c.b16 %v928, %v927
        %v1035 = vpack.c.b16 %v930, %v929
        %v1036 = vpack.c.b16 %v932, %v931
        %v1037 = vpack.c.b16 %v934, %v933
        %v1038 = vpack.c.b16 %v936, %v935
        %v1039 = vpack.c.b16 %v938, %v937
        %v1040 = vpack.c.b16 %v940, %v939
        %v1041 = vpack.c.b16 %v942, %v941
        %v1042 = vpack.c.b16 %v944, %v943
        %v1043 = vpack.c.b16 %v946, %v945
        %v1044 = vpack.c.b16 %v948, %v947
        %v1045 = vpack.c.b16 %v950, %v949
        %v1046 = vpack.c.b16 %v952, %v951
        %v1047 = vpack.c.b16 %v954, %v953
        %v1048 = vpack.c.b16 %v956, %v955
        %v1049 = vpack.c.b16 %v958, %v957
        %v1050 = vpack.c.b16 %v960, %v959
        %v1051 = vpack.c.b16 %v962, %v961
        %v1052 = vpack.c.b16 %v964, %v963
        %v1053 = vpack.c.b16 %v966, %v965
        %v1054 = vpack.c.b16 %v968, %v967
        %v1055 = vpack.c.b16 %v970, %v969
        %v1056 = vpack.c.b16 %v972, %v971
        %v1057 = vpack.c.b16 %v974, %v973
        %v1058 = vpack.c.b16 %v976, %v975
        %v1059 = vpack.c.b16 %v978, %v977
        %v1060 = vpack.c.b16 %v980, %v979
        %1141 = vmatprep.subr.bf16.mxu0 0
        %1142 = vmatpush1.bf16.msra.mxu0 %v981
        %1143 = vmatprep.subr.bf16.mxu0 0
        %1144 = vmatpush1.bf16.msra.mxu0 %v982
        %1145 = vmatprep.subr.bf16.mxu0 0
        %1146 = vmatpush1.bf16.msra.mxu0 %v983
        %1147 = vmatprep.subr.bf16.mxu0 0
        %1148 = vmatpush1.bf16.msra.mxu0 %v984
        %1149 = vmatprep.subr.bf16.mxu0 0
        %1150 = vmatpush1.bf16.msra.mxu0 %v985
        %1151 = vmatprep.subr.bf16.mxu0 0
        %1152 = vmatpush1.bf16.msra.mxu0 %v986
        %1153 = vmatprep.subr.bf16.mxu0 0
        %1154 = vmatpush1.bf16.msra.mxu0 %v987
        %1155 = vmatprep.subr.bf16.mxu0 0
        %1156 = vmatpush1.bf16.msra.mxu0 %v988
        %1157 = vmatprep.subr.bf16.mxu0 0
        %1158 = vmatpush1.bf16.msra.mxu0 %v989
        %1159 = vmatprep.subr.bf16.mxu0 0
        %1160 = vmatpush1.bf16.msra.mxu0 %v990
        %1161 = vmatprep.subr.bf16.mxu0 0
        %1162 = vmatpush1.bf16.msra.mxu0 %v991
        %1163 = vmatprep.subr.bf16.mxu0 0
        %1164 = vmatpush1.bf16.msra.mxu0 %v992
        %1165 = vmatprep.subr.bf16.mxu0 0
        %1166 = vmatpush1.bf16.msra.mxu0 %v993
        %1167 = vmatprep.subr.bf16.mxu0 0
        %1168 = vmatpush1.bf16.msra.mxu0 %v994
        %1169 = vmatprep.subr.bf16.mxu0 0
        %1170 = vmatpush1.bf16.msra.mxu0 %v995
        %1171 = vmatprep.subr.bf16.mxu0 0
        %1172 = vmatpush1.bf16.msra.mxu0 %v996
        %1173 = vmatprep.mubr.bf16.mxu0 %v602
        %1174 = vmatmul.mubr.bf16.gmra.mrb[0].mxu0 %v601
        %v1175 = vpop.f32.mrb[0].mxu0
        %v1176 = vadd.f32 0.0, %v1175
        %v1177 = vpop.f32.mrb[0].mxu0
        %v1178 = vpop.f32.mrb[0].mxu0
        %v1179 = vadd.f32 0.0, %v1178
        %v1180 = vpop.f32.mrb[0].mxu0
        %1181 = vmatprep.mubr.bf16.mxu0 %v612
        %1182 = vmatmul.mubr.bf16.gmra.mrb[0].mxu0 %v611
        %v1183 = vpop.f32.mrb[0].mxu0
        %v1184 = vadd.f32 0.0, %v1183
        %v1185 = vpop.f32.mrb[0].mxu0
        %v1186 = vpop.f32.mrb[0].mxu0
        %v1187 = vadd.f32 0.0, %v1186
        %v1188 = vpop.f32.mrb[0].mxu0
        %1189 = vmatprep.mubr.bf16.mxu0 %v622
        %1190 = vmatmul.mubr.bf16.gmra.mrb[0].mxu0 %v621
        %v1191 = vpop.f32.mrb[0].mxu0
        %v1192 = vadd.f32 0.0, %v1191
        %v1193 = vpop.f32.mrb[0].mxu0
        %v1194 = vpop.f32.mrb[0].mxu0
        %v1195 = vadd.f32 0.0, %v1194
        %v1196 = vpop.f32.mrb[0].mxu0
        %1197 = vdwg.mxu0
        %1198 = vmatprep.subr.bf16.mxu0 0
        %1199 = vmatpush1.bf16.msra.mxu0 %v997
        %1200 = vmatprep.subr.bf16.mxu0 0
        %1201 = vmatpush1.bf16.msra.mxu0 %v998
        %1202 = vmatprep.subr.bf16.mxu0 0
        %1203 = vmatpush1.bf16.msra.mxu0 %v999
        %1204 = vmatprep.subr.bf16.mxu0 0
        %1205 = vmatpush1.bf16.msra.mxu0 %v1000
        %1206 = vmatprep.subr.bf16.mxu0 0
        %1207 = vmatpush1.bf16.msra.mxu0 %v1001
        %1208 = vmatprep.subr.bf16.mxu0 0
        %1209 = vmatpush1.bf16.msra.mxu0 %v1002
        %1210 = vmatprep.subr.bf16.mxu0 0
        %1211 = vmatpush1.bf16.msra.mxu0 %v1003
        %1212 = vmatprep.subr.bf16.mxu0 0
        %1213 = vmatpush1.bf16.msra.mxu0 %v1004
        %1214 = vmatprep.subr.bf16.mxu0 0
        %1215 = vmatpush1.bf16.msra.mxu0 %v1005
        %1216 = vmatprep.subr.bf16.mxu0 0
        %1217 = vmatpush1.bf16.msra.mxu0 %v1006
        %1218 = vmatprep.subr.bf16.mxu0 0
        %1219 = vmatpush1.bf16.msra.mxu0 %v1007
        %1220 = vmatprep.subr.bf16.mxu0 0
        %1221 = vmatpush1.bf16.msra.mxu0 %v1008
        %1222 = vmatprep.subr.bf16.mxu0 0
        %1223 = vmatpush1.bf16.msra.mxu0 %v1009
        %1224 = vmatprep.subr.bf16.mxu0 0
        %1225 = vmatpush1.bf16.msra.mxu0 %v1010
        %1226 = vmatprep.subr.bf16.mxu0 0
        %1227 = vmatpush1.bf16.msra.mxu0 %v1011
        %1228 = vmatprep.subr.bf16.mxu0 0
        %1229 = vmatpush1.bf16.msra.mxu0 %v1012
        %1230 = vmatprep.mubr.bf16.mxu0 %v604
        %1231 = vmatmul.mubr.bf16.gmra.mrb[0].mxu0 %v603
        %v1232 = vpop.f32.mrb[0].mxu0
        %v1233 = vadd.f32 %v1176, %v1232
        %v1234 = vpop.f32.mrb[0].mxu0
        %v1235 = vpop.f32.mrb[0].mxu0
        %v1236 = vadd.f32 %v1179, %v1235
        %v1237 = vpop.f32.mrb[0].mxu0
        %1238 = vmatprep.mubr.bf16.mxu0 %v614
        %1239 = vmatmul.mubr.bf16.gmra.mrb[0].mxu0 %v613
        %v1240 = vpop.f32.mrb[0].mxu0
        %v1241 = vadd.f32 %v1184, %v1240
        %v1242 = vpop.f32.mrb[0].mxu0
        %v1243 = vpop.f32.mrb[0].mxu0
        %v1244 = vadd.f32 %v1187, %v1243
        %v1245 = vpop.f32.mrb[0].mxu0
        %1246 = vmatprep.mubr.bf16.mxu0 %v624
        %1247 = vmatmul.mubr.bf16.gmra.mrb[0].mxu0 %v623
        %v1248 = vpop.f32.mrb[0].mxu0
        %v1249 = vadd.f32 %v1192, %v1248
        %v1250 = vpop.f32.mrb[0].mxu0
        %v1251 = vpop.f32.mrb[0].mxu0
        %v1252 = vadd.f32 %v1195, %v1251
        %v1253 = vpop.f32.mrb[0].mxu0
        %1254 = vdwg.mxu0
        %1255 = vmatprep.subr.bf16.mxu0 0
        %1256 = vmatpush1.bf16.msra.mxu0 %v1013
        %1257 = vmatprep.subr.bf16.mxu0 0
        %1258 = vmatpush1.bf16.msra.mxu0 %v1014
        %1259 = vmatprep.subr.bf16.mxu0 0
        %1260 = vmatpush1.bf16.msra.mxu0 %v1015
        %1261 = vmatprep.subr.bf16.mxu0 0
        %1262 = vmatpush1.bf16.msra.mxu0 %v1016
        %1263 = vmatprep.subr.bf16.mxu0 0
        %1264 = vmatpush1.bf16.msra.mxu0 %v1017
        %1265 = vmatprep.subr.bf16.mxu0 0
        %1266 = vmatpush1.bf16.msra.mxu0 %v1018
        %1267 = vmatprep.subr.bf16.mxu0 0
        %1268 = vmatpush1.bf16.msra.mxu0 %v1019
        %1269 = vmatprep.subr.bf16.mxu0 0
        %1270 = vmatpush1.bf16.msra.mxu0 %v1020
        %1271 = vmatprep.subr.bf16.mxu0 0
        %1272 = vmatpush1.bf16.msra.mxu0 %v1021
        %1273 = vmatprep.subr.bf16.mxu0 0
        %1274 = vmatpush1.bf16.msra.mxu0 %v1022
        %1275 = vmatprep.subr.bf16.mxu0 0
        %1276 = vmatpush1.bf16.msra.mxu0 %v1023
        %1277 = vmatprep.subr.bf16.mxu0 0
        %1278 = vmatpush1.bf16.msra.mxu0 %v1024
        %1279 = vmatprep.subr.bf16.mxu0 0
        %1280 = vmatpush1.bf16.msra.mxu0 %v1025
        %1281 = vmatprep.subr.bf16.mxu0 0
        %1282 = vmatpush1.bf16.msra.mxu0 %v1026
        %1283 = vmatprep.subr.bf16.mxu0 0
        %1284 = vmatpush1.bf16.msra.mxu0 %v1027
        %1285 = vmatprep.subr.bf16.mxu0 0
        %1286 = vmatpush1.bf16.msra.mxu0 %v1028
        %1287 = vmatprep.mubr.bf16.mxu0 %v606
        %1288 = vmatmul.mubr.bf16.gmra.mrb[0].mxu0 %v605
        %v1289 = vpop.f32.mrb[0].mxu0
        %v1290 = vadd.f32 %v1233, %v1289
        %v1291 = vpop.f32.mrb[0].mxu0
        %v1292 = vpop.f32.mrb[0].mxu0
        %v1293 = vadd.f32 %v1236, %v1292
        %v1294 = vpop.f32.mrb[0].mxu0
        %1295 = vmatprep.mubr.bf16.mxu0 %v616
        %1296 = vmatmul.mubr.bf16.gmra.mrb[0].mxu0 %v615
        %v1297 = vpop.f32.mrb[0].mxu0
        %v1298 = vadd.f32 %v1241, %v1297
        %v1299 = vpop.f32.mrb[0].mxu0
        %v1300 = vpop.f32.mrb[0].mxu0
        %v1301 = vadd.f32 %v1244, %v1300
        %v1302 = vpop.f32.mrb[0].mxu0
        %1303 = vmatprep.mubr.bf16.mxu0 %v626
        %1304 = vmatmul.mubr.bf16.gmra.mrb[0].mxu0 %v625
        %v1305 = vpop.f32.mrb[0].mxu0
        %v1306 = vadd.f32 %v1249, %v1305
        %v1307 = vpop.f32.mrb[0].mxu0
        %v1308 = vpop.f32.mrb[0].mxu0
        %v1309 = vadd.f32 %v1252, %v1308
        %v1310 = vpop.f32.mrb[0].mxu0
        %1311 = vdwg.mxu0
        %1312 = vmatprep.subr.bf16.mxu0 0
        %1313 = vmatpush1.bf16.msra.mxu0 %v1029
        %1314 = vmatprep.subr.bf16.mxu0 0
        %1315 = vmatpush1.bf16.msra.mxu0 %v1030
        %1316 = vmatprep.subr.bf16.mxu0 0
        %1317 = vmatpush1.bf16.msra.mxu0 %v1031
        %1318 = vmatprep.subr.bf16.mxu0 0
        %1319 = vmatpush1.bf16.msra.mxu0 %v1032
        %1320 = vmatprep.subr.bf16.mxu0 0
        %1321 = vmatpush1.bf16.msra.mxu0 %v1033
        %1322 = vmatprep.subr.bf16.mxu0 0
        %1323 = vmatpush1.bf16.msra.mxu0 %v1034
        %1324 = vmatprep.subr.bf16.mxu0 0
        %1325 = vmatpush1.bf16.msra.mxu0 %v1035
        %1326 = vmatprep.subr.bf16.mxu0 0
        %1327 = vmatpush1.bf16.msra.mxu0 %v1036
        %1328 = vmatprep.subr.bf16.mxu0 0
        %1329 = vmatpush1.bf16.msra.mxu0 %v1037
        %1330 = vmatprep.subr.bf16.mxu0 0
        %1331 = vmatpush1.bf16.msra.mxu0 %v1038
        %1332 = vmatprep.subr.bf16.mxu0 0
        %1333 = vmatpush1.bf16.msra.mxu0 %v1039
        %1334 = vmatprep.subr.bf16.mxu0 0
        %1335 = vmatpush1.bf16.msra.mxu0 %v1040
        %1336 = vmatprep.subr.bf16.mxu0 0
        %1337 = vmatpush1.bf16.msra.mxu0 %v1041
        %1338 = vmatprep.subr.bf16.mxu0 0
        %1339 = vmatpush1.bf16.msra.mxu0 %v1042
        %1340 = vmatprep.subr.bf16.mxu0 0
        %1341 = vmatpush1.bf16.msra.mxu0 %v1043
        %1342 = vmatprep.subr.bf16.mxu0 0
        %1343 = vmatpush1.bf16.msra.mxu0 %v1044
        %1344 = vmatprep.mubr.bf16.mxu0 %v608
        %1345 = vmatmul.mubr.bf16.gmra.mrb[0].mxu0 %v607
        %v1346 = vpop.f32.mrb[0].mxu0
        %v1347 = vadd.f32 %v1290, %v1346
        %v1348 = vpop.f32.mrb[0].mxu0
        %v1349 = vpop.f32.mrb[0].mxu0
        %v1350 = vadd.f32 %v1293, %v1349
        %v1351 = vpop.f32.mrb[0].mxu0
        %1352 = vmatprep.mubr.bf16.mxu0 %v618
        %1353 = vmatmul.mubr.bf16.gmra.mrb[0].mxu0 %v617
        %v1354 = vpop.f32.mrb[0].mxu0
        %v1355 = vadd.f32 %v1298, %v1354
        %v1356 = vpop.f32.mrb[0].mxu0
        %v1357 = vpop.f32.mrb[0].mxu0
        %v1358 = vadd.f32 %v1301, %v1357
        %v1359 = vpop.f32.mrb[0].mxu0
        %1360 = vmatprep.mubr.bf16.mxu0 %v628
        %1361 = vmatmul.mubr.bf16.gmra.mrb[0].mxu0 %v627
        %v1362 = vpop.f32.mrb[0].mxu0
        %v1363 = vadd.f32 %v1306, %v1362
        %v1364 = vpop.f32.mrb[0].mxu0
        %v1365 = vpop.f32.mrb[0].mxu0
        %v1366 = vadd.f32 %v1309, %v1365
        %v1367 = vpop.f32.mrb[0].mxu0
        %1368 = vdwg.mxu0
        %1369 = vmatprep.subr.bf16.mxu0 0
        %1370 = vmatpush1.bf16.msra.mxu0 %v1045
        %1371 = vmatprep.subr.bf16.mxu0 0
        %1372 = vmatpush1.bf16.msra.mxu0 %v1046
        %1373 = vmatprep.subr.bf16.mxu0 0
        %1374 = vmatpush1.bf16.msra.mxu0 %v1047
        %1375 = vmatprep.subr.bf16.mxu0 0
        %1376 = vmatpush1.bf16.msra.mxu0 %v1048
        %1377 = vmatprep.subr.bf16.mxu0 0
        %1378 = vmatpush1.bf16.msra.mxu0 %v1049
        %1379 = vmatprep.subr.bf16.mxu0 0
        %1380 = vmatpush1.bf16.msra.mxu0 %v1050
        %1381 = vmatprep.subr.bf16.mxu0 0
        %1382 = vmatpush1.bf16.msra.mxu0 %v1051
        %1383 = vmatprep.subr.bf16.mxu0 0
        %1384 = vmatpush1.bf16.msra.mxu0 %v1052
        %1385 = vmatprep.subr.bf16.mxu0 0
        %1386 = vmatpush1.bf16.msra.mxu0 %v1053
        %1387 = vmatprep.subr.bf16.mxu0 0
        %1388 = vmatpush1.bf16.msra.mxu0 %v1054
        %1389 = vmatprep.subr.bf16.mxu0 0
        %1390 = vmatpush1.bf16.msra.mxu0 %v1055
        %1391 = vmatprep.subr.bf16.mxu0 0
        %1392 = vmatpush1.bf16.msra.mxu0 %v1056
        %1393 = vmatprep.subr.bf16.mxu0 0
        %1394 = vmatpush1.bf16.msra.mxu0 %v1057
        %1395 = vmatprep.subr.bf16.mxu0 0
        %1396 = vmatpush1.bf16.msra.mxu0 %v1058
        %1397 = vmatprep.subr.bf16.mxu0 0
        %1398 = vmatpush1.bf16.msra.mxu0 %v1059
        %1399 = vmatprep.subr.bf16.mxu0 0
        %1400 = vmatpush1.bf16.msra.mxu0 %v1060
        %1401 = vmatprep.mubr.bf16.mxu0 %v610
        %1402 = vmatmul.mubr.bf16.gmra.mrb[0].mxu0 %v609
        %v1403 = vpop.f32.mrb[0].mxu0
        %v1404 = vadd.f32 %v1347, %v1403
        %v1405 = vpop.f32.mrb[0].mxu0
        %v1406 = vpop.f32.mrb[0].mxu0
        %v1407 = vadd.f32 %v1350, %v1406
        %v1408 = vpop.f32.mrb[0].mxu0
        %1409 = vmatprep.mubr.bf16.mxu0 %v620
        %1410 = vmatmul.mubr.bf16.gmra.mrb[0].mxu0 %v619
        %v1411 = vpop.f32.mrb[0].mxu0
        %v1412 = vadd.f32 %v1355, %v1411
        %v1413 = vpop.f32.mrb[0].mxu0
        %v1414 = vpop.f32.mrb[0].mxu0
        %v1415 = vadd.f32 %v1358, %v1414
        %v1416 = vpop.f32.mrb[0].mxu0
        %1417 = vmatprep.mubr.bf16.mxu0 %v630
        %1418 = vmatmul.mubr.bf16.gmra.mrb[0].mxu0 %v629
        %v1419 = vpop.f32.mrb[0].mxu0
        %v1420 = vadd.f32 %v1363, %v1419
        %v1421 = vpop.f32.mrb[0].mxu0
        %v1422 = vpop.f32.mrb[0].mxu0
        %v1423 = vadd.f32 %v1366, %v1422
        %v1424 = vpop.f32.mrb[0].mxu0
        %1425 = vdwg.mxu0
        %v1426 = vadd.f32 %v315, %v1404
        %v1427 = vadd.f32 %v316, %v1407
        %v1428 = vadd.f32 %v317, %v1412
        %v1429 = vadd.f32 %v318, %v1415
        %v1430 = vadd.f32 %v319, %v1420
        %v1431 = vadd.f32 %v320, %v1423
        %1432 = vst [vmem:[#allocation2] sm:$0xff] %v1426
        %1433 = vst [vmem:[#allocation2 + $0x8] sm:$0xff] %v1427
        %1434 = vst [vmem:[#allocation2 + $0x10] sm:$0xff] %v1428
        %1435 = vst [vmem:[#allocation2 + $0x18] sm:$0xff] %v1429
        %1436 = vst [vmem:[#allocation2 + $0x20] sm:$0xff] %v1430
        %1437 = vst [vmem:[#allocation2 + $0x28] sm:$0xff] %v1431
        // Predicated region
        $region37: #{itracker_forward.7} parent=31 // pred_check
          %p1438 = pneg %p305
        $region38: #{itracker_forward.7} parent=31 // pred_check_branch
          %1440 = sbr.rel (%p1438) target = $region40
        $region39: #{itracker_forward.7} parent=31 // pred_region
          %v1441 = vld [vmem:[#allocation2] sm:$0xff]
          %v1442 = vld [vmem:[#allocation2 + $0x8] sm:$0xff]
          %v1443 = vld [vmem:[#allocation2 + $0x10] sm:$0xff]
          %v1444 = vld [vmem:[#allocation2 + $0x18] sm:$0xff]
          %v1445 = vld [vmem:[#allocation2 + $0x20] sm:$0xff]
          %v1446 = vld [vmem:[#allocation2 + $0x28] sm:$0xff]
          %v1447 = vld [vmem:[%s301] sm:$0x1]
          %v1449 = vlaneseq
          %v1450 = vshrl.u32 %v1449, 7
          %v1451 = vsub.s32 0, %v1450
          %v1452 = vrot.slane %v1447, %v1451
          %v1454 = vadd.f32 %v1441, %v1452
          %v1455 = vadd.f32 %v1442, %v1452
          %v1456 = vadd.f32 %v1443, %v1452
          %v1457 = vadd.f32 %v1444, %v1452
          %v1458 = vadd.f32 %v1445, %v1452
          %v1459 = vadd.f32 %v1446, %v1452
          %v1460 = vmax.f32 %v1454, 0.0
          %v1461 = vmax.f32 %v1455, 0.0
          %v1462 = vmax.f32 %v1456, 0.0
          %v1463 = vmax.f32 %v1457, 0.0
          %v1464 = vmax.f32 %v1458, 0.0
          %v1465 = vmax.f32 %v1459, 0.0
          %v1466 = vpack.c.bf16 %v1461, %v1460
          %v1467 = vpack.c.bf16 %v1463, %v1462
          %v1468 = vpack.c.bf16 %v1465, %v1464
          %v1472 = vunpack.c.l.b16 %v1466
          %v1473 = vunpack.c.h.b16 %v1466
          %v1474 = vunpack.c.l.b16 %v1467
          %v1475 = vunpack.c.h.b16 %v1467
          %v1476 = vunpack.c.l.b16 %v1468
          %v1477 = vunpack.c.h.b16 %v1468
          %v1478 = vpack.c.b16 %v1472, %v1472
          %v1479 = vpack.c.b16 %v1473, %v1473
          %v1480 = vpack.c.b16 %v1474, %v1474
          %v1481 = vpack.c.b16 %v1475, %v1475
          %v1482 = vpack.c.b16 %v1476, %v1476
          %v1483 = vpack.c.b16 %v1477, %v1477
          %1490 = vst [vmem:[%s266] sm:$0xf] %v1478
          %1491 = vst [vmem:[%s266 + $0x4] sm:$0xf] %v1479
          %1492 = vst [vmem:[%s266 + $0x8] sm:$0xf] %v1480
          %1493 = vst [vmem:[%s266 + $0xc] sm:$0xf] %v1481
          %1494 = vst [vmem:[%s266 + $0x10] sm:$0xf] %v1482
          %1495 = vst [vmem:[%s266 + $0x14] sm:$0xf] %v1483
        $region40: #{itracker_forward.7} parent=31 // pred_fallthru
          _
        %s1496 = sand.u32 %s140, 1
        %s1497 = sand.u32 %s140, 1
        %s1498 = smul.addr %s1497, 24
        %s1499 = scalar_lea.vmem [#allocation3], %s1498
        // Predicated region
        $region41: #{itracker_forward.7} parent=31 // pred_check
          %p1500 = pneg %p150
        $region42: #{itracker_forward.7} parent=31 // pred_check_branch
          %1502 = sbr.rel (%p1500) target = $region44
        $region43: #{itracker_forward.7} parent=31 // pred_region
          %s1503 = sadd.s32 %s20, %s22
          %s1504 = smul.u32 6, %s21
          %s1505 = smul.addr %s1504, 2
          %s1506 = sadd.s32 %s1503, %s1505
          %s1507 = smul.addr %s1506, 4
          %s1508 = scalar_lea.vmem %s3, %s1507
          // Predicated region
          $region45: #{itracker_forward.7} parent=43 // pred_check
            _
          $region46: #{itracker_forward.7} parent=43 // pred_check_branch
            %1510 = sbr.rel (0) target = $region48
          $region47: #{itracker_forward.7} parent=43 // pred_region
            // Predicated region
            $region49: #{itracker_forward.7} parent=47 // pred_check
              _
            $region50: #{itracker_forward.7} parent=47 // pred_check_branch
              %1512 = sbr.rel target = $region52
            $region51: #{itracker_forward.7} parent=47 // pred_region
              // Predicated region
              $region64: #{itracker_forward.7} parent=51 // pred_check
                _
              $region65: #{itracker_forward.7} parent=51 // pred_check_branch
                %1537 = sbr.rel (0) target = $region67
              $region66: #{itracker_forward.7} parent=51 // pred_region
                loop: start=0, step=1, limit=1
                $region68: #{itracker_forward.7} parent=66 // loop_pre_header
                  _
                $region69: #{itracker_forward.7} parent=66 // loop_header
                  %s1539 = sphi 0, %s1543
                  %p1540 = scmp.ge.s32.totalorder %s1539, 1
                  %s1544 = sphi %s1499, %s1499
                  %s1545 = sphi %s1508, %s1508
                $region70: #{itracker_forward.7} parent=66 // loop_header_branch
                  %1542 = sbr.rel (%p1540) target = $region74
                $region71: #{itracker_forward.7} parent=66 // loop_body
                  _
                $region72: #{itracker_forward.7} parent=66 // loop_footer
                  %s1543 = sadd.s32 1, %s1539
                $region73: #{itracker_forward.7} parent=66 // loop_footer_branch
                  %1538 = sbr.rel target = $region69
                $region74: #{itracker_forward.7} parent=66 // loop_exit
                  _
                loop: start=0, step=1, limit=1
                $region75: #{itracker_forward.7} parent=66 // loop_pre_header
                  _
                $region76: #{itracker_forward.7} parent=66 // loop_header
                  %s1548 = sphi 0, %s1552
                  %p1549 = scmp.ge.s32.totalorder %s1548, 1
                  %s1553 = sphi %s1499, %s1499
                  %s1554 = sphi %s1508, %s1508
                $region77: #{itracker_forward.7} parent=66 // loop_header_branch
                  %1551 = sbr.rel (%p1549) target = $region81
                $region78: #{itracker_forward.7} parent=66 // loop_body
                  %v1555 = vld [vmem:[%s1553] sm:$0xf]
                  %1556 = vst [vmem:[%s1554] sm:$0xf] %v1555
                  %v1557 = vld [vmem:[%s1553 + $0x4] sm:$0xf]
                  %1558 = vst [vmem:[%s1554 + $0x8] sm:$0xf] %v1557
                  %v1559 = vld [vmem:[%s1553 + $0x8] sm:$0xf]
                  %1560 = vst [vmem:[%s1554 + $0x10] sm:$0xf] %v1559
                  %v1561 = vld [vmem:[%s1553 + $0xc] sm:$0xf]
                  %1562 = vst [vmem:[%s1554 + $0x18] sm:$0xf] %v1561
                  %v1563 = vld [vmem:[%s1553 + $0x10] sm:$0xf]
                  %1564 = vst [vmem:[%s1554 + $0x20] sm:$0xf] %v1563
                  %v1565 = vld [vmem:[%s1553 + $0x14] sm:$0xf]
                  %1566 = vst [vmem:[%s1554 + $0x28] sm:$0xf] %v1565
                $region79: #{itracker_forward.7} parent=66 // loop_footer
                  %s1552 = sadd.s32 1, %s1548
                $region80: #{itracker_forward.7} parent=66 // loop_footer_branch
                  %1547 = sbr.rel target = $region76
                $region81: #{itracker_forward.7} parent=66 // loop_exit
                  _
              $region67: #{itracker_forward.7} parent=51 // pred_fallthru
                _
            $region52: #{itracker_forward.7} parent=47 // pred_fallthru
              _
            // Predicated region
            $region53: #{itracker_forward.7} parent=47 // pred_check
              _
            $region54: #{itracker_forward.7} parent=47 // pred_check_branch
              %1514 = sbr.rel (0) target = $region56
            $region55: #{itracker_forward.7} parent=47 // pred_region
              loop: start=0, step=1, limit=1
              $region57: #{itracker_forward.7} parent=55 // loop_pre_header
                _
              $region58: #{itracker_forward.7} parent=55 // loop_header
                %s1517 = sphi 0, %s1521
                %p1518 = scmp.ge.s32.totalorder %s1517, 1
                %s1522 = sphi %s1499, %s1499
                %s1523 = sphi %s1508, %s1508
              $region59: #{itracker_forward.7} parent=55 // loop_header_branch
                %1520 = sbr.rel (%p1518) target = $region63
              $region60: #{itracker_forward.7} parent=55 // loop_body
                %v1524 = vld [vmem:[%s1522] sm:$0xf]
                %1525 = vst [vmem:[%s1523] sm:$0xf] %v1524
                %v1526 = vld [vmem:[%s1522 + $0x4] sm:$0xf]
                %1527 = vst [vmem:[%s1523 + $0x8] sm:$0xf] %v1526
                %v1528 = vld [vmem:[%s1522 + $0x8] sm:$0xf]
                %1529 = vst [vmem:[%s1523 + $0x10] sm:$0xf] %v1528
                %v1530 = vld [vmem:[%s1522 + $0xc] sm:$0xf]
                %1531 = vst [vmem:[%s1523 + $0x18] sm:$0xf] %v1530
                %v1532 = vld [vmem:[%s1522 + $0x10] sm:$0xf]
                %1533 = vst [vmem:[%s1523 + $0x20] sm:$0xf] %v1532
                %v1534 = vld [vmem:[%s1522 + $0x14] sm:$0xf]
                %1535 = vst [vmem:[%s1523 + $0x28] sm:$0xf] %v1534
              $region61: #{itracker_forward.7} parent=55 // loop_footer
                %s1521 = sadd.s32 1, %s1517
              $region62: #{itracker_forward.7} parent=55 // loop_footer_branch
                %1516 = sbr.rel target = $region58
              $region63: #{itracker_forward.7} parent=55 // loop_exit
                _
            $region56: #{itracker_forward.7} parent=47 // pred_fallthru
              _
          $region48: #{itracker_forward.7} parent=43 // pred_fallthru
            _
          %1567 = vnop
        $region44: #{itracker_forward.7} parent=31 // pred_fallthru
          _
      $region32: #{itracker_forward.7} parent=5 // pred_fallthru
        _
      %p1568 = scmp.le.s32.totalorder 2, %s9
      // Predicated region
      $region82: #{itracker_forward.7} parent=5 // pred_check
        %p1569 = pneg %p1568
      $region83: #{itracker_forward.7} parent=5 // pred_check_branch
        %1571 = sbr.rel (%p1569) target = $region85
      $region84: #{itracker_forward.7} parent=5 // pred_region
        %s1572 = ssub.s32 %s9, 2
        // Predicated region
        $region86: #{itracker_forward.7} parent=84 // pred_check
          %p1573 = pneg %p156
        $region87: #{itracker_forward.7} parent=84 // pred_check_branch
          %1575 = sbr.rel (%p1573) target = $region89
        $region88: #{itracker_forward.7} parent=84 // pred_region
          %s1576 = sand.u32 %s141, 1
          %s1577 = sand.u32 %s141, 1
          %s1578 = smul.addr %s1577, 24
          %s1579 = scalar_lea.vmem [#allocation3], %s1578
        $region89: #{itracker_forward.7} parent=84 // pred_fallthru
          _
      $region85: #{itracker_forward.7} parent=5 // pred_fallthru
        _
    $region6: #{itracker_forward.7} parent=1 // loop_footer
      %s13 = sadd.s32 1, %s9
    $region7: #{itracker_forward.7} parent=1 // loop_footer_branch
      %8 = sbr.rel target = $region3
    $region8: #{itracker_forward.7} parent=1 // loop_exit
      _

// kernel: itracker_forward.8
$region0: #{itracker_forward.8}
  #allocation0 [shape = 'u32[]', space=smem, size = 0x4, offset = 0x4, fixed_abs, tag = 'smem constant byte address 0x4 - core index']
  #allocation1 [shape = 'u32[144,128]{1,0:T(1,128)}', space=vmem, size = 0x12000, scoped, tag = 'internal scratch']
  %s0 = inlined_call_operand.vmem [shape: bf16[2,3,2,2,256], index: 0, kind: input, shape index: {}]
  %s1 = inlined_call_operand.vmem [shape: bf16[256,256], index: 1, kind: input, shape index: {}]
  %s2 = inlined_call_operand.vmem [shape: bf16[2,2,2,256], index: 2, kind: output, shape index: {}]
  %s3 = sld [smem:[#allocation0]]
  $region41: #{itracker_forward.8} parent=0
    _
  %s5 = ssub.s32 1, %s3
  %s6 = scalar_select 0, %s5, %s3
  loop: start=0, step=1, limit=4
  $region2: #{itracker_forward.8} parent=0 // loop_pre_header
    _
  $region3: #{itracker_forward.8} parent=0 // loop_header
    %s8 = sphi 0, %s12
    %p9 = scmp.ge.s32.totalorder %s8, 4
    %s18 = sphi 0, %s20
    %s21 = sphi 0, %s18
    %s22 = sphi 0, %s21
    %s38 = sphi 0, %s22
    %s42 = sphi 0, %s42
    %s44 = sphi 0, %s42
    %s45 = sphi 0, %s44
    %s59 = sphi 0, %s45
    %s65 = sphi 0, %s67
    %s68 = sphi 0, %s65
    %s69 = sphi 0, %s68
    %s85 = sphi 0, %s69
  $region4: #{itracker_forward.8} parent=0 // loop_header_branch
    %11 = sbr.rel (%p9) target = $region8
  $region5: #{itracker_forward.8} parent=0 // loop_body
    %s13 = ssub.s32 %s8, 1
    %s14 = ssub.s32 %s8, 2
    %s15 = sadd.s32 %s8, 1
    %s16 = ssub.s32 %s8, %s15
    %p17 = scmp.eq.s32.totalorder %s16, 0
    %s19 = sadd.s32 %s18, 1
    %s20 = scalar_select %p17, %s18, %s19
    %p23 = pneg %p17
    %p24 = scmp.eq.s32.totalorder %s8, 1
    %p25 = por %p23, %p24
    %p26 = scmp.ne.s32.totalorder %s18, %s21
    %p27 = scmp.eq.s32.totalorder %s8, 0
    %p28 = por %p26, %p27
    %p29 = scmp.ne.s32.totalorder %s18, %s21
    %p30 = scmp.eq.s32.totalorder %s13, 1
    %p31 = por %p29, %p30
    %p32 = scmp.ne.s32.totalorder %s21, %s22
    %p33 = scmp.eq.s32.totalorder %s13, 0
    %p34 = por %p32, %p33
    %p35 = scmp.ne.s32.totalorder %s21, %s22
    %p36 = scmp.eq.s32.totalorder %s14, 1
    %p37 = por %p35, %p36
    %p39 = scmp.ne.s32.totalorder %s22, %s38
    %p40 = scmp.eq.s32.totalorder %s14, 0
    %p41 = por %p39, %p40
    %s43 = sadd.s32 %s42, 1
    %p46 = scmp.eq.s32.totalorder %s8, 1
    %p47 = scmp.ne.s32.totalorder %s42, %s44
    %p48 = scmp.eq.s32.totalorder %s8, 0
    %p49 = por %p47, %p48
    %p50 = scmp.ne.s32.totalorder %s42, %s44
    %p51 = scmp.eq.s32.totalorder %s13, 1
    %p52 = por %p50, %p51
    %p53 = scmp.ne.s32.totalorder %s44, %s45
    %p54 = scmp.eq.s32.totalorder %s13, 0
    %p55 = por %p53, %p54
    %p56 = scmp.ne.s32.totalorder %s44, %s45
    %p57 = scmp.eq.s32.totalorder %s14, 1
    %p58 = por %p56, %p57
    %p60 = scmp.ne.s32.totalorder %s45, %s59
    %p61 = scmp.eq.s32.totalorder %s14, 0
    %p62 = por %p60, %p61
    %s63 = ssub.s32 %s8, %s15
    %p64 = scmp.eq.s32.totalorder %s63, 0
    %s66 = sadd.s32 %s65, 1
    %s67 = scalar_select %p64, %s65, %s66
    %p70 = pneg %p64
    %p71 = scmp.eq.s32.totalorder %s8, 1
    %p72 = por %p70, %p71
    %p73 = scmp.ne.s32.totalorder %s65, %s68
    %p74 = scmp.eq.s32.totalorder %s8, 0
    %p75 = por %p73, %p74
    %p76 = scmp.ne.s32.totalorder %s65, %s68
    %p77 = scmp.eq.s32.totalorder %s13, 1
    %p78 = por %p76, %p77
    %p79 = scmp.ne.s32.totalorder %s68, %s69
    %p80 = scmp.eq.s32.totalorder %s13, 0
    %p81 = por %p79, %p80
    %p82 = scmp.ne.s32.totalorder %s68, %s69
    %p83 = scmp.eq.s32.totalorder %s14, 1
    %p84 = por %p82, %p83
    %p86 = scmp.ne.s32.totalorder %s69, %s85
    %p87 = scmp.eq.s32.totalorder %s14, 0
    %p88 = por %p86, %p87
    %p89 = scmp.le.s32.totalorder 1, %s8
    %p90 = scmp.lt.s32.totalorder %s8, 3
    %p91 = pnand %p89, %p90
    %p92 = pneg %p91
    // Predicated region
    $region9: #{itracker_forward.8} parent=5 // pred_check
      _
    $region10: #{itracker_forward.8} parent=5 // pred_check_branch
      %94 = sbr.rel (%p91) target = $region12
    $region11: #{itracker_forward.8} parent=5 // pred_region
      %s95 = ssub.s32 %s8, 1
      // Predicated region
      $region13: #{itracker_forward.8} parent=11 // pred_check
        %p96 = pneg %p55
      $region14: #{itracker_forward.8} parent=11 // pred_check_branch
        %98 = sbr.rel (%p96) target = $region16
      $region15: #{itracker_forward.8} parent=11 // pred_region
        _
      $region16: #{itracker_forward.8} parent=11 // pred_fallthru
        _
    $region12: #{itracker_forward.8} parent=5 // pred_fallthru
      _
    %p99 = scmp.lt.s32.totalorder %s8, 2
    // Predicated region
    $region17: #{itracker_forward.8} parent=5 // pred_check
      %p100 = pneg %p99
    $region18: #{itracker_forward.8} parent=5 // pred_check_branch
      %102 = sbr.rel (%p100) target = $region20
    $region19: #{itracker_forward.8} parent=5 // pred_region
      // Predicated region
      $region21: #{itracker_forward.8} parent=19 // pred_check
        %p103 = pneg %p28
      $region22: #{itracker_forward.8} parent=19 // pred_check_branch
        %105 = sbr.rel (%p103) target = $region24
      $region23: #{itracker_forward.8} parent=19 // pred_region
        %p106 = scmp.lt.s32.totalorder %s8, 1
        %s107 = scalar_select %p106, %s8, 1
        %s108 = smul.addr %s107, 12
        %s109 = scalar_lea.vmem %s0, %s108
      $region24: #{itracker_forward.8} parent=19 // pred_fallthru
        _
    $region20: #{itracker_forward.8} parent=5 // pred_fallthru
      _
    %p110 = scmp.le.s32.totalorder 1, %s8
    %p111 = scmp.lt.s32.totalorder %s8, 3
    %p112 = pnand %p110, %p111
    %p113 = pneg %p112
    // Predicated region
    $region25: #{itracker_forward.8} parent=5 // pred_check
      _
    $region26: #{itracker_forward.8} parent=5 // pred_check_branch
      %115 = sbr.rel (%p112) target = $region28
    $region27: #{itracker_forward.8} parent=5 // pred_region
      %s116 = ssub.s32 %s8, 1
      %p117 = scmp.lt.s32.totalorder %s13, 1
      %s118 = scalar_select %p117, %s13, 1
      %s119 = smul.addr %s118, 12
      %s120 = scalar_lea.vmem %s0, %s119
      %p121 = pneg %p34
      %p122 = pneg %p31
      %p123 = pneg %p55
      %p124 = pneg %p52
      %p125 = pneg %p81
      %p126 = pneg %p78
      %p127 = scmp.lt.s32.totalorder %s13, 1
      %s128 = scalar_select %p127, %s13, 1
      %s129 = smul.addr %s128, 4
      %s130 = scalar_lea.vmem %s2, %s129
      %p131 = scmp.lt.s32.totalorder %s13, 1
      %s132 = scalar_select %p131, %s13, 1
      %s133 = smul.addr %s132, 12
      %s134 = scalar_lea.vmem %s0, %s133
      %p135 = scmp.lt.s32.totalorder %s13, 1
      %s136 = scalar_select %p135, %s13, 1
      %s137 = smul.addr %s136, 4
      %s138 = scalar_lea.vmem %s2, %s137
      %v139 = vld [vmem:[%s134] sm:$0x3]
      %v140 = vld [vmem:[%s134 + $0x2] sm:$0x3]
      %v141 = vld [vmem:[%s134 + $0x4] sm:$0x3]
      %v142 = vld [vmem:[%s134 + $0x6] sm:$0x3]
      %v143 = vld [vmem:[%s134 + $0x8] sm:$0x3]
      %v144 = vmax.bf16 %v139, %v140
      %v145 = vmax.bf16 %v141, %v142
      %v146 = vmax.bf16 %v144, %v141
      %v147 = vmax.bf16 %v145, %v143
      %v148 = vld [vmem:[%s1] sm:$0xff]
      %v149 = vld [vmem:[%s1 + $0x8] sm:$0xff]
      %v150 = vld [vmem:[%s1 + $0x10] sm:$0xff]
      %v151 = vld [vmem:[%s1 + $0x18] sm:$0xff]
      %v152 = vld [vmem:[%s1 + $0x20] sm:$0xff]
      %v153 = vld [vmem:[%s1 + $0x28] sm:$0xff]
      %v154 = vld [vmem:[%s1 + $0x30] sm:$0xff]
      %v155 = vld [vmem:[%s1 + $0x38] sm:$0xff]
      %v156 = vld [vmem:[%s1 + $0x40] sm:$0xff]
      %v157 = vld [vmem:[%s1 + $0x48] sm:$0xff]
      %v158 = vld [vmem:[%s1 + $0x50] sm:$0xff]
      %v159 = vld [vmem:[%s1 + $0x58] sm:$0xff]
      %v160 = vld [vmem:[%s1 + $0x60] sm:$0xff]
      %v161 = vld [vmem:[%s1 + $0x68] sm:$0xff]
      %v162 = vld [vmem:[%s1 + $0x70] sm:$0xff]
      %v163 = vld [vmem:[%s1 + $0x78] sm:$0xff]
      %v164 = vld [vmem:[%s1 + $0x80] sm:$0xff]
      %v165 = vld [vmem:[%s1 + $0x88] sm:$0xff]
      %v166 = vld [vmem:[%s1 + $0x90] sm:$0xff]
      %v167 = vld [vmem:[%s1 + $0x98] sm:$0xff]
      %v168 = vld [vmem:[%s1 + $0xa0] sm:$0xff]
      %v169 = vld [vmem:[%s1 + $0xa8] sm:$0xff]
      %v170 = vld [vmem:[%s1 + $0xb0] sm:$0xff]
      %v171 = vld [vmem:[%s1 + $0xb8] sm:$0xff]
      %v172 = vld [vmem:[%s1 + $0xc0] sm:$0xff]
      %v173 = vld [vmem:[%s1 + $0xc8] sm:$0xff]
      %v174 = vld [vmem:[%s1 + $0xd0] sm:$0xff]
      %v175 = vld [vmem:[%s1 + $0xd8] sm:$0xff]
      %v176 = vld [vmem:[%s1 + $0xe0] sm:$0xff]
      %v177 = vld [vmem:[%s1 + $0xe8] sm:$0xff]
      %v178 = vld [vmem:[%s1 + $0xf0] sm:$0xff]
      %v179 = vld [vmem:[%s1 + $0xf8] sm:$0xff]
      %v180 = vunpack.c.l.bf16 %v146
      %v181 = vmul.f32 %v180, %v180
      %v184 = vunpack.c.l.s4 1983009808
      %v185 = vunpack.c.0.s8 %v184
      %v186 = vlaneseq
      %v187 = vshrl.u32 %v186, 7
      %v188 = vsub.s32 %v185, %v187
      %v189 = vrot.slane %v181, %v188
      %v190 = vcombine.high %v189, %v189
      %v193 = vpack.c.bf16 %v189, %v189
      %v194 = vpack.c.bf16 %v190, %v190
      %v227 = vunpack.c.l.b16 %v148
      %v228 = vunpack.c.h.b16 %v148
      %v229 = vunpack.c.l.b16 %v149
      %v230 = vunpack.c.h.b16 %v149
      %v231 = vunpack.c.l.b16 %v150
      %v232 = vunpack.c.h.b16 %v150
      %v233 = vunpack.c.l.b16 %v151
      %v234 = vunpack.c.h.b16 %v151
      %v235 = vunpack.c.l.b16 %v152
      %v236 = vunpack.c.h.b16 %v152
      %v237 = vunpack.c.l.b16 %v153
      %v238 = vunpack.c.h.b16 %v153
      %v239 = vunpack.c.l.b16 %v154
      %v240 = vunpack.c.h.b16 %v154
      %v241 = vunpack.c.l.b16 %v155
      %v242 = vunpack.c.h.b16 %v155
      %v243 = vunpack.c.l.b16 %v156
      %v244 = vunpack.c.h.b16 %v156
      %v245 = vunpack.c.l.b16 %v157
      %v246 = vunpack.c.h.b16 %v157
      %v247 = vunpack.c.l.b16 %v158
      %v248 = vunpack.c.h.b16 %v158
      %v249 = vunpack.c.l.b16 %v159
      %v250 = vunpack.c.h.b16 %v159
      %v251 = vunpack.c.l.b16 %v160
      %v252 = vunpack.c.h.b16 %v160
      %v253 = vunpack.c.l.b16 %v161
      %v254 = vunpack.c.h.b16 %v161
      %v255 = vunpack.c.l.b16 %v162
      %v256 = vunpack.c.h.b16 %v162
      %v257 = vunpack.c.l.b16 %v163
      %v258 = vunpack.c.h.b16 %v163
      %v259 = vunpack.c.l.b16 %v164
      %v260 = vunpack.c.h.b16 %v164
      %v261 = vunpack.c.l.b16 %v165
      %v262 = vunpack.c.h.b16 %v165
      %v263 = vunpack.c.l.b16 %v166
      %v264 = vunpack.c.h.b16 %v166
      %v265 = vunpack.c.l.b16 %v167
      %v266 = vunpack.c.h.b16 %v167
      %v267 = vunpack.c.l.b16 %v168
      %v268 = vunpack.c.h.b16 %v168
      %v269 = vunpack.c.l.b16 %v169
      %v270 = vunpack.c.h.b16 %v169
      %v271 = vunpack.c.l.b16 %v170
      %v272 = vunpack.c.h.b16 %v170
      %v273 = vunpack.c.l.b16 %v171
      %v274 = vunpack.c.h.b16 %v171
      %v275 = vunpack.c.l.b16 %v172
      %v276 = vunpack.c.h.b16 %v172
      %v277 = vunpack.c.l.b16 %v173
      %v278 = vunpack.c.h.b16 %v173
      %v279 = vunpack.c.l.b16 %v174
      %v280 = vunpack.c.h.b16 %v174
      %v281 = vunpack.c.l.b16 %v175
      %v282 = vunpack.c.h.b16 %v175
      %v283 = vunpack.c.l.b16 %v176
      %v284 = vunpack.c.h.b16 %v176
      %v285 = vunpack.c.l.b16 %v177
      %v286 = vunpack.c.h.b16 %v177
      %v287 = vunpack.c.l.b16 %v178
      %v288 = vunpack.c.h.b16 %v178
      %v289 = vunpack.c.l.b16 %v179
      %v290 = vunpack.c.h.b16 %v179
      %v291 = vpack.c.b16 %v229, %v227
      %v292 = vpack.c.b16 %v230, %v228
      %v293 = vpack.c.b16 %v233, %v231
      %v294 = vpack.c.b16 %v234, %v232
      %v295 = vpack.c.b16 %v237, %v235
      %v296 = vpack.c.b16 %v238, %v236
      %v297 = vpack.c.b16 %v241, %v239
      %v298 = vpack.c.b16 %v242, %v240
      %v299 = vpack.c.b16 %v245, %v243
      %v300 = vpack.c.b16 %v246, %v244
      %v301 = vpack.c.b16 %v249, %v247
      %v302 = vpack.c.b16 %v250, %v248
      %v303 = vpack.c.b16 %v253, %v251
      %v304 = vpack.c.b16 %v254, %v252
      %v305 = vpack.c.b16 %v257, %v255
      %v306 = vpack.c.b16 %v258, %v256
      %v307 = vpack.c.b16 %v261, %v259
      %v308 = vpack.c.b16 %v262, %v260
      %v309 = vpack.c.b16 %v265, %v263
      %v310 = vpack.c.b16 %v266, %v264
      %v311 = vpack.c.b16 %v269, %v267
      %v312 = vpack.c.b16 %v270, %v268
      %v313 = vpack.c.b16 %v273, %v271
      %v314 = vpack.c.b16 %v274, %v272
      %v315 = vpack.c.b16 %v277, %v275
      %v316 = vpack.c.b16 %v278, %v276
      %v317 = vpack.c.b16 %v281, %v279
      %v318 = vpack.c.b16 %v282, %v280
      %v319 = vpack.c.b16 %v285, %v283
      %v320 = vpack.c.b16 %v286, %v284
      %v321 = vpack.c.b16 %v289, %v287
      %v322 = vpack.c.b16 %v290, %v288
      %355 = vmatprep.subr.bf16.mxu0 %v292
      %356 = vmatpush1.bf16.msra.mxu0 %v291
      %357 = vmatprep.subr.bf16.mxu0 %v294
      %358 = vmatpush1.bf16.msra.mxu0 %v293
      %359 = vmatprep.subr.bf16.mxu0 %v296
      %360 = vmatpush1.bf16.msra.mxu0 %v295
      %361 = vmatprep.subr.bf16.mxu0 %v298
      %362 = vmatpush1.bf16.msra.mxu0 %v297
      %363 = vmatprep.subr.bf16.mxu0 %v300
      %364 = vmatpush1.bf16.msra.mxu0 %v299
      %365 = vmatprep.subr.bf16.mxu0 %v302
      %366 = vmatpush1.bf16.msra.mxu0 %v301
      %367 = vmatprep.subr.bf16.mxu0 %v304
      %368 = vmatpush1.bf16.msra.mxu0 %v303
      %369 = vmatprep.subr.bf16.mxu0 %v306
      %370 = vmatpush1.bf16.msra.mxu0 %v305
      %371 = vmatprep.subr.bf16.mxu0 %v308
      %372 = vmatpush1.bf16.msra.mxu0 %v307
      %373 = vmatprep.subr.bf16.mxu0 %v310
      %374 = vmatpush1.bf16.msra.mxu0 %v309
      %375 = vmatprep.subr.bf16.mxu0 %v312
      %376 = vmatpush1.bf16.msra.mxu0 %v311
      %377 = vmatprep.subr.bf16.mxu0 %v314
      %378 = vmatpush1.bf16.msra.mxu0 %v313
      %379 = vmatprep.subr.bf16.mxu0 %v316
      %380 = vmatpush1.bf16.msra.mxu0 %v315
      %381 = vmatprep.subr.bf16.mxu0 %v318
      %382 = vmatpush1.bf16.msra.mxu0 %v317
      %383 = vmatprep.subr.bf16.mxu0 %v320
      %384 = vmatpush1.bf16.msra.mxu0 %v319
      %385 = vmatprep.subr.bf16.mxu0 %v322
      %386 = vmatpush1.bf16.msra.mxu0 %v321
      %387 = vmatprep.mubr.bf16.mxu0 %v194
      %388 = vmatmul.mubr.bf16.gmra.mrb[0].mxu0 %v193
      %v389 = vpop.f32.mrb[0].mxu0
      %v390 = vadd.f32 0.0, %v389
      %v391 = vpop.f32.mrb[0].mxu0
      %v392 = vadd.f32 0.0, %v391
      %v393 = vpop.f32.mrb[0].mxu0
      %v394 = vpop.f32.mrb[0].mxu0
      %395 = vdwg.mxu0
      %v396 = vmul.f32 %v390, 2e-05
      %v397 = vmul.f32 %v392, 2e-05
      %v398 = vadd.f32 %v396, 1.0
      %v399 = vadd.f32 %v397, 1.0
      %v400 = vlog2.pop %v398
      %v401 = vmul.f32 %v400, 0.6931472
      %v402 = vlog2.pop %v399
      %v403 = vmul.f32 %v402, 0.6931472
      %v404 = vmul.f32 %v401, -0.75
      %v405 = vmul.f32 %v403, -0.75
      %v406 = vmul.f32 %v404, 1.442695
      %v407 = vpow.pop %v406
      %v408 = vmul.f32 %v405, 1.442695
      %v409 = vpow.pop %v408
      %v412 = vcombine.low %v407, %v409
      %v414 = vunpack.c.l.s4 1983009808
      %v415 = vunpack.c.0.s8 %v414
      %v416 = vlaneseq
      %v417 = vshrl.u32 %v416, 7
      %v418 = vsub.s32 %v415, %v417
      %v419 = vrot.slane %v412, %v418
      %v421 = vmul.f32 %v180, %v419
      %v424 = vunpack.c.l.s4 1983009808
      %v425 = vunpack.c.0.s8 %v424
      %v426 = vlaneseq
      %v427 = vshrl.u32 %v426, 7
      %v428 = vsub.s32 %v425, %v427
      %v429 = vrot.slane %v421, %v428
      %v430 = vcombine.high %v429, %v429
      %v433 = vpack.c.bf16 %v429, %v429
      %v434 = vpack.c.bf16 %v430, %v430
      %v437 = vcombine.low %v433, %v434
      %v439 = vunpack.c.l.s4 1966171168
      %v440 = vunpack.c.0.s8 %v439
      %v441 = vlaneseq
      %v442 = vshrl.u32 %v441, 7
      %v443 = vsub.s32 %v440, %v442
      %v444 = vrot.slane %v437, %v443
      %v446 = vunpack.c.l.s4 1966171168
      %v447 = vunpack.c.0.s8 %v446
      %v448 = vlaneseq
      %v449 = vshrl.u32 %v448, 7
      %v450 = vsub.s32 %v447, %v449
      %v451 = vrot.slane %v444, %v450
      %453 = vst [vmem:[%s138] sm:$0x3] %v451
      %v454 = vunpack.c.l.bf16 %v147
      %v455 = vmul.f32 %v454, %v454
      %v458 = vunpack.c.l.s4 1983009808
      %v459 = vunpack.c.0.s8 %v458
      %v460 = vlaneseq
      %v461 = vshrl.u32 %v460, 7
      %v462 = vsub.s32 %v459, %v461
      %v463 = vrot.slane %v455, %v462
      %v464 = vcombine.high %v463, %v463
      %v467 = vpack.c.bf16 %v463, %v463
      %v468 = vpack.c.bf16 %v464, %v464
      %469 = vmatprep.subr.bf16.mxu0 %v292
      %470 = vmatpush1.bf16.msra.mxu0 %v291
      %471 = vmatprep.subr.bf16.mxu0 %v294
      %472 = vmatpush1.bf16.msra.mxu0 %v293
      %473 = vmatprep.subr.bf16.mxu0 %v296
      %474 = vmatpush1.bf16.msra.mxu0 %v295
      %475 = vmatprep.subr.bf16.mxu0 %v298
      %476 = vmatpush1.bf16.msra.mxu0 %v297
      %477 = vmatprep.subr.bf16.mxu0 %v300
      %478 = vmatpush1.bf16.msra.mxu0 %v299
      %479 = vmatprep.subr.bf16.mxu0 %v302
      %480 = vmatpush1.bf16.msra.mxu0 %v301
      %481 = vmatprep.subr.bf16.mxu0 %v304
      %482 = vmatpush1.bf16.msra.mxu0 %v303
      %483 = vmatprep.subr.bf16.mxu0 %v306
      %484 = vmatpush1.bf16.msra.mxu0 %v305
      %485 = vmatprep.subr.bf16.mxu0 %v308
      %486 = vmatpush1.bf16.msra.mxu0 %v307
      %487 = vmatprep.subr.bf16.mxu0 %v310
      %488 = vmatpush1.bf16.msra.mxu0 %v309
      %489 = vmatprep.subr.bf16.mxu0 %v312
      %490 = vmatpush1.bf16.msra.mxu0 %v311
      %491 = vmatprep.subr.bf16.mxu0 %v314
      %492 = vmatpush1.bf16.msra.mxu0 %v313
      %493 = vmatprep.subr.bf16.mxu0 %v316
      %494 = vmatpush1.bf16.msra.mxu0 %v315
      %495 = vmatprep.subr.bf16.mxu0 %v318
      %496 = vmatpush1.bf16.msra.mxu0 %v317
      %497 = vmatprep.subr.bf16.mxu0 %v320
      %498 = vmatpush1.bf16.msra.mxu0 %v319
      %499 = vmatprep.subr.bf16.mxu0 %v322
      %500 = vmatpush1.bf16.msra.mxu0 %v321
      %501 = vmatprep.mubr.bf16.mxu0 %v468
      %502 = vmatmul.mubr.bf16.gmra.mrb[0].mxu0 %v467
      %v503 = vpop.f32.mrb[0].mxu0
      %v504 = vadd.f32 0.0, %v503
      %v505 = vpop.f32.mrb[0].mxu0
      %v506 = vadd.f32 0.0, %v505
      %v507 = vpop.f32.mrb[0].mxu0
      %v508 = vpop.f32.mrb[0].mxu0
      %509 = vdwg.mxu0
      %v510 = vmul.f32 %v504, 2e-05
      %v511 = vmul.f32 %v506, 2e-05
      %v512 = vadd.f32 %v510, 1.0
      %v513 = vadd.f32 %v511, 1.0
      %v514 = vlog2.pop %v512
      %v515 = vmul.f32 %v514, 0.6931472
      %v516 = vlog2.pop %v513
      %v517 = vmul.f32 %v516, 0.6931472
      %v518 = vmul.f32 %v515, -0.75
      %v519 = vmul.f32 %v517, -0.75
      %v520 = vmul.f32 %v518, 1.442695
      %v521 = vpow.pop %v520
      %v522 = vmul.f32 %v519, 1.442695
      %v523 = vpow.pop %v522
      %v526 = vcombine.low %v521, %v523
      %v528 = vunpack.c.l.s4 1983009808
      %v529 = vunpack.c.0.s8 %v528
      %v530 = vlaneseq
      %v531 = vshrl.u32 %v530, 7
      %v532 = vsub.s32 %v529, %v531
      %v533 = vrot.slane %v526, %v532
      %v535 = vmul.f32 %v454, %v533
      %v538 = vunpack.c.l.s4 1983009808
      %v539 = vunpack.c.0.s8 %v538
      %v540 = vlaneseq
      %v541 = vshrl.u32 %v540, 7
      %v542 = vsub.s32 %v539, %v541
      %v543 = vrot.slane %v535, %v542
      %v544 = vcombine.high %v543, %v543
      %v547 = vpack.c.bf16 %v543, %v543
      %v548 = vpack.c.bf16 %v544, %v544
      %v551 = vcombine.low %v547, %v548
      %v553 = vunpack.c.l.s4 1966171168
      %v554 = vunpack.c.0.s8 %v553
      %v555 = vlaneseq
      %v556 = vshrl.u32 %v555, 7
      %v557 = vsub.s32 %v554, %v556
      %v558 = vrot.slane %v551, %v557
      %v560 = vunpack.c.l.s4 1966171168
      %v561 = vunpack.c.0.s8 %v560
      %v562 = vlaneseq
      %v563 = vshrl.u32 %v562, 7
      %v564 = vsub.s32 %v561, %v563
      %v565 = vrot.slane %v558, %v564
      %s567 = scalar_lea.vmem %s138, 2
      %568 = vst [vmem:[%s567] sm:$0x3] %v565
      %p569 = scmp.lt.s32.totalorder %s13, 1
      %s570 = scalar_select %p569, %s13, 1
      %s571 = smul.addr %s570, 4
      %s572 = scalar_lea.vmem %s2, %s571
      // Predicated region
      $region29: #{itracker_forward.8} parent=27 // pred_check
        %p573 = pneg %p78
      $region30: #{itracker_forward.8} parent=27 // pred_check_branch
        %575 = sbr.rel (%p573) target = $region32
      $region31: #{itracker_forward.8} parent=27 // pred_region
        _
      $region32: #{itracker_forward.8} parent=27 // pred_fallthru
        _
    $region28: #{itracker_forward.8} parent=5 // pred_fallthru
      _
    %p576 = scmp.le.s32.totalorder 2, %s8
    // Predicated region
    $region33: #{itracker_forward.8} parent=5 // pred_check
      %p577 = pneg %p576
    $region34: #{itracker_forward.8} parent=5 // pred_check_branch
      %579 = sbr.rel (%p577) target = $region36
    $region35: #{itracker_forward.8} parent=5 // pred_region
      %s580 = ssub.s32 %s8, 2
      // Predicated region
      $region37: #{itracker_forward.8} parent=35 // pred_check
        %p581 = pneg %p84
      $region38: #{itracker_forward.8} parent=35 // pred_check_branch
        %583 = sbr.rel (%p581) target = $region40
      $region39: #{itracker_forward.8} parent=35 // pred_region
        %p584 = scmp.lt.s32.totalorder %s14, 1
        %s585 = scalar_select %p584, %s14, 1
        %s586 = smul.addr %s585, 4
        %s587 = scalar_lea.vmem %s2, %s586
      $region40: #{itracker_forward.8} parent=35 // pred_fallthru
        _
    $region36: #{itracker_forward.8} parent=5 // pred_fallthru
      _
  $region6: #{itracker_forward.8} parent=0 // loop_footer
    %s12 = sadd.s32 1, %s8
  $region7: #{itracker_forward.8} parent=0 // loop_footer_branch
    %7 = sbr.rel target = $region3
  $region8: #{itracker_forward.8} parent=0 // loop_exit
    _

// kernel: itracker_forward.9
$region0: #{itracker_forward.9}
  #allocation0 [shape = 'u32[]', space=smem, size = 0x4, offset = 0x4, fixed_abs, tag = 'smem constant byte address 0x4 - core index']
  #allocation1 [shape = 'u32[144,128]{1,0:T(1,128)}', space=vmem, size = 0x12000, scoped, tag = 'internal scratch']
  %s0 = inlined_call_operand.vmem [shape: bf16[2,16,2304], index: 0, kind: input, shape index: {}]
  %s1 = inlined_call_operand.vmem [shape: bf16[2304,384], index: 1, kind: input, shape index: {}]
  %s2 = inlined_call_operand.vmem [shape: f32[1,384], index: 2, kind: input, shape index: {}]
  %s3 = inlined_call_operand.vmem [shape: bf16[384,128], index: 3, kind: input, shape index: {}]
  %s4 = inlined_call_operand.vmem [shape: f32[1,128], index: 4, kind: input, shape index: {}]
  %s5 = inlined_call_operand.vmem [shape: f32[2,16,128], index: 5, kind: output, shape index: {}]
  %s6 = sld [smem:[#allocation0]]
  $region53: #{itracker_forward.9} parent=0
    _
  %s8 = ssub.s32 1, %s6
  %s9 = scalar_select 0, %s8, %s6
  loop: start=0, step=1, limit=4
  $region2: #{itracker_forward.9} parent=0 // loop_pre_header
    _
  $region3: #{itracker_forward.9} parent=0 // loop_header
    %s11 = sphi 0, %s15
    %p12 = scmp.ge.s32.totalorder %s11, 4
    %s18 = sphi 0, %s30
    %s19 = sphi 0, %s26
    %s20 = sphi 0, %s18
    %s21 = sphi 0, %s19
    %s22 = sphi 0, %s20
    %s23 = sphi 0, %s21
    %s35 = sphi 0, %s37
    %s38 = sphi 0, %s35
    %s39 = sphi 0, %s38
    %s55 = sphi 0, %s39
    %s59 = sphi 0, %s59
    %s61 = sphi 0, %s59
    %s62 = sphi 0, %s61
    %s76 = sphi 0, %s62
    %s80 = sphi 0, %s80
    %s82 = sphi 0, %s80
    %s83 = sphi 0, %s82
    %s97 = sphi 0, %s83
    %s101 = sphi 0, %s101
    %s103 = sphi 0, %s101
    %s104 = sphi 0, %s103
    %s118 = sphi 0, %s104
    %s122 = sphi 0, %s122
    %s124 = sphi 0, %s122
    %s125 = sphi 0, %s124
    %s139 = sphi 0, %s125
    %s147 = sphi 0, %s149
    %s150 = sphi 0, %s147
    %s151 = sphi 0, %s150
    %s167 = sphi 0, %s151
  $region4: #{itracker_forward.9} parent=0 // loop_header_branch
    %14 = sbr.rel (%p12) target = $region8
  $region5: #{itracker_forward.9} parent=0 // loop_body
    %s16 = ssub.s32 %s11, 1
    %s17 = ssub.s32 %s11, 2
    %s24 = sadd.s32 1, %s19
    %p25 = scmp.ge.s32.totalorder %s24, 1
    %s26 = scalar_select %p25, 0, %s24
    %s27 = sadd.s32 1, %s18
    %s28 = scalar_select %p25, %s27, %s18
    %p29 = scmp.ge.s32.totalorder %s28, 2
    %s30 = scalar_select %p29, 0, %s28
    %s31 = ssub.s32 %s18, %s30
    %s32 = ssub.s32 %s19, %s26
    %s33 = sor.u32 %s31, %s32
    %p34 = scmp.eq.s32.totalorder %s33, 0
    %s36 = sadd.s32 %s35, 1
    %s37 = scalar_select %p34, %s35, %s36
    %p40 = pneg %p34
    %p41 = scmp.eq.s32.totalorder %s11, 1
    %p42 = por %p40, %p41
    %p43 = scmp.ne.s32.totalorder %s35, %s38
    %p44 = scmp.eq.s32.totalorder %s11, 0
    %p45 = por %p43, %p44
    %p46 = scmp.ne.s32.totalorder %s35, %s38
    %p47 = scmp.eq.s32.totalorder %s16, 1
    %p48 = por %p46, %p47
    %p49 = scmp.ne.s32.totalorder %s38, %s39
    %p50 = scmp.eq.s32.totalorder %s16, 0
    %p51 = por %p49, %p50
    %p52 = scmp.ne.s32.totalorder %s38, %s39
    %p53 = scmp.eq.s32.totalorder %s17, 1
    %p54 = por %p52, %p53
    %p56 = scmp.ne.s32.totalorder %s39, %s55
    %p57 = scmp.eq.s32.totalorder %s17, 0
    %p58 = por %p56, %p57
    %s60 = sadd.s32 %s59, 1
    %p63 = scmp.eq.s32.totalorder %s11, 1
    %p64 = scmp.ne.s32.totalorder %s59, %s61
    %p65 = scmp.eq.s32.totalorder %s11, 0
    %p66 = por %p64, %p65
    %p67 = scmp.ne.s32.totalorder %s59, %s61
    %p68 = scmp.eq.s32.totalorder %s16, 1
    %p69 = por %p67, %p68
    %p70 = scmp.ne.s32.totalorder %s61, %s62
    %p71 = scmp.eq.s32.totalorder %s16, 0
    %p72 = por %p70, %p71
    %p73 = scmp.ne.s32.totalorder %s61, %s62
    %p74 = scmp.eq.s32.totalorder %s17, 1
    %p75 = por %p73, %p74
    %p77 = scmp.ne.s32.totalorder %s62, %s76
    %p78 = scmp.eq.s32.totalorder %s17, 0
    %p79 = por %p77, %p78
    %s81 = sadd.s32 %s80, 1
    %p84 = scmp.eq.s32.totalorder %s11, 1
    %p85 = scmp.ne.s32.totalorder %s80, %s82
    %p86 = scmp.eq.s32.totalorder %s11, 0
    %p87 = por %p85, %p86
    %p88 = scmp.ne.s32.totalorder %s80, %s82
    %p89 = scmp.eq.s32.totalorder %s16, 1
    %p90 = por %p88, %p89
    %p91 = scmp.ne.s32.totalorder %s82, %s83
    %p92 = scmp.eq.s32.totalorder %s16, 0
    %p93 = por %p91, %p92
    %p94 = scmp.ne.s32.totalorder %s82, %s83
    %p95 = scmp.eq.s32.totalorder %s17, 1
    %p96 = por %p94, %p95
    %p98 = scmp.ne.s32.totalorder %s83, %s97
    %p99 = scmp.eq.s32.totalorder %s17, 0
    %p100 = por %p98, %p99
    %s102 = sadd.s32 %s101, 1
    %p105 = scmp.eq.s32.totalorder %s11, 1
    %p106 = scmp.ne.s32.totalorder %s101, %s103
    %p107 = scmp.eq.s32.totalorder %s11, 0
    %p108 = por %p106, %p107
    %p109 = scmp.ne.s32.totalorder %s101, %s103
    %p110 = scmp.eq.s32.totalorder %s16, 1
    %p111 = por %p109, %p110
    %p112 = scmp.ne.s32.totalorder %s103, %s104
    %p113 = scmp.eq.s32.totalorder %s16, 0
    %p114 = por %p112, %p113
    %p115 = scmp.ne.s32.totalorder %s103, %s104
    %p116 = scmp.eq.s32.totalorder %s17, 1
    %p117 = por %p115, %p116
    %p119 = scmp.ne.s32.totalorder %s104, %s118
    %p120 = scmp.eq.s32.totalorder %s17, 0
    %p121 = por %p119, %p120
    %s123 = sadd.s32 %s122, 1
    %p126 = scmp.eq.s32.totalorder %s11, 1
    %p127 = scmp.ne.s32.totalorder %s122, %s124
    %p128 = scmp.eq.s32.totalorder %s11, 0
    %p129 = por %p127, %p128
    %p130 = scmp.ne.s32.totalorder %s122, %s124
    %p131 = scmp.eq.s32.totalorder %s16, 1
    %p132 = por %p130, %p131
    %p133 = scmp.ne.s32.totalorder %s124, %s125
    %p134 = scmp.eq.s32.totalorder %s16, 0
    %p135 = por %p133, %p134
    %p136 = scmp.ne.s32.totalorder %s124, %s125
    %p137 = scmp.eq.s32.totalorder %s17, 1
    %p138 = por %p136, %p137
    %p140 = scmp.ne.s32.totalorder %s125, %s139
    %p141 = scmp.eq.s32.totalorder %s17, 0
    %p142 = por %p140, %p141
    %s143 = ssub.s32 %s18, %s30
    %s144 = ssub.s32 %s19, %s26
    %s145 = sor.u32 %s143, %s144
    %p146 = scmp.eq.s32.totalorder %s145, 0
    %s148 = sadd.s32 %s147, 1
    %s149 = scalar_select %p146, %s147, %s148
    %p152 = pneg %p146
    %p153 = scmp.eq.s32.totalorder %s11, 1
    %p154 = por %p152, %p153
    %p155 = scmp.ne.s32.totalorder %s147, %s150
    %p156 = scmp.eq.s32.totalorder %s11, 0
    %p157 = por %p155, %p156
    %p158 = scmp.ne.s32.totalorder %s147, %s150
    %p159 = scmp.eq.s32.totalorder %s16, 1
    %p160 = por %p158, %p159
    %p161 = scmp.ne.s32.totalorder %s150, %s151
    %p162 = scmp.eq.s32.totalorder %s16, 0
    %p163 = por %p161, %p162
    %p164 = scmp.ne.s32.totalorder %s150, %s151
    %p165 = scmp.eq.s32.totalorder %s17, 1
    %p166 = por %p164, %p165
    %p168 = scmp.ne.s32.totalorder %s151, %s167
    %p169 = scmp.eq.s32.totalorder %s17, 0
    %p170 = por %p168, %p169
    %p171 = scmp.le.s32.totalorder 1, %s11
    %p172 = scmp.lt.s32.totalorder %s11, 3
    %p173 = pnand %p171, %p172
    %p174 = pneg %p173
    // Predicated region
    $region9: #{itracker_forward.9} parent=5 // pred_check
      _
    $region10: #{itracker_forward.9} parent=5 // pred_check_branch
      %176 = sbr.rel (%p173) target = $region12
    $region11: #{itracker_forward.9} parent=5 // pred_region
      %s177 = ssub.s32 %s11, 1
      // Predicated region
      $region13: #{itracker_forward.9} parent=11 // pred_check
        %p178 = pneg %p72
      $region14: #{itracker_forward.9} parent=11 // pred_check_branch
        %180 = sbr.rel (%p178) target = $region16
      $region15: #{itracker_forward.9} parent=11 // pred_region
        _
      $region16: #{itracker_forward.9} parent=11 // pred_fallthru
        _
      // Predicated region
      $region17: #{itracker_forward.9} parent=11 // pred_check
        %p181 = pneg %p93
      $region18: #{itracker_forward.9} parent=11 // pred_check_branch
        %183 = sbr.rel (%p181) target = $region20
      $region19: #{itracker_forward.9} parent=11 // pred_region
        _
      $region20: #{itracker_forward.9} parent=11 // pred_fallthru
        _
      // Predicated region
      $region21: #{itracker_forward.9} parent=11 // pred_check
        %p184 = pneg %p114
      $region22: #{itracker_forward.9} parent=11 // pred_check_branch
        %186 = sbr.rel (%p184) target = $region24
      $region23: #{itracker_forward.9} parent=11 // pred_region
        _
      $region24: #{itracker_forward.9} parent=11 // pred_fallthru
        _
      // Predicated region
      $region25: #{itracker_forward.9} parent=11 // pred_check
        %p187 = pneg %p135
      $region26: #{itracker_forward.9} parent=11 // pred_check_branch
        %189 = sbr.rel (%p187) target = $region28
      $region27: #{itracker_forward.9} parent=11 // pred_region
        _
      $region28: #{itracker_forward.9} parent=11 // pred_fallthru
        _
    $region12: #{itracker_forward.9} parent=5 // pred_fallthru
      _
    %p190 = scmp.lt.s32.totalorder %s11, 2
    // Predicated region
    $region29: #{itracker_forward.9} parent=5 // pred_check
      %p191 = pneg %p190
    $region30: #{itracker_forward.9} parent=5 // pred_check_branch
      %193 = sbr.rel (%p191) target = $region32
    $region31: #{itracker_forward.9} parent=5 // pred_region
      // Predicated region
      $region33: #{itracker_forward.9} parent=31 // pred_check
        %p194 = pneg %p45
      $region34: #{itracker_forward.9} parent=31 // pred_check_branch
        %196 = sbr.rel (%p194) target = $region36
      $region35: #{itracker_forward.9} parent=31 // pred_region
        %s197 = smul.u32 2, %s19
        %p198 = scmp.lt.s32.totalorder %s18, 1
        %s199 = scalar_select %p198, %s18, 1
        %p200 = scmp.lt.s32.totalorder %s197, 1
        %s201 = scalar_select %p200, %s197, 1
        %s202 = smul.addr %s201, 18
        %s203 = smul.addr %s199, 36
        %s204 = sadd.s32 %s202, %s203
        %s205 = smul.addr %s204, 4
        %s206 = scalar_lea.vmem %s0, %s205
        %s207 = smul.u32 2, %s19
      $region36: #{itracker_forward.9} parent=31 // pred_fallthru
        _
    $region32: #{itracker_forward.9} parent=5 // pred_fallthru
      _
    %p208 = scmp.le.s32.totalorder 1, %s11
    %p209 = scmp.lt.s32.totalorder %s11, 3
    %p210 = pnand %p208, %p209
    %p211 = pneg %p210
    // Predicated region
    $region37: #{itracker_forward.9} parent=5 // pred_check
      _
    $region38: #{itracker_forward.9} parent=5 // pred_check_branch
      %213 = sbr.rel (%p210) target = $region40
    $region39: #{itracker_forward.9} parent=5 // pred_region
      %s214 = ssub.s32 %s11, 1
      %s215 = smul.u32 2, %s21
      %p216 = scmp.lt.s32.totalorder %s20, 1
      %s217 = scalar_select %p216, %s20, 1
      %p218 = scmp.lt.s32.totalorder %s215, 1
      %s219 = scalar_select %p218, %s215, 1
      %s220 = smul.addr %s219, 18
      %s221 = smul.addr %s217, 36
      %s222 = sadd.s32 %s220, %s221
      %s223 = smul.addr %s222, 4
      %s224 = scalar_lea.vmem %s0, %s223
      %p225 = pneg %p51
      %p226 = pneg %p48
      %p227 = pneg %p72
      %p228 = pneg %p69
      %p229 = pneg %p93
      %p230 = pneg %p90
      %p231 = pneg %p114
      %p232 = pneg %p111
      %p233 = pneg %p135
      %p234 = pneg %p132
      %p235 = pneg %p163
      %p236 = pneg %p160
      %s237 = smul.u32 2, %s21
      %p238 = scmp.lt.s32.totalorder %s20, 1
      %s239 = scalar_select %p238, %s20, 1
      %p240 = scmp.lt.s32.totalorder %s237, 1
      %s241 = scalar_select %p240, %s237, 1
      %s242 = smul.addr %s239, 2
      %s243 = sadd.s32 %s241, %s242
      %s244 = smul.addr %s243, 8
      %s245 = scalar_lea.vmem %s5, %s244
      %s246 = smul.u32 2, %s21
      %p247 = scmp.lt.s32.totalorder %s20, 1
      %s248 = scalar_select %p247, %s20, 1
      %p249 = scmp.lt.s32.totalorder %s246, 1
      %s250 = scalar_select %p249, %s246, 1
      %s251 = smul.addr %s250, 18
      %s252 = smul.addr %s248, 36
      %s253 = sadd.s32 %s251, %s252
      %s254 = smul.addr %s253, 4
      %s255 = scalar_lea.vmem %s0, %s254
      %s256 = smul.u32 2, %s21
      %s257 = smul.u32 2, %s21
      %p258 = scmp.lt.s32.totalorder %s20, 1
      %s259 = scalar_select %p258, %s20, 1
      %p260 = scmp.lt.s32.totalorder %s257, 1
      %s261 = scalar_select %p260, %s257, 1
      %s262 = smul.addr %s259, 2
      %s263 = sadd.s32 %s261, %s262
      %s264 = smul.addr %s263, 8
      %s265 = scalar_lea.vmem %s5, %s264
      %s266 = smul.u32 2, %s21
      %v268 = vld [vmem:[%s255] sm:$0xff]
      %v269 = vld [vmem:[%s255 + $0x8] sm:$0xff]
      %v270 = vld [vmem:[%s255 + $0x10] sm:$0xff]
      %v271 = vld [vmem:[%s255 + $0x18] sm:$0xff]
      %v272 = vld [vmem:[%s255 + $0x20] sm:$0xff]
      %v273 = vld [vmem:[%s255 + $0x28] sm:$0xff]
      %v274 = vld [vmem:[%s255 + $0x30] sm:$0xff]
      %v275 = vld [vmem:[%s255 + $0x38] sm:$0xff]
      %v276 = vld [vmem:[%s255 + $0x40] sm:$0xff]
      %v277 = vld [vmem:[%s255 + $0x48] sm:$0xff]
      %v278 = vld [vmem:[%s255 + $0x50] sm:$0xff]
      %v279 = vld [vmem:[%s255 + $0x58] sm:$0xff]
      %v280 = vld [vmem:[%s255 + $0x60] sm:$0xff]
      %v281 = vld [vmem:[%s255 + $0x68] sm:$0xff]
      %v282 = vld [vmem:[%s255 + $0x70] sm:$0xff]
      %v283 = vld [vmem:[%s255 + $0x78] sm:$0xff]
      %v284 = vld [vmem:[%s255 + $0x80] sm:$0xff]
      %v285 = vld [vmem:[%s255 + $0x88] sm:$0xff]
      %v286 = vld [vmem:[%s1] sm:$0xff]
      %v287 = vld [vmem:[%s1 + $0x8] sm:$0xf]
      %v288 = vld [vmem:[%s1 + $0xc] sm:$0xff]
      %v289 = vld [vmem:[%s1 + $0x14] sm:$0xf]
      %v290 = vld [vmem:[%s1 + $0x18] sm:$0xff]
      %v291 = vld [vmem:[%s1 + $0x20] sm:$0xf]
      %v292 = vld [vmem:[%s1 + $0x24] sm:$0xff]
      %v293 = vld [vmem:[%s1 + $0x2c] sm:$0xf]
      %v294 = vld [vmem:[%s1 + $0x30] sm:$0xff]
      %v295 = vld [vmem:[%s1 + $0x38] sm:$0xf]
      %v296 = vld [vmem:[%s1 + $0x3c] sm:$0xff]
      %v297 = vld [vmem:[%s1 + $0x44] sm:$0xf]
      %v298 = vld [vmem:[%s1 + $0x48] sm:$0xff]
      %v299 = vld [vmem:[%s1 + $0x50] sm:$0xf]
      %v300 = vld [vmem:[%s1 + $0x54] sm:$0xff]
      %v301 = vld [vmem:[%s1 + $0x5c] sm:$0xf]
      %v302 = vld [vmem:[%s1 + $0x60] sm:$0xff]
      %v303 = vld [vmem:[%s1 + $0x68] sm:$0xf]
      %v304 = vld [vmem:[%s1 + $0x6c] sm:$0xff]
      %v305 = vld [vmem:[%s1 + $0x74] sm:$0xf]
      %v306 = vld [vmem:[%s1 + $0x78] sm:$0xff]
      %v307 = vld [vmem:[%s1 + $0x80] sm:$0xf]
      %v308 = vld [vmem:[%s1 + $0x84] sm:$0xff]
      %v309 = vld [vmem:[%s1 + $0x8c] sm:$0xf]
      %v310 = vld [vmem:[%s1 + $0x90] sm:$0xff]
      %v311 = vld [vmem:[%s1 + $0x98] sm:$0xf]
      %v312 = vld [vmem:[%s1 + $0x9c] sm:$0xff]
      %v313 = vld [vmem:[%s1 + $0xa4] sm:$0xf]
      %v314 = vld [vmem:[%s1 + $0xa8] sm:$0xff]
      %v315 = vld [vmem:[%s1 + $0xb0] sm:$0xf]
      %v316 = vld [vmem:[%s1 + $0xb4] sm:$0xff]
      %v317 = vld [vmem:[%s1 + $0xbc] sm:$0xf]
      %v318 = vld [vmem:[%s1 + $0xc0] sm:$0xff]
      %v319 = vld [vmem:[%s1 + $0xc8] sm:$0xf]
      %v320 = vld [vmem:[%s1 + $0xcc] sm:$0xff]
      %v321 = vld [vmem:[%s1 + $0xd4] sm:$0xf]
      %v322 = vld [vmem:[%s1 + $0xd8] sm:$0xff]
      %v323 = vld [vmem:[%s1 + $0xe0] sm:$0xf]
      %v324 = vld [vmem:[%s1 + $0xe4] sm:$0xff]
      %v325 = vld [vmem:[%s1 + $0xec] sm:$0xf]
      %v326 = vld [vmem:[%s1 + $0xf0] sm:$0xff]
      %v327 = vld [vmem:[%s1 + $0xf8] sm:$0xf]
      %v328 = vld [vmem:[%s1 + $0xfc] sm:$0xff]
      %v329 = vld [vmem:[%s1 + $0x104] sm:$0xf]
      %v330 = vld [vmem:[%s1 + $0x108] sm:$0xff]
      %v331 = vld [vmem:[%s1 + $0x110] sm:$0xf]
      %v332 = vld [vmem:[%s1 + $0x114] sm:$0xff]
      %v333 = vld [vmem:[%s1 + $0x11c] sm:$0xf]
      %v334 = vld [vmem:[%s1 + $0x120] sm:$0xff]
      %v335 = vld [vmem:[%s1 + $0x128] sm:$0xf]
      %v336 = vld [vmem:[%s1 + $0x12c] sm:$0xff]
      %v337 = vld [vmem:[%s1 + $0x134] sm:$0xf]
      %v338 = vld [vmem:[%s1 + $0x138] sm:$0xff]
      %v339 = vld [vmem:[%s1 + $0x140] sm:$0xf]
      %v340 = vld [vmem:[%s1 + $0x144] sm:$0xff]
      %v341 = vld [vmem:[%s1 + $0x14c] sm:$0xf]
      %v342 = vld [vmem:[%s1 + $0x150] sm:$0xff]
      %v343 = vld [vmem:[%s1 + $0x158] sm:$0xf]
      %v344 = vld [vmem:[%s1 + $0x15c] sm:$0xff]
      %v345 = vld [vmem:[%s1 + $0x164] sm:$0xf]
      %v346 = vld [vmem:[%s1 + $0x168] sm:$0xff]
      %v347 = vld [vmem:[%s1 + $0x170] sm:$0xf]
      %v348 = vld [vmem:[%s1 + $0x174] sm:$0xff]
      %v349 = vld [vmem:[%s1 + $0x17c] sm:$0xf]
      %v350 = vld [vmem:[%s1 + $0x180] sm:$0xff]
      %v351 = vld [vmem:[%s1 + $0x188] sm:$0xf]
      %v352 = vld [vmem:[%s1 + $0x18c] sm:$0xff]
      %v353 = vld [vmem:[%s1 + $0x194] sm:$0xf]
      %v354 = vld [vmem:[%s1 + $0x198] sm:$0xff]
      %v355 = vld [vmem:[%s1 + $0x1a0] sm:$0xf]
      %v356 = vld [vmem:[%s1 + $0x1a4] sm:$0xff]
      %v357 = vld [vmem:[%s1 + $0x1ac] sm:$0xf]
      %v358 = vld [vmem:[%s1 + $0x1b0] sm:$0xff]
      %v359 = vld [vmem:[%s1 + $0x1b8] sm:$0xf]
      %v360 = vld [vmem:[%s1 + $0x1bc] sm:$0xff]
      %v361 = vld [vmem:[%s1 + $0x1c4] sm:$0xf]
      %v362 = vld [vmem:[%s1 + $0x1c8] sm:$0xff]
      %v363 = vld [vmem:[%s1 + $0x1d0] sm:$0xf]
      %v364 = vld [vmem:[%s1 + $0x1d4] sm:$0xff]
      %v365 = vld [vmem:[%s1 + $0x1dc] sm:$0xf]
      %v366 = vld [vmem:[%s1 + $0x1e0] sm:$0xff]
      %v367 = vld [vmem:[%s1 + $0x1e8] sm:$0xf]
      %v368 = vld [vmem:[%s1 + $0x1ec] sm:$0xff]
      %v369 = vld [vmem:[%s1 + $0x1f4] sm:$0xf]
      %v370 = vld [vmem:[%s1 + $0x1f8] sm:$0xff]
      %v371 = vld [vmem:[%s1 + $0x200] sm:$0xf]
      %v372 = vld [vmem:[%s1 + $0x204] sm:$0xff]
      %v373 = vld [vmem:[%s1 + $0x20c] sm:$0xf]
      %v374 = vld [vmem:[%s1 + $0x210] sm:$0xff]
      %v375 = vld [vmem:[%s1 + $0x218] sm:$0xf]
      %v376 = vld [vmem:[%s1 + $0x21c] sm:$0xff]
      %v377 = vld [vmem:[%s1 + $0x224] sm:$0xf]
      %v378 = vld [vmem:[%s1 + $0x228] sm:$0xff]
      %v379 = vld [vmem:[%s1 + $0x230] sm:$0xf]
      %v380 = vld [vmem:[%s1 + $0x234] sm:$0xff]
      %v381 = vld [vmem:[%s1 + $0x23c] sm:$0xf]
      %v382 = vld [vmem:[%s1 + $0x240] sm:$0xff]
      %v383 = vld [vmem:[%s1 + $0x248] sm:$0xf]
      %v384 = vld [vmem:[%s1 + $0x24c] sm:$0xff]
      %v385 = vld [vmem:[%s1 + $0x254] sm:$0xf]
      %v386 = vld [vmem:[%s1 + $0x258] sm:$0xff]
      %v387 = vld [vmem:[%s1 + $0x260] sm:$0xf]
      %v388 = vld [vmem:[%s1 + $0x264] sm:$0xff]
      %v389 = vld [vmem:[%s1 + $0x26c] sm:$0xf]
      %v390 = vld [vmem:[%s1 + $0x270] sm:$0xff]
      %v391 = vld [vmem:[%s1 + $0x278] sm:$0xf]
      %v392 = vld [vmem:[%s1 + $0x27c] sm:$0xff]
      %v393 = vld [vmem:[%s1 + $0x284] sm:$0xf]
      %v394 = vld [vmem:[%s1 + $0x288] sm:$0xff]
      %v395 = vld [vmem:[%s1 + $0x290] sm:$0xf]
      %v396 = vld [vmem:[%s1 + $0x294] sm:$0xff]
      %v397 = vld [vmem:[%s1 + $0x29c] sm:$0xf]
      %v398 = vld [vmem:[%s1 + $0x2a0] sm:$0xff]
      %v399 = vld [vmem:[%s1 + $0x2a8] sm:$0xf]
      %v400 = vld [vmem:[%s1 + $0x2ac] sm:$0xff]
      %v401 = vld [vmem:[%s1 + $0x2b4] sm:$0xf]
      %v402 = vld [vmem:[%s1 + $0x2b8] sm:$0xff]
      %v403 = vld [vmem:[%s1 + $0x2c0] sm:$0xf]
      %v404 = vld [vmem:[%s1 + $0x2c4] sm:$0xff]
      %v405 = vld [vmem:[%s1 + $0x2cc] sm:$0xf]
      %v406 = vld [vmem:[%s1 + $0x2d0] sm:$0xff]
      %v407 = vld [vmem:[%s1 + $0x2d8] sm:$0xf]
      %v408 = vld [vmem:[%s1 + $0x2dc] sm:$0xff]
      %v409 = vld [vmem:[%s1 + $0x2e4] sm:$0xf]
      %v410 = vld [vmem:[%s1 + $0x2e8] sm:$0xff]
      %v411 = vld [vmem:[%s1 + $0x2f0] sm:$0xf]
      %v412 = vld [vmem:[%s1 + $0x2f4] sm:$0xff]
      %v413 = vld [vmem:[%s1 + $0x2fc] sm:$0xf]
      %v414 = vld [vmem:[%s1 + $0x300] sm:$0xff]
      %v415 = vld [vmem:[%s1 + $0x308] sm:$0xf]
      %v416 = vld [vmem:[%s1 + $0x30c] sm:$0xff]
      %v417 = vld [vmem:[%s1 + $0x314] sm:$0xf]
      %v418 = vld [vmem:[%s1 + $0x318] sm:$0xff]
      %v419 = vld [vmem:[%s1 + $0x320] sm:$0xf]
      %v420 = vld [vmem:[%s1 + $0x324] sm:$0xff]
      %v421 = vld [vmem:[%s1 + $0x32c] sm:$0xf]
      %v422 = vld [vmem:[%s1 + $0x330] sm:$0xff]
      %v423 = vld [vmem:[%s1 + $0x338] sm:$0xf]
      %v424 = vld [vmem:[%s1 + $0x33c] sm:$0xff]
      %v425 = vld [vmem:[%s1 + $0x344] sm:$0xf]
      %v426 = vld [vmem:[%s1 + $0x348] sm:$0xff]
      %v427 = vld [vmem:[%s1 + $0x350] sm:$0xf]
      %v428 = vld [vmem:[%s1 + $0x354] sm:$0xff]
      %v429 = vld [vmem:[%s1 + $0x35c] sm:$0xf]
      %v430 = vld [vmem:[%s1 + $0x360] sm:$0xff]
      %v431 = vld [vmem:[%s1 + $0x368] sm:$0xf]
      %v432 = vld [vmem:[%s1 + $0x36c] sm:$0xff]
      %v433 = vld [vmem:[%s1 + $0x374] sm:$0xf]
      %v434 = vld [vmem:[%s1 + $0x378] sm:$0xff]
      %v435 = vld [vmem:[%s1 + $0x380] sm:$0xf]
      %v436 = vld [vmem:[%s1 + $0x384] sm:$0xff]
      %v437 = vld [vmem:[%s1 + $0x38c] sm:$0xf]
      %v438 = vld [vmem:[%s1 + $0x390] sm:$0xff]
      %v439 = vld [vmem:[%s1 + $0x398] sm:$0xf]
      %v440 = vld [vmem:[%s1 + $0x39c] sm:$0xff]
      %v441 = vld [vmem:[%s1 + $0x3a4] sm:$0xf]
      %v442 = vld [vmem:[%s1 + $0x3a8] sm:$0xff]
      %v443 = vld [vmem:[%s1 + $0x3b0] sm:$0xf]
      %v444 = vld [vmem:[%s1 + $0x3b4] sm:$0xff]
      %v445 = vld [vmem:[%s1 + $0x3bc] sm:$0xf]
      %v446 = vld [vmem:[%s1 + $0x3c0] sm:$0xff]
      %v447 = vld [vmem:[%s1 + $0x3c8] sm:$0xf]
      %v448 = vld [vmem:[%s1 + $0x3cc] sm:$0xff]
      %v449 = vld [vmem:[%s1 + $0x3d4] sm:$0xf]
      %v450 = vld [vmem:[%s1 + $0x3d8] sm:$0xff]
      %v451 = vld [vmem:[%s1 + $0x3e0] sm:$0xf]
      %v452 = vld [vmem:[%s1 + $0x3e4] sm:$0xff]
      %v453 = vld [vmem:[%s1 + $0x3ec] sm:$0xf]
      %v454 = vld [vmem:[%s1 + $0x3f0] sm:$0xff]
      %v455 = vld [vmem:[%s1 + $0x3f8] sm:$0xf]
      %v456 = vld [vmem:[%s1 + $0x3fc] sm:$0xff]
      %v457 = vld [vmem:[%s1 + $0x404] sm:$0xf]
      %v458 = vld [vmem:[%s1 + $0x408] sm:$0xff]
      %v459 = vld [vmem:[%s1 + $0x410] sm:$0xf]
      %v460 = vld [vmem:[%s1 + $0x414] sm:$0xff]
      %v461 = vld [vmem:[%s1 + $0x41c] sm:$0xf]
      %v462 = vld [vmem:[%s1 + $0x420] sm:$0xff]
      %v463 = vld [vmem:[%s1 + $0x428] sm:$0xf]
      %v464 = vld [vmem:[%s1 + $0x42c] sm:$0xff]
      %v465 = vld [vmem:[%s1 + $0x434] sm:$0xf]
      %v466 = vld [vmem:[%s1 + $0x438] sm:$0xff]
      %v467 = vld [vmem:[%s1 + $0x440] sm:$0xf]
      %v468 = vld [vmem:[%s1 + $0x444] sm:$0xff]
      %v469 = vld [vmem:[%s1 + $0x44c] sm:$0xf]
      %v470 = vld [vmem:[%s1 + $0x450] sm:$0xff]
      %v471 = vld [vmem:[%s1 + $0x458] sm:$0xf]
      %v472 = vld [vmem:[%s1 + $0x45c] sm:$0xff]
      %v473 = vld [vmem:[%s1 + $0x464] sm:$0xf]
      %v474 = vld [vmem:[%s1 + $0x468] sm:$0xff]
      %v475 = vld [vmem:[%s1 + $0x470] sm:$0xf]
      %v476 = vld [vmem:[%s1 + $0x474] sm:$0xff]
      %v477 = vld [vmem:[%s1 + $0x47c] sm:$0xf]
      %v478 = vld [vmem:[%s1 + $0x480] sm:$0xff]
      %v479 = vld [vmem:[%s1 + $0x488] sm:$0xf]
      %v480 = vld [vmem:[%s1 + $0x48c] sm:$0xff]
      %v481 = vld [vmem:[%s1 + $0x494] sm:$0xf]
      %v482 = vld [vmem:[%s1 + $0x498] sm:$0xff]
      %v483 = vld [vmem:[%s1 + $0x4a0] sm:$0xf]
      %v484 = vld [vmem:[%s1 + $0x4a4] sm:$0xff]
      %v485 = vld [vmem:[%s1 + $0x4ac] sm:$0xf]
      %v486 = vld [vmem:[%s1 + $0x4b0] sm:$0xff]
      %v487 = vld [vmem:[%s1 + $0x4b8] sm:$0xf]
      %v488 = vld [vmem:[%s1 + $0x4bc] sm:$0xff]
      %v489 = vld [vmem:[%s1 + $0x4c4] sm:$0xf]
      %v490 = vld [vmem:[%s1 + $0x4c8] sm:$0xff]
      %v491 = vld [vmem:[%s1 + $0x4d0] sm:$0xf]
      %v492 = vld [vmem:[%s1 + $0x4d4] sm:$0xff]
      %v493 = vld [vmem:[%s1 + $0x4dc] sm:$0xf]
      %v494 = vld [vmem:[%s1 + $0x4e0] sm:$0xff]
      %v495 = vld [vmem:[%s1 + $0x4e8] sm:$0xf]
      %v496 = vld [vmem:[%s1 + $0x4ec] sm:$0xff]
      %v497 = vld [vmem:[%s1 + $0x4f4] sm:$0xf]
      %v498 = vld [vmem:[%s1 + $0x4f8] sm:$0xff]
      %v499 = vld [vmem:[%s1 + $0x500] sm:$0xf]
      %v500 = vld [vmem:[%s1 + $0x504] sm:$0xff]
      %v501 = vld [vmem:[%s1 + $0x50c] sm:$0xf]
      %v502 = vld [vmem:[%s1 + $0x510] sm:$0xff]
      %v503 = vld [vmem:[%s1 + $0x518] sm:$0xf]
      %v504 = vld [vmem:[%s1 + $0x51c] sm:$0xff]
      %v505 = vld [vmem:[%s1 + $0x524] sm:$0xf]
      %v506 = vld [vmem:[%s1 + $0x528] sm:$0xff]
      %v507 = vld [vmem:[%s1 + $0x530] sm:$0xf]
      %v508 = vld [vmem:[%s1 + $0x534] sm:$0xff]
      %v509 = vld [vmem:[%s1 + $0x53c] sm:$0xf]
      %v510 = vld [vmem:[%s1 + $0x540] sm:$0xff]
      %v511 = vld [vmem:[%s1 + $0x548] sm:$0xf]
      %v512 = vld [vmem:[%s1 + $0x54c] sm:$0xff]
      %v513 = vld [vmem:[%s1 + $0x554] sm:$0xf]
      %v514 = vld [vmem:[%s1 + $0x558] sm:$0xff]
      %v515 = vld [vmem:[%s1 + $0x560] sm:$0xf]
      %v516 = vld [vmem:[%s1 + $0x564] sm:$0xff]
      %v517 = vld [vmem:[%s1 + $0x56c] sm:$0xf]
      %v518 = vld [vmem:[%s1 + $0x570] sm:$0xff]
      %v519 = vld [vmem:[%s1 + $0x578] sm:$0xf]
      %v520 = vld [vmem:[%s1 + $0x57c] sm:$0xff]
      %v521 = vld [vmem:[%s1 + $0x584] sm:$0xf]
      %v522 = vld [vmem:[%s1 + $0x588] sm:$0xff]
      %v523 = vld [vmem:[%s1 + $0x590] sm:$0xf]
      %v524 = vld [vmem:[%s1 + $0x594] sm:$0xff]
      %v525 = vld [vmem:[%s1 + $0x59c] sm:$0xf]
      %v526 = vld [vmem:[%s1 + $0x5a0] sm:$0xff]
      %v527 = vld [vmem:[%s1 + $0x5a8] sm:$0xf]
      %v528 = vld [vmem:[%s1 + $0x5ac] sm:$0xff]
      %v529 = vld [vmem:[%s1 + $0x5b4] sm:$0xf]
      %v530 = vld [vmem:[%s1 + $0x5b8] sm:$0xff]
      %v531 = vld [vmem:[%s1 + $0x5c0] sm:$0xf]
      %v532 = vld [vmem:[%s1 + $0x5c4] sm:$0xff]
      %v533 = vld [vmem:[%s1 + $0x5cc] sm:$0xf]
      %v534 = vld [vmem:[%s1 + $0x5d0] sm:$0xff]
      %v535 = vld [vmem:[%s1 + $0x5d8] sm:$0xf]
      %v536 = vld [vmem:[%s1 + $0x5dc] sm:$0xff]
      %v537 = vld [vmem:[%s1 + $0x5e4] sm:$0xf]
      %v538 = vld [vmem:[%s1 + $0x5e8] sm:$0xff]
      %v539 = vld [vmem:[%s1 + $0x5f0] sm:$0xf]
      %v540 = vld [vmem:[%s1 + $0x5f4] sm:$0xff]
      %v541 = vld [vmem:[%s1 + $0x5fc] sm:$0xf]
      %v542 = vld [vmem:[%s1 + $0x600] sm:$0xff]
      %v543 = vld [vmem:[%s1 + $0x608] sm:$0xf]
      %v544 = vld [vmem:[%s1 + $0x60c] sm:$0xff]
      %v545 = vld [vmem:[%s1 + $0x614] sm:$0xf]
      %v546 = vld [vmem:[%s1 + $0x618] sm:$0xff]
      %v547 = vld [vmem:[%s1 + $0x620] sm:$0xf]
      %v548 = vld [vmem:[%s1 + $0x624] sm:$0xff]
      %v549 = vld [vmem:[%s1 + $0x62c] sm:$0xf]
      %v550 = vld [vmem:[%s1 + $0x630] sm:$0xff]
      %v551 = vld [vmem:[%s1 + $0x638] sm:$0xf]
      %v552 = vld [vmem:[%s1 + $0x63c] sm:$0xff]
      %v553 = vld [vmem:[%s1 + $0x644] sm:$0xf]
      %v554 = vld [vmem:[%s1 + $0x648] sm:$0xff]
      %v555 = vld [vmem:[%s1 + $0x650] sm:$0xf]
      %v556 = vld [vmem:[%s1 + $0x654] sm:$0xff]
      %v557 = vld [vmem:[%s1 + $0x65c] sm:$0xf]
      %v558 = vld [vmem:[%s1 + $0x660] sm:$0xff]
      %v559 = vld [vmem:[%s1 + $0x668] sm:$0xf]
      %v560 = vld [vmem:[%s1 + $0x66c] sm:$0xff]
      %v561 = vld [vmem:[%s1 + $0x674] sm:$0xf]
      %v562 = vld [vmem:[%s1 + $0x678] sm:$0xff]
      %v563 = vld [vmem:[%s1 + $0x680] sm:$0xf]
      %v564 = vld [vmem:[%s1 + $0x684] sm:$0xff]
      %v565 = vld [vmem:[%s1 + $0x68c] sm:$0xf]
      %v566 = vld [vmem:[%s1 + $0x690] sm:$0xff]
      %v567 = vld [vmem:[%s1 + $0x698] sm:$0xf]
      %v568 = vld [vmem:[%s1 + $0x69c] sm:$0xff]
      %v569 = vld [vmem:[%s1 + $0x6a4] sm:$0xf]
      %v570 = vld [vmem:[%s1 + $0x6a8] sm:$0xff]
      %v571 = vld [vmem:[%s1 + $0x6b0] sm:$0xf]
      %v572 = vld [vmem:[%s1 + $0x6b4] sm:$0xff]
      %v573 = vld [vmem:[%s1 + $0x6bc] sm:$0xf]
      %v574 = vld [vmem:[%s1 + $0x6c0] sm:$0xff]
      %v575 = vld [vmem:[%s1 + $0x6c8] sm:$0xf]
      %v576 = vld [vmem:[%s1 + $0x6cc] sm:$0xff]
      %v577 = vld [vmem:[%s1 + $0x6d4] sm:$0xf]
      %v578 = vld [vmem:[%s1 + $0x6d8] sm:$0xff]
      %v579 = vld [vmem:[%s1 + $0x6e0] sm:$0xf]
      %v580 = vld [vmem:[%s1 + $0x6e4] sm:$0xff]
      %v581 = vld [vmem:[%s1 + $0x6ec] sm:$0xf]
      %v582 = vld [vmem:[%s1 + $0x6f0] sm:$0xff]
      %v583 = vld [vmem:[%s1 + $0x6f8] sm:$0xf]
      %v584 = vld [vmem:[%s1 + $0x6fc] sm:$0xff]
      %v585 = vld [vmem:[%s1 + $0x704] sm:$0xf]
      %v586 = vld [vmem:[%s1 + $0x708] sm:$0xff]
      %v587 = vld [vmem:[%s1 + $0x710] sm:$0xf]
      %v588 = vld [vmem:[%s1 + $0x714] sm:$0xff]
      %v589 = vld [vmem:[%s1 + $0x71c] sm:$0xf]
      %v590 = vld [vmem:[%s1 + $0x720] sm:$0xff]
      %v591 = vld [vmem:[%s1 + $0x728] sm:$0xf]
      %v592 = vld [vmem:[%s1 + $0x72c] sm:$0xff]
      %v593 = vld [vmem:[%s1 + $0x734] sm:$0xf]
      %v594 = vld [vmem:[%s1 + $0x738] sm:$0xff]
      %v595 = vld [vmem:[%s1 + $0x740] sm:$0xf]
      %v596 = vld [vmem:[%s1 + $0x744] sm:$0xff]
      %v597 = vld [vmem:[%s1 + $0x74c] sm:$0xf]
      %v598 = vld [vmem:[%s1 + $0x750] sm:$0xff]
      %v599 = vld [vmem:[%s1 + $0x758] sm:$0xf]
      %v600 = vld [vmem:[%s1 + $0x75c] sm:$0xff]
      %v601 = vld [vmem:[%s1 + $0x764] sm:$0xf]
      %v602 = vld [vmem:[%s1 + $0x768] sm:$0xff]
      %v603 = vld [vmem:[%s1 + $0x770] sm:$0xf]
      %v604 = vld [vmem:[%s1 + $0x774] sm:$0xff]
      %v605 = vld [vmem:[%s1 + $0x77c] sm:$0xf]
      %v606 = vld [vmem:[%s1 + $0x780] sm:$0xff]
      %v607 = vld [vmem:[%s1 + $0x788] sm:$0xf]
      %v608 = vld [vmem:[%s1 + $0x78c] sm:$0xff]
      %v609 = vld [vmem:[%s1 + $0x794] sm:$0xf]
      %v610 = vld [vmem:[%s1 + $0x798] sm:$0xff]
      %v611 = vld [vmem:[%s1 + $0x7a0] sm:$0xf]
      %v612 = vld [vmem:[%s1 + $0x7a4] sm:$0xff]
      %v613 = vld [vmem:[%s1 + $0x7ac] sm:$0xf]
      %v614 = vld [vmem:[%s1 + $0x7b0] sm:$0xff]
      %v615 = vld [vmem:[%s1 + $0x7b8] sm:$0xf]
      %v616 = vld [vmem:[%s1 + $0x7bc] sm:$0xff]
      %v617 = vld [vmem:[%s1 + $0x7c4] sm:$0xf]
      %v618 = vld [vmem:[%s1 + $0x7c8] sm:$0xff]
      %v619 = vld [vmem:[%s1 + $0x7d0] sm:$0xf]
      %v620 = vld [vmem:[%s1 + $0x7d4] sm:$0xff]
      %v621 = vld [vmem:[%s1 + $0x7dc] sm:$0xf]
      %v622 = vld [vmem:[%s1 + $0x7e0] sm:$0xff]
      %v623 = vld [vmem:[%s1 + $0x7e8] sm:$0xf]
      %v624 = vld [vmem:[%s1 + $0x7ec] sm:$0xff]
      %v625 = vld [vmem:[%s1 + $0x7f4] sm:$0xf]
      %v626 = vld [vmem:[%s1 + $0x7f8] sm:$0xff]
      %v627 = vld [vmem:[%s1 + $0x800] sm:$0xf]
      %v628 = vld [vmem:[%s1 + $0x804] sm:$0xff]
      %v629 = vld [vmem:[%s1 + $0x80c] sm:$0xf]
      %v630 = vld [vmem:[%s1 + $0x810] sm:$0xff]
      %v631 = vld [vmem:[%s1 + $0x818] sm:$0xf]
      %v632 = vld [vmem:[%s1 + $0x81c] sm:$0xff]
      %v633 = vld [vmem:[%s1 + $0x824] sm:$0xf]
      %v634 = vld [vmem:[%s1 + $0x828] sm:$0xff]
      %v635 = vld [vmem:[%s1 + $0x830] sm:$0xf]
      %v636 = vld [vmem:[%s1 + $0x834] sm:$0xff]
      %v637 = vld [vmem:[%s1 + $0x83c] sm:$0xf]
      %v638 = vld [vmem:[%s1 + $0x840] sm:$0xff]
      %v639 = vld [vmem:[%s1 + $0x848] sm:$0xf]
      %v640 = vld [vmem:[%s1 + $0x84c] sm:$0xff]
      %v641 = vld [vmem:[%s1 + $0x854] sm:$0xf]
      %v642 = vld [vmem:[%s1 + $0x858] sm:$0xff]
      %v643 = vld [vmem:[%s1 + $0x860] sm:$0xf]
      %v644 = vld [vmem:[%s1 + $0x864] sm:$0xff]
      %v645 = vld [vmem:[%s1 + $0x86c] sm:$0xf]
      %v646 = vld [vmem:[%s1 + $0x870] sm:$0xff]
      %v647 = vld [vmem:[%s1 + $0x878] sm:$0xf]
      %v648 = vld [vmem:[%s1 + $0x87c] sm:$0xff]
      %v649 = vld [vmem:[%s1 + $0x884] sm:$0xf]
      %v650 = vld [vmem:[%s1 + $0x888] sm:$0xff]
      %v651 = vld [vmem:[%s1 + $0x890] sm:$0xf]
      %v652 = vld [vmem:[%s1 + $0x894] sm:$0xff]
      %v653 = vld [vmem:[%s1 + $0x89c] sm:$0xf]
      %v654 = vld [vmem:[%s1 + $0x8a0] sm:$0xff]
      %v655 = vld [vmem:[%s1 + $0x8a8] sm:$0xf]
      %v656 = vld [vmem:[%s1 + $0x8ac] sm:$0xff]
      %v657 = vld [vmem:[%s1 + $0x8b4] sm:$0xf]
      %v658 = vld [vmem:[%s1 + $0x8b8] sm:$0xff]
      %v659 = vld [vmem:[%s1 + $0x8c0] sm:$0xf]
      %v660 = vld [vmem:[%s1 + $0x8c4] sm:$0xff]
      %v661 = vld [vmem:[%s1 + $0x8cc] sm:$0xf]
      %v662 = vld [vmem:[%s1 + $0x8d0] sm:$0xff]
      %v663 = vld [vmem:[%s1 + $0x8d8] sm:$0xf]
      %v664 = vld [vmem:[%s1 + $0x8dc] sm:$0xff]
      %v665 = vld [vmem:[%s1 + $0x8e4] sm:$0xf]
      %v666 = vld [vmem:[%s1 + $0x8e8] sm:$0xff]
      %v667 = vld [vmem:[%s1 + $0x8f0] sm:$0xf]
      %v668 = vld [vmem:[%s1 + $0x8f4] sm:$0xff]
      %v669 = vld [vmem:[%s1 + $0x8fc] sm:$0xf]
      %v670 = vld [vmem:[%s1 + $0x900] sm:$0xff]
      %v671 = vld [vmem:[%s1 + $0x908] sm:$0xf]
      %v672 = vld [vmem:[%s1 + $0x90c] sm:$0xff]
      %v673 = vld [vmem:[%s1 + $0x914] sm:$0xf]
      %v674 = vld [vmem:[%s1 + $0x918] sm:$0xff]
      %v675 = vld [vmem:[%s1 + $0x920] sm:$0xf]
      %v676 = vld [vmem:[%s1 + $0x924] sm:$0xff]
      %v677 = vld [vmem:[%s1 + $0x92c] sm:$0xf]
      %v678 = vld [vmem:[%s1 + $0x930] sm:$0xff]
      %v679 = vld [vmem:[%s1 + $0x938] sm:$0xf]
      %v680 = vld [vmem:[%s1 + $0x93c] sm:$0xff]
      %v681 = vld [vmem:[%s1 + $0x944] sm:$0xf]
      %v682 = vld [vmem:[%s1 + $0x948] sm:$0xff]
      %v683 = vld [vmem:[%s1 + $0x950] sm:$0xf]
      %v684 = vld [vmem:[%s1 + $0x954] sm:$0xff]
      %v685 = vld [vmem:[%s1 + $0x95c] sm:$0xf]
      %v686 = vld [vmem:[%s1 + $0x960] sm:$0xff]
      %v687 = vld [vmem:[%s1 + $0x968] sm:$0xf]
      %v688 = vld [vmem:[%s1 + $0x96c] sm:$0xff]
      %v689 = vld [vmem:[%s1 + $0x974] sm:$0xf]
      %v690 = vld [vmem:[%s1 + $0x978] sm:$0xff]
      %v691 = vld [vmem:[%s1 + $0x980] sm:$0xf]
      %v692 = vld [vmem:[%s1 + $0x984] sm:$0xff]
      %v693 = vld [vmem:[%s1 + $0x98c] sm:$0xf]
      %v694 = vld [vmem:[%s1 + $0x990] sm:$0xff]
      %v695 = vld [vmem:[%s1 + $0x998] sm:$0xf]
      %v696 = vld [vmem:[%s1 + $0x99c] sm:$0xff]
      %v697 = vld [vmem:[%s1 + $0x9a4] sm:$0xf]
      %v698 = vld [vmem:[%s1 + $0x9a8] sm:$0xff]
      %v699 = vld [vmem:[%s1 + $0x9b0] sm:$0xf]
      %v700 = vld [vmem:[%s1 + $0x9b4] sm:$0xff]
      %v701 = vld [vmem:[%s1 + $0x9bc] sm:$0xf]
      %v702 = vld [vmem:[%s1 + $0x9c0] sm:$0xff]
      %v703 = vld [vmem:[%s1 + $0x9c8] sm:$0xf]
      %v704 = vld [vmem:[%s1 + $0x9cc] sm:$0xff]
      %v705 = vld [vmem:[%s1 + $0x9d4] sm:$0xf]
      %v706 = vld [vmem:[%s1 + $0x9d8] sm:$0xff]
      %v707 = vld [vmem:[%s1 + $0x9e0] sm:$0xf]
      %v708 = vld [vmem:[%s1 + $0x9e4] sm:$0xff]
      %v709 = vld [vmem:[%s1 + $0x9ec] sm:$0xf]
      %v710 = vld [vmem:[%s1 + $0x9f0] sm:$0xff]
      %v711 = vld [vmem:[%s1 + $0x9f8] sm:$0xf]
      %v712 = vld [vmem:[%s1 + $0x9fc] sm:$0xff]
      %v713 = vld [vmem:[%s1 + $0xa04] sm:$0xf]
      %v714 = vld [vmem:[%s1 + $0xa08] sm:$0xff]
      %v715 = vld [vmem:[%s1 + $0xa10] sm:$0xf]
      %v716 = vld [vmem:[%s1 + $0xa14] sm:$0xff]
      %v717 = vld [vmem:[%s1 + $0xa1c] sm:$0xf]
      %v718 = vld [vmem:[%s1 + $0xa20] sm:$0xff]
      %v719 = vld [vmem:[%s1 + $0xa28] sm:$0xf]
      %v720 = vld [vmem:[%s1 + $0xa2c] sm:$0xff]
      %v721 = vld [vmem:[%s1 + $0xa34] sm:$0xf]
      %v722 = vld [vmem:[%s1 + $0xa38] sm:$0xff]
      %v723 = vld [vmem:[%s1 + $0xa40] sm:$0xf]
      %v724 = vld [vmem:[%s1 + $0xa44] sm:$0xff]
      %v725 = vld [vmem:[%s1 + $0xa4c] sm:$0xf]
      %v726 = vld [vmem:[%s1 + $0xa50] sm:$0xff]
      %v727 = vld [vmem:[%s1 + $0xa58] sm:$0xf]
      %v728 = vld [vmem:[%s1 + $0xa5c] sm:$0xff]
      %v729 = vld [vmem:[%s1 + $0xa64] sm:$0xf]
      %v730 = vld [vmem:[%s1 + $0xa68] sm:$0xff]
      %v731 = vld [vmem:[%s1 + $0xa70] sm:$0xf]
      %v732 = vld [vmem:[%s1 + $0xa74] sm:$0xff]
      %v733 = vld [vmem:[%s1 + $0xa7c] sm:$0xf]
      %v734 = vld [vmem:[%s1 + $0xa80] sm:$0xff]
      %v735 = vld [vmem:[%s1 + $0xa88] sm:$0xf]
      %v736 = vld [vmem:[%s1 + $0xa8c] sm:$0xff]
      %v737 = vld [vmem:[%s1 + $0xa94] sm:$0xf]
      %v738 = vld [vmem:[%s1 + $0xa98] sm:$0xff]
      %v739 = vld [vmem:[%s1 + $0xaa0] sm:$0xf]
      %v740 = vld [vmem:[%s1 + $0xaa4] sm:$0xff]
      %v741 = vld [vmem:[%s1 + $0xaac] sm:$0xf]
      %v742 = vld [vmem:[%s1 + $0xab0] sm:$0xff]
      %v743 = vld [vmem:[%s1 + $0xab8] sm:$0xf]
      %v744 = vld [vmem:[%s1 + $0xabc] sm:$0xff]
      %v745 = vld [vmem:[%s1 + $0xac4] sm:$0xf]
      %v746 = vld [vmem:[%s1 + $0xac8] sm:$0xff]
      %v747 = vld [vmem:[%s1 + $0xad0] sm:$0xf]
      %v748 = vld [vmem:[%s1 + $0xad4] sm:$0xff]
      %v749 = vld [vmem:[%s1 + $0xadc] sm:$0xf]
      %v750 = vld [vmem:[%s1 + $0xae0] sm:$0xff]
      %v751 = vld [vmem:[%s1 + $0xae8] sm:$0xf]
      %v752 = vld [vmem:[%s1 + $0xaec] sm:$0xff]
      %v753 = vld [vmem:[%s1 + $0xaf4] sm:$0xf]
      %v754 = vld [vmem:[%s1 + $0xaf8] sm:$0xff]
      %v755 = vld [vmem:[%s1 + $0xb00] sm:$0xf]
      %v756 = vld [vmem:[%s1 + $0xb04] sm:$0xff]
      %v757 = vld [vmem:[%s1 + $0xb0c] sm:$0xf]
      %v758 = vld [vmem:[%s1 + $0xb10] sm:$0xff]
      %v759 = vld [vmem:[%s1 + $0xb18] sm:$0xf]
      %v760 = vld [vmem:[%s1 + $0xb1c] sm:$0xff]
      %v761 = vld [vmem:[%s1 + $0xb24] sm:$0xf]
      %v762 = vld [vmem:[%s1 + $0xb28] sm:$0xff]
      %v763 = vld [vmem:[%s1 + $0xb30] sm:$0xf]
      %v764 = vld [vmem:[%s1 + $0xb34] sm:$0xff]
      %v765 = vld [vmem:[%s1 + $0xb3c] sm:$0xf]
      %v766 = vld [vmem:[%s1 + $0xb40] sm:$0xff]
      %v767 = vld [vmem:[%s1 + $0xb48] sm:$0xf]
      %v768 = vld [vmem:[%s1 + $0xb4c] sm:$0xff]
      %v769 = vld [vmem:[%s1 + $0xb54] sm:$0xf]
      %v770 = vld [vmem:[%s1 + $0xb58] sm:$0xff]
      %v771 = vld [vmem:[%s1 + $0xb60] sm:$0xf]
      %v772 = vld [vmem:[%s1 + $0xb64] sm:$0xff]
      %v773 = vld [vmem:[%s1 + $0xb6c] sm:$0xf]
      %v774 = vld [vmem:[%s1 + $0xb70] sm:$0xff]
      %v775 = vld [vmem:[%s1 + $0xb78] sm:$0xf]
      %v776 = vld [vmem:[%s1 + $0xb7c] sm:$0xff]
      %v777 = vld [vmem:[%s1 + $0xb84] sm:$0xf]
      %v778 = vld [vmem:[%s1 + $0xb88] sm:$0xff]
      %v779 = vld [vmem:[%s1 + $0xb90] sm:$0xf]
      %v780 = vld [vmem:[%s1 + $0xb94] sm:$0xff]
      %v781 = vld [vmem:[%s1 + $0xb9c] sm:$0xf]
      %v782 = vld [vmem:[%s1 + $0xba0] sm:$0xff]
      %v783 = vld [vmem:[%s1 + $0xba8] sm:$0xf]
      %v784 = vld [vmem:[%s1 + $0xbac] sm:$0xff]
      %v785 = vld [vmem:[%s1 + $0xbb4] sm:$0xf]
      %v786 = vld [vmem:[%s1 + $0xbb8] sm:$0xff]
      %v787 = vld [vmem:[%s1 + $0xbc0] sm:$0xf]
      %v788 = vld [vmem:[%s1 + $0xbc4] sm:$0xff]
      %v789 = vld [vmem:[%s1 + $0xbcc] sm:$0xf]
      %v790 = vld [vmem:[%s1 + $0xbd0] sm:$0xff]
      %v791 = vld [vmem:[%s1 + $0xbd8] sm:$0xf]
      %v792 = vld [vmem:[%s1 + $0xbdc] sm:$0xff]
      %v793 = vld [vmem:[%s1 + $0xbe4] sm:$0xf]
      %v794 = vld [vmem:[%s1 + $0xbe8] sm:$0xff]
      %v795 = vld [vmem:[%s1 + $0xbf0] sm:$0xf]
      %v796 = vld [vmem:[%s1 + $0xbf4] sm:$0xff]
      %v797 = vld [vmem:[%s1 + $0xbfc] sm:$0xf]
      %v798 = vld [vmem:[%s1 + $0xc00] sm:$0xff]
      %v799 = vld [vmem:[%s1 + $0xc08] sm:$0xf]
      %v800 = vld [vmem:[%s1 + $0xc0c] sm:$0xff]
      %v801 = vld [vmem:[%s1 + $0xc14] sm:$0xf]
      %v802 = vld [vmem:[%s1 + $0xc18] sm:$0xff]
      %v803 = vld [vmem:[%s1 + $0xc20] sm:$0xf]
      %v804 = vld [vmem:[%s1 + $0xc24] sm:$0xff]
      %v805 = vld [vmem:[%s1 + $0xc2c] sm:$0xf]
      %v806 = vld [vmem:[%s1 + $0xc30] sm:$0xff]
      %v807 = vld [vmem:[%s1 + $0xc38] sm:$0xf]
      %v808 = vld [vmem:[%s1 + $0xc3c] sm:$0xff]
      %v809 = vld [vmem:[%s1 + $0xc44] sm:$0xf]
      %v810 = vld [vmem:[%s1 + $0xc48] sm:$0xff]
      %v811 = vld [vmem:[%s1 + $0xc50] sm:$0xf]
      %v812 = vld [vmem:[%s1 + $0xc54] sm:$0xff]
      %v813 = vld [vmem:[%s1 + $0xc5c] sm:$0xf]
      %v814 = vld [vmem:[%s1 + $0xc60] sm:$0xff]
      %v815 = vld [vmem:[%s1 + $0xc68] sm:$0xf]
      %v816 = vld [vmem:[%s1 + $0xc6c] sm:$0xff]
      %v817 = vld [vmem:[%s1 + $0xc74] sm:$0xf]
      %v818 = vld [vmem:[%s1 + $0xc78] sm:$0xff]
      %v819 = vld [vmem:[%s1 + $0xc80] sm:$0xf]
      %v820 = vld [vmem:[%s1 + $0xc84] sm:$0xff]
      %v821 = vld [vmem:[%s1 + $0xc8c] sm:$0xf]
      %v822 = vld [vmem:[%s1 + $0xc90] sm:$0xff]
      %v823 = vld [vmem:[%s1 + $0xc98] sm:$0xf]
      %v824 = vld [vmem:[%s1 + $0xc9c] sm:$0xff]
      %v825 = vld [vmem:[%s1 + $0xca4] sm:$0xf]
      %v826 = vld [vmem:[%s1 + $0xca8] sm:$0xff]
      %v827 = vld [vmem:[%s1 + $0xcb0] sm:$0xf]
      %v828 = vld [vmem:[%s1 + $0xcb4] sm:$0xff]
      %v829 = vld [vmem:[%s1 + $0xcbc] sm:$0xf]
      %v830 = vld [vmem:[%s1 + $0xcc0] sm:$0xff]
      %v831 = vld [vmem:[%s1 + $0xcc8] sm:$0xf]
      %v832 = vld [vmem:[%s1 + $0xccc] sm:$0xff]
      %v833 = vld [vmem:[%s1 + $0xcd4] sm:$0xf]
      %v834 = vld [vmem:[%s1 + $0xcd8] sm:$0xff]
      %v835 = vld [vmem:[%s1 + $0xce0] sm:$0xf]
      %v836 = vld [vmem:[%s1 + $0xce4] sm:$0xff]
      %v837 = vld [vmem:[%s1 + $0xcec] sm:$0xf]
      %v838 = vld [vmem:[%s1 + $0xcf0] sm:$0xff]
      %v839 = vld [vmem:[%s1 + $0xcf8] sm:$0xf]
      %v840 = vld [vmem:[%s1 + $0xcfc] sm:$0xff]
      %v841 = vld [vmem:[%s1 + $0xd04] sm:$0xf]
      %v842 = vld [vmem:[%s1 + $0xd08] sm:$0xff]
      %v843 = vld [vmem:[%s1 + $0xd10] sm:$0xf]
      %v844 = vld [vmem:[%s1 + $0xd14] sm:$0xff]
      %v845 = vld [vmem:[%s1 + $0xd1c] sm:$0xf]
      %v846 = vld [vmem:[%s1 + $0xd20] sm:$0xff]
      %v847 = vld [vmem:[%s1 + $0xd28] sm:$0xf]
      %v848 = vld [vmem:[%s1 + $0xd2c] sm:$0xff]
      %v849 = vld [vmem:[%s1 + $0xd34] sm:$0xf]
      %v850 = vld [vmem:[%s1 + $0xd38] sm:$0xff]
      %v851 = vld [vmem:[%s1 + $0xd40] sm:$0xf]
      %v852 = vld [vmem:[%s1 + $0xd44] sm:$0xff]
      %v853 = vld [vmem:[%s1 + $0xd4c] sm:$0xf]
      %v854 = vld [vmem:[%s1 + $0xd50] sm:$0xff]
      %v855 = vld [vmem:[%s1 + $0xd58] sm:$0xf]
      %v856 = vld [vmem:[%s1 + $0xd5c] sm:$0xff]
      %v857 = vld [vmem:[%s1 + $0xd64] sm:$0xf]
      %v858 = vld [vmem:[%s1 + $0xd68] sm:$0xff]
      %v859 = vld [vmem:[%s1 + $0xd70] sm:$0xf]
      %v860 = vld [vmem:[%s1 + $0xd74] sm:$0xff]
      %v861 = vld [vmem:[%s1 + $0xd7c] sm:$0xf]
      %v862 = vld [vmem:[%s2] sm:$0x7]
      %v864 = vlaneseq
      %v865 = vshrl.u32 %v864, 7
      %v866 = vsub.s32 0, %v865
      %v867 = vrot.slane %v862, %v866
      %v868 = vlaneseq
      %v869 = vshrl.u32 %v868, 7
      %v870 = vsub.s32 1, %v869
      %v871 = vrot.slane %v862, %v870
      %v872 = vlaneseq
      %v873 = vshrl.u32 %v872, 7
      %v874 = vsub.s32 2, %v873
      %v875 = vrot.slane %v862, %v874
      %v897 = vunpack.c.l.b16 %v268
      %v898 = vunpack.c.h.b16 %v268
      %v899 = vunpack.c.l.b16 %v269
      %v900 = vunpack.c.h.b16 %v269
      %v901 = vunpack.c.l.b16 %v270
      %v902 = vunpack.c.h.b16 %v270
      %v903 = vunpack.c.l.b16 %v271
      %v904 = vunpack.c.h.b16 %v271
      %v905 = vunpack.c.l.b16 %v272
      %v906 = vunpack.c.h.b16 %v272
      %v907 = vunpack.c.l.b16 %v273
      %v908 = vunpack.c.h.b16 %v273
      %v909 = vunpack.c.l.b16 %v274
      %v910 = vunpack.c.h.b16 %v274
      %v911 = vunpack.c.l.b16 %v275
      %v912 = vunpack.c.h.b16 %v275
      %v913 = vunpack.c.l.b16 %v276
      %v914 = vunpack.c.h.b16 %v276
      %v915 = vunpack.c.l.b16 %v277
      %v916 = vunpack.c.h.b16 %v277
      %v917 = vunpack.c.l.b16 %v278
      %v918 = vunpack.c.h.b16 %v278
      %v919 = vunpack.c.l.b16 %v279
      %v920 = vunpack.c.h.b16 %v279
      %v921 = vunpack.c.l.b16 %v280
      %v922 = vunpack.c.h.b16 %v280
      %v923 = vunpack.c.l.b16 %v281
      %v924 = vunpack.c.h.b16 %v281
      %v925 = vunpack.c.l.b16 %v282
      %v926 = vunpack.c.h.b16 %v282
      %v927 = vunpack.c.l.b16 %v283
      %v928 = vunpack.c.h.b16 %v283
      %v929 = vunpack.c.l.b16 %v284
      %v930 = vunpack.c.h.b16 %v284
      %v931 = vunpack.c.l.b16 %v285
      %v932 = vunpack.c.h.b16 %v285
      %v933 = vpack.c.b16 %v915, %v897
      %v934 = vpack.c.b16 %v916, %v898
      %v935 = vpack.c.b16 %v917, %v899
      %v936 = vpack.c.b16 %v918, %v900
      %v937 = vpack.c.b16 %v919, %v901
      %v938 = vpack.c.b16 %v920, %v902
      %v939 = vpack.c.b16 %v921, %v903
      %v940 = vpack.c.b16 %v922, %v904
      %v941 = vpack.c.b16 %v923, %v905
      %v942 = vpack.c.b16 %v924, %v906
      %v943 = vpack.c.b16 %v925, %v907
      %v944 = vpack.c.b16 %v926, %v908
      %v945 = vpack.c.b16 %v927, %v909
      %v946 = vpack.c.b16 %v928, %v910
      %v947 = vpack.c.b16 %v929, %v911
      %v948 = vpack.c.b16 %v930, %v912
      %v949 = vpack.c.b16 %v931, %v913
      %v950 = vpack.c.b16 %v932, %v914
      %v1545 = vunpack.c.l.b16 %v286
      %v1546 = vunpack.c.h.b16 %v286
      %v1547 = vunpack.c.l.b16 %v287
      %v1548 = vunpack.c.l.b16 %v288
      %v1549 = vunpack.c.h.b16 %v288
      %v1550 = vunpack.c.l.b16 %v289
      %v1551 = vunpack.c.l.b16 %v290
      %v1552 = vunpack.c.h.b16 %v290
      %v1553 = vunpack.c.l.b16 %v291
      %v1554 = vunpack.c.l.b16 %v292
      %v1555 = vunpack.c.h.b16 %v292
      %v1556 = vunpack.c.l.b16 %v293
      %v1557 = vunpack.c.l.b16 %v294
      %v1558 = vunpack.c.h.b16 %v294
      %v1559 = vunpack.c.l.b16 %v295
      %v1560 = vunpack.c.l.b16 %v296
      %v1561 = vunpack.c.h.b16 %v296
      %v1562 = vunpack.c.l.b16 %v297
      %v1563 = vunpack.c.l.b16 %v298
      %v1564 = vunpack.c.h.b16 %v298
      %v1565 = vunpack.c.l.b16 %v299
      %v1566 = vunpack.c.l.b16 %v300
      %v1567 = vunpack.c.h.b16 %v300
      %v1568 = vunpack.c.l.b16 %v301
      %v1569 = vunpack.c.l.b16 %v302
      %v1570 = vunpack.c.h.b16 %v302
      %v1571 = vunpack.c.l.b16 %v303
      %v1572 = vunpack.c.l.b16 %v304
      %v1573 = vunpack.c.h.b16 %v304
      %v1574 = vunpack.c.l.b16 %v305
      %v1575 = vunpack.c.l.b16 %v306
      %v1576 = vunpack.c.h.b16 %v306
      %v1577 = vunpack.c.l.b16 %v307
      %v1578 = vunpack.c.l.b16 %v308
      %v1579 = vunpack.c.h.b16 %v308
      %v1580 = vunpack.c.l.b16 %v309
      %v1581 = vunpack.c.l.b16 %v310
      %v1582 = vunpack.c.h.b16 %v310
      %v1583 = vunpack.c.l.b16 %v311
      %v1584 = vunpack.c.l.b16 %v312
      %v1585 = vunpack.c.h.b16 %v312
      %v1586 = vunpack.c.l.b16 %v313
      %v1587 = vunpack.c.l.b16 %v314
      %v1588 = vunpack.c.h.b16 %v314
      %v1589 = vunpack.c.l.b16 %v315
      %v1590 = vunpack.c.l.b16 %v316
      %v1591 = vunpack.c.h.b16 %v316
      %v1592 = vunpack.c.l.b16 %v317
      %v1593 = vunpack.c.l.b16 %v318
      %v1594 = vunpack.c.h.b16 %v318
      %v1595 = vunpack.c.l.b16 %v319
      %v1596 = vunpack.c.l.b16 %v320
      %v1597 = vunpack.c.h.b16 %v320
      %v1598 = vunpack.c.l.b16 %v321
      %v1599 = vunpack.c.l.b16 %v322
      %v1600 = vunpack.c.h.b16 %v322
      %v1601 = vunpack.c.l.b16 %v323
      %v1602 = vunpack.c.l.b16 %v324
      %v1603 = vunpack.c.h.b16 %v324
      %v1604 = vunpack.c.l.b16 %v325
      %v1605 = vunpack.c.l.b16 %v326
      %v1606 = vunpack.c.h.b16 %v326
      %v1607 = vunpack.c.l.b16 %v327
      %v1608 = vunpack.c.l.b16 %v328
      %v1609 = vunpack.c.h.b16 %v328
      %v1610 = vunpack.c.l.b16 %v329
      %v1611 = vunpack.c.l.b16 %v330
      %v1612 = vunpack.c.h.b16 %v330
      %v1613 = vunpack.c.l.b16 %v331
      %v1614 = vunpack.c.l.b16 %v332
      %v1615 = vunpack.c.h.b16 %v332
      %v1616 = vunpack.c.l.b16 %v333
      %v1617 = vunpack.c.l.b16 %v334
      %v1618 = vunpack.c.h.b16 %v334
      %v1619 = vunpack.c.l.b16 %v335
      %v1620 = vunpack.c.l.b16 %v336
      %v1621 = vunpack.c.h.b16 %v336
      %v1622 = vunpack.c.l.b16 %v337
      %v1623 = vunpack.c.l.b16 %v338
      %v1624 = vunpack.c.h.b16 %v338
      %v1625 = vunpack.c.l.b16 %v339
      %v1626 = vunpack.c.l.b16 %v340
      %v1627 = vunpack.c.h.b16 %v340
      %v1628 = vunpack.c.l.b16 %v341
      %v1629 = vunpack.c.l.b16 %v342
      %v1630 = vunpack.c.h.b16 %v342
      %v1631 = vunpack.c.l.b16 %v343
      %v1632 = vunpack.c.l.b16 %v344
      %v1633 = vunpack.c.h.b16 %v344
      %v1634 = vunpack.c.l.b16 %v345
      %v1635 = vunpack.c.l.b16 %v346
      %v1636 = vunpack.c.h.b16 %v346
      %v1637 = vunpack.c.l.b16 %v347
      %v1638 = vunpack.c.l.b16 %v348
      %v1639 = vunpack.c.h.b16 %v348
      %v1640 = vunpack.c.l.b16 %v349
      %v1641 = vunpack.c.l.b16 %v350
      %v1642 = vunpack.c.h.b16 %v350
      %v1643 = vunpack.c.l.b16 %v351
      %v1644 = vunpack.c.l.b16 %v352
      %v1645 = vunpack.c.h.b16 %v352
      %v1646 = vunpack.c.l.b16 %v353
      %v1647 = vunpack.c.l.b16 %v354
      %v1648 = vunpack.c.h.b16 %v354
      %v1649 = vunpack.c.l.b16 %v355
      %v1650 = vunpack.c.l.b16 %v356
      %v1651 = vunpack.c.h.b16 %v356
      %v1652 = vunpack.c.l.b16 %v357
      %v1653 = vunpack.c.l.b16 %v358
      %v1654 = vunpack.c.h.b16 %v358
      %v1655 = vunpack.c.l.b16 %v359
      %v1656 = vunpack.c.l.b16 %v360
      %v1657 = vunpack.c.h.b16 %v360
      %v1658 = vunpack.c.l.b16 %v361
      %v1659 = vunpack.c.l.b16 %v362
      %v1660 = vunpack.c.h.b16 %v362
      %v1661 = vunpack.c.l.b16 %v363
      %v1662 = vunpack.c.l.b16 %v364
      %v1663 = vunpack.c.h.b16 %v364
      %v1664 = vunpack.c.l.b16 %v365
      %v1665 = vunpack.c.l.b16 %v366
      %v1666 = vunpack.c.h.b16 %v366
      %v1667 = vunpack.c.l.b16 %v367
      %v1668 = vunpack.c.l.b16 %v368
      %v1669 = vunpack.c.h.b16 %v368
      %v1670 = vunpack.c.l.b16 %v369
      %v1671 = vunpack.c.l.b16 %v370
      %v1672 = vunpack.c.h.b16 %v370
      %v1673 = vunpack.c.l.b16 %v371
      %v1674 = vunpack.c.l.b16 %v372
      %v1675 = vunpack.c.h.b16 %v372
      %v1676 = vunpack.c.l.b16 %v373
      %v1677 = vunpack.c.l.b16 %v374
      %v1678 = vunpack.c.h.b16 %v374
      %v1679 = vunpack.c.l.b16 %v375
      %v1680 = vunpack.c.l.b16 %v376
      %v1681 = vunpack.c.h.b16 %v376
      %v1682 = vunpack.c.l.b16 %v377
      %v1683 = vunpack.c.l.b16 %v378
      %v1684 = vunpack.c.h.b16 %v378
      %v1685 = vunpack.c.l.b16 %v379
      %v1686 = vunpack.c.l.b16 %v380
      %v1687 = vunpack.c.h.b16 %v380
      %v1688 = vunpack.c.l.b16 %v381
      %v1689 = vunpack.c.l.b16 %v382
      %v1690 = vunpack.c.h.b16 %v382
      %v1691 = vunpack.c.l.b16 %v383
      %v1692 = vunpack.c.l.b16 %v384
      %v1693 = vunpack.c.h.b16 %v384
      %v1694 = vunpack.c.l.b16 %v385
      %v1695 = vunpack.c.l.b16 %v386
      %v1696 = vunpack.c.h.b16 %v386
      %v1697 = vunpack.c.l.b16 %v387
      %v1698 = vunpack.c.l.b16 %v388
      %v1699 = vunpack.c.h.b16 %v388
      %v1700 = vunpack.c.l.b16 %v389
      %v1701 = vunpack.c.l.b16 %v390
      %v1702 = vunpack.c.h.b16 %v390
      %v1703 = vunpack.c.l.b16 %v391
      %v1704 = vunpack.c.l.b16 %v392
      %v1705 = vunpack.c.h.b16 %v392
      %v1706 = vunpack.c.l.b16 %v393
      %v1707 = vunpack.c.l.b16 %v394
      %v1708 = vunpack.c.h.b16 %v394
      %v1709 = vunpack.c.l.b16 %v395
      %v1710 = vunpack.c.l.b16 %v396
      %v1711 = vunpack.c.h.b16 %v396
      %v1712 = vunpack.c.l.b16 %v397
      %v1713 = vunpack.c.l.b16 %v398
      %v1714 = vunpack.c.h.b16 %v398
      %v1715 = vunpack.c.l.b16 %v399
      %v1716 = vunpack.c.l.b16 %v400
      %v1717 = vunpack.c.h.b16 %v400
      %v1718 = vunpack.c.l.b16 %v401
      %v1719 = vunpack.c.l.b16 %v402
      %v1720 = vunpack.c.h.b16 %v402
      %v1721 = vunpack.c.l.b16 %v403
      %v1722 = vunpack.c.l.b16 %v404
      %v1723 = vunpack.c.h.b16 %v404
      %v1724 = vunpack.c.l.b16 %v405
      %v1725 = vunpack.c.l.b16 %v406
      %v1726 = vunpack.c.h.b16 %v406
      %v1727 = vunpack.c.l.b16 %v407
      %v1728 = vunpack.c.l.b16 %v408
      %v1729 = vunpack.c.h.b16 %v408
      %v1730 = vunpack.c.l.b16 %v409
      %v1731 = vunpack.c.l.b16 %v410
      %v1732 = vunpack.c.h.b16 %v410
      %v1733 = vunpack.c.l.b16 %v411
      %v1734 = vunpack.c.l.b16 %v412
      %v1735 = vunpack.c.h.b16 %v412
      %v1736 = vunpack.c.l.b16 %v413
      %v1737 = vunpack.c.l.b16 %v414
      %v1738 = vunpack.c.h.b16 %v414
      %v1739 = vunpack.c.l.b16 %v415
      %v1740 = vunpack.c.l.b16 %v416
      %v1741 = vunpack.c.h.b16 %v416
      %v1742 = vunpack.c.l.b16 %v417
      %v1743 = vunpack.c.l.b16 %v418
      %v1744 = vunpack.c.h.b16 %v418
      %v1745 = vunpack.c.l.b16 %v419
      %v1746 = vunpack.c.l.b16 %v420
      %v1747 = vunpack.c.h.b16 %v420
      %v1748 = vunpack.c.l.b16 %v421
      %v1749 = vunpack.c.l.b16 %v422
      %v1750 = vunpack.c.h.b16 %v422
      %v1751 = vunpack.c.l.b16 %v423
      %v1752 = vunpack.c.l.b16 %v424
      %v1753 = vunpack.c.h.b16 %v424
      %v1754 = vunpack.c.l.b16 %v425
      %v1755 = vunpack.c.l.b16 %v426
      %v1756 = vunpack.c.h.b16 %v426
      %v1757 = vunpack.c.l.b16 %v427
      %v1758 = vunpack.c.l.b16 %v428
      %v1759 = vunpack.c.h.b16 %v428
      %v1760 = vunpack.c.l.b16 %v429
      %v1761 = vunpack.c.l.b16 %v430
      %v1762 = vunpack.c.h.b16 %v430
      %v1763 = vunpack.c.l.b16 %v431
      %v1764 = vunpack.c.l.b16 %v432
      %v1765 = vunpack.c.h.b16 %v432
      %v1766 = vunpack.c.l.b16 %v433
      %v1767 = vunpack.c.l.b16 %v434
      %v1768 = vunpack.c.h.b16 %v434
      %v1769 = vunpack.c.l.b16 %v435
      %v1770 = vunpack.c.l.b16 %v436
      %v1771 = vunpack.c.h.b16 %v436
      %v1772 = vunpack.c.l.b16 %v437
      %v1773 = vunpack.c.l.b16 %v438
      %v1774 = vunpack.c.h.b16 %v438
      %v1775 = vunpack.c.l.b16 %v439
      %v1776 = vunpack.c.l.b16 %v440
      %v1777 = vunpack.c.h.b16 %v440
      %v1778 = vunpack.c.l.b16 %v441
      %v1779 = vunpack.c.l.b16 %v442
      %v1780 = vunpack.c.h.b16 %v442
      %v1781 = vunpack.c.l.b16 %v443
      %v1782 = vunpack.c.l.b16 %v444
      %v1783 = vunpack.c.h.b16 %v444
      %v1784 = vunpack.c.l.b16 %v445
      %v1785 = vunpack.c.l.b16 %v446
      %v1786 = vunpack.c.h.b16 %v446
      %v1787 = vunpack.c.l.b16 %v447
      %v1788 = vunpack.c.l.b16 %v448
      %v1789 = vunpack.c.h.b16 %v448
      %v1790 = vunpack.c.l.b16 %v449
      %v1791 = vunpack.c.l.b16 %v450
      %v1792 = vunpack.c.h.b16 %v450
      %v1793 = vunpack.c.l.b16 %v451
      %v1794 = vunpack.c.l.b16 %v452
      %v1795 = vunpack.c.h.b16 %v452
      %v1796 = vunpack.c.l.b16 %v453
      %v1797 = vunpack.c.l.b16 %v454
      %v1798 = vunpack.c.h.b16 %v454
      %v1799 = vunpack.c.l.b16 %v455
      %v1800 = vunpack.c.l.b16 %v456
      %v1801 = vunpack.c.h.b16 %v456
      %v1802 = vunpack.c.l.b16 %v457
      %v1803 = vunpack.c.l.b16 %v458
      %v1804 = vunpack.c.h.b16 %v458
      %v1805 = vunpack.c.l.b16 %v459
      %v1806 = vunpack.c.l.b16 %v460
      %v1807 = vunpack.c.h.b16 %v460
      %v1808 = vunpack.c.l.b16 %v461
      %v1809 = vunpack.c.l.b16 %v462
      %v1810 = vunpack.c.h.b16 %v462
      %v1811 = vunpack.c.l.b16 %v463
      %v1812 = vunpack.c.l.b16 %v464
      %v1813 = vunpack.c.h.b16 %v464
      %v1814 = vunpack.c.l.b16 %v465
      %v1815 = vunpack.c.l.b16 %v466
      %v1816 = vunpack.c.h.b16 %v466
      %v1817 = vunpack.c.l.b16 %v467
      %v1818 = vunpack.c.l.b16 %v468
      %v1819 = vunpack.c.h.b16 %v468
      %v1820 = vunpack.c.l.b16 %v469
      %v1821 = vunpack.c.l.b16 %v470
      %v1822 = vunpack.c.h.b16 %v470
      %v1823 = vunpack.c.l.b16 %v471
      %v1824 = vunpack.c.l.b16 %v472
      %v1825 = vunpack.c.h.b16 %v472
      %v1826 = vunpack.c.l.b16 %v473
      %v1827 = vunpack.c.l.b16 %v474
      %v1828 = vunpack.c.h.b16 %v474
      %v1829 = vunpack.c.l.b16 %v475
      %v1830 = vunpack.c.l.b16 %v476
      %v1831 = vunpack.c.h.b16 %v476
      %v1832 = vunpack.c.l.b16 %v477
      %v1833 = vunpack.c.l.b16 %v478
      %v1834 = vunpack.c.h.b16 %v478
      %v1835 = vunpack.c.l.b16 %v479
      %v1836 = vunpack.c.l.b16 %v480
      %v1837 = vunpack.c.h.b16 %v480
      %v1838 = vunpack.c.l.b16 %v481
      %v1839 = vunpack.c.l.b16 %v482
      %v1840 = vunpack.c.h.b16 %v482
      %v1841 = vunpack.c.l.b16 %v483
      %v1842 = vunpack.c.l.b16 %v484
      %v1843 = vunpack.c.h.b16 %v484
      %v1844 = vunpack.c.l.b16 %v485
      %v1845 = vunpack.c.l.b16 %v486
      %v1846 = vunpack.c.h.b16 %v486
      %v1847 = vunpack.c.l.b16 %v487
      %v1848 = vunpack.c.l.b16 %v488
      %v1849 = vunpack.c.h.b16 %v488
      %v1850 = vunpack.c.l.b16 %v489
      %v1851 = vunpack.c.l.b16 %v490
      %v1852 = vunpack.c.h.b16 %v490
      %v1853 = vunpack.c.l.b16 %v491
      %v1854 = vunpack.c.l.b16 %v492
      %v1855 = vunpack.c.h.b16 %v492
      %v1856 = vunpack.c.l.b16 %v493
      %v1857 = vunpack.c.l.b16 %v494
      %v1858 = vunpack.c.h.b16 %v494
      %v1859 = vunpack.c.l.b16 %v495
      %v1860 = vunpack.c.l.b16 %v496
      %v1861 = vunpack.c.h.b16 %v496
      %v1862 = vunpack.c.l.b16 %v497
      %v1863 = vunpack.c.l.b16 %v498
      %v1864 = vunpack.c.h.b16 %v498
      %v1865 = vunpack.c.l.b16 %v499
      %v1866 = vunpack.c.l.b16 %v500
      %v1867 = vunpack.c.h.b16 %v500
      %v1868 = vunpack.c.l.b16 %v501
      %v1869 = vunpack.c.l.b16 %v502
      %v1870 = vunpack.c.h.b16 %v502
      %v1871 = vunpack.c.l.b16 %v503
      %v1872 = vunpack.c.l.b16 %v504
      %v1873 = vunpack.c.h.b16 %v504
      %v1874 = vunpack.c.l.b16 %v505
      %v1875 = vunpack.c.l.b16 %v506
      %v1876 = vunpack.c.h.b16 %v506
      %v1877 = vunpack.c.l.b16 %v507
      %v1878 = vunpack.c.l.b16 %v508
      %v1879 = vunpack.c.h.b16 %v508
      %v1880 = vunpack.c.l.b16 %v509
      %v1881 = vunpack.c.l.b16 %v510
      %v1882 = vunpack.c.h.b16 %v510
      %v1883 = vunpack.c.l.b16 %v511
      %v1884 = vunpack.c.l.b16 %v512
      %v1885 = vunpack.c.h.b16 %v512
      %v1886 = vunpack.c.l.b16 %v513
      %v1887 = vunpack.c.l.b16 %v514
      %v1888 = vunpack.c.h.b16 %v514
      %v1889 = vunpack.c.l.b16 %v515
      %v1890 = vunpack.c.l.b16 %v516
      %v1891 = vunpack.c.h.b16 %v516
      %v1892 = vunpack.c.l.b16 %v517
      %v1893 = vunpack.c.l.b16 %v518
      %v1894 = vunpack.c.h.b16 %v518
      %v1895 = vunpack.c.l.b16 %v519
      %v1896 = vunpack.c.l.b16 %v520
      %v1897 = vunpack.c.h.b16 %v520
      %v1898 = vunpack.c.l.b16 %v521
      %v1899 = vunpack.c.l.b16 %v522
      %v1900 = vunpack.c.h.b16 %v522
      %v1901 = vunpack.c.l.b16 %v523
      %v1902 = vunpack.c.l.b16 %v524
      %v1903 = vunpack.c.h.b16 %v524
      %v1904 = vunpack.c.l.b16 %v525
      %v1905 = vunpack.c.l.b16 %v526
      %v1906 = vunpack.c.h.b16 %v526
      %v1907 = vunpack.c.l.b16 %v527
      %v1908 = vunpack.c.l.b16 %v528
      %v1909 = vunpack.c.h.b16 %v528
      %v1910 = vunpack.c.l.b16 %v529
      %v1911 = vunpack.c.l.b16 %v530
      %v1912 = vunpack.c.h.b16 %v530
      %v1913 = vunpack.c.l.b16 %v531
      %v1914 = vunpack.c.l.b16 %v532
      %v1915 = vunpack.c.h.b16 %v532
      %v1916 = vunpack.c.l.b16 %v533
      %v1917 = vunpack.c.l.b16 %v534
      %v1918 = vunpack.c.h.b16 %v534
      %v1919 = vunpack.c.l.b16 %v535
      %v1920 = vunpack.c.l.b16 %v536
      %v1921 = vunpack.c.h.b16 %v536
      %v1922 = vunpack.c.l.b16 %v537
      %v1923 = vunpack.c.l.b16 %v538
      %v1924 = vunpack.c.h.b16 %v538
      %v1925 = vunpack.c.l.b16 %v539
      %v1926 = vunpack.c.l.b16 %v540
      %v1927 = vunpack.c.h.b16 %v540
      %v1928 = vunpack.c.l.b16 %v541
      %v1929 = vunpack.c.l.b16 %v542
      %v1930 = vunpack.c.h.b16 %v542
      %v1931 = vunpack.c.l.b16 %v543
      %v1932 = vunpack.c.l.b16 %v544
      %v1933 = vunpack.c.h.b16 %v544
      %v1934 = vunpack.c.l.b16 %v545
      %v1935 = vunpack.c.l.b16 %v546
      %v1936 = vunpack.c.h.b16 %v546
      %v1937 = vunpack.c.l.b16 %v547
      %v1938 = vunpack.c.l.b16 %v548
      %v1939 = vunpack.c.h.b16 %v548
      %v1940 = vunpack.c.l.b16 %v549
      %v1941 = vunpack.c.l.b16 %v550
      %v1942 = vunpack.c.h.b16 %v550
      %v1943 = vunpack.c.l.b16 %v551
      %v1944 = vunpack.c.l.b16 %v552
      %v1945 = vunpack.c.h.b16 %v552
      %v1946 = vunpack.c.l.b16 %v553
      %v1947 = vunpack.c.l.b16 %v554
      %v1948 = vunpack.c.h.b16 %v554
      %v1949 = vunpack.c.l.b16 %v555
      %v1950 = vunpack.c.l.b16 %v556
      %v1951 = vunpack.c.h.b16 %v556
      %v1952 = vunpack.c.l.b16 %v557
      %v1953 = vunpack.c.l.b16 %v558
      %v1954 = vunpack.c.h.b16 %v558
      %v1955 = vunpack.c.l.b16 %v559
      %v1956 = vunpack.c.l.b16 %v560
      %v1957 = vunpack.c.h.b16 %v560
      %v1958 = vunpack.c.l.b16 %v561
      %v1959 = vunpack.c.l.b16 %v562
      %v1960 = vunpack.c.h.b16 %v562
      %v1961 = vunpack.c.l.b16 %v563
      %v1962 = vunpack.c.l.b16 %v564
      %v1963 = vunpack.c.h.b16 %v564
      %v1964 = vunpack.c.l.b16 %v565
      %v1965 = vunpack.c.l.b16 %v566
      %v1966 = vunpack.c.h.b16 %v566
      %v1967 = vunpack.c.l.b16 %v567
      %v1968 = vunpack.c.l.b16 %v568
      %v1969 = vunpack.c.h.b16 %v568
      %v1970 = vunpack.c.l.b16 %v569
      %v1971 = vunpack.c.l.b16 %v570
      %v1972 = vunpack.c.h.b16 %v570
      %v1973 = vunpack.c.l.b16 %v571
      %v1974 = vunpack.c.l.b16 %v572
      %v1975 = vunpack.c.h.b16 %v572
      %v1976 = vunpack.c.l.b16 %v573
      %v1977 = vunpack.c.l.b16 %v574
      %v1978 = vunpack.c.h.b16 %v574
      %v1979 = vunpack.c.l.b16 %v575
      %v1980 = vunpack.c.l.b16 %v576
      %v1981 = vunpack.c.h.b16 %v576
      %v1982 = vunpack.c.l.b16 %v577
      %v1983 = vunpack.c.l.b16 %v578
      %v1984 = vunpack.c.h.b16 %v578
      %v1985 = vunpack.c.l.b16 %v579
      %v1986 = vunpack.c.l.b16 %v580
      %v1987 = vunpack.c.h.b16 %v580
      %v1988 = vunpack.c.l.b16 %v581
      %v1989 = vunpack.c.l.b16 %v582
      %v1990 = vunpack.c.h.b16 %v582
      %v1991 = vunpack.c.l.b16 %v583
      %v1992 = vunpack.c.l.b16 %v584
      %v1993 = vunpack.c.h.b16 %v584
      %v1994 = vunpack.c.l.b16 %v585
      %v1995 = vunpack.c.l.b16 %v586
      %v1996 = vunpack.c.h.b16 %v586
      %v1997 = vunpack.c.l.b16 %v587
      %v1998 = vunpack.c.l.b16 %v588
      %v1999 = vunpack.c.h.b16 %v588
      %v2000 = vunpack.c.l.b16 %v589
      %v2001 = vunpack.c.l.b16 %v590
      %v2002 = vunpack.c.h.b16 %v590
      %v2003 = vunpack.c.l.b16 %v591
      %v2004 = vunpack.c.l.b16 %v592
      %v2005 = vunpack.c.h.b16 %v592
      %v2006 = vunpack.c.l.b16 %v593
      %v2007 = vunpack.c.l.b16 %v594
      %v2008 = vunpack.c.h.b16 %v594
      %v2009 = vunpack.c.l.b16 %v595
      %v2010 = vunpack.c.l.b16 %v596
      %v2011 = vunpack.c.h.b16 %v596
      %v2012 = vunpack.c.l.b16 %v597
      %v2013 = vunpack.c.l.b16 %v598
      %v2014 = vunpack.c.h.b16 %v598
      %v2015 = vunpack.c.l.b16 %v599
      %v2016 = vunpack.c.l.b16 %v600
      %v2017 = vunpack.c.h.b16 %v600
      %v2018 = vunpack.c.l.b16 %v601
      %v2019 = vunpack.c.l.b16 %v602
      %v2020 = vunpack.c.h.b16 %v602
      %v2021 = vunpack.c.l.b16 %v603
      %v2022 = vunpack.c.l.b16 %v604
      %v2023 = vunpack.c.h.b16 %v604
      %v2024 = vunpack.c.l.b16 %v605
      %v2025 = vunpack.c.l.b16 %v606
      %v2026 = vunpack.c.h.b16 %v606
      %v2027 = vunpack.c.l.b16 %v607
      %v2028 = vunpack.c.l.b16 %v608
      %v2029 = vunpack.c.h.b16 %v608
      %v2030 = vunpack.c.l.b16 %v609
      %v2031 = vunpack.c.l.b16 %v610
      %v2032 = vunpack.c.h.b16 %v610
      %v2033 = vunpack.c.l.b16 %v611
      %v2034 = vunpack.c.l.b16 %v612
      %v2035 = vunpack.c.h.b16 %v612
      %v2036 = vunpack.c.l.b16 %v613
      %v2037 = vunpack.c.l.b16 %v614
      %v2038 = vunpack.c.h.b16 %v614
      %v2039 = vunpack.c.l.b16 %v615
      %v2040 = vunpack.c.l.b16 %v616
      %v2041 = vunpack.c.h.b16 %v616
      %v2042 = vunpack.c.l.b16 %v617
      %v2043 = vunpack.c.l.b16 %v618
      %v2044 = vunpack.c.h.b16 %v618
      %v2045 = vunpack.c.l.b16 %v619
      %v2046 = vunpack.c.l.b16 %v620
      %v2047 = vunpack.c.h.b16 %v620
      %v2048 = vunpack.c.l.b16 %v621
      %v2049 = vunpack.c.l.b16 %v622
      %v2050 = vunpack.c.h.b16 %v622
      %v2051 = vunpack.c.l.b16 %v623
      %v2052 = vunpack.c.l.b16 %v624
      %v2053 = vunpack.c.h.b16 %v624
      %v2054 = vunpack.c.l.b16 %v625
      %v2055 = vunpack.c.l.b16 %v626
      %v2056 = vunpack.c.h.b16 %v626
      %v2057 = vunpack.c.l.b16 %v627
      %v2058 = vunpack.c.l.b16 %v628
      %v2059 = vunpack.c.h.b16 %v628
      %v2060 = vunpack.c.l.b16 %v629
      %v2061 = vunpack.c.l.b16 %v630
      %v2062 = vunpack.c.h.b16 %v630
      %v2063 = vunpack.c.l.b16 %v631
      %v2064 = vunpack.c.l.b16 %v632
      %v2065 = vunpack.c.h.b16 %v632
      %v2066 = vunpack.c.l.b16 %v633
      %v2067 = vunpack.c.l.b16 %v634
      %v2068 = vunpack.c.h.b16 %v634
      %v2069 = vunpack.c.l.b16 %v635
      %v2070 = vunpack.c.l.b16 %v636
      %v2071 = vunpack.c.h.b16 %v636
      %v2072 = vunpack.c.l.b16 %v637
      %v2073 = vunpack.c.l.b16 %v638
      %v2074 = vunpack.c.h.b16 %v638
      %v2075 = vunpack.c.l.b16 %v639
      %v2076 = vunpack.c.l.b16 %v640
      %v2077 = vunpack.c.h.b16 %v640
      %v2078 = vunpack.c.l.b16 %v641
      %v2079 = vunpack.c.l.b16 %v642
      %v2080 = vunpack.c.h.b16 %v642
      %v2081 = vunpack.c.l.b16 %v643
      %v2082 = vunpack.c.l.b16 %v644
      %v2083 = vunpack.c.h.b16 %v644
      %v2084 = vunpack.c.l.b16 %v645
      %v2085 = vunpack.c.l.b16 %v646
      %v2086 = vunpack.c.h.b16 %v646
      %v2087 = vunpack.c.l.b16 %v647
      %v2088 = vunpack.c.l.b16 %v648
      %v2089 = vunpack.c.h.b16 %v648
      %v2090 = vunpack.c.l.b16 %v649
      %v2091 = vunpack.c.l.b16 %v650
      %v2092 = vunpack.c.h.b16 %v650
      %v2093 = vunpack.c.l.b16 %v651
      %v2094 = vunpack.c.l.b16 %v652
      %v2095 = vunpack.c.h.b16 %v652
      %v2096 = vunpack.c.l.b16 %v653
      %v2097 = vunpack.c.l.b16 %v654
      %v2098 = vunpack.c.h.b16 %v654
      %v2099 = vunpack.c.l.b16 %v655
      %v2100 = vunpack.c.l.b16 %v656
      %v2101 = vunpack.c.h.b16 %v656
      %v2102 = vunpack.c.l.b16 %v657
      %v2103 = vunpack.c.l.b16 %v658
      %v2104 = vunpack.c.h.b16 %v658
      %v2105 = vunpack.c.l.b16 %v659
      %v2106 = vunpack.c.l.b16 %v660
      %v2107 = vunpack.c.h.b16 %v660
      %v2108 = vunpack.c.l.b16 %v661
      %v2109 = vunpack.c.l.b16 %v662
      %v2110 = vunpack.c.h.b16 %v662
      %v2111 = vunpack.c.l.b16 %v663
      %v2112 = vunpack.c.l.b16 %v664
      %v2113 = vunpack.c.h.b16 %v664
      %v2114 = vunpack.c.l.b16 %v665
      %v2115 = vunpack.c.l.b16 %v666
      %v2116 = vunpack.c.h.b16 %v666
      %v2117 = vunpack.c.l.b16 %v667
      %v2118 = vunpack.c.l.b16 %v668
      %v2119 = vunpack.c.h.b16 %v668
      %v2120 = vunpack.c.l.b16 %v669
      %v2121 = vunpack.c.l.b16 %v670
      %v2122 = vunpack.c.h.b16 %v670
      %v2123 = vunpack.c.l.b16 %v671
      %v2124 = vunpack.c.l.b16 %v672
      %v2125 = vunpack.c.h.b16 %v672
      %v2126 = vunpack.c.l.b16 %v673
      %v2127 = vunpack.c.l.b16 %v674
      %v2128 = vunpack.c.h.b16 %v674
      %v2129 = vunpack.c.l.b16 %v675
      %v2130 = vunpack.c.l.b16 %v676
      %v2131 = vunpack.c.h.b16 %v676
      %v2132 = vunpack.c.l.b16 %v677
      %v2133 = vunpack.c.l.b16 %v678
      %v2134 = vunpack.c.h.b16 %v678
      %v2135 = vunpack.c.l.b16 %v679
      %v2136 = vunpack.c.l.b16 %v680
      %v2137 = vunpack.c.h.b16 %v680
      %v2138 = vunpack.c.l.b16 %v681
      %v2139 = vunpack.c.l.b16 %v682
      %v2140 = vunpack.c.h.b16 %v682
      %v2141 = vunpack.c.l.b16 %v683
      %v2142 = vunpack.c.l.b16 %v684
      %v2143 = vunpack.c.h.b16 %v684
      %v2144 = vunpack.c.l.b16 %v685
      %v2145 = vunpack.c.l.b16 %v686
      %v2146 = vunpack.c.h.b16 %v686
      %v2147 = vunpack.c.l.b16 %v687
      %v2148 = vunpack.c.l.b16 %v688
      %v2149 = vunpack.c.h.b16 %v688
      %v2150 = vunpack.c.l.b16 %v689
      %v2151 = vunpack.c.l.b16 %v690
      %v2152 = vunpack.c.h.b16 %v690
      %v2153 = vunpack.c.l.b16 %v691
      %v2154 = vunpack.c.l.b16 %v692
      %v2155 = vunpack.c.h.b16 %v692
      %v2156 = vunpack.c.l.b16 %v693
      %v2157 = vunpack.c.l.b16 %v694
      %v2158 = vunpack.c.h.b16 %v694
      %v2159 = vunpack.c.l.b16 %v695
      %v2160 = vunpack.c.l.b16 %v696
      %v2161 = vunpack.c.h.b16 %v696
      %v2162 = vunpack.c.l.b16 %v697
      %v2163 = vunpack.c.l.b16 %v698
      %v2164 = vunpack.c.h.b16 %v698
      %v2165 = vunpack.c.l.b16 %v699
      %v2166 = vunpack.c.l.b16 %v700
      %v2167 = vunpack.c.h.b16 %v700
      %v2168 = vunpack.c.l.b16 %v701
      %v2169 = vunpack.c.l.b16 %v702
      %v2170 = vunpack.c.h.b16 %v702
      %v2171 = vunpack.c.l.b16 %v703
      %v2172 = vunpack.c.l.b16 %v704
      %v2173 = vunpack.c.h.b16 %v704
      %v2174 = vunpack.c.l.b16 %v705
      %v2175 = vunpack.c.l.b16 %v706
      %v2176 = vunpack.c.h.b16 %v706
      %v2177 = vunpack.c.l.b16 %v707
      %v2178 = vunpack.c.l.b16 %v708
      %v2179 = vunpack.c.h.b16 %v708
      %v2180 = vunpack.c.l.b16 %v709
      %v2181 = vunpack.c.l.b16 %v710
      %v2182 = vunpack.c.h.b16 %v710
      %v2183 = vunpack.c.l.b16 %v711
      %v2184 = vunpack.c.l.b16 %v712
      %v2185 = vunpack.c.h.b16 %v712
      %v2186 = vunpack.c.l.b16 %v713
      %v2187 = vunpack.c.l.b16 %v714
      %v2188 = vunpack.c.h.b16 %v714
      %v2189 = vunpack.c.l.b16 %v715
      %v2190 = vunpack.c.l.b16 %v716
      %v2191 = vunpack.c.h.b16 %v716
      %v2192 = vunpack.c.l.b16 %v717
      %v2193 = vunpack.c.l.b16 %v718
      %v2194 = vunpack.c.h.b16 %v718
      %v2195 = vunpack.c.l.b16 %v719
      %v2196 = vunpack.c.l.b16 %v720
      %v2197 = vunpack.c.h.b16 %v720
      %v2198 = vunpack.c.l.b16 %v721
      %v2199 = vunpack.c.l.b16 %v722
      %v2200 = vunpack.c.h.b16 %v722
      %v2201 = vunpack.c.l.b16 %v723
      %v2202 = vunpack.c.l.b16 %v724
      %v2203 = vunpack.c.h.b16 %v724
      %v2204 = vunpack.c.l.b16 %v725
      %v2205 = vunpack.c.l.b16 %v726
      %v2206 = vunpack.c.h.b16 %v726
      %v2207 = vunpack.c.l.b16 %v727
      %v2208 = vunpack.c.l.b16 %v728
      %v2209 = vunpack.c.h.b16 %v728
      %v2210 = vunpack.c.l.b16 %v729
      %v2211 = vunpack.c.l.b16 %v730
      %v2212 = vunpack.c.h.b16 %v730
      %v2213 = vunpack.c.l.b16 %v731
      %v2214 = vunpack.c.l.b16 %v732
      %v2215 = vunpack.c.h.b16 %v732
      %v2216 = vunpack.c.l.b16 %v733
      %v2217 = vunpack.c.l.b16 %v734
      %v2218 = vunpack.c.h.b16 %v734
      %v2219 = vunpack.c.l.b16 %v735
      %v2220 = vunpack.c.l.b16 %v736
      %v2221 = vunpack.c.h.b16 %v736
      %v2222 = vunpack.c.l.b16 %v737
      %v2223 = vunpack.c.l.b16 %v738
      %v2224 = vunpack.c.h.b16 %v738
      %v2225 = vunpack.c.l.b16 %v739
      %v2226 = vunpack.c.l.b16 %v740
      %v2227 = vunpack.c.h.b16 %v740
      %v2228 = vunpack.c.l.b16 %v741
      %v2229 = vunpack.c.l.b16 %v742
      %v2230 = vunpack.c.h.b16 %v742
      %v2231 = vunpack.c.l.b16 %v743
      %v2232 = vunpack.c.l.b16 %v744
      %v2233 = vunpack.c.h.b16 %v744
      %v2234 = vunpack.c.l.b16 %v745
      %v2235 = vunpack.c.l.b16 %v746
      %v2236 = vunpack.c.h.b16 %v746
      %v2237 = vunpack.c.l.b16 %v747
      %v2238 = vunpack.c.l.b16 %v748
      %v2239 = vunpack.c.h.b16 %v748
      %v2240 = vunpack.c.l.b16 %v749
      %v2241 = vunpack.c.l.b16 %v750
      %v2242 = vunpack.c.h.b16 %v750
      %v2243 = vunpack.c.l.b16 %v751
      %v2244 = vunpack.c.l.b16 %v752
      %v2245 = vunpack.c.h.b16 %v752
      %v2246 = vunpack.c.l.b16 %v753
      %v2247 = vunpack.c.l.b16 %v754
      %v2248 = vunpack.c.h.b16 %v754
      %v2249 = vunpack.c.l.b16 %v755
      %v2250 = vunpack.c.l.b16 %v756
      %v2251 = vunpack.c.h.b16 %v756
      %v2252 = vunpack.c.l.b16 %v757
      %v2253 = vunpack.c.l.b16 %v758
      %v2254 = vunpack.c.h.b16 %v758
      %v2255 = vunpack.c.l.b16 %v759
      %v2256 = vunpack.c.l.b16 %v760
      %v2257 = vunpack.c.h.b16 %v760
      %v2258 = vunpack.c.l.b16 %v761
      %v2259 = vunpack.c.l.b16 %v762
      %v2260 = vunpack.c.h.b16 %v762
      %v2261 = vunpack.c.l.b16 %v763
      %v2262 = vunpack.c.l.b16 %v764
      %v2263 = vunpack.c.h.b16 %v764
      %v2264 = vunpack.c.l.b16 %v765
      %v2265 = vunpack.c.l.b16 %v766
      %v2266 = vunpack.c.h.b16 %v766
      %v2267 = vunpack.c.l.b16 %v767
      %v2268 = vunpack.c.l.b16 %v768
      %v2269 = vunpack.c.h.b16 %v768
      %v2270 = vunpack.c.l.b16 %v769
      %v2271 = vunpack.c.l.b16 %v770
      %v2272 = vunpack.c.h.b16 %v770
      %v2273 = vunpack.c.l.b16 %v771
      %v2274 = vunpack.c.l.b16 %v772
      %v2275 = vunpack.c.h.b16 %v772
      %v2276 = vunpack.c.l.b16 %v773
      %v2277 = vunpack.c.l.b16 %v774
      %v2278 = vunpack.c.h.b16 %v774
      %v2279 = vunpack.c.l.b16 %v775
      %v2280 = vunpack.c.l.b16 %v776
      %v2281 = vunpack.c.h.b16 %v776
      %v2282 = vunpack.c.l.b16 %v777
      %v2283 = vunpack.c.l.b16 %v778
      %v2284 = vunpack.c.h.b16 %v778
      %v2285 = vunpack.c.l.b16 %v779
      %v2286 = vunpack.c.l.b16 %v780
      %v2287 = vunpack.c.h.b16 %v780
      %v2288 = vunpack.c.l.b16 %v781
      %v2289 = vunpack.c.l.b16 %v782
      %v2290 = vunpack.c.h.b16 %v782
      %v2291 = vunpack.c.l.b16 %v783
      %v2292 = vunpack.c.l.b16 %v784
      %v2293 = vunpack.c.h.b16 %v784
      %v2294 = vunpack.c.l.b16 %v785
      %v2295 = vunpack.c.l.b16 %v786
      %v2296 = vunpack.c.h.b16 %v786
      %v2297 = vunpack.c.l.b16 %v787
      %v2298 = vunpack.c.l.b16 %v788
      %v2299 = vunpack.c.h.b16 %v788
      %v2300 = vunpack.c.l.b16 %v789
      %v2301 = vunpack.c.l.b16 %v790
      %v2302 = vunpack.c.h.b16 %v790
      %v2303 = vunpack.c.l.b16 %v791
      %v2304 = vunpack.c.l.b16 %v792
      %v2305 = vunpack.c.h.b16 %v792
      %v2306 = vunpack.c.l.b16 %v793
      %v2307 = vunpack.c.l.b16 %v794
      %v2308 = vunpack.c.h.b16 %v794
      %v2309 = vunpack.c.l.b16 %v795
      %v2310 = vunpack.c.l.b16 %v796
      %v2311 = vunpack.c.h.b16 %v796
      %v2312 = vunpack.c.l.b16 %v797
      %v2313 = vunpack.c.l.b16 %v798
      %v2314 = vunpack.c.h.b16 %v798
      %v2315 = vunpack.c.l.b16 %v799
      %v2316 = vunpack.c.l.b16 %v800
      %v2317 = vunpack.c.h.b16 %v800
      %v2318 = vunpack.c.l.b16 %v801
      %v2319 = vunpack.c.l.b16 %v802
      %v2320 = vunpack.c.h.b16 %v802
      %v2321 = vunpack.c.l.b16 %v803
      %v2322 = vunpack.c.l.b16 %v804
      %v2323 = vunpack.c.h.b16 %v804
      %v2324 = vunpack.c.l.b16 %v805
      %v2325 = vunpack.c.l.b16 %v806
      %v2326 = vunpack.c.h.b16 %v806
      %v2327 = vunpack.c.l.b16 %v807
      %v2328 = vunpack.c.l.b16 %v808
      %v2329 = vunpack.c.h.b16 %v808
      %v2330 = vunpack.c.l.b16 %v809
      %v2331 = vunpack.c.l.b16 %v810
      %v2332 = vunpack.c.h.b16 %v810
      %v2333 = vunpack.c.l.b16 %v811
      %v2334 = vunpack.c.l.b16 %v812
      %v2335 = vunpack.c.h.b16 %v812
      %v2336 = vunpack.c.l.b16 %v813
      %v2337 = vunpack.c.l.b16 %v814
      %v2338 = vunpack.c.h.b16 %v814
      %v2339 = vunpack.c.l.b16 %v815
      %v2340 = vunpack.c.l.b16 %v816
      %v2341 = vunpack.c.h.b16 %v816
      %v2342 = vunpack.c.l.b16 %v817
      %v2343 = vunpack.c.l.b16 %v818
      %v2344 = vunpack.c.h.b16 %v818
      %v2345 = vunpack.c.l.b16 %v819
      %v2346 = vunpack.c.l.b16 %v820
      %v2347 = vunpack.c.h.b16 %v820
      %v2348 = vunpack.c.l.b16 %v821
      %v2349 = vunpack.c.l.b16 %v822
      %v2350 = vunpack.c.h.b16 %v822
      %v2351 = vunpack.c.l.b16 %v823
      %v2352 = vunpack.c.l.b16 %v824
      %v2353 = vunpack.c.h.b16 %v824
      %v2354 = vunpack.c.l.b16 %v825
      %v2355 = vunpack.c.l.b16 %v826
      %v2356 = vunpack.c.h.b16 %v826
      %v2357 = vunpack.c.l.b16 %v827
      %v2358 = vunpack.c.l.b16 %v828
      %v2359 = vunpack.c.h.b16 %v828
      %v2360 = vunpack.c.l.b16 %v829
      %v2361 = vunpack.c.l.b16 %v830
      %v2362 = vunpack.c.h.b16 %v830
      %v2363 = vunpack.c.l.b16 %v831
      %v2364 = vunpack.c.l.b16 %v832
      %v2365 = vunpack.c.h.b16 %v832
      %v2366 = vunpack.c.l.b16 %v833
      %v2367 = vunpack.c.l.b16 %v834
      %v2368 = vunpack.c.h.b16 %v834
      %v2369 = vunpack.c.l.b16 %v835
      %v2370 = vunpack.c.l.b16 %v836
      %v2371 = vunpack.c.h.b16 %v836
      %v2372 = vunpack.c.l.b16 %v837
      %v2373 = vunpack.c.l.b16 %v838
      %v2374 = vunpack.c.h.b16 %v838
      %v2375 = vunpack.c.l.b16 %v839
      %v2376 = vunpack.c.l.b16 %v840
      %v2377 = vunpack.c.h.b16 %v840
      %v2378 = vunpack.c.l.b16 %v841
      %v2379 = vunpack.c.l.b16 %v842
      %v2380 = vunpack.c.h.b16 %v842
      %v2381 = vunpack.c.l.b16 %v843
      %v2382 = vunpack.c.l.b16 %v844
      %v2383 = vunpack.c.h.b16 %v844
      %v2384 = vunpack.c.l.b16 %v845
      %v2385 = vunpack.c.l.b16 %v846
      %v2386 = vunpack.c.h.b16 %v846
      %v2387 = vunpack.c.l.b16 %v847
      %v2388 = vunpack.c.l.b16 %v848
      %v2389 = vunpack.c.h.b16 %v848
      %v2390 = vunpack.c.l.b16 %v849
      %v2391 = vunpack.c.l.b16 %v850
      %v2392 = vunpack.c.h.b16 %v850
      %v2393 = vunpack.c.l.b16 %v851
      %v2394 = vunpack.c.l.b16 %v852
      %v2395 = vunpack.c.h.b16 %v852
      %v2396 = vunpack.c.l.b16 %v853
      %v2397 = vunpack.c.l.b16 %v854
      %v2398 = vunpack.c.h.b16 %v854
      %v2399 = vunpack.c.l.b16 %v855
      %v2400 = vunpack.c.l.b16 %v856
      %v2401 = vunpack.c.h.b16 %v856
      %v2402 = vunpack.c.l.b16 %v857
      %v2403 = vunpack.c.l.b16 %v858
      %v2404 = vunpack.c.h.b16 %v858
      %v2405 = vunpack.c.l.b16 %v859
      %v2406 = vunpack.c.l.b16 %v860
      %v2407 = vunpack.c.h.b16 %v860
      %v2408 = vunpack.c.l.b16 %v861
      %v2409 = vpack.c.b16 %v1548, %v1545
      %v2410 = vpack.c.b16 %v1549, %v1546
      %v2411 = vpack.c.b16 %v1550, %v1547
      %v2412 = vpack.c.b16 %v1554, %v1551
      %v2413 = vpack.c.b16 %v1555, %v1552
      %v2414 = vpack.c.b16 %v1556, %v1553
      %v2415 = vpack.c.b16 %v1560, %v1557
      %v2416 = vpack.c.b16 %v1561, %v1558
      %v2417 = vpack.c.b16 %v1562, %v1559
      %v2418 = vpack.c.b16 %v1566, %v1563
      %v2419 = vpack.c.b16 %v1567, %v1564
      %v2420 = vpack.c.b16 %v1568, %v1565
      %v2421 = vpack.c.b16 %v1572, %v1569
      %v2422 = vpack.c.b16 %v1573, %v1570
      %v2423 = vpack.c.b16 %v1574, %v1571
      %v2424 = vpack.c.b16 %v1578, %v1575
      %v2425 = vpack.c.b16 %v1579, %v1576
      %v2426 = vpack.c.b16 %v1580, %v1577
      %v2427 = vpack.c.b16 %v1584, %v1581
      %v2428 = vpack.c.b16 %v1585, %v1582
      %v2429 = vpack.c.b16 %v1586, %v1583
      %v2430 = vpack.c.b16 %v1590, %v1587
      %v2431 = vpack.c.b16 %v1591, %v1588
      %v2432 = vpack.c.b16 %v1592, %v1589
      %v2433 = vpack.c.b16 %v1596, %v1593
      %v2434 = vpack.c.b16 %v1597, %v1594
      %v2435 = vpack.c.b16 %v1598, %v1595
      %v2436 = vpack.c.b16 %v1602, %v1599
      %v2437 = vpack.c.b16 %v1603, %v1600
      %v2438 = vpack.c.b16 %v1604, %v1601
      %v2439 = vpack.c.b16 %v1608, %v1605
      %v2440 = vpack.c.b16 %v1609, %v1606
      %v2441 = vpack.c.b16 %v1610, %v1607
      %v2442 = vpack.c.b16 %v1614, %v1611
      %v2443 = vpack.c.b16 %v1615, %v1612
      %v2444 = vpack.c.b16 %v1616, %v1613
      %v2445 = vpack.c.b16 %v1620, %v1617
      %v2446 = vpack.c.b16 %v1621, %v1618
      %v2447 = vpack.c.b16 %v1622, %v1619
      %v2448 = vpack.c.b16 %v1626, %v1623
      %v2449 = vpack.c.b16 %v1627, %v1624
      %v2450 = vpack.c.b16 %v1628, %v1625
      %v2451 = vpack.c.b16 %v1632, %v1629
      %v2452 = vpack.c.b16 %v1633, %v1630
      %v2453 = vpack.c.b16 %v1634, %v1631
      %v2454 = vpack.c.b16 %v1638, %v1635
      %v2455 = vpack.c.b16 %v1639, %v1636
      %v2456 = vpack.c.b16 %v1640, %v1637
      %v2457 = vpack.c.b16 %v1644, %v1641
      %v2458 = vpack.c.b16 %v1645, %v1642
      %v2459 = vpack.c.b16 %v1646, %v1643
      %v2460 = vpack.c.b16 %v1650, %v1647
      %v2461 = vpack.c.b16 %v1651, %v1648
      %v2462 = vpack.c.b16 %v1652, %v1649
      %v2463 = vpack.c.b16 %v1656, %v1653
      %v2464 = vpack.c.b16 %v1657, %v1654
      %v2465 = vpack.c.b16 %v1658, %v1655
      %v2466 = vpack.c.b16 %v1662, %v1659
      %v2467 = vpack.c.b16 %v1663, %v1660
      %v2468 = vpack.c.b16 %v1664, %v1661
      %v2469 = vpack.c.b16 %v1668, %v1665
      %v2470 = vpack.c.b16 %v1669, %v1666
      %v2471 = vpack.c.b16 %v1670, %v1667
      %v2472 = vpack.c.b16 %v1674, %v1671
      %v2473 = vpack.c.b16 %v1675, %v1672
      %v2474 = vpack.c.b16 %v1676, %v1673
      %v2475 = vpack.c.b16 %v1680, %v1677
      %v2476 = vpack.c.b16 %v1681, %v1678
      %v2477 = vpack.c.b16 %v1682, %v1679
      %v2478 = vpack.c.b16 %v1686, %v1683
      %v2479 = vpack.c.b16 %v1687, %v1684
      %v2480 = vpack.c.b16 %v1688, %v1685
      %v2481 = vpack.c.b16 %v1692, %v1689
      %v2482 = vpack.c.b16 %v1693, %v1690
      %v2483 = vpack.c.b16 %v1694, %v1691
      %v2484 = vpack.c.b16 %v1698, %v1695
      %v2485 = vpack.c.b16 %v1699, %v1696
      %v2486 = vpack.c.b16 %v1700, %v1697
      %v2487 = vpack.c.b16 %v1704, %v1701
      %v2488 = vpack.c.b16 %v1705, %v1702
      %v2489 = vpack.c.b16 %v1706, %v1703
      %v2490 = vpack.c.b16 %v1710, %v1707
      %v2491 = vpack.c.b16 %v1711, %v1708
      %v2492 = vpack.c.b16 %v1712, %v1709
      %v2493 = vpack.c.b16 %v1716, %v1713
      %v2494 = vpack.c.b16 %v1717, %v1714
      %v2495 = vpack.c.b16 %v1718, %v1715
      %v2496 = vpack.c.b16 %v1722, %v1719
      %v2497 = vpack.c.b16 %v1723, %v1720
      %v2498 = vpack.c.b16 %v1724, %v1721
      %v2499 = vpack.c.b16 %v1728, %v1725
      %v2500 = vpack.c.b16 %v1729, %v1726
      %v2501 = vpack.c.b16 %v1730, %v1727
      %v2502 = vpack.c.b16 %v1734, %v1731
      %v2503 = vpack.c.b16 %v1735, %v1732
      %v2504 = vpack.c.b16 %v1736, %v1733
      %v2505 = vpack.c.b16 %v1740, %v1737
      %v2506 = vpack.c.b16 %v1741, %v1738
      %v2507 = vpack.c.b16 %v1742, %v1739
      %v2508 = vpack.c.b16 %v1746, %v1743
      %v2509 = vpack.c.b16 %v1747, %v1744
      %v2510 = vpack.c.b16 %v1748, %v1745
      %v2511 = vpack.c.b16 %v1752, %v1749
      %v2512 = vpack.c.b16 %v1753, %v1750
      %v2513 = vpack.c.b16 %v1754, %v1751
      %v2514 = vpack.c.b16 %v1758, %v1755
      %v2515 = vpack.c.b16 %v1759, %v1756
      %v2516 = vpack.c.b16 %v1760, %v1757
      %v2517 = vpack.c.b16 %v1764, %v1761
      %v2518 = vpack.c.b16 %v1765, %v1762
      %v2519 = vpack.c.b16 %v1766, %v1763
      %v2520 = vpack.c.b16 %v1770, %v1767
      %v2521 = vpack.c.b16 %v1771, %v1768
      %v2522 = vpack.c.b16 %v1772, %v1769
      %v2523 = vpack.c.b16 %v1776, %v1773
      %v2524 = vpack.c.b16 %v1777, %v1774
      %v2525 = vpack.c.b16 %v1778, %v1775
      %v2526 = vpack.c.b16 %v1782, %v1779
      %v2527 = vpack.c.b16 %v1783, %v1780
      %v2528 = vpack.c.b16 %v1784, %v1781
      %v2529 = vpack.c.b16 %v1788, %v1785
      %v2530 = vpack.c.b16 %v1789, %v1786
      %v2531 = vpack.c.b16 %v1790, %v1787
      %v2532 = vpack.c.b16 %v1794, %v1791
      %v2533 = vpack.c.b16 %v1795, %v1792
      %v2534 = vpack.c.b16 %v1796, %v1793
      %v2535 = vpack.c.b16 %v1800, %v1797
      %v2536 = vpack.c.b16 %v1801, %v1798
      %v2537 = vpack.c.b16 %v1802, %v1799
      %v2538 = vpack.c.b16 %v1806, %v1803
      %v2539 = vpack.c.b16 %v1807, %v1804
      %v2540 = vpack.c.b16 %v1808, %v1805
      %v2541 = vpack.c.b16 %v1812, %v1809
      %v2542 = vpack.c.b16 %v1813, %v1810
      %v2543 = vpack.c.b16 %v1814, %v1811
      %v2544 = vpack.c.b16 %v1818, %v1815
      %v2545 = vpack.c.b16 %v1819, %v1816
      %v2546 = vpack.c.b16 %v1820, %v1817
      %v2547 = vpack.c.b16 %v1824, %v1821
      %v2548 = vpack.c.b16 %v1825, %v1822
      %v2549 = vpack.c.b16 %v1826, %v1823
      %v2550 = vpack.c.b16 %v1830, %v1827
      %v2551 = vpack.c.b16 %v1831, %v1828
      %v2552 = vpack.c.b16 %v1832, %v1829
      %v2553 = vpack.c.b16 %v1836, %v1833
      %v2554 = vpack.c.b16 %v1837, %v1834
      %v2555 = vpack.c.b16 %v1838, %v1835
      %v2556 = vpack.c.b16 %v1842, %v1839
      %v2557 = vpack.c.b16 %v1843, %v1840
      %v2558 = vpack.c.b16 %v1844, %v1841
      %v2559 = vpack.c.b16 %v1848, %v1845
      %v2560 = vpack.c.b16 %v1849, %v1846
      %v2561 = vpack.c.b16 %v1850, %v1847
      %v2562 = vpack.c.b16 %v1854, %v1851
      %v2563 = vpack.c.b16 %v1855, %v1852
      %v2564 = vpack.c.b16 %v1856, %v1853
      %v2565 = vpack.c.b16 %v1860, %v1857
      %v2566 = vpack.c.b16 %v1861, %v1858
      %v2567 = vpack.c.b16 %v1862, %v1859
      %v2568 = vpack.c.b16 %v1866, %v1863
      %v2569 = vpack.c.b16 %v1867, %v1864
      %v2570 = vpack.c.b16 %v1868, %v1865
      %v2571 = vpack.c.b16 %v1872, %v1869
      %v2572 = vpack.c.b16 %v1873, %v1870
      %v2573 = vpack.c.b16 %v1874, %v1871
      %v2574 = vpack.c.b16 %v1878, %v1875
      %v2575 = vpack.c.b16 %v1879, %v1876
      %v2576 = vpack.c.b16 %v1880, %v1877
      %v2577 = vpack.c.b16 %v1884, %v1881
      %v2578 = vpack.c.b16 %v1885, %v1882
      %v2579 = vpack.c.b16 %v1886, %v1883
      %v2580 = vpack.c.b16 %v1890, %v1887
      %v2581 = vpack.c.b16 %v1891, %v1888
      %v2582 = vpack.c.b16 %v1892, %v1889
      %v2583 = vpack.c.b16 %v1896, %v1893
      %v2584 = vpack.c.b16 %v1897, %v1894
      %v2585 = vpack.c.b16 %v1898, %v1895
      %v2586 = vpack.c.b16 %v1902, %v1899
      %v2587 = vpack.c.b16 %v1903, %v1900
      %v2588 = vpack.c.b16 %v1904, %v1901
      %v2589 = vpack.c.b16 %v1908, %v1905
      %v2590 = vpack.c.b16 %v1909, %v1906
      %v2591 = vpack.c.b16 %v1910, %v1907
      %v2592 = vpack.c.b16 %v1914, %v1911
      %v2593 = vpack.c.b16 %v1915, %v1912
      %v2594 = vpack.c.b16 %v1916, %v1913
      %v2595 = vpack.c.b16 %v1920, %v1917
      %v2596 = vpack.c.b16 %v1921, %v1918
      %v2597 = vpack.c.b16 %v1922, %v1919
      %v2598 = vpack.c.b16 %v1926, %v1923
      %v2599 = vpack.c.b16 %v1927, %v1924
      %v2600 = vpack.c.b16 %v1928, %v1925
      %v2601 = vpack.c.b16 %v1932, %v1929
      %v2602 = vpack.c.b16 %v1933, %v1930
      %v2603 = vpack.c.b16 %v1934, %v1931
      %v2604 = vpack.c.b16 %v1938, %v1935
      %v2605 = vpack.c.b16 %v1939, %v1936
      %v2606 = vpack.c.b16 %v1940, %v1937
      %v2607 = vpack.c.b16 %v1944, %v1941
      %v2608 = vpack.c.b16 %v1945, %v1942
      %v2609 = vpack.c.b16 %v1946, %v1943
      %v2610 = vpack.c.b16 %v1950, %v1947
      %v2611 = vpack.c.b16 %v1951, %v1948
      %v2612 = vpack.c.b16 %v1952, %v1949
      %v2613 = vpack.c.b16 %v1956, %v1953
      %v2614 = vpack.c.b16 %v1957, %v1954
      %v2615 = vpack.c.b16 %v1958, %v1955
      %v2616 = vpack.c.b16 %v1962, %v1959
      %v2617 = vpack.c.b16 %v1963, %v1960
      %v2618 = vpack.c.b16 %v1964, %v1961
      %v2619 = vpack.c.b16 %v1968, %v1965
      %v2620 = vpack.c.b16 %v1969, %v1966
      %v2621 = vpack.c.b16 %v1970, %v1967
      %v2622 = vpack.c.b16 %v1974, %v1971
      %v2623 = vpack.c.b16 %v1975, %v1972
      %v2624 = vpack.c.b16 %v1976, %v1973
      %v2625 = vpack.c.b16 %v1980, %v1977
      %v2626 = vpack.c.b16 %v1981, %v1978
      %v2627 = vpack.c.b16 %v1982, %v1979
      %v2628 = vpack.c.b16 %v1986, %v1983
      %v2629 = vpack.c.b16 %v1987, %v1984
      %v2630 = vpack.c.b16 %v1988, %v1985
      %v2631 = vpack.c.b16 %v1992, %v1989
      %v2632 = vpack.c.b16 %v1993, %v1990
      %v2633 = vpack.c.b16 %v1994, %v1991
      %v2634 = vpack.c.b16 %v1998, %v1995
      %v2635 = vpack.c.b16 %v1999, %v1996
      %v2636 = vpack.c.b16 %v2000, %v1997
      %v2637 = vpack.c.b16 %v2004, %v2001
      %v2638 = vpack.c.b16 %v2005, %v2002
      %v2639 = vpack.c.b16 %v2006, %v2003
      %v2640 = vpack.c.b16 %v2010, %v2007
      %v2641 = vpack.c.b16 %v2011, %v2008
      %v2642 = vpack.c.b16 %v2012, %v2009
      %v2643 = vpack.c.b16 %v2016, %v2013
      %v2644 = vpack.c.b16 %v2017, %v2014
      %v2645 = vpack.c.b16 %v2018, %v2015
      %v2646 = vpack.c.b16 %v2022, %v2019
      %v2647 = vpack.c.b16 %v2023, %v2020
      %v2648 = vpack.c.b16 %v2024, %v2021
      %v2649 = vpack.c.b16 %v2028, %v2025
      %v2650 = vpack.c.b16 %v2029, %v2026
      %v2651 = vpack.c.b16 %v2030, %v2027
      %v2652 = vpack.c.b16 %v2034, %v2031
      %v2653 = vpack.c.b16 %v2035, %v2032
      %v2654 = vpack.c.b16 %v2036, %v2033
      %v2655 = vpack.c.b16 %v2040, %v2037
      %v2656 = vpack.c.b16 %v2041, %v2038
      %v2657 = vpack.c.b16 %v2042, %v2039
      %v2658 = vpack.c.b16 %v2046, %v2043
      %v2659 = vpack.c.b16 %v2047, %v2044
      %v2660 = vpack.c.b16 %v2048, %v2045
      %v2661 = vpack.c.b16 %v2052, %v2049
      %v2662 = vpack.c.b16 %v2053, %v2050
      %v2663 = vpack.c.b16 %v2054, %v2051
      %v2664 = vpack.c.b16 %v2058, %v2055
      %v2665 = vpack.c.b16 %v2059, %v2056
      %v2666 = vpack.c.b16 %v2060, %v2057
      %v2667 = vpack.c.b16 %v2064, %v2061
      %v2668 = vpack.c.b16 %v2065, %v2062
      %v2669 = vpack.c.b16 %v2066, %v2063
      %v2670 = vpack.c.b16 %v2070, %v2067
      %v2671 = vpack.c.b16 %v2071, %v2068
      %v2672 = vpack.c.b16 %v2072, %v2069
      %v2673 = vpack.c.b16 %v2076, %v2073
      %v2674 = vpack.c.b16 %v2077, %v2074
      %v2675 = vpack.c.b16 %v2078, %v2075
      %v2676 = vpack.c.b16 %v2082, %v2079
      %v2677 = vpack.c.b16 %v2083, %v2080
      %v2678 = vpack.c.b16 %v2084, %v2081
      %v2679 = vpack.c.b16 %v2088, %v2085
      %v2680 = vpack.c.b16 %v2089, %v2086
      %v2681 = vpack.c.b16 %v2090, %v2087
      %v2682 = vpack.c.b16 %v2094, %v2091
      %v2683 = vpack.c.b16 %v2095, %v2092
      %v2684 = vpack.c.b16 %v2096, %v2093
      %v2685 = vpack.c.b16 %v2100, %v2097
      %v2686 = vpack.c.b16 %v2101, %v2098
      %v2687 = vpack.c.b16 %v2102, %v2099
      %v2688 = vpack.c.b16 %v2106, %v2103
      %v2689 = vpack.c.b16 %v2107, %v2104
      %v2690 = vpack.c.b16 %v2108, %v2105
      %v2691 = vpack.c.b16 %v2112, %v2109
      %v2692 = vpack.c.b16 %v2113, %v2110
      %v2693 = vpack.c.b16 %v2114, %v2111
      %v2694 = vpack.c.b16 %v2118, %v2115
      %v2695 = vpack.c.b16 %v2119, %v2116
      %v2696 = vpack.c.b16 %v2120, %v2117
      %v2697 = vpack.c.b16 %v2124, %v2121
      %v2698 = vpack.c.b16 %v2125, %v2122
      %v2699 = vpack.c.b16 %v2126, %v2123
      %v2700 = vpack.c.b16 %v2130, %v2127
      %v2701 = vpack.c.b16 %v2131, %v2128
      %v2702 = vpack.c.b16 %v2132, %v2129
      %v2703 = vpack.c.b16 %v2136, %v2133
      %v2704 = vpack.c.b16 %v2137, %v2134
      %v2705 = vpack.c.b16 %v2138, %v2135
      %v2706 = vpack.c.b16 %v2142, %v2139
      %v2707 = vpack.c.b16 %v2143, %v2140
      %v2708 = vpack.c.b16 %v2144, %v2141
      %v2709 = vpack.c.b16 %v2148, %v2145
      %v2710 = vpack.c.b16 %v2149, %v2146
      %v2711 = vpack.c.b16 %v2150, %v2147
      %v2712 = vpack.c.b16 %v2154, %v2151
      %v2713 = vpack.c.b16 %v2155, %v2152
      %v2714 = vpack.c.b16 %v2156, %v2153
      %v2715 = vpack.c.b16 %v2160, %v2157
      %v2716 = vpack.c.b16 %v2161, %v2158
      %v2717 = vpack.c.b16 %v2162, %v2159
      %v2718 = vpack.c.b16 %v2166, %v2163
      %v2719 = vpack.c.b16 %v2167, %v2164
      %v2720 = vpack.c.b16 %v2168, %v2165
      %v2721 = vpack.c.b16 %v2172, %v2169
      %v2722 = vpack.c.b16 %v2173, %v2170
      %v2723 = vpack.c.b16 %v2174, %v2171
      %v2724 = vpack.c.b16 %v2178, %v2175
      %v2725 = vpack.c.b16 %v2179, %v2176
      %v2726 = vpack.c.b16 %v2180, %v2177
      %v2727 = vpack.c.b16 %v2184, %v2181
      %v2728 = vpack.c.b16 %v2185, %v2182
      %v2729 = vpack.c.b16 %v2186, %v2183
      %v2730 = vpack.c.b16 %v2190, %v2187
      %v2731 = vpack.c.b16 %v2191, %v2188
      %v2732 = vpack.c.b16 %v2192, %v2189
      %v2733 = vpack.c.b16 %v2196, %v2193
      %v2734 = vpack.c.b16 %v2197, %v2194
      %v2735 = vpack.c.b16 %v2198, %v2195
      %v2736 = vpack.c.b16 %v2202, %v2199
      %v2737 = vpack.c.b16 %v2203, %v2200
      %v2738 = vpack.c.b16 %v2204, %v2201
      %v2739 = vpack.c.b16 %v2208, %v2205
      %v2740 = vpack.c.b16 %v2209, %v2206
      %v2741 = vpack.c.b16 %v2210, %v2207
      %v2742 = vpack.c.b16 %v2214, %v2211
      %v2743 = vpack.c.b16 %v2215, %v2212
      %v2744 = vpack.c.b16 %v2216, %v2213
      %v2745 = vpack.c.b16 %v2220, %v2217
      %v2746 = vpack.c.b16 %v2221, %v2218
      %v2747 = vpack.c.b16 %v2222, %v2219
      %v2748 = vpack.c.b16 %v2226, %v2223
      %v2749 = vpack.c.b16 %v2227, %v2224
      %v2750 = vpack.c.b16 %v2228, %v2225
      %v2751 = vpack.c.b16 %v2232, %v2229
      %v2752 = vpack.c.b16 %v2233, %v2230
      %v2753 = vpack.c.b16 %v2234, %v2231
      %v2754 = vpack.c.b16 %v2238, %v2235
      %v2755 = vpack.c.b16 %v2239, %v2236
      %v2756 = vpack.c.b16 %v2240, %v2237
      %v2757 = vpack.c.b16 %v2244, %v2241
      %v2758 = vpack.c.b16 %v2245, %v2242
      %v2759 = vpack.c.b16 %v2246, %v2243
      %v2760 = vpack.c.b16 %v2250, %v2247
      %v2761 = vpack.c.b16 %v2251, %v2248
      %v2762 = vpack.c.b16 %v2252, %v2249
      %v2763 = vpack.c.b16 %v2256, %v2253
      %v2764 = vpack.c.b16 %v2257, %v2254
      %v2765 = vpack.c.b16 %v2258, %v2255
      %v2766 = vpack.c.b16 %v2262, %v2259
      %v2767 = vpack.c.b16 %v2263, %v2260
      %v2768 = vpack.c.b16 %v2264, %v2261
      %v2769 = vpack.c.b16 %v2268, %v2265
      %v2770 = vpack.c.b16 %v2269, %v2266
      %v2771 = vpack.c.b16 %v2270, %v2267
      %v2772 = vpack.c.b16 %v2274, %v2271
      %v2773 = vpack.c.b16 %v2275, %v2272
      %v2774 = vpack.c.b16 %v2276, %v2273
      %v2775 = vpack.c.b16 %v2280, %v2277
      %v2776 = vpack.c.b16 %v2281, %v2278
      %v2777 = vpack.c.b16 %v2282, %v2279
      %v2778 = vpack.c.b16 %v2286, %v2283
      %v2779 = vpack.c.b16 %v2287, %v2284
      %v2780 = vpack.c.b16 %v2288, %v2285
      %v2781 = vpack.c.b16 %v2292, %v2289
      %v2782 = vpack.c.b16 %v2293, %v2290
      %v2783 = vpack.c.b16 %v2294, %v2291
      %v2784 = vpack.c.b16 %v2298, %v2295
      %v2785 = vpack.c.b16 %v2299, %v2296
      %v2786 = vpack.c.b16 %v2300, %v2297
      %v2787 = vpack.c.b16 %v2304, %v2301
      %v2788 = vpack.c.b16 %v2305, %v2302
      %v2789 = vpack.c.b16 %v2306, %v2303
      %v2790 = vpack.c.b16 %v2310, %v2307
      %v2791 = vpack.c.b16 %v2311, %v2308
      %v2792 = vpack.c.b16 %v2312, %v2309
      %v2793 = vpack.c.b16 %v2316, %v2313
      %v2794 = vpack.c.b16 %v2317, %v2314
      %v2795 = vpack.c.b16 %v2318, %v2315
      %v2796 = vpack.c.b16 %v2322, %v2319
      %v2797 = vpack.c.b16 %v2323, %v2320
      %v2798 = vpack.c.b16 %v2324, %v2321
      %v2799 = vpack.c.b16 %v2328, %v2325
      %v2800 = vpack.c.b16 %v2329, %v2326
      %v2801 = vpack.c.b16 %v2330, %v2327
      %v2802 = vpack.c.b16 %v2334, %v2331
      %v2803 = vpack.c.b16 %v2335, %v2332
      %v2804 = vpack.c.b16 %v2336, %v2333
      %v2805 = vpack.c.b16 %v2340, %v2337
      %v2806 = vpack.c.b16 %v2341, %v2338
      %v2807 = vpack.c.b16 %v2342, %v2339
      %v2808 = vpack.c.b16 %v2346, %v2343
      %v2809 = vpack.c.b16 %v2347, %v2344
      %v2810 = vpack.c.b16 %v2348, %v2345
      %v2811 = vpack.c.b16 %v2352, %v2349
      %v2812 = vpack.c.b16 %v2353, %v2350
      %v2813 = vpack.c.b16 %v2354, %v2351
      %v2814 = vpack.c.b16 %v2358, %v2355
      %v2815 = vpack.c.b16 %v2359, %v2356
      %v2816 = vpack.c.b16 %v2360, %v2357
      %v2817 = vpack.c.b16 %v2364, %v2361
      %v2818 = vpack.c.b16 %v2365, %v2362
      %v2819 = vpack.c.b16 %v2366, %v2363
      %v2820 = vpack.c.b16 %v2370, %v2367
      %v2821 = vpack.c.b16 %v2371, %v2368
      %v2822 = vpack.c.b16 %v2372, %v2369
      %v2823 = vpack.c.b16 %v2376, %v2373
      %v2824 = vpack.c.b16 %v2377, %v2374
      %v2825 = vpack.c.b16 %v2378, %v2375
      %v2826 = vpack.c.b16 %v2382, %v2379
      %v2827 = vpack.c.b16 %v2383, %v2380
      %v2828 = vpack.c.b16 %v2384, %v2381
      %v2829 = vpack.c.b16 %v2388, %v2385
      %v2830 = vpack.c.b16 %v2389, %v2386
      %v2831 = vpack.c.b16 %v2390, %v2387
      %v2832 = vpack.c.b16 %v2394, %v2391
      %v2833 = vpack.c.b16 %v2395, %v2392
      %v2834 = vpack.c.b16 %v2396, %v2393
      %v2835 = vpack.c.b16 %v2400, %v2397
      %v2836 = vpack.c.b16 %v2401, %v2398
      %v2837 = vpack.c.b16 %v2402, %v2399
      %v2838 = vpack.c.b16 %v2406, %v2403
      %v2839 = vpack.c.b16 %v2407, %v2404
      %v2840 = vpack.c.b16 %v2408, %v2405
      %3273 = vmatprep.subr.bf16.mxu0 %v2410
      %3274 = vmatpush1.bf16.msra.mxu0 %v2409
      %3275 = vmatprep.subr.bf16.mxu0 %v2413
      %3276 = vmatpush1.bf16.msra.mxu0 %v2412
      %3277 = vmatprep.subr.bf16.mxu0 %v2416
      %3278 = vmatpush1.bf16.msra.mxu0 %v2415
      %3279 = vmatprep.subr.bf16.mxu0 %v2419
      %3280 = vmatpush1.bf16.msra.mxu0 %v2418
      %3281 = vmatprep.subr.bf16.mxu0 %v2422
      %3282 = vmatpush1.bf16.msra.mxu0 %v2421
      %3283 = vmatprep.subr.bf16.mxu0 %v2425
      %3284 = vmatpush1.bf16.msra.mxu0 %v2424
      %3285 = vmatprep.subr.bf16.mxu0 %v2428
      %3286 = vmatpush1.bf16.msra.mxu0 %v2427
      %3287 = vmatprep.subr.bf16.mxu0 %v2431
      %3288 = vmatpush1.bf16.msra.mxu0 %v2430
      %3289 = vmatprep.subr.bf16.mxu0 %v2434
      %3290 = vmatpush1.bf16.msra.mxu0 %v2433
      %3291 = vmatprep.subr.bf16.mxu0 %v2437
      %3292 = vmatpush1.bf16.msra.mxu0 %v2436
      %3293 = vmatprep.subr.bf16.mxu0 %v2440
      %3294 = vmatpush1.bf16.msra.mxu0 %v2439
      %3295 = vmatprep.subr.bf16.mxu0 %v2443
      %3296 = vmatpush1.bf16.msra.mxu0 %v2442
      %3297 = vmatprep.subr.bf16.mxu0 %v2446
      %3298 = vmatpush1.bf16.msra.mxu0 %v2445
      %3299 = vmatprep.subr.bf16.mxu0 %v2449
      %3300 = vmatpush1.bf16.msra.mxu0 %v2448
      %3301 = vmatprep.subr.bf16.mxu0 %v2452
      %3302 = vmatpush1.bf16.msra.mxu0 %v2451
      %3303 = vmatprep.subr.bf16.mxu0 %v2455
      %3304 = vmatpush1.bf16.msra.mxu0 %v2454
      %3305 = vmatprep.mubr.bf16.mxu0 %v934
      %3306 = vmatmul.mubr.bf16.gmra.mrb[0].mxu0 %v933
      %v3307 = vpop.f32.mrb[0].mxu0
      %v3308 = vadd.f32 %v867, %v3307
      %v3309 = vpop.f32.mrb[0].mxu0
      %v3310 = vadd.f32 %v871, %v3309
      %v3311 = vpop.f32.mrb[0].mxu0
      %v3312 = vadd.f32 %v867, %v3311
      %v3313 = vpop.f32.mrb[0].mxu0
      %v3314 = vadd.f32 %v871, %v3313
      %3315 = vdwg.mxu0
      %3316 = vmatprep.subr.bf16.mxu0 %v2458
      %3317 = vmatpush1.bf16.msra.mxu0 %v2457
      %3318 = vmatprep.subr.bf16.mxu0 %v2461
      %3319 = vmatpush1.bf16.msra.mxu0 %v2460
      %3320 = vmatprep.subr.bf16.mxu0 %v2464
      %3321 = vmatpush1.bf16.msra.mxu0 %v2463
      %3322 = vmatprep.subr.bf16.mxu0 %v2467
      %3323 = vmatpush1.bf16.msra.mxu0 %v2466
      %3324 = vmatprep.subr.bf16.mxu0 %v2470
      %3325 = vmatpush1.bf16.msra.mxu0 %v2469
      %3326 = vmatprep.subr.bf16.mxu0 %v2473
      %3327 = vmatpush1.bf16.msra.mxu0 %v2472
      %3328 = vmatprep.subr.bf16.mxu0 %v2476
      %3329 = vmatpush1.bf16.msra.mxu0 %v2475
      %3330 = vmatprep.subr.bf16.mxu0 %v2479
      %3331 = vmatpush1.bf16.msra.mxu0 %v2478
      %3332 = vmatprep.subr.bf16.mxu0 %v2482
      %3333 = vmatpush1.bf16.msra.mxu0 %v2481
      %3334 = vmatprep.subr.bf16.mxu0 %v2485
      %3335 = vmatpush1.bf16.msra.mxu0 %v2484
      %3336 = vmatprep.subr.bf16.mxu0 %v2488
      %3337 = vmatpush1.bf16.msra.mxu0 %v2487
      %3338 = vmatprep.subr.bf16.mxu0 %v2491
      %3339 = vmatpush1.bf16.msra.mxu0 %v2490
      %3340 = vmatprep.subr.bf16.mxu0 %v2494
      %3341 = vmatpush1.bf16.msra.mxu0 %v2493
      %3342 = vmatprep.subr.bf16.mxu0 %v2497
      %3343 = vmatpush1.bf16.msra.mxu0 %v2496
      %3344 = vmatprep.subr.bf16.mxu0 %v2500
      %3345 = vmatpush1.bf16.msra.mxu0 %v2499
      %3346 = vmatprep.subr.bf16.mxu0 %v2503
      %3347 = vmatpush1.bf16.msra.mxu0 %v2502
      %3348 = vmatprep.mubr.bf16.mxu0 %v936
      %3349 = vmatmul.mubr.bf16.gmra.mrb[0].mxu0 %v935
      %v3350 = vpop.f32.mrb[0].mxu0
      %v3351 = vadd.f32 %v3308, %v3350
      %v3352 = vpop.f32.mrb[0].mxu0
      %v3353 = vadd.f32 %v3310, %v3352
      %v3354 = vpop.f32.mrb[0].mxu0
      %v3355 = vadd.f32 %v3312, %v3354
      %v3356 = vpop.f32.mrb[0].mxu0
      %v3357 = vadd.f32 %v3314, %v3356
      %3358 = vdwg.mxu0
      %3359 = vmatprep.subr.bf16.mxu0 %v2506
      %3360 = vmatpush1.bf16.msra.mxu0 %v2505
      %3361 = vmatprep.subr.bf16.mxu0 %v2509
      %3362 = vmatpush1.bf16.msra.mxu0 %v2508
      %3363 = vmatprep.subr.bf16.mxu0 %v2512
      %3364 = vmatpush1.bf16.msra.mxu0 %v2511
      %3365 = vmatprep.subr.bf16.mxu0 %v2515
      %3366 = vmatpush1.bf16.msra.mxu0 %v2514
      %3367 = vmatprep.subr.bf16.mxu0 %v2518
      %3368 = vmatpush1.bf16.msra.mxu0 %v2517
      %3369 = vmatprep.subr.bf16.mxu0 %v2521
      %3370 = vmatpush1.bf16.msra.mxu0 %v2520
      %3371 = vmatprep.subr.bf16.mxu0 %v2524
      %3372 = vmatpush1.bf16.msra.mxu0 %v2523
      %3373 = vmatprep.subr.bf16.mxu0 %v2527
      %3374 = vmatpush1.bf16.msra.mxu0 %v2526
      %3375 = vmatprep.subr.bf16.mxu0 %v2530
      %3376 = vmatpush1.bf16.msra.mxu0 %v2529
      %3377 = vmatprep.subr.bf16.mxu0 %v2533
      %3378 = vmatpush1.bf16.msra.mxu0 %v2532
      %3379 = vmatprep.subr.bf16.mxu0 %v2536
      %3380 = vmatpush1.bf16.msra.mxu0 %v2535
      %3381 = vmatprep.subr.bf16.mxu0 %v2539
      %3382 = vmatpush1.bf16.msra.mxu0 %v2538
      %3383 = vmatprep.subr.bf16.mxu0 %v2542
      %3384 = vmatpush1.bf16.msra.mxu0 %v2541
      %3385 = vmatprep.subr.bf16.mxu0 %v2545
      %3386 = vmatpush1.bf16.msra.mxu0 %v2544
      %3387 = vmatprep.subr.bf16.mxu0 %v2548
      %3388 = vmatpush1.bf16.msra.mxu0 %v2547
      %3389 = vmatprep.subr.bf16.mxu0 %v2551
      %3390 = vmatpush1.bf16.msra.mxu0 %v2550
      %3391 = vmatprep.mubr.bf16.mxu0 %v938
      %3392 = vmatmul.mubr.bf16.gmra.mrb[0].mxu0 %v937
      %v3393 = vpop.f32.mrb[0].mxu0
      %v3394 = vadd.f32 %v3351, %v3393
      %v3395 = vpop.f32.mrb[0].mxu0
      %v3396 = vadd.f32 %v3353, %v3395
      %v3397 = vpop.f32.mrb[0].mxu0
      %v3398 = vadd.f32 %v3355, %v3397
      %v3399 = vpop.f32.mrb[0].mxu0
      %v3400 = vadd.f32 %v3357, %v3399
      %3401 = vdwg.mxu0
      %3402 = vmatprep.subr.bf16.mxu0 %v2554
      %3403 = vmatpush1.bf16.msra.mxu0 %v2553
      %3404 = vmatprep.subr.bf16.mxu0 %v2557
      %3405 = vmatpush1.bf16.msra.mxu0 %v2556
      %3406 = vmatprep.subr.bf16.mxu0 %v2560
      %3407 = vmatpush1.bf16.msra.mxu0 %v2559
      %3408 = vmatprep.subr.bf16.mxu0 %v2563
      %3409 = vmatpush1.bf16.msra.mxu0 %v2562
      %3410 = vmatprep.subr.bf16.mxu0 %v2566
      %3411 = vmatpush1.bf16.msra.mxu0 %v2565
      %3412 = vmatprep.subr.bf16.mxu0 %v2569
      %3413 = vmatpush1.bf16.msra.mxu0 %v2568
      %3414 = vmatprep.subr.bf16.mxu0 %v2572
      %3415 = vmatpush1.bf16.msra.mxu0 %v2571
      %3416 = vmatprep.subr.bf16.mxu0 %v2575
      %3417 = vmatpush1.bf16.msra.mxu0 %v2574
      %3418 = vmatprep.subr.bf16.mxu0 %v2578
      %3419 = vmatpush1.bf16.msra.mxu0 %v2577
      %3420 = vmatprep.subr.bf16.mxu0 %v2581
      %3421 = vmatpush1.bf16.msra.mxu0 %v2580
      %3422 = vmatprep.subr.bf16.mxu0 %v2584
      %3423 = vmatpush1.bf16.msra.mxu0 %v2583
      %3424 = vmatprep.subr.bf16.mxu0 %v2587
      %3425 = vmatpush1.bf16.msra.mxu0 %v2586
      %3426 = vmatprep.subr.bf16.mxu0 %v2590
      %3427 = vmatpush1.bf16.msra.mxu0 %v2589
      %3428 = vmatprep.subr.bf16.mxu0 %v2593
      %3429 = vmatpush1.bf16.msra.mxu0 %v2592
      %3430 = vmatprep.subr.bf16.mxu0 %v2596
      %3431 = vmatpush1.bf16.msra.mxu0 %v2595
      %3432 = vmatprep.subr.bf16.mxu0 %v2599
      %3433 = vmatpush1.bf16.msra.mxu0 %v2598
      %3434 = vmatprep.mubr.bf16.mxu0 %v940
      %3435 = vmatmul.mubr.bf16.gmra.mrb[0].mxu0 %v939
      %v3436 = vpop.f32.mrb[0].mxu0
      %v3437 = vadd.f32 %v3394, %v3436
      %v3438 = vpop.f32.mrb[0].mxu0
      %v3439 = vadd.f32 %v3396, %v3438
      %v3440 = vpop.f32.mrb[0].mxu0
      %v3441 = vadd.f32 %v3398, %v3440
      %v3442 = vpop.f32.mrb[0].mxu0
      %v3443 = vadd.f32 %v3400, %v3442
      %3444 = vdwg.mxu0
      %3445 = vmatprep.subr.bf16.mxu0 %v2602
      %3446 = vmatpush1.bf16.msra.mxu0 %v2601
      %3447 = vmatprep.subr.bf16.mxu0 %v2605
      %3448 = vmatpush1.bf16.msra.mxu0 %v2604
      %3449 = vmatprep.subr.bf16.mxu0 %v2608
      %3450 = vmatpush1.bf16.msra.mxu0 %v2607
      %3451 = vmatprep.subr.bf16.mxu0 %v2611
      %3452 = vmatpush1.bf16.msra.mxu0 %v2610
      %3453 = vmatprep.subr.bf16.mxu0 %v2614
      %3454 = vmatpush1.bf16.msra.mxu0 %v2613
      %3455 = vmatprep.subr.bf16.mxu0 %v2617
      %3456 = vmatpush1.bf16.msra.mxu0 %v2616
      %3457 = vmatprep.subr.bf16.mxu0 %v2620
      %3458 = vmatpush1.bf16.msra.mxu0 %v2619
      %3459 = vmatprep.subr.bf16.mxu0 %v2623
      %3460 = vmatpush1.bf16.msra.mxu0 %v2622
      %3461 = vmatprep.subr.bf16.mxu0 %v2626
      %3462 = vmatpush1.bf16.msra.mxu0 %v2625
      %3463 = vmatprep.subr.bf16.mxu0 %v2629
      %3464 = vmatpush1.bf16.msra.mxu0 %v2628
      %3465 = vmatprep.subr.bf16.mxu0 %v2632
      %3466 = vmatpush1.bf16.msra.mxu0 %v2631
      %3467 = vmatprep.subr.bf16.mxu0 %v2635
      %3468 = vmatpush1.bf16.msra.mxu0 %v2634
      %3469 = vmatprep.subr.bf16.mxu0 %v2638
      %3470 = vmatpush1.bf16.msra.mxu0 %v2637
      %3471 = vmatprep.subr.bf16.mxu0 %v2641
      %3472 = vmatpush1.bf16.msra.mxu0 %v2640
      %3473 = vmatprep.subr.bf16.mxu0 %v2644
      %3474 = vmatpush1.bf16.msra.mxu0 %v2643
      %3475 = vmatprep.subr.bf16.mxu0 %v2647
      %3476 = vmatpush1.bf16.msra.mxu0 %v2646
      %3477 = vmatprep.mubr.bf16.mxu0 %v942
      %3478 = vmatmul.mubr.bf16.gmra.mrb[0].mxu0 %v941
      %v3479 = vpop.f32.mrb[0].mxu0
      %v3480 = vadd.f32 %v3437, %v3479
      %v3481 = vpop.f32.mrb[0].mxu0
      %v3482 = vadd.f32 %v3439, %v3481
      %v3483 = vpop.f32.mrb[0].mxu0
      %v3484 = vadd.f32 %v3441, %v3483
      %v3485 = vpop.f32.mrb[0].mxu0
      %v3486 = vadd.f32 %v3443, %v3485
      %3487 = vdwg.mxu0
      %3488 = vmatprep.subr.bf16.mxu0 %v2650
      %3489 = vmatpush1.bf16.msra.mxu0 %v2649
      %3490 = vmatprep.subr.bf16.mxu0 %v2653
      %3491 = vmatpush1.bf16.msra.mxu0 %v2652
      %3492 = vmatprep.subr.bf16.mxu0 %v2656
      %3493 = vmatpush1.bf16.msra.mxu0 %v2655
      %3494 = vmatprep.subr.bf16.mxu0 %v2659
      %3495 = vmatpush1.bf16.msra.mxu0 %v2658
      %3496 = vmatprep.subr.bf16.mxu0 %v2662
      %3497 = vmatpush1.bf16.msra.mxu0 %v2661
      %3498 = vmatprep.subr.bf16.mxu0 %v2665
      %3499 = vmatpush1.bf16.msra.mxu0 %v2664
      %3500 = vmatprep.subr.bf16.mxu0 %v2668
      %3501 = vmatpush1.bf16.msra.mxu0 %v2667
      %3502 = vmatprep.subr.bf16.mxu0 %v2671
      %3503 = vmatpush1.bf16.msra.mxu0 %v2670
      %3504 = vmatprep.subr.bf16.mxu0 %v2674
      %3505 = vmatpush1.bf16.msra.mxu0 %v2673
      %3506 = vmatprep.subr.bf16.mxu0 %v2677
      %3507 = vmatpush1.bf16.msra.mxu0 %v2676
      %3508 = vmatprep.subr.bf16.mxu0 %v2680
      %3509 = vmatpush1.bf16.msra.mxu0 %v2679
      %3510 = vmatprep.subr.bf16.mxu0 %v2683
      %3511 = vmatpush1.bf16.msra.mxu0 %v2682
      %3512 = vmatprep.subr.bf16.mxu0 %v2686
      %3513 = vmatpush1.bf16.msra.mxu0 %v2685
      %3514 = vmatprep.subr.bf16.mxu0 %v2689
      %3515 = vmatpush1.bf16.msra.mxu0 %v2688
      %3516 = vmatprep.subr.bf16.mxu0 %v2692
      %3517 = vmatpush1.bf16.msra.mxu0 %v2691
      %3518 = vmatprep.subr.bf16.mxu0 %v2695
      %3519 = vmatpush1.bf16.msra.mxu0 %v2694
      %3520 = vmatprep.mubr.bf16.mxu0 %v944
      %3521 = vmatmul.mubr.bf16.gmra.mrb[0].mxu0 %v943
      %v3522 = vpop.f32.mrb[0].mxu0
      %v3523 = vadd.f32 %v3480, %v3522
      %v3524 = vpop.f32.mrb[0].mxu0
      %v3525 = vadd.f32 %v3482, %v3524
      %v3526 = vpop.f32.mrb[0].mxu0
      %v3527 = vadd.f32 %v3484, %v3526
      %v3528 = vpop.f32.mrb[0].mxu0
      %v3529 = vadd.f32 %v3486, %v3528
      %3530 = vdwg.mxu0
      %3531 = vmatprep.subr.bf16.mxu0 %v2698
      %3532 = vmatpush1.bf16.msra.mxu0 %v2697
      %3533 = vmatprep.subr.bf16.mxu0 %v2701
      %3534 = vmatpush1.bf16.msra.mxu0 %v2700
      %3535 = vmatprep.subr.bf16.mxu0 %v2704
      %3536 = vmatpush1.bf16.msra.mxu0 %v2703
      %3537 = vmatprep.subr.bf16.mxu0 %v2707
      %3538 = vmatpush1.bf16.msra.mxu0 %v2706
      %3539 = vmatprep.subr.bf16.mxu0 %v2710
      %3540 = vmatpush1.bf16.msra.mxu0 %v2709
      %3541 = vmatprep.subr.bf16.mxu0 %v2713
      %3542 = vmatpush1.bf16.msra.mxu0 %v2712
      %3543 = vmatprep.subr.bf16.mxu0 %v2716
      %3544 = vmatpush1.bf16.msra.mxu0 %v2715
      %3545 = vmatprep.subr.bf16.mxu0 %v2719
      %3546 = vmatpush1.bf16.msra.mxu0 %v2718
      %3547 = vmatprep.subr.bf16.mxu0 %v2722
      %3548 = vmatpush1.bf16.msra.mxu0 %v2721
      %3549 = vmatprep.subr.bf16.mxu0 %v2725
      %3550 = vmatpush1.bf16.msra.mxu0 %v2724
      %3551 = vmatprep.subr.bf16.mxu0 %v2728
      %3552 = vmatpush1.bf16.msra.mxu0 %v2727
      %3553 = vmatprep.subr.bf16.mxu0 %v2731
      %3554 = vmatpush1.bf16.msra.mxu0 %v2730
      %3555 = vmatprep.subr.bf16.mxu0 %v2734
      %3556 = vmatpush1.bf16.msra.mxu0 %v2733
      %3557 = vmatprep.subr.bf16.mxu0 %v2737
      %3558 = vmatpush1.bf16.msra.mxu0 %v2736
      %3559 = vmatprep.subr.bf16.mxu0 %v2740
      %3560 = vmatpush1.bf16.msra.mxu0 %v2739
      %3561 = vmatprep.subr.bf16.mxu0 %v2743
      %3562 = vmatpush1.bf16.msra.mxu0 %v2742
      %3563 = vmatprep.mubr.bf16.mxu0 %v946
      %3564 = vmatmul.mubr.bf16.gmra.mrb[0].mxu0 %v945
      %v3565 = vpop.f32.mrb[0].mxu0
      %v3566 = vadd.f32 %v3523, %v3565
      %v3567 = vpop.f32.mrb[0].mxu0
      %v3568 = vadd.f32 %v3525, %v3567
      %v3569 = vpop.f32.mrb[0].mxu0
      %v3570 = vadd.f32 %v3527, %v3569
      %v3571 = vpop.f32.mrb[0].mxu0
      %v3572 = vadd.f32 %v3529, %v3571
      %3573 = vdwg.mxu0
      %3574 = vmatprep.subr.bf16.mxu0 %v2746
      %3575 = vmatpush1.bf16.msra.mxu0 %v2745
      %3576 = vmatprep.subr.bf16.mxu0 %v2749
      %3577 = vmatpush1.bf16.msra.mxu0 %v2748
      %3578 = vmatprep.subr.bf16.mxu0 %v2752
      %3579 = vmatpush1.bf16.msra.mxu0 %v2751
      %3580 = vmatprep.subr.bf16.mxu0 %v2755
      %3581 = vmatpush1.bf16.msra.mxu0 %v2754
      %3582 = vmatprep.subr.bf16.mxu0 %v2758
      %3583 = vmatpush1.bf16.msra.mxu0 %v2757
      %3584 = vmatprep.subr.bf16.mxu0 %v2761
      %3585 = vmatpush1.bf16.msra.mxu0 %v2760
      %3586 = vmatprep.subr.bf16.mxu0 %v2764
      %3587 = vmatpush1.bf16.msra.mxu0 %v2763
      %3588 = vmatprep.subr.bf16.mxu0 %v2767
      %3589 = vmatpush1.bf16.msra.mxu0 %v2766
      %3590 = vmatprep.subr.bf16.mxu0 %v2770
      %3591 = vmatpush1.bf16.msra.mxu0 %v2769
      %3592 = vmatprep.subr.bf16.mxu0 %v2773
      %3593 = vmatpush1.bf16.msra.mxu0 %v2772
      %3594 = vmatprep.subr.bf16.mxu0 %v2776
      %3595 = vmatpush1.bf16.msra.mxu0 %v2775
      %3596 = vmatprep.subr.bf16.mxu0 %v2779
      %3597 = vmatpush1.bf16.msra.mxu0 %v2778
      %3598 = vmatprep.subr.bf16.mxu0 %v2782
      %3599 = vmatpush1.bf16.msra.mxu0 %v2781
      %3600 = vmatprep.subr.bf16.mxu0 %v2785
      %3601 = vmatpush1.bf16.msra.mxu0 %v2784
      %3602 = vmatprep.subr.bf16.mxu0 %v2788
      %3603 = vmatpush1.bf16.msra.mxu0 %v2787
      %3604 = vmatprep.subr.bf16.mxu0 %v2791
      %3605 = vmatpush1.bf16.msra.mxu0 %v2790
      %3606 = vmatprep.mubr.bf16.mxu0 %v948
      %3607 = vmatmul.mubr.bf16.gmra.mrb[0].mxu0 %v947
      %v3608 = vpop.f32.mrb[0].mxu0
      %v3609 = vadd.f32 %v3566, %v3608
      %v3610 = vpop.f32.mrb[0].mxu0
      %v3611 = vadd.f32 %v3568, %v3610
      %v3612 = vpop.f32.mrb[0].mxu0
      %v3613 = vadd.f32 %v3570, %v3612
      %v3614 = vpop.f32.mrb[0].mxu0
      %v3615 = vadd.f32 %v3572, %v3614
      %3616 = vdwg.mxu0
      %3617 = vmatprep.subr.bf16.mxu0 %v2794
      %3618 = vmatpush1.bf16.msra.mxu0 %v2793
      %3619 = vmatprep.subr.bf16.mxu0 %v2797
      %3620 = vmatpush1.bf16.msra.mxu0 %v2796
      %3621 = vmatprep.subr.bf16.mxu0 %v2800
      %3622 = vmatpush1.bf16.msra.mxu0 %v2799
      %3623 = vmatprep.subr.bf16.mxu0 %v2803
      %3624 = vmatpush1.bf16.msra.mxu0 %v2802
      %3625 = vmatprep.subr.bf16.mxu0 %v2806
      %3626 = vmatpush1.bf16.msra.mxu0 %v2805
      %3627 = vmatprep.subr.bf16.mxu0 %v2809
      %3628 = vmatpush1.bf16.msra.mxu0 %v2808
      %3629 = vmatprep.subr.bf16.mxu0 %v2812
      %3630 = vmatpush1.bf16.msra.mxu0 %v2811
      %3631 = vmatprep.subr.bf16.mxu0 %v2815
      %3632 = vmatpush1.bf16.msra.mxu0 %v2814
      %3633 = vmatprep.subr.bf16.mxu0 %v2818
      %3634 = vmatpush1.bf16.msra.mxu0 %v2817
      %3635 = vmatprep.subr.bf16.mxu0 %v2821
      %3636 = vmatpush1.bf16.msra.mxu0 %v2820
      %3637 = vmatprep.subr.bf16.mxu0 %v2824
      %3638 = vmatpush1.bf16.msra.mxu0 %v2823
      %3639 = vmatprep.subr.bf16.mxu0 %v2827
      %3640 = vmatpush1.bf16.msra.mxu0 %v2826
      %3641 = vmatprep.subr.bf16.mxu0 %v2830
      %3642 = vmatpush1.bf16.msra.mxu0 %v2829
      %3643 = vmatprep.subr.bf16.mxu0 %v2833
      %3644 = vmatpush1.bf16.msra.mxu0 %v2832
      %3645 = vmatprep.subr.bf16.mxu0 %v2836
      %3646 = vmatpush1.bf16.msra.mxu0 %v2835
      %3647 = vmatprep.subr.bf16.mxu0 %v2839
      %3648 = vmatpush1.bf16.msra.mxu0 %v2838
      %3649 = vmatprep.mubr.bf16.mxu0 %v950
      %3650 = vmatmul.mubr.bf16.gmra.mrb[0].mxu0 %v949
      %v3651 = vpop.f32.mrb[0].mxu0
      %v3652 = vadd.f32 %v3609, %v3651
      %v3653 = vpop.f32.mrb[0].mxu0
      %v3654 = vadd.f32 %v3611, %v3653
      %v3655 = vpop.f32.mrb[0].mxu0
      %v3656 = vadd.f32 %v3613, %v3655
      %v3657 = vpop.f32.mrb[0].mxu0
      %v3658 = vadd.f32 %v3615, %v3657
      %3659 = vdwg.mxu0
      %3660 = vmatprep.subr.bf16.mxu0 0
      %3661 = vmatpush1.bf16.msra.mxu0 %v2411
      %3662 = vmatprep.subr.bf16.mxu0 0
      %3663 = vmatpush1.bf16.msra.mxu0 %v2414
      %3664 = vmatprep.subr.bf16.mxu0 0
      %3665 = vmatpush1.bf16.msra.mxu0 %v2417
      %3666 = vmatprep.subr.bf16.mxu0 0
      %3667 = vmatpush1.bf16.msra.mxu0 %v2420
      %3668 = vmatprep.subr.bf16.mxu0 0
      %3669 = vmatpush1.bf16.msra.mxu0 %v2423
      %3670 = vmatprep.subr.bf16.mxu0 0
      %3671 = vmatpush1.bf16.msra.mxu0 %v2426
      %3672 = vmatprep.subr.bf16.mxu0 0
      %3673 = vmatpush1.bf16.msra.mxu0 %v2429
      %3674 = vmatprep.subr.bf16.mxu0 0
      %3675 = vmatpush1.bf16.msra.mxu0 %v2432
      %3676 = vmatprep.subr.bf16.mxu0 0
      %3677 = vmatpush1.bf16.msra.mxu0 %v2435
      %3678 = vmatprep.subr.bf16.mxu0 0
      %3679 = vmatpush1.bf16.msra.mxu0 %v2438
      %3680 = vmatprep.subr.bf16.mxu0 0
      %3681 = vmatpush1.bf16.msra.mxu0 %v2441
      %3682 = vmatprep.subr.bf16.mxu0 0
      %3683 = vmatpush1.bf16.msra.mxu0 %v2444
      %3684 = vmatprep.subr.bf16.mxu0 0
      %3685 = vmatpush1.bf16.msra.mxu0 %v2447
      %3686 = vmatprep.subr.bf16.mxu0 0
      %3687 = vmatpush1.bf16.msra.mxu0 %v2450
      %3688 = vmatprep.subr.bf16.mxu0 0
      %3689 = vmatpush1.bf16.msra.mxu0 %v2453
      %3690 = vmatprep.subr.bf16.mxu0 0
      %3691 = vmatpush1.bf16.msra.mxu0 %v2456
      %3692 = vmatprep.mubr.bf16.mxu0 %v934
      %3693 = vmatmul.mubr.bf16.gmra.mrb[0].mxu0 %v933
      %v3694 = vpop.f32.mrb[0].mxu0
      %v3695 = vadd.f32 %v875, %v3694
      %v3696 = vpop.f32.mrb[0].mxu0
      %v3697 = vpop.f32.mrb[0].mxu0
      %v3698 = vadd.f32 %v875, %v3697
      %v3699 = vpop.f32.mrb[0].mxu0
      %3700 = vdwg.mxu0
      %3701 = vmatprep.subr.bf16.mxu0 0
      %3702 = vmatpush1.bf16.msra.mxu0 %v2459
      %3703 = vmatprep.subr.bf16.mxu0 0
      %3704 = vmatpush1.bf16.msra.mxu0 %v2462
      %3705 = vmatprep.subr.bf16.mxu0 0
      %3706 = vmatpush1.bf16.msra.mxu0 %v2465
      %3707 = vmatprep.subr.bf16.mxu0 0
      %3708 = vmatpush1.bf16.msra.mxu0 %v2468
      %3709 = vmatprep.subr.bf16.mxu0 0
      %3710 = vmatpush1.bf16.msra.mxu0 %v2471
      %3711 = vmatprep.subr.bf16.mxu0 0
      %3712 = vmatpush1.bf16.msra.mxu0 %v2474
      %3713 = vmatprep.subr.bf16.mxu0 0
      %3714 = vmatpush1.bf16.msra.mxu0 %v2477
      %3715 = vmatprep.subr.bf16.mxu0 0
      %3716 = vmatpush1.bf16.msra.mxu0 %v2480
      %3717 = vmatprep.subr.bf16.mxu0 0
      %3718 = vmatpush1.bf16.msra.mxu0 %v2483
      %3719 = vmatprep.subr.bf16.mxu0 0
      %3720 = vmatpush1.bf16.msra.mxu0 %v2486
      %3721 = vmatprep.subr.bf16.mxu0 0
      %3722 = vmatpush1.bf16.msra.mxu0 %v2489
      %3723 = vmatprep.subr.bf16.mxu0 0
      %3724 = vmatpush1.bf16.msra.mxu0 %v2492
      %3725 = vmatprep.subr.bf16.mxu0 0
      %3726 = vmatpush1.bf16.msra.mxu0 %v2495
      %3727 = vmatprep.subr.bf16.mxu0 0
      %3728 = vmatpush1.bf16.msra.mxu0 %v2498
      %3729 = vmatprep.subr.bf16.mxu0 0
      %3730 = vmatpush1.bf16.msra.mxu0 %v2501
      %3731 = vmatprep.subr.bf16.mxu0 0
      %3732 = vmatpush1.bf16.msra.mxu0 %v2504
      %3733 = vmatprep.mubr.bf16.mxu0 %v936
      %3734 = vmatmul.mubr.bf16.gmra.mrb[0].mxu0 %v935
      %v3735 = vpop.f32.mrb[0].mxu0
      %v3736 = vadd.f32 %v3695, %v3735
      %v3737 = vpop.f32.mrb[0].mxu0
      %v3738 = vpop.f32.mrb[0].mxu0
      %v3739 = vadd.f32 %v3698, %v3738
      %v3740 = vpop.f32.mrb[0].mxu0
      %3741 = vdwg.mxu0
      %3742 = vmatprep.subr.bf16.mxu0 0
      %3743 = vmatpush1.bf16.msra.mxu0 %v2507
      %3744 = vmatprep.subr.bf16.mxu0 0
      %3745 = vmatpush1.bf16.msra.mxu0 %v2510
      %3746 = vmatprep.subr.bf16.mxu0 0
      %3747 = vmatpush1.bf16.msra.mxu0 %v2513
      %3748 = vmatprep.subr.bf16.mxu0 0
      %3749 = vmatpush1.bf16.msra.mxu0 %v2516
      %3750 = vmatprep.subr.bf16.mxu0 0
      %3751 = vmatpush1.bf16.msra.mxu0 %v2519
      %3752 = vmatprep.subr.bf16.mxu0 0
      %3753 = vmatpush1.bf16.msra.mxu0 %v2522
      %3754 = vmatprep.subr.bf16.mxu0 0
      %3755 = vmatpush1.bf16.msra.mxu0 %v2525
      %3756 = vmatprep.subr.bf16.mxu0 0
      %3757 = vmatpush1.bf16.msra.mxu0 %v2528
      %3758 = vmatprep.subr.bf16.mxu0 0
      %3759 = vmatpush1.bf16.msra.mxu0 %v2531
      %3760 = vmatprep.subr.bf16.mxu0 0
      %3761 = vmatpush1.bf16.msra.mxu0 %v2534
      %3762 = vmatprep.subr.bf16.mxu0 0
      %3763 = vmatpush1.bf16.msra.mxu0 %v2537
      %3764 = vmatprep.subr.bf16.mxu0 0
      %3765 = vmatpush1.bf16.msra.mxu0 %v2540
      %3766 = vmatprep.subr.bf16.mxu0 0
      %3767 = vmatpush1.bf16.msra.mxu0 %v2543
      %3768 = vmatprep.subr.bf16.mxu0 0
      %3769 = vmatpush1.bf16.msra.mxu0 %v2546
      %3770 = vmatprep.subr.bf16.mxu0 0
      %3771 = vmatpush1.bf16.msra.mxu0 %v2549
      %3772 = vmatprep.subr.bf16.mxu0 0
      %3773 = vmatpush1.bf16.msra.mxu0 %v2552
      %3774 = vmatprep.mubr.bf16.mxu0 %v938
      %3775 = vmatmul.mubr.bf16.gmra.mrb[0].mxu0 %v937
      %v3776 = vpop.f32.mrb[0].mxu0
      %v3777 = vadd.f32 %v3736, %v3776
      %v3778 = vpop.f32.mrb[0].mxu0
      %v3779 = vpop.f32.mrb[0].mxu0
      %v3780 = vadd.f32 %v3739, %v3779
      %v3781 = vpop.f32.mrb[0].mxu0
      %3782 = vdwg.mxu0
      %3783 = vmatprep.subr.bf16.mxu0 0
      %3784 = vmatpush1.bf16.msra.mxu0 %v2555
      %3785 = vmatprep.subr.bf16.mxu0 0
      %3786 = vmatpush1.bf16.msra.mxu0 %v2558
      %3787 = vmatprep.subr.bf16.mxu0 0
      %3788 = vmatpush1.bf16.msra.mxu0 %v2561
      %3789 = vmatprep.subr.bf16.mxu0 0
      %3790 = vmatpush1.bf16.msra.mxu0 %v2564
      %3791 = vmatprep.subr.bf16.mxu0 0
      %3792 = vmatpush1.bf16.msra.mxu0 %v2567
      %3793 = vmatprep.subr.bf16.mxu0 0
      %3794 = vmatpush1.bf16.msra.mxu0 %v2570
      %3795 = vmatprep.subr.bf16.mxu0 0
      %3796 = vmatpush1.bf16.msra.mxu0 %v2573
      %3797 = vmatprep.subr.bf16.mxu0 0
      %3798 = vmatpush1.bf16.msra.mxu0 %v2576
      %3799 = vmatprep.subr.bf16.mxu0 0
      %3800 = vmatpush1.bf16.msra.mxu0 %v2579
      %3801 = vmatprep.subr.bf16.mxu0 0
      %3802 = vmatpush1.bf16.msra.mxu0 %v2582
      %3803 = vmatprep.subr.bf16.mxu0 0
      %3804 = vmatpush1.bf16.msra.mxu0 %v2585
      %3805 = vmatprep.subr.bf16.mxu0 0
      %3806 = vmatpush1.bf16.msra.mxu0 %v2588
      %3807 = vmatprep.subr.bf16.mxu0 0
      %3808 = vmatpush1.bf16.msra.mxu0 %v2591
      %3809 = vmatprep.subr.bf16.mxu0 0
      %3810 = vmatpush1.bf16.msra.mxu0 %v2594
      %3811 = vmatprep.subr.bf16.mxu0 0
      %3812 = vmatpush1.bf16.msra.mxu0 %v2597
      %3813 = vmatprep.subr.bf16.mxu0 0
      %3814 = vmatpush1.bf16.msra.mxu0 %v2600
      %3815 = vmatprep.mubr.bf16.mxu0 %v940
      %3816 = vmatmul.mubr.bf16.gmra.mrb[0].mxu0 %v939
      %v3817 = vpop.f32.mrb[0].mxu0
      %v3818 = vadd.f32 %v3777, %v3817
      %v3819 = vpop.f32.mrb[0].mxu0
      %v3820 = vpop.f32.mrb[0].mxu0
      %v3821 = vadd.f32 %v3780, %v3820
      %v3822 = vpop.f32.mrb[0].mxu0
      %3823 = vdwg.mxu0
      %3824 = vmatprep.subr.bf16.mxu0 0
      %3825 = vmatpush1.bf16.msra.mxu0 %v2603
      %3826 = vmatprep.subr.bf16.mxu0 0
      %3827 = vmatpush1.bf16.msra.mxu0 %v2606
      %3828 = vmatprep.subr.bf16.mxu0 0
      %3829 = vmatpush1.bf16.msra.mxu0 %v2609
      %3830 = vmatprep.subr.bf16.mxu0 0
      %3831 = vmatpush1.bf16.msra.mxu0 %v2612
      %3832 = vmatprep.subr.bf16.mxu0 0
      %3833 = vmatpush1.bf16.msra.mxu0 %v2615
      %3834 = vmatprep.subr.bf16.mxu0 0
      %3835 = vmatpush1.bf16.msra.mxu0 %v2618
      %3836 = vmatprep.subr.bf16.mxu0 0
      %3837 = vmatpush1.bf16.msra.mxu0 %v2621
      %3838 = vmatprep.subr.bf16.mxu0 0
      %3839 = vmatpush1.bf16.msra.mxu0 %v2624
      %3840 = vmatprep.subr.bf16.mxu0 0
      %3841 = vmatpush1.bf16.msra.mxu0 %v2627
      %3842 = vmatprep.subr.bf16.mxu0 0
      %3843 = vmatpush1.bf16.msra.mxu0 %v2630
      %3844 = vmatprep.subr.bf16.mxu0 0
      %3845 = vmatpush1.bf16.msra.mxu0 %v2633
      %3846 = vmatprep.subr.bf16.mxu0 0
      %3847 = vmatpush1.bf16.msra.mxu0 %v2636
      %3848 = vmatprep.subr.bf16.mxu0 0
      %3849 = vmatpush1.bf16.msra.mxu0 %v2639
      %3850 = vmatprep.subr.bf16.mxu0 0
      %3851 = vmatpush1.bf16.msra.mxu0 %v2642
      %3852 = vmatprep.subr.bf16.mxu0 0
      %3853 = vmatpush1.bf16.msra.mxu0 %v2645
      %3854 = vmatprep.subr.bf16.mxu0 0
      %3855 = vmatpush1.bf16.msra.mxu0 %v2648
      %3856 = vmatprep.mubr.bf16.mxu0 %v942
      %3857 = vmatmul.mubr.bf16.gmra.mrb[0].mxu0 %v941
      %v3858 = vpop.f32.mrb[0].mxu0
      %v3859 = vadd.f32 %v3818, %v3858
      %v3860 = vpop.f32.mrb[0].mxu0
      %v3861 = vpop.f32.mrb[0].mxu0
      %v3862 = vadd.f32 %v3821, %v3861
      %v3863 = vpop.f32.mrb[0].mxu0
      %3864 = vdwg.mxu0
      %3865 = vmatprep.subr.bf16.mxu0 0
      %3866 = vmatpush1.bf16.msra.mxu0 %v2651
      %3867 = vmatprep.subr.bf16.mxu0 0
      %3868 = vmatpush1.bf16.msra.mxu0 %v2654
      %3869 = vmatprep.subr.bf16.mxu0 0
      %3870 = vmatpush1.bf16.msra.mxu0 %v2657
      %3871 = vmatprep.subr.bf16.mxu0 0
      %3872 = vmatpush1.bf16.msra.mxu0 %v2660
      %3873 = vmatprep.subr.bf16.mxu0 0
      %3874 = vmatpush1.bf16.msra.mxu0 %v2663
      %3875 = vmatprep.subr.bf16.mxu0 0
      %3876 = vmatpush1.bf16.msra.mxu0 %v2666
      %3877 = vmatprep.subr.bf16.mxu0 0
      %3878 = vmatpush1.bf16.msra.mxu0 %v2669
      %3879 = vmatprep.subr.bf16.mxu0 0
      %3880 = vmatpush1.bf16.msra.mxu0 %v2672
      %3881 = vmatprep.subr.bf16.mxu0 0
      %3882 = vmatpush1.bf16.msra.mxu0 %v2675
      %3883 = vmatprep.subr.bf16.mxu0 0
      %3884 = vmatpush1.bf16.msra.mxu0 %v2678
      %3885 = vmatprep.subr.bf16.mxu0 0
      %3886 = vmatpush1.bf16.msra.mxu0 %v2681
      %3887 = vmatprep.subr.bf16.mxu0 0
      %3888 = vmatpush1.bf16.msra.mxu0 %v2684
      %3889 = vmatprep.subr.bf16.mxu0 0
      %3890 = vmatpush1.bf16.msra.mxu0 %v2687
      %3891 = vmatprep.subr.bf16.mxu0 0
      %3892 = vmatpush1.bf16.msra.mxu0 %v2690
      %3893 = vmatprep.subr.bf16.mxu0 0
      %3894 = vmatpush1.bf16.msra.mxu0 %v2693
      %3895 = vmatprep.subr.bf16.mxu0 0
      %3896 = vmatpush1.bf16.msra.mxu0 %v2696
      %3897 = vmatprep.mubr.bf16.mxu0 %v944
      %3898 = vmatmul.mubr.bf16.gmra.mrb[0].mxu0 %v943
      %v3899 = vpop.f32.mrb[0].mxu0
      %v3900 = vadd.f32 %v3859, %v3899
      %v3901 = vpop.f32.mrb[0].mxu0
      %v3902 = vpop.f32.mrb[0].mxu0
      %v3903 = vadd.f32 %v3862, %v3902
      %v3904 = vpop.f32.mrb[0].mxu0
      %3905 = vdwg.mxu0
      %3906 = vmatprep.subr.bf16.mxu0 0
      %3907 = vmatpush1.bf16.msra.mxu0 %v2699
      %3908 = vmatprep.subr.bf16.mxu0 0
      %3909 = vmatpush1.bf16.msra.mxu0 %v2702
      %3910 = vmatprep.subr.bf16.mxu0 0
      %3911 = vmatpush1.bf16.msra.mxu0 %v2705
      %3912 = vmatprep.subr.bf16.mxu0 0
      %3913 = vmatpush1.bf16.msra.mxu0 %v2708
      %3914 = vmatprep.subr.bf16.mxu0 0
      %3915 = vmatpush1.bf16.msra.mxu0 %v2711
      %3916 = vmatprep.subr.bf16.mxu0 0
      %3917 = vmatpush1.bf16.msra.mxu0 %v2714
      %3918 = vmatprep.subr.bf16.mxu0 0
      %3919 = vmatpush1.bf16.msra.mxu0 %v2717
      %3920 = vmatprep.subr.bf16.mxu0 0
      %3921 = vmatpush1.bf16.msra.mxu0 %v2720
      %3922 = vmatprep.subr.bf16.mxu0 0
      %3923 = vmatpush1.bf16.msra.mxu0 %v2723
      %3924 = vmatprep.subr.bf16.mxu0 0
      %3925 = vmatpush1.bf16.msra.mxu0 %v2726
      %3926 = vmatprep.subr.bf16.mxu0 0
      %3927 = vmatpush1.bf16.msra.mxu0 %v2729
      %3928 = vmatprep.subr.bf16.mxu0 0
      %3929 = vmatpush1.bf16.msra.mxu0 %v2732
      %3930 = vmatprep.subr.bf16.mxu0 0
      %3931 = vmatpush1.bf16.msra.mxu0 %v2735
      %3932 = vmatprep.subr.bf16.mxu0 0
      %3933 = vmatpush1.bf16.msra.mxu0 %v2738
      %3934 = vmatprep.subr.bf16.mxu0 0
      %3935 = vmatpush1.bf16.msra.mxu0 %v2741
      %3936 = vmatprep.subr.bf16.mxu0 0
      %3937 = vmatpush1.bf16.msra.mxu0 %v2744
      %3938 = vmatprep.mubr.bf16.mxu0 %v946
      %3939 = vmatmul.mubr.bf16.gmra.mrb[0].mxu0 %v945
      %v3940 = vpop.f32.mrb[0].mxu0
      %v3941 = vadd.f32 %v3900, %v3940
      %v3942 = vpop.f32.mrb[0].mxu0
      %v3943 = vpop.f32.mrb[0].mxu0
      %v3944 = vadd.f32 %v3903, %v3943
      %v3945 = vpop.f32.mrb[0].mxu0
      %3946 = vdwg.mxu0
      %3947 = vmatprep.subr.bf16.mxu0 0
      %3948 = vmatpush1.bf16.msra.mxu0 %v2747
      %3949 = vmatprep.subr.bf16.mxu0 0
      %3950 = vmatpush1.bf16.msra.mxu0 %v2750
      %3951 = vmatprep.subr.bf16.mxu0 0
      %3952 = vmatpush1.bf16.msra.mxu0 %v2753
      %3953 = vmatprep.subr.bf16.mxu0 0
      %3954 = vmatpush1.bf16.msra.mxu0 %v2756
      %3955 = vmatprep.subr.bf16.mxu0 0
      %3956 = vmatpush1.bf16.msra.mxu0 %v2759
      %3957 = vmatprep.subr.bf16.mxu0 0
      %3958 = vmatpush1.bf16.msra.mxu0 %v2762
      %3959 = vmatprep.subr.bf16.mxu0 0
      %3960 = vmatpush1.bf16.msra.mxu0 %v2765
      %3961 = vmatprep.subr.bf16.mxu0 0
      %3962 = vmatpush1.bf16.msra.mxu0 %v2768
      %3963 = vmatprep.subr.bf16.mxu0 0
      %3964 = vmatpush1.bf16.msra.mxu0 %v2771
      %3965 = vmatprep.subr.bf16.mxu0 0
      %3966 = vmatpush1.bf16.msra.mxu0 %v2774
      %3967 = vmatprep.subr.bf16.mxu0 0
      %3968 = vmatpush1.bf16.msra.mxu0 %v2777
      %3969 = vmatprep.subr.bf16.mxu0 0
      %3970 = vmatpush1.bf16.msra.mxu0 %v2780
      %3971 = vmatprep.subr.bf16.mxu0 0
      %3972 = vmatpush1.bf16.msra.mxu0 %v2783
      %3973 = vmatprep.subr.bf16.mxu0 0
      %3974 = vmatpush1.bf16.msra.mxu0 %v2786
      %3975 = vmatprep.subr.bf16.mxu0 0
      %3976 = vmatpush1.bf16.msra.mxu0 %v2789
      %3977 = vmatprep.subr.bf16.mxu0 0
      %3978 = vmatpush1.bf16.msra.mxu0 %v2792
      %3979 = vmatprep.mubr.bf16.mxu0 %v948
      %3980 = vmatmul.mubr.bf16.gmra.mrb[0].mxu0 %v947
      %v3981 = vpop.f32.mrb[0].mxu0
      %v3982 = vadd.f32 %v3941, %v3981
      %v3983 = vpop.f32.mrb[0].mxu0
      %v3984 = vpop.f32.mrb[0].mxu0
      %v3985 = vadd.f32 %v3944, %v3984
      %v3986 = vpop.f32.mrb[0].mxu0
      %3987 = vdwg.mxu0
      %3988 = vmatprep.subr.bf16.mxu0 0
      %3989 = vmatpush1.bf16.msra.mxu0 %v2795
      %3990 = vmatprep.subr.bf16.mxu0 0
      %3991 = vmatpush1.bf16.msra.mxu0 %v2798
      %3992 = vmatprep.subr.bf16.mxu0 0
      %3993 = vmatpush1.bf16.msra.mxu0 %v2801
      %3994 = vmatprep.subr.bf16.mxu0 0
      %3995 = vmatpush1.bf16.msra.mxu0 %v2804
      %3996 = vmatprep.subr.bf16.mxu0 0
      %3997 = vmatpush1.bf16.msra.mxu0 %v2807
      %3998 = vmatprep.subr.bf16.mxu0 0
      %3999 = vmatpush1.bf16.msra.mxu0 %v2810
      %4000 = vmatprep.subr.bf16.mxu0 0
      %4001 = vmatpush1.bf16.msra.mxu0 %v2813
      %4002 = vmatprep.subr.bf16.mxu0 0
      %4003 = vmatpush1.bf16.msra.mxu0 %v2816
      %4004 = vmatprep.subr.bf16.mxu0 0
      %4005 = vmatpush1.bf16.msra.mxu0 %v2819
      %4006 = vmatprep.subr.bf16.mxu0 0
      %4007 = vmatpush1.bf16.msra.mxu0 %v2822
      %4008 = vmatprep.subr.bf16.mxu0 0
      %4009 = vmatpush1.bf16.msra.mxu0 %v2825
      %4010 = vmatprep.subr.bf16.mxu0 0
      %4011 = vmatpush1.bf16.msra.mxu0 %v2828
      %4012 = vmatprep.subr.bf16.mxu0 0
      %4013 = vmatpush1.bf16.msra.mxu0 %v2831
      %4014 = vmatprep.subr.bf16.mxu0 0
      %4015 = vmatpush1.bf16.msra.mxu0 %v2834
      %4016 = vmatprep.subr.bf16.mxu0 0
      %4017 = vmatpush1.bf16.msra.mxu0 %v2837
      %4018 = vmatprep.subr.bf16.mxu0 0
      %4019 = vmatpush1.bf16.msra.mxu0 %v2840
      %4020 = vmatprep.mubr.bf16.mxu0 %v950
      %4021 = vmatmul.mubr.bf16.gmra.mrb[0].mxu0 %v949
      %v4022 = vpop.f32.mrb[0].mxu0
      %v4023 = vadd.f32 %v3982, %v4022
      %v4024 = vpop.f32.mrb[0].mxu0
      %v4025 = vpop.f32.mrb[0].mxu0
      %v4026 = vadd.f32 %v3985, %v4025
      %v4027 = vpop.f32.mrb[0].mxu0
      %4028 = vdwg.mxu0
      %v4029 = vmax.f32 %v3652, 0.0
      %v4030 = vmax.f32 %v3654, 0.0
      %v4031 = vmax.f32 %v4023, 0.0
      %v4032 = vmax.f32 %v3656, 0.0
      %v4033 = vmax.f32 %v3658, 0.0
      %v4034 = vmax.f32 %v4026, 0.0
      %v4035 = vpack.c.bf16 %v4032, %v4029
      %v4036 = vpack.c.bf16 %v4033, %v4030
      %v4037 = vpack.c.bf16 %v4034, %v4031
      %v4038 = vld [vmem:[%s3] sm:$0xf]
      %v4039 = vld [vmem:[%s3 + $0x4] sm:$0xf]
      %v4040 = vld [vmem:[%s3 + $0x8] sm:$0xf]
      %v4041 = vld [vmem:[%s3 + $0xc] sm:$0xf]
      %v4042 = vld [vmem:[%s3 + $0x10] sm:$0xf]
      %v4043 = vld [vmem:[%s3 + $0x14] sm:$0xf]
      %v4044 = vld [vmem:[%s3 + $0x18] sm:$0xf]
      %v4045 = vld [vmem:[%s3 + $0x1c] sm:$0xf]
      %v4046 = vld [vmem:[%s3 + $0x20] sm:$0xf]
      %v4047 = vld [vmem:[%s3 + $0x24] sm:$0xf]
      %v4048 = vld [vmem:[%s3 + $0x28] sm:$0xf]
      %v4049 = vld [vmem:[%s3 + $0x2c] sm:$0xf]
      %v4050 = vld [vmem:[%s3 + $0x30] sm:$0xf]
      %v4051 = vld [vmem:[%s3 + $0x34] sm:$0xf]
      %v4052 = vld [vmem:[%s3 + $0x38] sm:$0xf]
      %v4053 = vld [vmem:[%s3 + $0x3c] sm:$0xf]
      %v4054 = vld [vmem:[%s3 + $0x40] sm:$0xf]
      %v4055 = vld [vmem:[%s3 + $0x44] sm:$0xf]
      %v4056 = vld [vmem:[%s3 + $0x48] sm:$0xf]
      %v4057 = vld [vmem:[%s3 + $0x4c] sm:$0xf]
      %v4058 = vld [vmem:[%s3 + $0x50] sm:$0xf]
      %v4059 = vld [vmem:[%s3 + $0x54] sm:$0xf]
      %v4060 = vld [vmem:[%s3 + $0x58] sm:$0xf]
      %v4061 = vld [vmem:[%s3 + $0x5c] sm:$0xf]
      %v4062 = vld [vmem:[%s3 + $0x60] sm:$0xf]
      %v4063 = vld [vmem:[%s3 + $0x64] sm:$0xf]
      %v4064 = vld [vmem:[%s3 + $0x68] sm:$0xf]
      %v4065 = vld [vmem:[%s3 + $0x6c] sm:$0xf]
      %v4066 = vld [vmem:[%s3 + $0x70] sm:$0xf]
      %v4067 = vld [vmem:[%s3 + $0x74] sm:$0xf]
      %v4068 = vld [vmem:[%s3 + $0x78] sm:$0xf]
      %v4069 = vld [vmem:[%s3 + $0x7c] sm:$0xf]
      %v4070 = vld [vmem:[%s3 + $0x80] sm:$0xf]
      %v4071 = vld [vmem:[%s3 + $0x84] sm:$0xf]
      %v4072 = vld [vmem:[%s3 + $0x88] sm:$0xf]
      %v4073 = vld [vmem:[%s3 + $0x8c] sm:$0xf]
      %v4074 = vld [vmem:[%s3 + $0x90] sm:$0xf]
      %v4075 = vld [vmem:[%s3 + $0x94] sm:$0xf]
      %v4076 = vld [vmem:[%s3 + $0x98] sm:$0xf]
      %v4077 = vld [vmem:[%s3 + $0x9c] sm:$0xf]
      %v4078 = vld [vmem:[%s3 + $0xa0] sm:$0xf]
      %v4079 = vld [vmem:[%s3 + $0xa4] sm:$0xf]
      %v4080 = vld [vmem:[%s3 + $0xa8] sm:$0xf]
      %v4081 = vld [vmem:[%s3 + $0xac] sm:$0xf]
      %v4082 = vld [vmem:[%s3 + $0xb0] sm:$0xf]
      %v4083 = vld [vmem:[%s3 + $0xb4] sm:$0xf]
      %v4084 = vld [vmem:[%s3 + $0xb8] sm:$0xf]
      %v4085 = vld [vmem:[%s3 + $0xbc] sm:$0xf]
      %v4086 = vld [vmem:[%s4] sm:$0x1]
      %v4088 = vlaneseq
      %v4089 = vshrl.u32 %v4088, 7
      %v4090 = vsub.s32 0, %v4089
      %v4091 = vrot.slane %v4086, %v4090
      %v4141 = vunpack.c.l.b16 %v4038
      %v4142 = vunpack.c.l.b16 %v4039
      %v4143 = vunpack.c.l.b16 %v4040
      %v4144 = vunpack.c.l.b16 %v4041
      %v4145 = vunpack.c.l.b16 %v4042
      %v4146 = vunpack.c.l.b16 %v4043
      %v4147 = vunpack.c.l.b16 %v4044
      %v4148 = vunpack.c.l.b16 %v4045
      %v4149 = vunpack.c.l.b16 %v4046
      %v4150 = vunpack.c.l.b16 %v4047
      %v4151 = vunpack.c.l.b16 %v4048
      %v4152 = vunpack.c.l.b16 %v4049
      %v4153 = vunpack.c.l.b16 %v4050
      %v4154 = vunpack.c.l.b16 %v4051
      %v4155 = vunpack.c.l.b16 %v4052
      %v4156 = vunpack.c.l.b16 %v4053
      %v4157 = vunpack.c.l.b16 %v4054
      %v4158 = vunpack.c.l.b16 %v4055
      %v4159 = vunpack.c.l.b16 %v4056
      %v4160 = vunpack.c.l.b16 %v4057
      %v4161 = vunpack.c.l.b16 %v4058
      %v4162 = vunpack.c.l.b16 %v4059
      %v4163 = vunpack.c.l.b16 %v4060
      %v4164 = vunpack.c.l.b16 %v4061
      %v4165 = vunpack.c.l.b16 %v4062
      %v4166 = vunpack.c.l.b16 %v4063
      %v4167 = vunpack.c.l.b16 %v4064
      %v4168 = vunpack.c.l.b16 %v4065
      %v4169 = vunpack.c.l.b16 %v4066
      %v4170 = vunpack.c.l.b16 %v4067
      %v4171 = vunpack.c.l.b16 %v4068
      %v4172 = vunpack.c.l.b16 %v4069
      %v4173 = vunpack.c.l.b16 %v4070
      %v4174 = vunpack.c.l.b16 %v4071
      %v4175 = vunpack.c.l.b16 %v4072
      %v4176 = vunpack.c.l.b16 %v4073
      %v4177 = vunpack.c.l.b16 %v4074
      %v4178 = vunpack.c.l.b16 %v4075
      %v4179 = vunpack.c.l.b16 %v4076
      %v4180 = vunpack.c.l.b16 %v4077
      %v4181 = vunpack.c.l.b16 %v4078
      %v4182 = vunpack.c.l.b16 %v4079
      %v4183 = vunpack.c.l.b16 %v4080
      %v4184 = vunpack.c.l.b16 %v4081
      %v4185 = vunpack.c.l.b16 %v4082
      %v4186 = vunpack.c.l.b16 %v4083
      %v4187 = vunpack.c.l.b16 %v4084
      %v4188 = vunpack.c.l.b16 %v4085
      %v4189 = vpack.c.b16 %v4142, %v4141
      %v4190 = vpack.c.b16 %v4144, %v4143
      %v4191 = vpack.c.b16 %v4146, %v4145
      %v4192 = vpack.c.b16 %v4148, %v4147
      %v4193 = vpack.c.b16 %v4150, %v4149
      %v4194 = vpack.c.b16 %v4152, %v4151
      %v4195 = vpack.c.b16 %v4154, %v4153
      %v4196 = vpack.c.b16 %v4156, %v4155
      %v4197 = vpack.c.b16 %v4158, %v4157
      %v4198 = vpack.c.b16 %v4160, %v4159
      %v4199 = vpack.c.b16 %v4162, %v4161
      %v4200 = vpack.c.b16 %v4164, %v4163
      %v4201 = vpack.c.b16 %v4166, %v4165
      %v4202 = vpack.c.b16 %v4168, %v4167
      %v4203 = vpack.c.b16 %v4170, %v4169
      %v4204 = vpack.c.b16 %v4172, %v4171
      %v4205 = vpack.c.b16 %v4174, %v4173
      %v4206 = vpack.c.b16 %v4176, %v4175
      %v4207 = vpack.c.b16 %v4178, %v4177
      %v4208 = vpack.c.b16 %v4180, %v4179
      %v4209 = vpack.c.b16 %v4182, %v4181
      %v4210 = vpack.c.b16 %v4184, %v4183
      %v4211 = vpack.c.b16 %v4186, %v4185
      %v4212 = vpack.c.b16 %v4188, %v4187
      %4237 = vmatprep.subr.bf16.mxu0 0
      %4238 = vmatpush1.bf16.msra.mxu0 %v4189
      %4239 = vmatprep.subr.bf16.mxu0 0
      %4240 = vmatpush1.bf16.msra.mxu0 %v4190
      %4241 = vmatprep.subr.bf16.mxu0 0
      %4242 = vmatpush1.bf16.msra.mxu0 %v4191
      %4243 = vmatprep.subr.bf16.mxu0 0
      %4244 = vmatpush1.bf16.msra.mxu0 %v4192
      %4245 = vmatprep.subr.bf16.mxu0 0
      %4246 = vmatpush1.bf16.msra.mxu0 %v4193
      %4247 = vmatprep.subr.bf16.mxu0 0
      %4248 = vmatpush1.bf16.msra.mxu0 %v4194
      %4249 = vmatprep.subr.bf16.mxu0 0
      %4250 = vmatpush1.bf16.msra.mxu0 %v4195
      %4251 = vmatprep.subr.bf16.mxu0 0
      %4252 = vmatpush1.bf16.msra.mxu0 %v4196
      %4253 = vmatprep.subr.bf16.mxu0 0
      %4254 = vmatpush1.bf16.msra.mxu0 %v4197
      %4255 = vmatprep.subr.bf16.mxu0 0
      %4256 = vmatpush1.bf16.msra.mxu0 %v4198
      %4257 = vmatprep.subr.bf16.mxu0 0
      %4258 = vmatpush1.bf16.msra.mxu0 %v4199
      %4259 = vmatprep.subr.bf16.mxu0 0
      %4260 = vmatpush1.bf16.msra.mxu0 %v4200
      %4261 = vmatprep.subr.bf16.mxu0 0
      %4262 = vmatpush1.bf16.msra.mxu0 %v4201
      %4263 = vmatprep.subr.bf16.mxu0 0
      %4264 = vmatpush1.bf16.msra.mxu0 %v4202
      %4265 = vmatprep.subr.bf16.mxu0 0
      %4266 = vmatpush1.bf16.msra.mxu0 %v4203
      %4267 = vmatprep.subr.bf16.mxu0 0
      %4268 = vmatpush1.bf16.msra.mxu0 %v4204
      %4269 = vmatprep.mubr.bf16.mxu0 %v4036
      %4270 = vmatmul.mubr.bf16.gmra.mrb[0].mxu0 %v4035
      %v4271 = vpop.f32.mrb[0].mxu0
      %v4272 = vadd.f32 %v4091, %v4271
      %v4273 = vpop.f32.mrb[0].mxu0
      %v4274 = vpop.f32.mrb[0].mxu0
      %v4275 = vadd.f32 %v4091, %v4274
      %v4276 = vpop.f32.mrb[0].mxu0
      %4277 = vdwg.mxu0
      %4278 = vmatprep.subr.bf16.mxu0 0
      %4279 = vmatpush1.bf16.msra.mxu0 %v4205
      %4280 = vmatprep.subr.bf16.mxu0 0
      %4281 = vmatpush1.bf16.msra.mxu0 %v4206
      %4282 = vmatprep.subr.bf16.mxu0 0
      %4283 = vmatpush1.bf16.msra.mxu0 %v4207
      %4284 = vmatprep.subr.bf16.mxu0 0
      %4285 = vmatpush1.bf16.msra.mxu0 %v4208
      %4286 = vmatprep.subr.bf16.mxu0 0
      %4287 = vmatpush1.bf16.msra.mxu0 %v4209
      %4288 = vmatprep.subr.bf16.mxu0 0
      %4289 = vmatpush1.bf16.msra.mxu0 %v4210
      %4290 = vmatprep.subr.bf16.mxu0 0
      %4291 = vmatpush1.bf16.msra.mxu0 %v4211
      %4292 = vmatprep.subr.bf16.mxu0 0
      %4293 = vmatpush1.bf16.msra.mxu0 %v4212
      %4294 = vmatprep.subr.bf16.mxu0 0
      %4295 = vmatpush1.bf16.msra.mxu0 0
      %4296 = vmatprep.subr.bf16.mxu0 0
      %4297 = vmatpush1.bf16.msra.mxu0 0
      %4298 = vmatprep.subr.bf16.mxu0 0
      %4299 = vmatpush1.bf16.msra.mxu0 0
      %4300 = vmatprep.subr.bf16.mxu0 0
      %4301 = vmatpush1.bf16.msra.mxu0 0
      %4302 = vmatprep.subr.bf16.mxu0 0
      %4303 = vmatpush1.bf16.msra.mxu0 0
      %4304 = vmatprep.subr.bf16.mxu0 0
      %4305 = vmatpush1.bf16.msra.mxu0 0
      %4306 = vmatprep.subr.bf16.mxu0 0
      %4307 = vmatpush1.bf16.msra.mxu0 0
      %4308 = vmatprep.subr.bf16.mxu0 0
      %4309 = vmatpush1.bf16.msra.mxu0 0
      %4310 = vmatprep.mubr.bf16.mxu0 0
      %4311 = vmatmul.mubr.bf16.gmra.mrb[0].mxu0 %v4037
      %v4312 = vpop.f32.mrb[0].mxu0
      %v4313 = vadd.f32 %v4272, %v4312
      %v4314 = vpop.f32.mrb[0].mxu0
      %v4315 = vpop.f32.mrb[0].mxu0
      %v4316 = vadd.f32 %v4275, %v4315
      %v4317 = vpop.f32.mrb[0].mxu0
      %4318 = vdwg.mxu0
      %v4319 = vmax.f32 %v4313, 0.0
      %v4320 = vmax.f32 %v4316, 0.0
      %4321 = vst [vmem:[%s265] sm:$0xff] %v4319
      %4322 = vst [vmem:[%s265 + $0x8] sm:$0xff] %v4320
      %s4323 = smul.u32 2, %s21
      %p4324 = scmp.lt.s32.totalorder %s20, 1
      %s4325 = scalar_select %p4324, %s20, 1
      %p4326 = scmp.lt.s32.totalorder %s4323, 1
      %s4327 = scalar_select %p4326, %s4323, 1
      %s4328 = smul.addr %s4325, 2
      %s4329 = sadd.s32 %s4327, %s4328
      %s4330 = smul.addr %s4329, 8
      %s4331 = scalar_lea.vmem %s5, %s4330
      // Predicated region
      $region41: #{itracker_forward.9} parent=39 // pred_check
        %p4332 = pneg %p160
      $region42: #{itracker_forward.9} parent=39 // pred_check_branch
        %4334 = sbr.rel (%p4332) target = $region44
      $region43: #{itracker_forward.9} parent=39 // pred_region
        %s4335 = smul.u32 2, %s21
      $region44: #{itracker_forward.9} parent=39 // pred_fallthru
        _
    $region40: #{itracker_forward.9} parent=5 // pred_fallthru
      _
    %p4336 = scmp.le.s32.totalorder 2, %s11
    // Predicated region
    $region45: #{itracker_forward.9} parent=5 // pred_check
      %p4337 = pneg %p4336
    $region46: #{itracker_forward.9} parent=5 // pred_check_branch
      %4339 = sbr.rel (%p4337) target = $region48
    $region47: #{itracker_forward.9} parent=5 // pred_region
      %s4340 = ssub.s32 %s11, 2
      // Predicated region
      $region49: #{itracker_forward.9} parent=47 // pred_check
        %p4341 = pneg %p166
      $region50: #{itracker_forward.9} parent=47 // pred_check_branch
        %4343 = sbr.rel (%p4341) target = $region52
      $region51: #{itracker_forward.9} parent=47 // pred_region
        %s4344 = smul.u32 2, %s23
        %p4345 = scmp.lt.s32.totalorder %s22, 1
        %s4346 = scalar_select %p4345, %s22, 1
        %p4347 = scmp.lt.s32.totalorder %s4344, 1
        %s4348 = scalar_select %p4347, %s4344, 1
        %s4349 = smul.addr %s4346, 2
        %s4350 = sadd.s32 %s4348, %s4349
        %s4351 = smul.addr %s4350, 8
        %s4352 = scalar_lea.vmem %s5, %s4351
      $region52: #{itracker_forward.9} parent=47 // pred_fallthru
        _
    $region48: #{itracker_forward.9} parent=5 // pred_fallthru
      _
  $region6: #{itracker_forward.9} parent=0 // loop_footer
    %s15 = sadd.s32 1, %s11
  $region7: #{itracker_forward.9} parent=0 // loop_footer_branch
    %10 = sbr.rel target = $region3
  $region8: #{itracker_forward.9} parent=0 // loop_exit
    _

</llo_original>
